<compile_context>
chip_gen: v7x
topology: tpu7x:2x2x1
jax: 0.10.0
libtpu: 0.0.40
codegen_flags: <defaults>
</compile_context>

<pallas_src>
import functools

import numpy as np
import jax
import jax.numpy as jnp
from jax import lax
from jax.experimental import pallas as pl
from jax.experimental.pallas import tpu as pltpu


# ----------------------------------------------------------------------------
# Static interpolation tables (align_corners=True)
# ----------------------------------------------------------------------------
def _lerp_taps(n_in, n_out):
    """Static per-output-row 2-tap table: (i0, i1, w0, w1)."""
    if n_in == 1:
        return [(0, 0, 1.0, 0.0) for _ in range(n_out)]
    taps = []
    for u in range(n_out):
        pos = u * (n_in - 1) / (n_out - 1)
        i0 = min(int(np.floor(pos)), n_in - 1)
        i1 = min(i0 + 1, n_in - 1)
        f = float(pos - i0)
        taps.append((i0, i1, 1.0 - f, f))
    return taps


def _bilinear_matrix(n_in, n_out):
    """Dense interp matrix (W axis in the kernel; both axes in the reference)."""
    m = np.zeros((n_out, n_in), np.float32)
    for u, (i0, i1, a0, a1) in enumerate(_lerp_taps(n_in, n_out)):
        m[u, i0] += a0
        m[u, i1] += a1
    return jnp.asarray(m)


# ----------------------------------------------------------------------------
# Fused kernel: conv3x3 (9 shifted matmuls) + streamed GroupNorm + ReLU +
# bilinear x2 (W-matmul first, then 2-tap H lerp), NCHW output.
# One grid step per batch image; everything between HBM read and HBM write is
# VMEM-resident.
# ----------------------------------------------------------------------------
def _fused_kernel(xf_ref, wm_ref, prm_ref, ag_ref, rwT_ref, hidx_ref, hwts_ref,
                  o_ref, y_ref, z_ref,
                  *, H, W, Wp, Cin, Cout, G, Hout, RH, mm_dtype):
    TM = RH * Wp          # flat rows per conv block (multiple of 8, >= 256 typically)
    NB = H // RH          # conv row-blocks

    def mm(a, b, dn=None):
        # matmul_dtype=jnp.bfloat16 is the v6e/v7x throughput knob (f32 accumulation)
        if mm_dtype is not None:
            a = a.astype(mm_dtype)
            b = b.astype(mm_dtype)
        if dn is None:
            return jnp.dot(a, b, preferred_element_type=jnp.float32)
        return lax.dot_general(a, b, dn, preferred_element_type=jnp.float32)

    bias = prm_ref[0:1, :]      # (1, Cout)
    gamma = prm_ref[1:2, :]
    beta = prm_ref[2:3, :]

    # Valid-column mask for one flat row-block (block bases are multiples of Wp,
    # so the mask is identical for every block -> hoisted out of the loop).
    colf = ((lax.broadcasted_iota(jnp.int32, (TM, 1), 0) % Wp) < W
            ).astype(jnp.float32)

    # ---- Phase 1: conv3x3 as 9 contiguous-shift matmuls, fused with bias,
    #      garbage-column masking and streamed GroupNorm statistics. ----
    def conv_block(blk, carry):
        s1, s2 = carry
        base = pl.multiple_of(blk * TM, 8)
        acc = jnp.zeros((TM, Cout), jnp.float32)
        for t in range(9):                                  # static 9-tap unroll
            dy, dx = divmod(t, 3)
            xs = xf_ref[0, pl.ds(base + dy * Wp + dx, TM), :]   # (TM, Cin) contiguous
            wk = wm_ref[pl.ds(t * Cin, Cin), :]                 # (Cin, Cout) static slice
            acc = acc + mm(xs, wk)
        yb = (acc + bias) * colf                            # zero out padded columns
        y_ref[pl.ds(base, TM), :] = yb
        s1 = s1 + jnp.sum(yb, axis=0, keepdims=True)
        s2 = s2 + jnp.sum(yb * yb, axis=0, keepdims=True)
        return s1, s2

    s1, s2 = lax.fori_loop(
        0, NB, conv_block,
        (jnp.zeros((1, Cout), jnp.float32), jnp.zeros((1, Cout), jnp.float32)))

    # ---- Phase 2: GroupNorm per-channel scale / shift (no full-slab temporaries).
    # Values are O(1) post-conv, so the one-pass E[x^2]-E[x]^2 form is safe in f32.
    A = ag_ref[...]                                         # (Cout, G) one-hot groups
    cnt = float(H * W * (Cout // G))
    nt = (((1,), (1,)), ((), ()))                           # contract the G axis of both
    mean_g = jnp.dot(s1, A, preferred_element_type=jnp.float32) / cnt      # (1, G)
    ex2_g = jnp.dot(s2, A, preferred_element_type=jnp.float32) / cnt
    var_g = ex2_g - mean_g * mean_g
    inv_g = lax.rsqrt(var_g + 1e-5)
    mean_c = lax.dot_general(mean_g, A, nt, preferred_element_type=jnp.float32)
    inv_c = lax.dot_general(inv_g, A, nt, preferred_element_type=jnp.float32)
    scale = inv_c * gamma                                   # (1, Cout)
    shift = beta - mean_c * scale                           # (1, Cout)

    # ---- Phase 3: normalize + ReLU + W-axis interpolation, once per CONV row ----
    # (W-first halves the upsample matmul count vs. interpolating H first)
    rwT = rwT_ref[...]                                      # (W, Wout)
    tn = (((0,), (0,)), ((), ()))                           # transposed-LHS matmul
    def w_interp(h, _):
        base = pl.multiple_of(h * Wp, 8)
        row = y_ref[pl.ds(base, W), :]                      # (W, Cout) valid columns only
        yn = jnp.maximum(row * scale + shift, 0.0)
        z_ref[h] = mm(yn, rwT, tn)                          # (Cout, Wout)
        return 0
    lax.fori_loop(0, H, w_interp, 0)

    # ---- Phase 4: 2-tap H lerp (pure VPU), writing NCHW output directly ----
    def h_lerp(u, _):
        i0 = hidx_ref[2 * u]
        i1 = hidx_ref[2 * u + 1]
        a0 = hwts_ref[2 * u]
        a1 = hwts_ref[2 * u + 1]
        o_ref[0, :, u, :] = a0 * z_ref[i0] + a1 * z_ref[i1]
        return 0
    lax.fori_loop(0, Hout, h_lerp, 0)


# ----------------------------------------------------------------------------
# Wrapper (public interface matches PyTorch NCHW)
# ----------------------------------------------------------------------------
def upsample_block(x_nchw, w, b, gamma, beta, num_groups=32, matmul_dtype=None):
    """x_nchw: (N, Cin, H, W) -> (N, Cout, 2H, 2W), all float32."""
    N, Cin, H, W = x_nchw.shape
    Cout = w.shape[0]
    G = num_groups
    assert Cout % G == 0
    Hout, Wout = 2 * H, 2 * W
    Wp = ((W + 2 + 7) // 8) * 8           # padded row width, multiple of 8
    Flat = (H + 3) * Wp                   # +3 rows: halo (1+2) so all tap slices stay in-bounds

    # Host-side prep on the *small* input: NCHW->NHWC, halo pad, flatten, weight
    # re-layout to (9*Cin, Cout) tap-major rows, packed affine params, interp tables.
    x_nhwc = jnp.transpose(x_nchw, (0, 2, 3, 1))
    xp = jnp.pad(x_nhwc, ((0, 0), (1, 2), (1, Wp - W - 1), (0, 0)))   # (N, H+3, Wp, Cin)
    xflat = xp.reshape(N, Flat, Cin)
    wm = jnp.transpose(w, (2, 3, 1, 0)).reshape(9 * Cin, Cout)        # rows = (ky, kx, cin)
    prm = jnp.stack([b, gamma, beta], axis=0)                         # (3, Cout)
    A = (jnp.arange(Cout)[:, None] // (Cout // G) ==
         jnp.arange(G)[None, :]).astype(jnp.float32)                  # (Cout, G)
    rwT = _bilinear_matrix(W, Wout).T                                 # (W, Wout)
    taps = _lerp_taps(H, Hout)
    hidx = jnp.asarray(np.array([[t[0], t[1]] for t in taps], np.int32).reshape(-1))
    hwts = jnp.asarray(np.array([[t[2], t[3]] for t in taps], np.float32).reshape(-1))

    # Conv row-block size: largest divisor of H whose flat block stays <= ~2 MiB.
    RH = 1
    for r in range(1, H + 1):
        if H % r == 0 and r * Wp * Cout * 4 <= (2 << 20):
            RH = r

    # VMEM budget: double-buffered in/out blocks + scratch.
    # TODO(synk): when this exceeds ~48 MiB (v7x), switch to the two-phase
    # (conv+stats, then H-tiled normalize+upsample) variant with an extra grid axis.
    vmem_need = (2 * Flat * Cin * 4
                 + 2 * Cout * Hout * Wout * 4
                 + H * Wp * Cout * 4
                 + H * Cout * Wout * 4
                 + (9 * Cin * Cout + 3 * Cout + Cout * G + W * Wout) * 4)
    vmem_limit = int(min(max(2 * vmem_need, 32 * 1024 * 1024), 96 * 1024 * 1024))

    kernel = functools.partial(
        _fused_kernel, H=H, W=W, Wp=Wp, Cin=Cin, Cout=Cout, G=G,
        Hout=Hout, RH=RH, mm_dtype=matmul_dtype)

    out = pl.pallas_call(
        kernel,
        out_shape=jax.ShapeDtypeStruct((N, Cout, Hout, Wout), jnp.float32),
        grid=(N,),
        in_specs=[
            pl.BlockSpec((1, Flat, Cin), lambda i: (i, 0, 0)),
            pl.BlockSpec((9 * Cin, Cout), lambda i: (0, 0)),
            pl.BlockSpec((3, Cout), lambda i: (0, 0)),
            pl.BlockSpec((Cout, G), lambda i: (0, 0)),
            pl.BlockSpec((W, Wout), lambda i: (0, 0)),
            pl.BlockSpec(memory_space=pltpu.MemorySpace.SMEM),   # H-lerp tap indices
            pl.BlockSpec(memory_space=pltpu.MemorySpace.SMEM),   # H-lerp tap weights
        ],
        out_specs=pl.BlockSpec((1, Cout, Hout, Wout), lambda i: (i, 0, 0, 0)),
        scratch_shapes=[pltpu.VMEM((H * Wp, Cout), jnp.float32),     # conv output (flat rows)
                        pltpu.VMEM((H, Cout, Wout), jnp.float32)],   # W-interpolated rows
        compiler_params=pltpu.CompilerParams(
            dimension_semantics=("parallel",),
            vmem_limit_bytes=vmem_limit),
    )(xflat, wm, prm, A, rwT, hidx, hwts)
    return out


# ----------------------------------------------------------------------------
# Pure-JAX reference for verification
# ----------------------------------------------------------------------------
def reference(x_nchw, w, b, gamma, beta, num_groups=32):
    N, Cin, H, W = x_nchw.shape
    Cout = w.shape[0]
    y = jax.lax.conv_general_dilated(
        x_nchw, w, window_strides=(1, 1), padding="SAME",
        dimension_numbers=("NCHW", "OIHW", "NCHW"))
    y = y + b.reshape(1, Cout, 1, 1)
    yg = y.reshape(N, num_groups, Cout // num_groups, H, W)
    mean = jnp.mean(yg, axis=(2, 3, 4), keepdims=True)
    var = jnp.var(yg, axis=(2, 3, 4), keepdims=True)
    yg = (yg - mean) * jax.lax.rsqrt(var + 1e-5)
    y = yg.reshape(N, Cout, H, W) * gamma.reshape(1, Cout, 1, 1) + beta.reshape(1, Cout, 1, 1)
    y = jnp.maximum(y, 0.0)
    Rh = _bilinear_matrix(H, 2 * H)
    Rw = _bilinear_matrix(W, 2 * W)
    y = jnp.einsum("uh,nchw->ncuw", Rh, y)
    y = jnp.einsum("vw,ncuw->ncuv", Rw, y)
    return y


if __name__ == "__main__":
    # Small deterministic config (GroupNorm(32) requires Cout % 32 == 0).
    N, Cin, Cout, H, W = 2, 4, 32, 16, 16
    key = jax.random.PRNGKey(0)
    kx, kw, kb, kg, kbt = jax.random.split(key, 5)

    x = jax.random.normal(kx, (N, Cin, H, W), jnp.float32)
    w = jax.random.normal(kw, (Cout, Cin, 3, 3), jnp.float32) * 0.1
    b = jax.random.normal(kb, (Cout,), jnp.float32) * 0.1
    gamma = 1.0 + 0.1 * jax.random.normal(kg, (Cout,), jnp.float32)
    beta = 0.1 * jax.random.normal(kbt, (Cout,), jnp.float32)

    out = jax.jit(upsample_block)(x, w, b, gamma, beta)
    out = jax.block_until_ready(out)

    ref = reference(x, w, b, gamma, beta)
    assert out.shape == (N, Cout, 2 * H, 2 * W), out.shape
    assert jnp.max(jnp.abs(out - ref)) < 1e-3, float(jnp.max(jnp.abs(out - ref)))

    print("KERNEL_OK")
</pallas_src>

<mosaic_0001>
module attributes {stable_mosaic.version = 11 : i64} {
  func.func @_fused_kernel(%arg0: i32, %arg1: memref<1x456x4xf32, #tpu.memory_space<vmem>>, %arg2: memref<36x32xf32, #tpu.memory_space<vmem>>, %arg3: memref<3x32xf32, #tpu.memory_space<vmem>>, %arg4: memref<32x32xf32, #tpu.memory_space<vmem>>, %arg5: memref<16x32xf32, #tpu.memory_space<vmem>>, %arg6: memref<64xi32, #tpu.memory_space<smem>>, %arg7: memref<64xf32, #tpu.memory_space<smem>>, %arg8: memref<1x32x32x32xf32, #tpu.memory_space<vmem>>, %arg9: memref<384x32xf32, #tpu.memory_space<vmem>>, %arg10: memref<16x32x32xf32, #tpu.memory_space<vmem>>) attributes {dimension_semantics = [#tpu.dimension_semantics<parallel>], iteration_bounds = array<i64: 2>, scalar_prefetch = 0 : i64, scratch_operands = 2 : i64, tpu.core_type = #tpu.core_type<tc>, window_params = [{transform_indices = @transform_0, window_bounds = array<i64: 1, 456, 4>}, {pipeline_mode = #tpu.pipeline_mode<synchronous>, transform_indices = @transform_1, window_bounds = array<i64: 36, 32>}, {pipeline_mode = #tpu.pipeline_mode<synchronous>, transform_indices = @transform_2, window_bounds = array<i64: 3, 32>}, {pipeline_mode = #tpu.pipeline_mode<synchronous>, transform_indices = @transform_3, window_bounds = array<i64: 32, 32>}, {pipeline_mode = #tpu.pipeline_mode<synchronous>, transform_indices = @transform_4, window_bounds = array<i64: 16, 32>}, {transform_indices = @transform_5, window_bounds = array<i64: 64>}, {transform_indices = @transform_6, window_bounds = array<i64: 64>}, {transform_indices = @transform_7, window_bounds = array<i64: 1, 32, 32, 32>}]} {
    %c0 = arith.constant 0 : index
    %c0_0 = arith.constant 0 : index
    %0 = vector.load %arg3[%c0, %c0_0] : memref<3x32xf32, #tpu.memory_space<vmem>>, vector<1x32xf32>
    %c1 = arith.constant 1 : index
    %c0_1 = arith.constant 0 : index
    %1 = vector.load %arg3[%c1, %c0_1] : memref<3x32xf32, #tpu.memory_space<vmem>>, vector<1x32xf32>
    %c2 = arith.constant 2 : index
    %c0_2 = arith.constant 0 : index
    %2 = vector.load %arg3[%c2, %c0_2] : memref<3x32xf32, #tpu.memory_space<vmem>>, vector<1x32xf32>
    %3 = tpu.iota {dimensions = array<i32: 0>} : vector<384x1xi32>
    %c24_i32 = arith.constant 24 : i32
    %c0_i32 = arith.constant 0 : i32
    %4 = arith.cmpi eq, %c24_i32, %c0_i32 : i32
    %c1_i32 = arith.constant 1 : i32
    %5 = arith.select %4, %c1_i32, %c24_i32 : i32
    %6 = vector.broadcast %5 : i32 to vector<384x1xi32>
    %7 = arith.remsi %3, %6 : vector<384x1xi32>
    %c0_i32_3 = arith.constant 0 : i32
    %8 = vector.broadcast %c0_i32_3 : i32 to vector<384x1xi32>
    %9 = arith.cmpi ne, %7, %8 : vector<384x1xi32>
    %c0_i32_4 = arith.constant 0 : i32
    %10 = vector.broadcast %c0_i32_4 : i32 to vector<384x1xi32>
    %11 = arith.cmpi slt, %7, %10 : vector<384x1xi32>
    %c0_i32_5 = arith.constant 0 : i32
    %12 = arith.cmpi slt, %5, %c0_i32_5 : i32
    %13 = vector.broadcast %12 : i1 to vector<384x1xi1>
    %14 = vector.broadcast %13 : vector<384x1xi1> to vector<384x1xi1>
    %15 = arith.xori %11, %14 : vector<384x1xi1>
    %16 = arith.andi %15, %9 : vector<384x1xi1>
    %17 = vector.broadcast %5 : i32 to vector<384x1xi32>
    %18 = arith.addi %7, %17 : vector<384x1xi32>
    %19 = arith.select %16, %18, %7 : vector<384x1xi1>, vector<384x1xi32>
    %c16_i32 = arith.constant 16 : i32
    %20 = vector.broadcast %c16_i32 : i32 to vector<384x1xi32>
    %21 = arith.cmpi slt, %19, %20 : vector<384x1xi32>
    %22 = arith.extui %21 : vector<384x1xi1> to vector<384x1xi32>
    %23 = arith.sitofp %22 : vector<384x1xi32> to vector<384x1xf32>
    %cst = arith.constant 0.000000e+00 : f32
    %24 = vector.broadcast %cst : f32 to vector<1x32xf32>
    %cst_6 = arith.constant 0.000000e+00 : f32
    %25 = vector.broadcast %cst_6 : f32 to vector<1x32xf32>
    %c0_i32_7 = arith.constant 0 : i32
    %c384_i32 = arith.constant 384 : i32
    %26 = arith.muli %c0_i32_7, %c384_i32 : i32
    %27 = tpu.assume_multiple %26, 8 : i32
    %cst_8 = arith.constant 0.000000e+00 : f32
    %28 = vector.broadcast %cst_8 : f32 to vector<384x32xf32>
    %c0_i32_9 = arith.constant 0 : i32
    %29 = arith.addi %27, %c0_i32_9 : i32
    %c0_i32_10 = arith.constant 0 : i32
    %30 = arith.addi %29, %c0_i32_10 : i32
    %c0_11 = arith.constant 0 : index
    %31 = arith.index_cast %30 : i32 to index
    %c0_12 = arith.constant 0 : index
    %32 = vector.load %arg1[%c0_11, %31, %c0_12] : memref<1x456x4xf32, #tpu.memory_space<vmem>>, vector<1x384x4xf32>
    %33 = vector.shape_cast %32 : vector<1x384x4xf32> to vector<384x4xf32>
    %c0_13 = arith.constant 0 : index
    %c0_14 = arith.constant 0 : index
    %34 = vector.load %arg2[%c0_13, %c0_14] : memref<36x32xf32, #tpu.memory_space<vmem>>, vector<4x32xf32>
    %cst_15 = arith.constant dense<0.000000e+00> : vector<384x32xf32>
    %35 = tpu.matmul %33, %34, %cst_15 {dimension_numbers = #tpu.dot_dimension_numbers<[1], [0], [0], [1], [0, 0, 1, 1], [], []>} : vector<384x4xf32>, vector<4x32xf32>, vector<384x32xf32> -> vector<384x32xf32>
    %36 = arith.addf %28, %35 : vector<384x32xf32>
    %c0_i32_16 = arith.constant 0 : i32
    %37 = arith.addi %27, %c0_i32_16 : i32
    %c1_i32_17 = arith.constant 1 : i32
    %38 = arith.addi %37, %c1_i32_17 : i32
    %c0_18 = arith.constant 0 : index
    %39 = arith.index_cast %38 : i32 to index
    %c0_19 = arith.constant 0 : index
    %40 = vector.load %arg1[%c0_18, %39, %c0_19] : memref<1x456x4xf32, #tpu.memory_space<vmem>>, vector<1x384x4xf32>
    %41 = vector.shape_cast %40 : vector<1x384x4xf32> to vector<384x4xf32>
    %c4 = arith.constant 4 : index
    %c0_20 = arith.constant 0 : index
    %42 = vector.load %arg2[%c4, %c0_20] : memref<36x32xf32, #tpu.memory_space<vmem>>, vector<4x32xf32>
    %cst_21 = arith.constant dense<0.000000e+00> : vector<384x32xf32>
    %43 = tpu.matmul %41, %42, %cst_21 {dimension_numbers = #tpu.dot_dimension_numbers<[1], [0], [0], [1], [0, 0, 1, 1], [], []>} : vector<384x4xf32>, vector<4x32xf32>, vector<384x32xf32> -> vector<384x32xf32>
    %44 = arith.addf %36, %43 : vector<384x32xf32>
    %c0_i32_22 = arith.constant 0 : i32
    %45 = arith.addi %27, %c0_i32_22 : i32
    %c2_i32 = arith.constant 2 : i32
    %46 = arith.addi %45, %c2_i32 : i32
    %c0_23 = arith.constant 0 : index
    %47 = arith.index_cast %46 : i32 to index
    %c0_24 = arith.constant 0 : index
    %48 = vector.load %arg1[%c0_23, %47, %c0_24] : memref<1x456x4xf32, #tpu.memory_space<vmem>>, vector<1x384x4xf32>
    %49 = vector.shape_cast %48 : vector<1x384x4xf32> to vector<384x4xf32>
    %c8 = arith.constant 8 : index
    %c0_25 = arith.constant 0 : index
    %50 = vector.load %arg2[%c8, %c0_25] : memref<36x32xf32, #tpu.memory_space<vmem>>, vector<4x32xf32>
    %cst_26 = arith.constant dense<0.000000e+00> : vector<384x32xf32>
    %51 = tpu.matmul %49, %50, %cst_26 {dimension_numbers = #tpu.dot_dimension_numbers<[1], [0], [0], [1], [0, 0, 1, 1], [], []>} : vector<384x4xf32>, vector<4x32xf32>, vector<384x32xf32> -> vector<384x32xf32>
    %52 = arith.addf %44, %51 : vector<384x32xf32>
    %c24_i32_27 = arith.constant 24 : i32
    %53 = arith.addi %27, %c24_i32_27 : i32
    %c0_i32_28 = arith.constant 0 : i32
    %54 = arith.addi %53, %c0_i32_28 : i32
    %c0_29 = arith.constant 0 : index
    %55 = arith.index_cast %54 : i32 to index
    %c0_30 = arith.constant 0 : index
    %56 = vector.load %arg1[%c0_29, %55, %c0_30] : memref<1x456x4xf32, #tpu.memory_space<vmem>>, vector<1x384x4xf32>
    %57 = vector.shape_cast %56 : vector<1x384x4xf32> to vector<384x4xf32>
    %c12 = arith.constant 12 : index
    %c0_31 = arith.constant 0 : index
    %58 = vector.load %arg2[%c12, %c0_31] : memref<36x32xf32, #tpu.memory_space<vmem>>, vector<4x32xf32>
    %cst_32 = arith.constant dense<0.000000e+00> : vector<384x32xf32>
    %59 = tpu.matmul %57, %58, %cst_32 {dimension_numbers = #tpu.dot_dimension_numbers<[1], [0], [0], [1], [0, 0, 1, 1], [], []>} : vector<384x4xf32>, vector<4x32xf32>, vector<384x32xf32> -> vector<384x32xf32>
    %60 = arith.addf %52, %59 : vector<384x32xf32>
    %c24_i32_33 = arith.constant 24 : i32
    %61 = arith.addi %27, %c24_i32_33 : i32
    %c1_i32_34 = arith.constant 1 : i32
    %62 = arith.addi %61, %c1_i32_34 : i32
    %c0_35 = arith.constant 0 : index
    %63 = arith.index_cast %62 : i32 to index
    %c0_36 = arith.constant 0 : index
    %64 = vector.load %arg1[%c0_35, %63, %c0_36] : memref<1x456x4xf32, #tpu.memory_space<vmem>>, vector<1x384x4xf32>
    %65 = vector.shape_cast %64 : vector<1x384x4xf32> to vector<384x4xf32>
    %c16 = arith.constant 16 : index
    %c0_37 = arith.constant 0 : index
    %66 = vector.load %arg2[%c16, %c0_37] : memref<36x32xf32, #tpu.memory_space<vmem>>, vector<4x32xf32>
    %cst_38 = arith.constant dense<0.000000e+00> : vector<384x32xf32>
    %67 = tpu.matmul %65, %66, %cst_38 {dimension_numbers = #tpu.dot_dimension_numbers<[1], [0], [0], [1], [0, 0, 1, 1], [], []>} : vector<384x4xf32>, vector<4x32xf32>, vector<384x32xf32> -> vector<384x32xf32>
    %68 = arith.addf %60, %67 : vector<384x32xf32>
    %c24_i32_39 = arith.constant 24 : i32
    %69 = arith.addi %27, %c24_i32_39 : i32
    %c2_i32_40 = arith.constant 2 : i32
    %70 = arith.addi %69, %c2_i32_40 : i32
    %c0_41 = arith.constant 0 : index
    %71 = arith.index_cast %70 : i32 to index
    %c0_42 = arith.constant 0 : index
    %72 = vector.load %arg1[%c0_41, %71, %c0_42] : memref<1x456x4xf32, #tpu.memory_space<vmem>>, vector<1x384x4xf32>
    %73 = vector.shape_cast %72 : vector<1x384x4xf32> to vector<384x4xf32>
    %c20 = arith.constant 20 : index
    %c0_43 = arith.constant 0 : index
    %74 = vector.load %arg2[%c20, %c0_43] : memref<36x32xf32, #tpu.memory_space<vmem>>, vector<4x32xf32>
    %cst_44 = arith.constant dense<0.000000e+00> : vector<384x32xf32>
    %75 = tpu.matmul %73, %74, %cst_44 {dimension_numbers = #tpu.dot_dimension_numbers<[1], [0], [0], [1], [0, 0, 1, 1], [], []>} : vector<384x4xf32>, vector<4x32xf32>, vector<384x32xf32> -> vector<384x32xf32>
    %76 = arith.addf %68, %75 : vector<384x32xf32>
    %c48_i32 = arith.constant 48 : i32
    %77 = arith.addi %27, %c48_i32 : i32
    %c0_i32_45 = arith.constant 0 : i32
    %78 = arith.addi %77, %c0_i32_45 : i32
    %c0_46 = arith.constant 0 : index
    %79 = arith.index_cast %78 : i32 to index
    %c0_47 = arith.constant 0 : index
    %80 = vector.load %arg1[%c0_46, %79, %c0_47] : memref<1x456x4xf32, #tpu.memory_space<vmem>>, vector<1x384x4xf32>
    %81 = vector.shape_cast %80 : vector<1x384x4xf32> to vector<384x4xf32>
    %c24 = arith.constant 24 : index
    %c0_48 = arith.constant 0 : index
    %82 = vector.load %arg2[%c24, %c0_48] : memref<36x32xf32, #tpu.memory_space<vmem>>, vector<4x32xf32>
    %cst_49 = arith.constant dense<0.000000e+00> : vector<384x32xf32>
    %83 = tpu.matmul %81, %82, %cst_49 {dimension_numbers = #tpu.dot_dimension_numbers<[1], [0], [0], [1], [0, 0, 1, 1], [], []>} : vector<384x4xf32>, vector<4x32xf32>, vector<384x32xf32> -> vector<384x32xf32>
    %84 = arith.addf %76, %83 : vector<384x32xf32>
    %c48_i32_50 = arith.constant 48 : i32
    %85 = arith.addi %27, %c48_i32_50 : i32
    %c1_i32_51 = arith.constant 1 : i32
    %86 = arith.addi %85, %c1_i32_51 : i32
    %c0_52 = arith.constant 0 : index
    %87 = arith.index_cast %86 : i32 to index
    %c0_53 = arith.constant 0 : index
    %88 = vector.load %arg1[%c0_52, %87, %c0_53] : memref<1x456x4xf32, #tpu.memory_space<vmem>>, vector<1x384x4xf32>
    %89 = vector.shape_cast %88 : vector<1x384x4xf32> to vector<384x4xf32>
    %c28 = arith.constant 28 : index
    %c0_54 = arith.constant 0 : index
    %90 = vector.load %arg2[%c28, %c0_54] : memref<36x32xf32, #tpu.memory_space<vmem>>, vector<4x32xf32>
    %cst_55 = arith.constant dense<0.000000e+00> : vector<384x32xf32>
    %91 = tpu.matmul %89, %90, %cst_55 {dimension_numbers = #tpu.dot_dimension_numbers<[1], [0], [0], [1], [0, 0, 1, 1], [], []>} : vector<384x4xf32>, vector<4x32xf32>, vector<384x32xf32> -> vector<384x32xf32>
    %92 = arith.addf %84, %91 : vector<384x32xf32>
    %c48_i32_56 = arith.constant 48 : i32
    %93 = arith.addi %27, %c48_i32_56 : i32
    %c2_i32_57 = arith.constant 2 : i32
    %94 = arith.addi %93, %c2_i32_57 : i32
    %c0_58 = arith.constant 0 : index
    %95 = arith.index_cast %94 : i32 to index
    %c0_59 = arith.constant 0 : index
    %96 = vector.load %arg1[%c0_58, %95, %c0_59] : memref<1x456x4xf32, #tpu.memory_space<vmem>>, vector<1x384x4xf32>
    %97 = vector.shape_cast %96 : vector<1x384x4xf32> to vector<384x4xf32>
    %c32 = arith.constant 32 : index
    %c0_60 = arith.constant 0 : index
    %98 = vector.load %arg2[%c32, %c0_60] : memref<36x32xf32, #tpu.memory_space<vmem>>, vector<4x32xf32>
    %cst_61 = arith.constant dense<0.000000e+00> : vector<384x32xf32>
    %99 = tpu.matmul %97, %98, %cst_61 {dimension_numbers = #tpu.dot_dimension_numbers<[1], [0], [0], [1], [0, 0, 1, 1], [], []>} : vector<384x4xf32>, vector<4x32xf32>, vector<384x32xf32> -> vector<384x32xf32>
    %100 = arith.addf %92, %99 : vector<384x32xf32>
    %101 = vector.broadcast %0 : vector<1x32xf32> to vector<384x32xf32>
    %102 = arith.addf %100, %101 : vector<384x32xf32>
    %103 = vector.broadcast %23 : vector<384x1xf32> to vector<384x32xf32>
    %104 = arith.mulf %102, %103 : vector<384x32xf32>
    %105 = arith.index_cast %27 : i32 to index
    %c0_62 = arith.constant 0 : index
    %106 = vector.load %arg9[%105, %c0_62] : memref<384x32xf32, #tpu.memory_space<vmem>>, vector<384x32xf32>
    tpu.vector_store %arg9[%105, %c0_62], %104 {strides = array<i32>} : memref<384x32xf32, #tpu.memory_space<vmem>>, vector<384x32xf32>,
    %cst_63 = arith.constant dense<0.000000e+00> : vector<32xf32>
    %107 = vector.multi_reduction <add>, %104, %cst_63 [0] : vector<384x32xf32> to vector<32xf32>
    %108 = vector.shape_cast %107 : vector<32xf32> to vector<1x32xf32>
    %109 = arith.addf %24, %108 : vector<1x32xf32>
    %110 = arith.mulf %104, %104 : vector<384x32xf32>
    %cst_64 = arith.constant dense<0.000000e+00> : vector<32xf32>
    %111 = vector.multi_reduction <add>, %110, %cst_64 [0] : vector<384x32xf32> to vector<32xf32>
    %112 = vector.shape_cast %111 : vector<32xf32> to vector<1x32xf32>
    %113 = arith.addf %25, %112 : vector<1x32xf32>
    %c1_i32_65 = arith.constant 1 : i32
    %c0_66 = arith.constant 0 : index
    %c0_67 = arith.constant 0 : index
    %114 = vector.load %arg4[%c0_66, %c0_67] : memref<32x32xf32, #tpu.memory_space<vmem>>, vector<32x32xf32>
    %cst_68 = arith.constant dense<0.000000e+00> : vector<1x32xf32>
    %115 = tpu.matmul %109, %114, %cst_68 {dimension_numbers = #tpu.dot_dimension_numbers<[1], [0], [0], [1], [0, 0, 1, 1], [], []>} : vector<1x32xf32>, vector<32x32xf32>, vector<1x32xf32> -> vector<1x32xf32>
    %cst_69 = arith.constant 2.560000e+02 : f32
    %116 = vector.broadcast %cst_69 : f32 to vector<1x32xf32>
    %117 = arith.divf %115, %116 : vector<1x32xf32>
    %cst_70 = arith.constant dense<0.000000e+00> : vector<1x32xf32>
    %118 = tpu.matmul %113, %114, %cst_70 {dimension_numbers = #tpu.dot_dimension_numbers<[1], [0], [0], [1], [0, 0, 1, 1], [], []>} : vector<1x32xf32>, vector<32x32xf32>, vector<1x32xf32> -> vector<1x32xf32>
    %cst_71 = arith.constant 2.560000e+02 : f32
    %119 = vector.broadcast %cst_71 : f32 to vector<1x32xf32>
    %120 = arith.divf %118, %119 : vector<1x32xf32>
    %121 = arith.mulf %117, %117 : vector<1x32xf32>
    %122 = arith.subf %120, %121 : vector<1x32xf32>
    %cst_72 = arith.constant 9.99999974E-6 : f32
    %123 = vector.broadcast %cst_72 : f32 to vector<1x32xf32>
    %124 = arith.addf %122, %123 : vector<1x32xf32>
    %125 = math.rsqrt %124 : vector<1x32xf32>
    %cst_73 = arith.constant dense<0.000000e+00> : vector<1x32xf32>
    %126 = tpu.matmul %117, %114, %cst_73 {dimension_numbers = #tpu.dot_dimension_numbers<[1], [1], [0], [0], [0, 0, 1, 0], [], []>} : vector<1x32xf32>, vector<32x32xf32>, vector<1x32xf32> -> vector<1x32xf32>
    %cst_74 = arith.constant dense<0.000000e+00> : vector<1x32xf32>
    %127 = tpu.matmul %125, %114, %cst_74 {dimension_numbers = #tpu.dot_dimension_numbers<[1], [1], [0], [0], [0, 0, 1, 0], [], []>} : vector<1x32xf32>, vector<32x32xf32>, vector<1x32xf32> -> vector<1x32xf32>
    %128 = arith.mulf %127, %1 : vector<1x32xf32>
    %129 = arith.mulf %126, %128 : vector<1x32xf32>
    %130 = arith.subf %2, %129 : vector<1x32xf32>
    %c0_75 = arith.constant 0 : index
    %c0_76 = arith.constant 0 : index
    %131 = vector.load %arg5[%c0_75, %c0_76] : memref<16x32xf32, #tpu.memory_space<vmem>>, vector<16x32xf32>
    %c0_i32_77 = arith.constant 0 : i32
    %c16_i32_78 = arith.constant 16 : i32
    %132 = arith.addi %c0_i32_77, %c16_i32_78 : i32
    %c1_i32_79 = arith.constant 1 : i32
    scf.for %arg11 = %c0_i32_77 to %132 step %c1_i32_79  : i32 {
      %c24_i32_84 = arith.constant 24 : i32
      %134 = arith.muli %arg11, %c24_i32_84 : i32
      %135 = tpu.assume_multiple %134, 8 : i32
      %136 = arith.index_cast %135 : i32 to index
      %c0_85 = arith.constant 0 : index
      %137 = vector.load %arg9[%136, %c0_85] : memref<384x32xf32, #tpu.memory_space<vmem>>, vector<16x32xf32>
      %138 = vector.broadcast %128 : vector<1x32xf32> to vector<16x32xf32>
      %139 = arith.mulf %137, %138 : vector<16x32xf32>
      %140 = vector.broadcast %130 : vector<1x32xf32> to vector<16x32xf32>
      %141 = arith.addf %139, %140 : vector<16x32xf32>
      %cst_86 = arith.constant 0.000000e+00 : f32
      %142 = vector.broadcast %cst_86 : f32 to vector<16x32xf32>
      %143 = arith.maximumf %141, %142 : vector<16x32xf32>
      %cst_87 = arith.constant dense<0.000000e+00> : vector<32x32xf32>
      %144 = tpu.matmul %143, %131, %cst_87 {dimension_numbers = #tpu.dot_dimension_numbers<[0], [0], [1], [1], [0, 1, 1, 1], [], []>} : vector<16x32xf32>, vector<16x32xf32>, vector<32x32xf32> -> vector<32x32xf32>
      %145 = arith.index_cast %arg11 : i32 to index
      %c0_88 = arith.constant 0 : index
      %c0_89 = arith.constant 0 : index
      %146 = vector.load %arg10[%145, %c0_88, %c0_89] : memref<16x32x32xf32, #tpu.memory_space<vmem>>, vector<1x32x32xf32>
      %147 = vector.shape_cast %146 : vector<1x32x32xf32> to vector<32x32xf32>
      %148 = vector.shape_cast %144 : vector<32x32xf32> to vector<1x32x32xf32>
      tpu.vector_store %arg10[%145, %c0_88, %c0_89], %148 {strides = array<i32>} : memref<16x32x32xf32, #tpu.memory_space<vmem>>, vector<1x32x32xf32>,
    }
    %c16_i32_80 = arith.constant 16 : i32
    %c0_i32_81 = arith.constant 0 : i32
    %c32_i32 = arith.constant 32 : i32
    %133 = arith.addi %c0_i32_81, %c32_i32 : i32
    %c1_i32_82 = arith.constant 1 : i32
    scf.for %arg11 = %c0_i32_81 to %133 step %c1_i32_82  : i32 {
      %c2_i32_84 = arith.constant 2 : i32
      %134 = arith.muli %c2_i32_84, %arg11 : i32
      %135 = arith.index_cast %134 : i32 to index
      %136 = memref.load %arg6[%135] : memref<64xi32, #tpu.memory_space<smem>>
      %c2_i32_85 = arith.constant 2 : i32
      %137 = arith.muli %c2_i32_85, %arg11 : i32
      %c1_i32_86 = arith.constant 1 : i32
      %138 = arith.addi %137, %c1_i32_86 : i32
      %139 = arith.index_cast %138 : i32 to index
      %140 = memref.load %arg6[%139] : memref<64xi32, #tpu.memory_space<smem>>
      %c2_i32_87 = arith.constant 2 : i32
      %141 = arith.muli %c2_i32_87, %arg11 : i32
      %142 = arith.index_cast %141 : i32 to index
      %143 = memref.load %arg7[%142] : memref<64xf32, #tpu.memory_space<smem>>
      %c2_i32_88 = arith.constant 2 : i32
      %144 = arith.muli %c2_i32_88, %arg11 : i32
      %c1_i32_89 = arith.constant 1 : i32
      %145 = arith.addi %144, %c1_i32_89 : i32
      %146 = arith.index_cast %145 : i32 to index
      %147 = memref.load %arg7[%146] : memref<64xf32, #tpu.memory_space<smem>>
      %148 = arith.index_cast %136 : i32 to index
      %c0_90 = arith.constant 0 : index
      %c0_91 = arith.constant 0 : index
      %149 = vector.load %arg10[%148, %c0_90, %c0_91] : memref<16x32x32xf32, #tpu.memory_space<vmem>>, vector<1x32x32xf32>
      %150 = vector.shape_cast %149 : vector<1x32x32xf32> to vector<32x32xf32>
      %151 = vector.broadcast %143 : f32 to vector<32x32xf32>
      %152 = arith.mulf %151, %150 : vector<32x32xf32>
      %153 = arith.index_cast %140 : i32 to index
      %c0_92 = arith.constant 0 : index
      %c0_93 = arith.constant 0 : index
      %154 = vector.load %arg10[%153, %c0_92, %c0_93] : memref<16x32x32xf32, #tpu.memory_space<vmem>>, vector<1x32x32xf32>
      %155 = vector.shape_cast %154 : vector<1x32x32xf32> to vector<32x32xf32>
      %156 = vector.broadcast %147 : f32 to vector<32x32xf32>
      %157 = arith.mulf %156, %155 : vector<32x32xf32>
      %158 = arith.addf %152, %157 : vector<32x32xf32>
      %c0_94 = arith.constant 0 : index
      %c0_95 = arith.constant 0 : index
      %159 = arith.index_cast %arg11 : i32 to index
      %c0_96 = arith.constant 0 : index
      %160 = vector.load %arg8[%c0_94, %c0_95, %159, %c0_96] : memref<1x32x32x32xf32, #tpu.memory_space<vmem>>, vector<1x32x1x32xf32>
      %161 = vector.shape_cast %160 : vector<1x32x1x32xf32> to vector<32x32xf32>
      %162 = vector.shape_cast %158 : vector<32x32xf32> to vector<1x32x1x32xf32>
      tpu.vector_store %arg8[%c0_94, %c0_95, %159, %c0_96], %162 {strides = array<i32>} : memref<1x32x32x32xf32, #tpu.memory_space<vmem>>, vector<1x32x1x32xf32>,
    }
    %c32_i32_83 = arith.constant 32 : i32
    return
  }
  func.func @transform_0(%arg0: i32) -> (i32, i32, i32) {
    %c0_i32 = arith.constant 0 : i32
    %c0_i32_0 = arith.constant 0 : i32
    %c0_i32_1 = arith.constant 0 : i32
    return %arg0, %c0_i32, %c0_i32_0 : i32, i32, i32
  }
  func.func @transform_1(%arg0: i32) -> (i32, i32) {
    %c0_i32 = arith.constant 0 : i32
    %c0_i32_0 = arith.constant 0 : i32
    %c0_i32_1 = arith.constant 0 : i32
    return %c0_i32, %c0_i32_0 : i32, i32
  }
  func.func @transform_2(%arg0: i32) -> (i32, i32) {
    %c0_i32 = arith.constant 0 : i32
    %c0_i32_0 = arith.constant 0 : i32
    %c0_i32_1 = arith.constant 0 : i32
    return %c0_i32, %c0_i32_0 : i32, i32
  }
  func.func @transform_3(%arg0: i32) -> (i32, i32) {
    %c0_i32 = arith.constant 0 : i32
    %c0_i32_0 = arith.constant 0 : i32
    %c0_i32_1 = arith.constant 0 : i32
    return %c0_i32, %c0_i32_0 : i32, i32
  }
  func.func @transform_4(%arg0: i32) -> (i32, i32) {
    %c0_i32 = arith.constant 0 : i32
    %c0_i32_0 = arith.constant 0 : i32
    %c0_i32_1 = arith.constant 0 : i32
    return %c0_i32, %c0_i32_0 : i32, i32
  }
  func.func @transform_5(%arg0: i32) -> i32 {
    %c0_i32 = arith.constant 0 : i32
    %c0_i32_0 = arith.constant 0 : i32
    return %c0_i32 : i32
  }
  func.func @transform_6(%arg0: i32) -> i32 {
    %c0_i32 = arith.constant 0 : i32
    %c0_i32_0 = arith.constant 0 : i32
    return %c0_i32 : i32
  }
  func.func @transform_7(%arg0: i32) -> (i32, i32, i32, i32) {
    %c0_i32 = arith.constant 0 : i32
    %c0_i32_0 = arith.constant 0 : i32
    %c0_i32_1 = arith.constant 0 : i32
    %c0_i32_2 = arith.constant 0 : i32
    return %arg0, %c0_i32, %c0_i32_0, %c0_i32_1 : i32, i32, i32, i32
  }
}

</mosaic_0001>

<llo_original>
// kernel: upsample_block.1
$region0: #{upsample_block.1}
  #allocation0 [shape = 'u32[]', space=smem, size = 0x4, offset = 0x4, fixed_abs, tag = 'smem constant byte address 0x4 - core index']
  #allocation1 [shape = 'u32[144,128]{1,0:T(1,128)}', space=vmem, size = 0x12000, scoped, tag = 'internal scratch']
  #allocation2 [shape = 'f32[384,32]{1,0:T(8,128)}', space=vmem, size = 0x30000, scoped, tag = 'scratch operand']
  #allocation3 [shape = 'f32[16,32,32]{2,1,0:T(8,128)}', space=vmem, size = 0x40000, scoped, tag = 'scratch operand']
  %s0 = inlined_call_operand.vmem [shape: f32[2,456,4], index: 0, kind: input, shape index: {}]
  %s1 = inlined_call_operand.vmem [shape: f32[36,32], index: 1, kind: input, shape index: {}]
  %s2 = inlined_call_operand.vmem [shape: f32[3,32], index: 2, kind: input, shape index: {}]
  %s3 = inlined_call_operand.vmem [shape: f32[32,32], index: 3, kind: input, shape index: {}]
  %s4 = inlined_call_operand.vmem [shape: f32[16,32], index: 4, kind: input, shape index: {}]
  %s5 = inlined_call_operand.vmem [shape: s32[64], index: 5, kind: input, shape index: {}]
  %s6 = inlined_call_operand.vmem [shape: f32[64], index: 6, kind: input, shape index: {}]
  %s7 = inlined_call_operand.hbm [shape: f32[2,32,32,32], index: 7, kind: output, shape index: {}]
  %s8 = sld [smem:[#allocation0]]
  $region83: #{upsample_block.1} parent=0
    _
  %s10 = ssub.s32 1, %s8
  %s11 = scalar_select 0, %s10, %s8
  $region1: #{upsample_block.1} parent=0
    #allocation4 [shape = 'u8[512]{0}', space=smem, size = 0x200, scoped, tag = 'input window, operand 5, single buffered']
    #allocation5 [shape = 's32[2]{0}', space=sflag, size = 0x8, scoped, tag = 'scoped memory for upsample_block.1']
    #allocation6 [shape = 's32[2]{0}', space=sflag, size = 0x8, scoped, tag = 'scoped memory for upsample_block.1']
    #allocation7 [shape = 'u8[512]{0}', space=smem, size = 0x200, scoped, tag = 'input window, operand 6, single buffered']
    #allocation8 [shape = 's32[1]{0}', space=sflag, size = 0x4, scoped, tag = 'scoped memory for upsample_block.1']
    #allocation9 [shape = 'u8[1048576]{0}', space=vmem, size = 0x100000, scoped, tag = 'output window, operand 0']
    %12 = vsyncpa [#allocation6], 0
    %13 = vsyncpa [#allocation8], 0
    %14 = vsyncpa [#allocation5], 0
    %s15 = scalar_lea.sflag [#allocation5], 1
    %16 = vsyncpa %s15, 0
    loop: start=0, step=1, limit=4
    $region2: #{upsample_block.1} parent=1 // loop_pre_header
      _
    $region3: #{upsample_block.1} parent=1 // loop_header
      %s18 = sphi 0, %s22
      %p19 = scmp.ge.s32.totalorder %s18, 4
      %s28 = sphi 0, %s30
      %s31 = sphi 0, %s28
      %s32 = sphi 0, %s31
      %s48 = sphi 0, %s32
      %s52 = sphi 0, %s52
      %s54 = sphi 0, %s52
      %s55 = sphi 0, %s54
      %s69 = sphi 0, %s55
      %s73 = sphi 0, %s73
      %s75 = sphi 0, %s73
      %s76 = sphi 0, %s75
      %s90 = sphi 0, %s76
      %s94 = sphi 0, %s94
      %s96 = sphi 0, %s94
      %s97 = sphi 0, %s96
      %s111 = sphi 0, %s97
      %s115 = sphi 0, %s115
      %s117 = sphi 0, %s115
      %s118 = sphi 0, %s117
      %s132 = sphi 0, %s118
      %s136 = sphi 0, %s136
      %s138 = sphi 0, %s136
      %s139 = sphi 0, %s138
      %s153 = sphi 0, %s139
      %s157 = sphi 0, %s157
      %s159 = sphi 0, %s157
      %s160 = sphi 0, %s159
      %s174 = sphi 0, %s160
      %s180 = sphi 0, %s182
      %s183 = sphi 0, %s180
      %s184 = sphi 0, %s183
      %s200 = sphi 0, %s184
    $region4: #{upsample_block.1} parent=1 // loop_header_branch
      %21 = sbr.rel (%p19) target = $region8
    $region5: #{upsample_block.1} parent=1 // loop_body
      %s23 = ssub.s32 %s18, 1
      %s24 = ssub.s32 %s18, 2
      %s25 = sadd.s32 %s18, 1
      %s26 = ssub.s32 %s18, %s25
      %p27 = scmp.eq.s32.totalorder %s26, 0
      %s29 = sadd.s32 %s28, 1
      %s30 = scalar_select %p27, %s28, %s29
      %p33 = pneg %p27
      %p34 = scmp.eq.s32.totalorder %s18, 1
      %p35 = por %p33, %p34
      %p36 = scmp.ne.s32.totalorder %s28, %s31
      %p37 = scmp.eq.s32.totalorder %s18, 0
      %p38 = por %p36, %p37
      %p39 = scmp.ne.s32.totalorder %s28, %s31
      %p40 = scmp.eq.s32.totalorder %s23, 1
      %p41 = por %p39, %p40
      %p42 = scmp.ne.s32.totalorder %s31, %s32
      %p43 = scmp.eq.s32.totalorder %s23, 0
      %p44 = por %p42, %p43
      %p45 = scmp.ne.s32.totalorder %s31, %s32
      %p46 = scmp.eq.s32.totalorder %s24, 1
      %p47 = por %p45, %p46
      %p49 = scmp.ne.s32.totalorder %s32, %s48
      %p50 = scmp.eq.s32.totalorder %s24, 0
      %p51 = por %p49, %p50
      %s53 = sadd.s32 %s52, 1
      %p56 = scmp.eq.s32.totalorder %s18, 1
      %p57 = scmp.ne.s32.totalorder %s52, %s54
      %p58 = scmp.eq.s32.totalorder %s18, 0
      %p59 = por %p57, %p58
      %p60 = scmp.ne.s32.totalorder %s52, %s54
      %p61 = scmp.eq.s32.totalorder %s23, 1
      %p62 = por %p60, %p61
      %p63 = scmp.ne.s32.totalorder %s54, %s55
      %p64 = scmp.eq.s32.totalorder %s23, 0
      %p65 = por %p63, %p64
      %p66 = scmp.ne.s32.totalorder %s54, %s55
      %p67 = scmp.eq.s32.totalorder %s24, 1
      %p68 = por %p66, %p67
      %p70 = scmp.ne.s32.totalorder %s55, %s69
      %p71 = scmp.eq.s32.totalorder %s24, 0
      %p72 = por %p70, %p71
      %s74 = sadd.s32 %s73, 1
      %p77 = scmp.eq.s32.totalorder %s18, 1
      %p78 = scmp.ne.s32.totalorder %s73, %s75
      %p79 = scmp.eq.s32.totalorder %s18, 0
      %p80 = por %p78, %p79
      %p81 = scmp.ne.s32.totalorder %s73, %s75
      %p82 = scmp.eq.s32.totalorder %s23, 1
      %p83 = por %p81, %p82
      %p84 = scmp.ne.s32.totalorder %s75, %s76
      %p85 = scmp.eq.s32.totalorder %s23, 0
      %p86 = por %p84, %p85
      %p87 = scmp.ne.s32.totalorder %s75, %s76
      %p88 = scmp.eq.s32.totalorder %s24, 1
      %p89 = por %p87, %p88
      %p91 = scmp.ne.s32.totalorder %s76, %s90
      %p92 = scmp.eq.s32.totalorder %s24, 0
      %p93 = por %p91, %p92
      %s95 = sadd.s32 %s94, 1
      %p98 = scmp.eq.s32.totalorder %s18, 1
      %p99 = scmp.ne.s32.totalorder %s94, %s96
      %p100 = scmp.eq.s32.totalorder %s18, 0
      %p101 = por %p99, %p100
      %p102 = scmp.ne.s32.totalorder %s94, %s96
      %p103 = scmp.eq.s32.totalorder %s23, 1
      %p104 = por %p102, %p103
      %p105 = scmp.ne.s32.totalorder %s96, %s97
      %p106 = scmp.eq.s32.totalorder %s23, 0
      %p107 = por %p105, %p106
      %p108 = scmp.ne.s32.totalorder %s96, %s97
      %p109 = scmp.eq.s32.totalorder %s24, 1
      %p110 = por %p108, %p109
      %p112 = scmp.ne.s32.totalorder %s97, %s111
      %p113 = scmp.eq.s32.totalorder %s24, 0
      %p114 = por %p112, %p113
      %s116 = sadd.s32 %s115, 1
      %p119 = scmp.eq.s32.totalorder %s18, 1
      %p120 = scmp.ne.s32.totalorder %s115, %s117
      %p121 = scmp.eq.s32.totalorder %s18, 0
      %p122 = por %p120, %p121
      %p123 = scmp.ne.s32.totalorder %s115, %s117
      %p124 = scmp.eq.s32.totalorder %s23, 1
      %p125 = por %p123, %p124
      %p126 = scmp.ne.s32.totalorder %s117, %s118
      %p127 = scmp.eq.s32.totalorder %s23, 0
      %p128 = por %p126, %p127
      %p129 = scmp.ne.s32.totalorder %s117, %s118
      %p130 = scmp.eq.s32.totalorder %s24, 1
      %p131 = por %p129, %p130
      %p133 = scmp.ne.s32.totalorder %s118, %s132
      %p134 = scmp.eq.s32.totalorder %s24, 0
      %p135 = por %p133, %p134
      %s137 = sadd.s32 %s136, 1
      %p140 = scmp.eq.s32.totalorder %s18, 1
      %p141 = scmp.ne.s32.totalorder %s136, %s138
      %p142 = scmp.eq.s32.totalorder %s18, 0
      %p143 = por %p141, %p142
      %p144 = scmp.ne.s32.totalorder %s136, %s138
      %p145 = scmp.eq.s32.totalorder %s23, 1
      %p146 = por %p144, %p145
      %p147 = scmp.ne.s32.totalorder %s138, %s139
      %p148 = scmp.eq.s32.totalorder %s23, 0
      %p149 = por %p147, %p148
      %p150 = scmp.ne.s32.totalorder %s138, %s139
      %p151 = scmp.eq.s32.totalorder %s24, 1
      %p152 = por %p150, %p151
      %p154 = scmp.ne.s32.totalorder %s139, %s153
      %p155 = scmp.eq.s32.totalorder %s24, 0
      %p156 = por %p154, %p155
      %s158 = sadd.s32 %s157, 1
      %p161 = scmp.eq.s32.totalorder %s18, 1
      %p162 = scmp.ne.s32.totalorder %s157, %s159
      %p163 = scmp.eq.s32.totalorder %s18, 0
      %p164 = por %p162, %p163
      %p165 = scmp.ne.s32.totalorder %s157, %s159
      %p166 = scmp.eq.s32.totalorder %s23, 1
      %p167 = por %p165, %p166
      %p168 = scmp.ne.s32.totalorder %s159, %s160
      %p169 = scmp.eq.s32.totalorder %s23, 0
      %p170 = por %p168, %p169
      %p171 = scmp.ne.s32.totalorder %s159, %s160
      %p172 = scmp.eq.s32.totalorder %s24, 1
      %p173 = por %p171, %p172
      %p175 = scmp.ne.s32.totalorder %s160, %s174
      %p176 = scmp.eq.s32.totalorder %s24, 0
      %p177 = por %p175, %p176
      %s178 = ssub.s32 %s18, %s25
      %p179 = scmp.eq.s32.totalorder %s178, 0
      %s181 = sadd.s32 %s180, 1
      %s182 = scalar_select %p179, %s180, %s181
      %p185 = pneg %p179
      %p186 = scmp.eq.s32.totalorder %s18, 1
      %p187 = por %p185, %p186
      %p188 = scmp.ne.s32.totalorder %s180, %s183
      %p189 = scmp.eq.s32.totalorder %s18, 0
      %p190 = por %p188, %p189
      %p191 = scmp.ne.s32.totalorder %s180, %s183
      %p192 = scmp.eq.s32.totalorder %s23, 1
      %p193 = por %p191, %p192
      %p194 = scmp.ne.s32.totalorder %s183, %s184
      %p195 = scmp.eq.s32.totalorder %s23, 0
      %p196 = por %p194, %p195
      %p197 = scmp.ne.s32.totalorder %s183, %s184
      %p198 = scmp.eq.s32.totalorder %s24, 1
      %p199 = por %p197, %p198
      %p201 = scmp.ne.s32.totalorder %s184, %s200
      %p202 = scmp.eq.s32.totalorder %s24, 0
      %p203 = por %p201, %p202
      %p204 = scmp.le.s32.totalorder 1, %s18
      %p205 = scmp.lt.s32.totalorder %s18, 3
      %p206 = pnand %p204, %p205
      %p207 = pneg %p206
      // Predicated region
      $region9: #{upsample_block.1} parent=5 // pred_check
        _
      $region10: #{upsample_block.1} parent=5 // pred_check_branch
        %209 = sbr.rel (%p206) target = $region12
      $region11: #{upsample_block.1} parent=5 // pred_region
        %s210 = ssub.s32 %s18, 1
        // Predicated region
        $region13: #{upsample_block.1} parent=11 // pred_check
          %p211 = pneg %p65
        $region14: #{upsample_block.1} parent=11 // pred_check_branch
          %213 = sbr.rel (%p211) target = $region16
        $region15: #{upsample_block.1} parent=11 // pred_region
          _
        $region16: #{upsample_block.1} parent=11 // pred_fallthru
          _
        // Predicated region
        $region17: #{upsample_block.1} parent=11 // pred_check
          %p214 = pneg %p86
        $region18: #{upsample_block.1} parent=11 // pred_check_branch
          %216 = sbr.rel (%p214) target = $region20
        $region19: #{upsample_block.1} parent=11 // pred_region
          _
        $region20: #{upsample_block.1} parent=11 // pred_fallthru
          _
        // Predicated region
        $region21: #{upsample_block.1} parent=11 // pred_check
          %p217 = pneg %p107
        $region22: #{upsample_block.1} parent=11 // pred_check_branch
          %219 = sbr.rel (%p217) target = $region24
        $region23: #{upsample_block.1} parent=11 // pred_region
          _
        $region24: #{upsample_block.1} parent=11 // pred_fallthru
          _
        // Predicated region
        $region25: #{upsample_block.1} parent=11 // pred_check
          %p220 = pneg %p128
        $region26: #{upsample_block.1} parent=11 // pred_check_branch
          %222 = sbr.rel (%p220) target = $region28
        $region27: #{upsample_block.1} parent=11 // pred_region
          _
        $region28: #{upsample_block.1} parent=11 // pred_fallthru
          _
        // Predicated region
        $region29: #{upsample_block.1} parent=11 // pred_check
          %p223 = pneg %p149
        $region30: #{upsample_block.1} parent=11 // pred_check_branch
          %225 = sbr.rel (%p223) target = $region32
        $region31: #{upsample_block.1} parent=11 // pred_region
          %s227 = ssub.s32 16, 16
          %228 = vsyncadd [#allocation6], %s227
          %s230 = sshll.u32 %s5, 4
          %s231 = int_to_ptr.vmem [resolvable:$true] %s230
          %233 = dma.vmem_to_smem %s231, 16, [#allocation4], [#allocation6]
        $region32: #{upsample_block.1} parent=11 // pred_fallthru
          _
        // Predicated region
        $region33: #{upsample_block.1} parent=11 // pred_check
          %p234 = pneg %p170
        $region34: #{upsample_block.1} parent=11 // pred_check_branch
          %236 = sbr.rel (%p234) target = $region36
        $region35: #{upsample_block.1} parent=11 // pred_region
          %s238 = ssub.s32 16, 16
          %239 = vsyncadd [#allocation8], %s238
          %s241 = sshll.u32 %s6, 4
          %s242 = int_to_ptr.vmem [resolvable:$true] %s241
          %244 = dma.vmem_to_smem %s242, 16, [#allocation7], [#allocation8]
        $region36: #{upsample_block.1} parent=11 // pred_fallthru
          _
      $region12: #{upsample_block.1} parent=5 // pred_fallthru
        _
      %p245 = scmp.lt.s32.totalorder %s18, 2
      // Predicated region
      $region37: #{upsample_block.1} parent=5 // pred_check
        %p246 = pneg %p245
      $region38: #{upsample_block.1} parent=5 // pred_check_branch
        %248 = sbr.rel (%p246) target = $region40
      $region39: #{upsample_block.1} parent=5 // pred_region
        // Predicated region
        $region41: #{upsample_block.1} parent=39 // pred_check
          %p249 = pneg %p38
        $region42: #{upsample_block.1} parent=39 // pred_check_branch
          %251 = sbr.rel (%p249) target = $region44
        $region43: #{upsample_block.1} parent=39 // pred_region
          %p252 = scmp.lt.s32.totalorder %s18, 1
          %s253 = scalar_select %p252, %s18, 1
          %s254 = smul.addr %s253, 57
          %s255 = smul.addr %s254, 8
          %s256 = scalar_lea.vmem %s0, %s255
        $region44: #{upsample_block.1} parent=39 // pred_fallthru
          _
      $region40: #{upsample_block.1} parent=5 // pred_fallthru
        _
      %p257 = scmp.le.s32.totalorder 1, %s18
      %p258 = scmp.lt.s32.totalorder %s18, 3
      %p259 = pnand %p257, %p258
      %p260 = pneg %p259
      // Predicated region
      $region45: #{upsample_block.1} parent=5 // pred_check
        _
      $region46: #{upsample_block.1} parent=5 // pred_check_branch
        %262 = sbr.rel (%p259) target = $region48
      $region47: #{upsample_block.1} parent=5 // pred_region
        %s263 = ssub.s32 %s18, 1
        // Predicated region
        $region49: #{upsample_block.1} parent=47 // pred_check
          %p264 = pneg %p149
        $region50: #{upsample_block.1} parent=47 // pred_check_branch
          %266 = sbr.rel (%p264) target = $region52
        $region51: #{upsample_block.1} parent=47 // pred_region
          %267 = dma.done [#allocation6], 16
        $region52: #{upsample_block.1} parent=47 // pred_fallthru
          _
        // Predicated region
        $region53: #{upsample_block.1} parent=47 // pred_check
          %p268 = pneg %p170
        $region54: #{upsample_block.1} parent=47 // pred_check_branch
          %270 = sbr.rel (%p268) target = $region56
        $region55: #{upsample_block.1} parent=47 // pred_region
          %271 = dma.done [#allocation8], 16
        $region56: #{upsample_block.1} parent=47 // pred_fallthru
          _
        %272 = sfence
        %p273 = scmp.lt.s32.totalorder %s23, 1
        %s274 = scalar_select %p273, %s23, 1
        %s275 = smul.addr %s274, 57
        %s276 = smul.addr %s275, 8
        %s277 = scalar_lea.vmem %s0, %s276
        %p278 = pneg %p44
        %p279 = pneg %p41
        %p280 = pneg %p65
        %p281 = pneg %p62
        %p282 = pneg %p86
        %p283 = pneg %p83
        %p284 = pneg %p107
        %p285 = pneg %p104
        %p286 = pneg %p128
        %p287 = pneg %p125
        %p288 = pneg %p149
        %p289 = pneg %p146
        %p290 = pneg %p170
        %p291 = pneg %p167
        %p292 = pneg %p196
        %p293 = pneg %p193
        %s294 = sand.u32 %s183, 1
        %s295 = scalar_lea.sflag [#allocation5], %s294
        %s296 = sand.u32 %s183, 1
        %s297 = smul.addr %s296, 1024
        %s298 = scalar_lea.vmem [#allocation9], %s297
        %p299 = scmp.lt.s32.totalorder %s23, 1
        %s300 = scalar_select %p299, %s23, 1
        %s301 = smul.addr %s300, 57
        %s302 = smul.addr %s301, 8
        %s303 = scalar_lea.vmem %s0, %s302
        %v304 = vld [vmem:[%s2] sm:$0x1]
        %v305 = vld [vmem:[%s2 + $0x1] sm:$0x1]
        %v306 = vld [vmem:[%s2 + $0x2] sm:$0x1]
        %v307 = vlaneseq
        %v308 = vshrl.u32 %v307, 7
        %v309 = vadd.s32 %v308, 8
        %v310 = vadd.s32 %v308, 16
        %v311 = vadd.s32 %v308, 24
        %v312 = vadd.s32 %v308, 32
        %v313 = vadd.s32 %v308, 40
        %v314 = vadd.s32 %v308, 48
        %v315 = vadd.s32 %v308, 56
        %v316 = vadd.s32 %v308, 64
        %v317 = vadd.s32 %v308, 72
        %v318 = vadd.s32 %v308, 80
        %v319 = vadd.s32 %v308, 88
        %v320 = vadd.s32 %v308, 96
        %v321 = vadd.s32 %v308, 104
        %v322 = vadd.s32 %v308, 112
        %v323 = vadd.s32 %v308, 120
        %v324 = vadd.s32 %v308, 128
        %v325 = vadd.s32 %v308, 136
        %v326 = vadd.s32 %v308, 144
        %v327 = vadd.s32 %v308, 152
        %v328 = vadd.s32 %v308, 160
        %v329 = vadd.s32 %v308, 168
        %v330 = vadd.s32 %v308, 176
        %v331 = vadd.s32 %v308, 184
        %v332 = vadd.s32 %v308, 192
        %v333 = vadd.s32 %v308, 200
        %v334 = vadd.s32 %v308, 208
        %v335 = vadd.s32 %v308, 216
        %v336 = vadd.s32 %v308, 224
        %v337 = vadd.s32 %v308, 232
        %v338 = vadd.s32 %v308, 240
        %v339 = vadd.s32 %v308, 248
        %v340 = vadd.s32 %v308, 256
        %v341 = vadd.s32 %v308, 264
        %v342 = vadd.s32 %v308, 272
        %v343 = vadd.s32 %v308, 280
        %v344 = vadd.s32 %v308, 288
        %v345 = vadd.s32 %v308, 296
        %v346 = vadd.s32 %v308, 304
        %v347 = vadd.s32 %v308, 312
        %v348 = vadd.s32 %v308, 320
        %v349 = vadd.s32 %v308, 328
        %v350 = vadd.s32 %v308, 336
        %v351 = vadd.s32 %v308, 344
        %v352 = vadd.s32 %v308, 352
        %v353 = vadd.s32 %v308, 360
        %v354 = vadd.s32 %v308, 368
        %v355 = vadd.s32 %v308, 376
        %vm356 = vcmp.lt.s32.totalorder %v308, 0
        %v357 = vsub.s32 0, %v308
        %v358 = vsel %vm356, %v357, %v308
        %v359 = vmul.u32.u64.compose %v358, 2863311531
        %v360 = vextract.low.u32 %v359
        %v361 = vextract.high.u32 %v359
        %v362 = vshrl.u32 %v361, 4
        %v363 = vmul.u32 %v362, 24
        %v364 = vsub.s32 %v358, %v363
        %v365 = vsub.s32 0, %v364
        %v366 = vsel %vm356, %v365, %v364
        %vm367 = vcmp.lt.s32.totalorder %v309, 0
        %v368 = vsub.s32 0, %v309
        %v369 = vsel %vm367, %v368, %v309
        %v370 = vmul.u32.u64.compose %v369, 2863311531
        %v371 = vextract.low.u32 %v370
        %v372 = vextract.high.u32 %v370
        %v373 = vshrl.u32 %v372, 4
        %v374 = vmul.u32 %v373, 24
        %v375 = vsub.s32 %v369, %v374
        %v376 = vsub.s32 0, %v375
        %v377 = vsel %vm367, %v376, %v375
        %vm378 = vcmp.lt.s32.totalorder %v310, 0
        %v379 = vsub.s32 0, %v310
        %v380 = vsel %vm378, %v379, %v310
        %v381 = vmul.u32.u64.compose %v380, 2863311531
        %v382 = vextract.low.u32 %v381
        %v383 = vextract.high.u32 %v381
        %v384 = vshrl.u32 %v383, 4
        %v385 = vmul.u32 %v384, 24
        %v386 = vsub.s32 %v380, %v385
        %v387 = vsub.s32 0, %v386
        %v388 = vsel %vm378, %v387, %v386
        %vm389 = vcmp.lt.s32.totalorder %v311, 0
        %v390 = vsub.s32 0, %v311
        %v391 = vsel %vm389, %v390, %v311
        %v392 = vmul.u32.u64.compose %v391, 2863311531
        %v393 = vextract.low.u32 %v392
        %v394 = vextract.high.u32 %v392
        %v395 = vshrl.u32 %v394, 4
        %v396 = vmul.u32 %v395, 24
        %v397 = vsub.s32 %v391, %v396
        %v398 = vsub.s32 0, %v397
        %v399 = vsel %vm389, %v398, %v397
        %vm400 = vcmp.lt.s32.totalorder %v312, 0
        %v401 = vsub.s32 0, %v312
        %v402 = vsel %vm400, %v401, %v312
        %v403 = vmul.u32.u64.compose %v402, 2863311531
        %v404 = vextract.low.u32 %v403
        %v405 = vextract.high.u32 %v403
        %v406 = vshrl.u32 %v405, 4
        %v407 = vmul.u32 %v406, 24
        %v408 = vsub.s32 %v402, %v407
        %v409 = vsub.s32 0, %v408
        %v410 = vsel %vm400, %v409, %v408
        %vm411 = vcmp.lt.s32.totalorder %v313, 0
        %v412 = vsub.s32 0, %v313
        %v413 = vsel %vm411, %v412, %v313
        %v414 = vmul.u32.u64.compose %v413, 2863311531
        %v415 = vextract.low.u32 %v414
        %v416 = vextract.high.u32 %v414
        %v417 = vshrl.u32 %v416, 4
        %v418 = vmul.u32 %v417, 24
        %v419 = vsub.s32 %v413, %v418
        %v420 = vsub.s32 0, %v419
        %v421 = vsel %vm411, %v420, %v419
        %vm422 = vcmp.lt.s32.totalorder %v314, 0
        %v423 = vsub.s32 0, %v314
        %v424 = vsel %vm422, %v423, %v314
        %v425 = vmul.u32.u64.compose %v424, 2863311531
        %v426 = vextract.low.u32 %v425
        %v427 = vextract.high.u32 %v425
        %v428 = vshrl.u32 %v427, 4
        %v429 = vmul.u32 %v428, 24
        %v430 = vsub.s32 %v424, %v429
        %v431 = vsub.s32 0, %v430
        %v432 = vsel %vm422, %v431, %v430
        %vm433 = vcmp.lt.s32.totalorder %v315, 0
        %v434 = vsub.s32 0, %v315
        %v435 = vsel %vm433, %v434, %v315
        %v436 = vmul.u32.u64.compose %v435, 2863311531
        %v437 = vextract.low.u32 %v436
        %v438 = vextract.high.u32 %v436
        %v439 = vshrl.u32 %v438, 4
        %v440 = vmul.u32 %v439, 24
        %v441 = vsub.s32 %v435, %v440
        %v442 = vsub.s32 0, %v441
        %v443 = vsel %vm433, %v442, %v441
        %vm444 = vcmp.lt.s32.totalorder %v316, 0
        %v445 = vsub.s32 0, %v316
        %v446 = vsel %vm444, %v445, %v316
        %v447 = vmul.u32.u64.compose %v446, 2863311531
        %v448 = vextract.low.u32 %v447
        %v449 = vextract.high.u32 %v447
        %v450 = vshrl.u32 %v449, 4
        %v451 = vmul.u32 %v450, 24
        %v452 = vsub.s32 %v446, %v451
        %v453 = vsub.s32 0, %v452
        %v454 = vsel %vm444, %v453, %v452
        %vm455 = vcmp.lt.s32.totalorder %v317, 0
        %v456 = vsub.s32 0, %v317
        %v457 = vsel %vm455, %v456, %v317
        %v458 = vmul.u32.u64.compose %v457, 2863311531
        %v459 = vextract.low.u32 %v458
        %v460 = vextract.high.u32 %v458
        %v461 = vshrl.u32 %v460, 4
        %v462 = vmul.u32 %v461, 24
        %v463 = vsub.s32 %v457, %v462
        %v464 = vsub.s32 0, %v463
        %v465 = vsel %vm455, %v464, %v463
        %vm466 = vcmp.lt.s32.totalorder %v318, 0
        %v467 = vsub.s32 0, %v318
        %v468 = vsel %vm466, %v467, %v318
        %v469 = vmul.u32.u64.compose %v468, 2863311531
        %v470 = vextract.low.u32 %v469
        %v471 = vextract.high.u32 %v469
        %v472 = vshrl.u32 %v471, 4
        %v473 = vmul.u32 %v472, 24
        %v474 = vsub.s32 %v468, %v473
        %v475 = vsub.s32 0, %v474
        %v476 = vsel %vm466, %v475, %v474
        %vm477 = vcmp.lt.s32.totalorder %v319, 0
        %v478 = vsub.s32 0, %v319
        %v479 = vsel %vm477, %v478, %v319
        %v480 = vmul.u32.u64.compose %v479, 2863311531
        %v481 = vextract.low.u32 %v480
        %v482 = vextract.high.u32 %v480
        %v483 = vshrl.u32 %v482, 4
        %v484 = vmul.u32 %v483, 24
        %v485 = vsub.s32 %v479, %v484
        %v486 = vsub.s32 0, %v485
        %v487 = vsel %vm477, %v486, %v485
        %vm488 = vcmp.lt.s32.totalorder %v320, 0
        %v489 = vsub.s32 0, %v320
        %v490 = vsel %vm488, %v489, %v320
        %v491 = vmul.u32.u64.compose %v490, 2863311531
        %v492 = vextract.low.u32 %v491
        %v493 = vextract.high.u32 %v491
        %v494 = vshrl.u32 %v493, 4
        %v495 = vmul.u32 %v494, 24
        %v496 = vsub.s32 %v490, %v495
        %v497 = vsub.s32 0, %v496
        %v498 = vsel %vm488, %v497, %v496
        %vm499 = vcmp.lt.s32.totalorder %v321, 0
        %v500 = vsub.s32 0, %v321
        %v501 = vsel %vm499, %v500, %v321
        %v502 = vmul.u32.u64.compose %v501, 2863311531
        %v503 = vextract.low.u32 %v502
        %v504 = vextract.high.u32 %v502
        %v505 = vshrl.u32 %v504, 4
        %v506 = vmul.u32 %v505, 24
        %v507 = vsub.s32 %v501, %v506
        %v508 = vsub.s32 0, %v507
        %v509 = vsel %vm499, %v508, %v507
        %vm510 = vcmp.lt.s32.totalorder %v322, 0
        %v511 = vsub.s32 0, %v322
        %v512 = vsel %vm510, %v511, %v322
        %v513 = vmul.u32.u64.compose %v512, 2863311531
        %v514 = vextract.low.u32 %v513
        %v515 = vextract.high.u32 %v513
        %v516 = vshrl.u32 %v515, 4
        %v517 = vmul.u32 %v516, 24
        %v518 = vsub.s32 %v512, %v517
        %v519 = vsub.s32 0, %v518
        %v520 = vsel %vm510, %v519, %v518
        %vm521 = vcmp.lt.s32.totalorder %v323, 0
        %v522 = vsub.s32 0, %v323
        %v523 = vsel %vm521, %v522, %v323
        %v524 = vmul.u32.u64.compose %v523, 2863311531
        %v525 = vextract.low.u32 %v524
        %v526 = vextract.high.u32 %v524
        %v527 = vshrl.u32 %v526, 4
        %v528 = vmul.u32 %v527, 24
        %v529 = vsub.s32 %v523, %v528
        %v530 = vsub.s32 0, %v529
        %v531 = vsel %vm521, %v530, %v529
        %vm532 = vcmp.lt.s32.totalorder %v324, 0
        %v533 = vsub.s32 0, %v324
        %v534 = vsel %vm532, %v533, %v324
        %v535 = vmul.u32.u64.compose %v534, 2863311531
        %v536 = vextract.low.u32 %v535
        %v537 = vextract.high.u32 %v535
        %v538 = vshrl.u32 %v537, 4
        %v539 = vmul.u32 %v538, 24
        %v540 = vsub.s32 %v534, %v539
        %v541 = vsub.s32 0, %v540
        %v542 = vsel %vm532, %v541, %v540
        %vm543 = vcmp.lt.s32.totalorder %v325, 0
        %v544 = vsub.s32 0, %v325
        %v545 = vsel %vm543, %v544, %v325
        %v546 = vmul.u32.u64.compose %v545, 2863311531
        %v547 = vextract.low.u32 %v546
        %v548 = vextract.high.u32 %v546
        %v549 = vshrl.u32 %v548, 4
        %v550 = vmul.u32 %v549, 24
        %v551 = vsub.s32 %v545, %v550
        %v552 = vsub.s32 0, %v551
        %v553 = vsel %vm543, %v552, %v551
        %vm554 = vcmp.lt.s32.totalorder %v326, 0
        %v555 = vsub.s32 0, %v326
        %v556 = vsel %vm554, %v555, %v326
        %v557 = vmul.u32.u64.compose %v556, 2863311531
        %v558 = vextract.low.u32 %v557
        %v559 = vextract.high.u32 %v557
        %v560 = vshrl.u32 %v559, 4
        %v561 = vmul.u32 %v560, 24
        %v562 = vsub.s32 %v556, %v561
        %v563 = vsub.s32 0, %v562
        %v564 = vsel %vm554, %v563, %v562
        %vm565 = vcmp.lt.s32.totalorder %v327, 0
        %v566 = vsub.s32 0, %v327
        %v567 = vsel %vm565, %v566, %v327
        %v568 = vmul.u32.u64.compose %v567, 2863311531
        %v569 = vextract.low.u32 %v568
        %v570 = vextract.high.u32 %v568
        %v571 = vshrl.u32 %v570, 4
        %v572 = vmul.u32 %v571, 24
        %v573 = vsub.s32 %v567, %v572
        %v574 = vsub.s32 0, %v573
        %v575 = vsel %vm565, %v574, %v573
        %vm576 = vcmp.lt.s32.totalorder %v328, 0
        %v577 = vsub.s32 0, %v328
        %v578 = vsel %vm576, %v577, %v328
        %v579 = vmul.u32.u64.compose %v578, 2863311531
        %v580 = vextract.low.u32 %v579
        %v581 = vextract.high.u32 %v579
        %v582 = vshrl.u32 %v581, 4
        %v583 = vmul.u32 %v582, 24
        %v584 = vsub.s32 %v578, %v583
        %v585 = vsub.s32 0, %v584
        %v586 = vsel %vm576, %v585, %v584
        %vm587 = vcmp.lt.s32.totalorder %v329, 0
        %v588 = vsub.s32 0, %v329
        %v589 = vsel %vm587, %v588, %v329
        %v590 = vmul.u32.u64.compose %v589, 2863311531
        %v591 = vextract.low.u32 %v590
        %v592 = vextract.high.u32 %v590
        %v593 = vshrl.u32 %v592, 4
        %v594 = vmul.u32 %v593, 24
        %v595 = vsub.s32 %v589, %v594
        %v596 = vsub.s32 0, %v595
        %v597 = vsel %vm587, %v596, %v595
        %vm598 = vcmp.lt.s32.totalorder %v330, 0
        %v599 = vsub.s32 0, %v330
        %v600 = vsel %vm598, %v599, %v330
        %v601 = vmul.u32.u64.compose %v600, 2863311531
        %v602 = vextract.low.u32 %v601
        %v603 = vextract.high.u32 %v601
        %v604 = vshrl.u32 %v603, 4
        %v605 = vmul.u32 %v604, 24
        %v606 = vsub.s32 %v600, %v605
        %v607 = vsub.s32 0, %v606
        %v608 = vsel %vm598, %v607, %v606
        %vm609 = vcmp.lt.s32.totalorder %v331, 0
        %v610 = vsub.s32 0, %v331
        %v611 = vsel %vm609, %v610, %v331
        %v612 = vmul.u32.u64.compose %v611, 2863311531
        %v613 = vextract.low.u32 %v612
        %v614 = vextract.high.u32 %v612
        %v615 = vshrl.u32 %v614, 4
        %v616 = vmul.u32 %v615, 24
        %v617 = vsub.s32 %v611, %v616
        %v618 = vsub.s32 0, %v617
        %v619 = vsel %vm609, %v618, %v617
        %vm620 = vcmp.lt.s32.totalorder %v332, 0
        %v621 = vsub.s32 0, %v332
        %v622 = vsel %vm620, %v621, %v332
        %v623 = vmul.u32.u64.compose %v622, 2863311531
        %v624 = vextract.low.u32 %v623
        %v625 = vextract.high.u32 %v623
        %v626 = vshrl.u32 %v625, 4
        %v627 = vmul.u32 %v626, 24
        %v628 = vsub.s32 %v622, %v627
        %v629 = vsub.s32 0, %v628
        %v630 = vsel %vm620, %v629, %v628
        %vm631 = vcmp.lt.s32.totalorder %v333, 0
        %v632 = vsub.s32 0, %v333
        %v633 = vsel %vm631, %v632, %v333
        %v634 = vmul.u32.u64.compose %v633, 2863311531
        %v635 = vextract.low.u32 %v634
        %v636 = vextract.high.u32 %v634
        %v637 = vshrl.u32 %v636, 4
        %v638 = vmul.u32 %v637, 24
        %v639 = vsub.s32 %v633, %v638
        %v640 = vsub.s32 0, %v639
        %v641 = vsel %vm631, %v640, %v639
        %vm642 = vcmp.lt.s32.totalorder %v334, 0
        %v643 = vsub.s32 0, %v334
        %v644 = vsel %vm642, %v643, %v334
        %v645 = vmul.u32.u64.compose %v644, 2863311531
        %v646 = vextract.low.u32 %v645
        %v647 = vextract.high.u32 %v645
        %v648 = vshrl.u32 %v647, 4
        %v649 = vmul.u32 %v648, 24
        %v650 = vsub.s32 %v644, %v649
        %v651 = vsub.s32 0, %v650
        %v652 = vsel %vm642, %v651, %v650
        %vm653 = vcmp.lt.s32.totalorder %v335, 0
        %v654 = vsub.s32 0, %v335
        %v655 = vsel %vm653, %v654, %v335
        %v656 = vmul.u32.u64.compose %v655, 2863311531
        %v657 = vextract.low.u32 %v656
        %v658 = vextract.high.u32 %v656
        %v659 = vshrl.u32 %v658, 4
        %v660 = vmul.u32 %v659, 24
        %v661 = vsub.s32 %v655, %v660
        %v662 = vsub.s32 0, %v661
        %v663 = vsel %vm653, %v662, %v661
        %vm664 = vcmp.lt.s32.totalorder %v336, 0
        %v665 = vsub.s32 0, %v336
        %v666 = vsel %vm664, %v665, %v336
        %v667 = vmul.u32.u64.compose %v666, 2863311531
        %v668 = vextract.low.u32 %v667
        %v669 = vextract.high.u32 %v667
        %v670 = vshrl.u32 %v669, 4
        %v671 = vmul.u32 %v670, 24
        %v672 = vsub.s32 %v666, %v671
        %v673 = vsub.s32 0, %v672
        %v674 = vsel %vm664, %v673, %v672
        %vm675 = vcmp.lt.s32.totalorder %v337, 0
        %v676 = vsub.s32 0, %v337
        %v677 = vsel %vm675, %v676, %v337
        %v678 = vmul.u32.u64.compose %v677, 2863311531
        %v679 = vextract.low.u32 %v678
        %v680 = vextract.high.u32 %v678
        %v681 = vshrl.u32 %v680, 4
        %v682 = vmul.u32 %v681, 24
        %v683 = vsub.s32 %v677, %v682
        %v684 = vsub.s32 0, %v683
        %v685 = vsel %vm675, %v684, %v683
        %vm686 = vcmp.lt.s32.totalorder %v338, 0
        %v687 = vsub.s32 0, %v338
        %v688 = vsel %vm686, %v687, %v338
        %v689 = vmul.u32.u64.compose %v688, 2863311531
        %v690 = vextract.low.u32 %v689
        %v691 = vextract.high.u32 %v689
        %v692 = vshrl.u32 %v691, 4
        %v693 = vmul.u32 %v692, 24
        %v694 = vsub.s32 %v688, %v693
        %v695 = vsub.s32 0, %v694
        %v696 = vsel %vm686, %v695, %v694
        %vm697 = vcmp.lt.s32.totalorder %v339, 0
        %v698 = vsub.s32 0, %v339
        %v699 = vsel %vm697, %v698, %v339
        %v700 = vmul.u32.u64.compose %v699, 2863311531
        %v701 = vextract.low.u32 %v700
        %v702 = vextract.high.u32 %v700
        %v703 = vshrl.u32 %v702, 4
        %v704 = vmul.u32 %v703, 24
        %v705 = vsub.s32 %v699, %v704
        %v706 = vsub.s32 0, %v705
        %v707 = vsel %vm697, %v706, %v705
        %vm708 = vcmp.lt.s32.totalorder %v340, 0
        %v709 = vsub.s32 0, %v340
        %v710 = vsel %vm708, %v709, %v340
        %v711 = vmul.u32.u64.compose %v710, 2863311531
        %v712 = vextract.low.u32 %v711
        %v713 = vextract.high.u32 %v711
        %v714 = vshrl.u32 %v713, 4
        %v715 = vmul.u32 %v714, 24
        %v716 = vsub.s32 %v710, %v715
        %v717 = vsub.s32 0, %v716
        %v718 = vsel %vm708, %v717, %v716
        %vm719 = vcmp.lt.s32.totalorder %v341, 0
        %v720 = vsub.s32 0, %v341
        %v721 = vsel %vm719, %v720, %v341
        %v722 = vmul.u32.u64.compose %v721, 2863311531
        %v723 = vextract.low.u32 %v722
        %v724 = vextract.high.u32 %v722
        %v725 = vshrl.u32 %v724, 4
        %v726 = vmul.u32 %v725, 24
        %v727 = vsub.s32 %v721, %v726
        %v728 = vsub.s32 0, %v727
        %v729 = vsel %vm719, %v728, %v727
        %vm730 = vcmp.lt.s32.totalorder %v342, 0
        %v731 = vsub.s32 0, %v342
        %v732 = vsel %vm730, %v731, %v342
        %v733 = vmul.u32.u64.compose %v732, 2863311531
        %v734 = vextract.low.u32 %v733
        %v735 = vextract.high.u32 %v733
        %v736 = vshrl.u32 %v735, 4
        %v737 = vmul.u32 %v736, 24
        %v738 = vsub.s32 %v732, %v737
        %v739 = vsub.s32 0, %v738
        %v740 = vsel %vm730, %v739, %v738
        %vm741 = vcmp.lt.s32.totalorder %v343, 0
        %v742 = vsub.s32 0, %v343
        %v743 = vsel %vm741, %v742, %v343
        %v744 = vmul.u32.u64.compose %v743, 2863311531
        %v745 = vextract.low.u32 %v744
        %v746 = vextract.high.u32 %v744
        %v747 = vshrl.u32 %v746, 4
        %v748 = vmul.u32 %v747, 24
        %v749 = vsub.s32 %v743, %v748
        %v750 = vsub.s32 0, %v749
        %v751 = vsel %vm741, %v750, %v749
        %vm752 = vcmp.lt.s32.totalorder %v344, 0
        %v753 = vsub.s32 0, %v344
        %v754 = vsel %vm752, %v753, %v344
        %v755 = vmul.u32.u64.compose %v754, 2863311531
        %v756 = vextract.low.u32 %v755
        %v757 = vextract.high.u32 %v755
        %v758 = vshrl.u32 %v757, 4
        %v759 = vmul.u32 %v758, 24
        %v760 = vsub.s32 %v754, %v759
        %v761 = vsub.s32 0, %v760
        %v762 = vsel %vm752, %v761, %v760
        %vm763 = vcmp.lt.s32.totalorder %v345, 0
        %v764 = vsub.s32 0, %v345
        %v765 = vsel %vm763, %v764, %v345
        %v766 = vmul.u32.u64.compose %v765, 2863311531
        %v767 = vextract.low.u32 %v766
        %v768 = vextract.high.u32 %v766
        %v769 = vshrl.u32 %v768, 4
        %v770 = vmul.u32 %v769, 24
        %v771 = vsub.s32 %v765, %v770
        %v772 = vsub.s32 0, %v771
        %v773 = vsel %vm763, %v772, %v771
        %vm774 = vcmp.lt.s32.totalorder %v346, 0
        %v775 = vsub.s32 0, %v346
        %v776 = vsel %vm774, %v775, %v346
        %v777 = vmul.u32.u64.compose %v776, 2863311531
        %v778 = vextract.low.u32 %v777
        %v779 = vextract.high.u32 %v777
        %v780 = vshrl.u32 %v779, 4
        %v781 = vmul.u32 %v780, 24
        %v782 = vsub.s32 %v776, %v781
        %v783 = vsub.s32 0, %v782
        %v784 = vsel %vm774, %v783, %v782
        %vm785 = vcmp.lt.s32.totalorder %v347, 0
        %v786 = vsub.s32 0, %v347
        %v787 = vsel %vm785, %v786, %v347
        %v788 = vmul.u32.u64.compose %v787, 2863311531
        %v789 = vextract.low.u32 %v788
        %v790 = vextract.high.u32 %v788
        %v791 = vshrl.u32 %v790, 4
        %v792 = vmul.u32 %v791, 24
        %v793 = vsub.s32 %v787, %v792
        %v794 = vsub.s32 0, %v793
        %v795 = vsel %vm785, %v794, %v793
        %vm796 = vcmp.lt.s32.totalorder %v348, 0
        %v797 = vsub.s32 0, %v348
        %v798 = vsel %vm796, %v797, %v348
        %v799 = vmul.u32.u64.compose %v798, 2863311531
        %v800 = vextract.low.u32 %v799
        %v801 = vextract.high.u32 %v799
        %v802 = vshrl.u32 %v801, 4
        %v803 = vmul.u32 %v802, 24
        %v804 = vsub.s32 %v798, %v803
        %v805 = vsub.s32 0, %v804
        %v806 = vsel %vm796, %v805, %v804
        %vm807 = vcmp.lt.s32.totalorder %v349, 0
        %v808 = vsub.s32 0, %v349
        %v809 = vsel %vm807, %v808, %v349
        %v810 = vmul.u32.u64.compose %v809, 2863311531
        %v811 = vextract.low.u32 %v810
        %v812 = vextract.high.u32 %v810
        %v813 = vshrl.u32 %v812, 4
        %v814 = vmul.u32 %v813, 24
        %v815 = vsub.s32 %v809, %v814
        %v816 = vsub.s32 0, %v815
        %v817 = vsel %vm807, %v816, %v815
        %vm818 = vcmp.lt.s32.totalorder %v350, 0
        %v819 = vsub.s32 0, %v350
        %v820 = vsel %vm818, %v819, %v350
        %v821 = vmul.u32.u64.compose %v820, 2863311531
        %v822 = vextract.low.u32 %v821
        %v823 = vextract.high.u32 %v821
        %v824 = vshrl.u32 %v823, 4
        %v825 = vmul.u32 %v824, 24
        %v826 = vsub.s32 %v820, %v825
        %v827 = vsub.s32 0, %v826
        %v828 = vsel %vm818, %v827, %v826
        %vm829 = vcmp.lt.s32.totalorder %v351, 0
        %v830 = vsub.s32 0, %v351
        %v831 = vsel %vm829, %v830, %v351
        %v832 = vmul.u32.u64.compose %v831, 2863311531
        %v833 = vextract.low.u32 %v832
        %v834 = vextract.high.u32 %v832
        %v835 = vshrl.u32 %v834, 4
        %v836 = vmul.u32 %v835, 24
        %v837 = vsub.s32 %v831, %v836
        %v838 = vsub.s32 0, %v837
        %v839 = vsel %vm829, %v838, %v837
        %vm840 = vcmp.lt.s32.totalorder %v352, 0
        %v841 = vsub.s32 0, %v352
        %v842 = vsel %vm840, %v841, %v352
        %v843 = vmul.u32.u64.compose %v842, 2863311531
        %v844 = vextract.low.u32 %v843
        %v845 = vextract.high.u32 %v843
        %v846 = vshrl.u32 %v845, 4
        %v847 = vmul.u32 %v846, 24
        %v848 = vsub.s32 %v842, %v847
        %v849 = vsub.s32 0, %v848
        %v850 = vsel %vm840, %v849, %v848
        %vm851 = vcmp.lt.s32.totalorder %v353, 0
        %v852 = vsub.s32 0, %v353
        %v853 = vsel %vm851, %v852, %v353
        %v854 = vmul.u32.u64.compose %v853, 2863311531
        %v855 = vextract.low.u32 %v854
        %v856 = vextract.high.u32 %v854
        %v857 = vshrl.u32 %v856, 4
        %v858 = vmul.u32 %v857, 24
        %v859 = vsub.s32 %v853, %v858
        %v860 = vsub.s32 0, %v859
        %v861 = vsel %vm851, %v860, %v859
        %vm862 = vcmp.lt.s32.totalorder %v354, 0
        %v863 = vsub.s32 0, %v354
        %v864 = vsel %vm862, %v863, %v354
        %v865 = vmul.u32.u64.compose %v864, 2863311531
        %v866 = vextract.low.u32 %v865
        %v867 = vextract.high.u32 %v865
        %v868 = vshrl.u32 %v867, 4
        %v869 = vmul.u32 %v868, 24
        %v870 = vsub.s32 %v864, %v869
        %v871 = vsub.s32 0, %v870
        %v872 = vsel %vm862, %v871, %v870
        %vm873 = vcmp.lt.s32.totalorder %v355, 0
        %v874 = vsub.s32 0, %v355
        %v875 = vsel %vm873, %v874, %v355
        %v876 = vmul.u32.u64.compose %v875, 2863311531
        %v877 = vextract.low.u32 %v876
        %v878 = vextract.high.u32 %v876
        %v879 = vshrl.u32 %v878, 4
        %v880 = vmul.u32 %v879, 24
        %v881 = vsub.s32 %v875, %v880
        %v882 = vsub.s32 0, %v881
        %v883 = vsel %vm873, %v882, %v881
        %vm884 = vcmp.ne.s32.totalorder %v366, 0
        %vm885 = vcmp.ne.s32.totalorder %v377, 0
        %vm886 = vcmp.ne.s32.totalorder %v388, 0
        %vm887 = vcmp.ne.s32.totalorder %v399, 0
        %vm888 = vcmp.ne.s32.totalorder %v410, 0
        %vm889 = vcmp.ne.s32.totalorder %v421, 0
        %vm890 = vcmp.ne.s32.totalorder %v432, 0
        %vm891 = vcmp.ne.s32.totalorder %v443, 0
        %vm892 = vcmp.ne.s32.totalorder %v454, 0
        %vm893 = vcmp.ne.s32.totalorder %v465, 0
        %vm894 = vcmp.ne.s32.totalorder %v476, 0
        %vm895 = vcmp.ne.s32.totalorder %v487, 0
        %vm896 = vcmp.ne.s32.totalorder %v498, 0
        %vm897 = vcmp.ne.s32.totalorder %v509, 0
        %vm898 = vcmp.ne.s32.totalorder %v520, 0
        %vm899 = vcmp.ne.s32.totalorder %v531, 0
        %vm900 = vcmp.ne.s32.totalorder %v542, 0
        %vm901 = vcmp.ne.s32.totalorder %v553, 0
        %vm902 = vcmp.ne.s32.totalorder %v564, 0
        %vm903 = vcmp.ne.s32.totalorder %v575, 0
        %vm904 = vcmp.ne.s32.totalorder %v586, 0
        %vm905 = vcmp.ne.s32.totalorder %v597, 0
        %vm906 = vcmp.ne.s32.totalorder %v608, 0
        %vm907 = vcmp.ne.s32.totalorder %v619, 0
        %vm908 = vcmp.ne.s32.totalorder %v630, 0
        %vm909 = vcmp.ne.s32.totalorder %v641, 0
        %vm910 = vcmp.ne.s32.totalorder %v652, 0
        %vm911 = vcmp.ne.s32.totalorder %v663, 0
        %vm912 = vcmp.ne.s32.totalorder %v674, 0
        %vm913 = vcmp.ne.s32.totalorder %v685, 0
        %vm914 = vcmp.ne.s32.totalorder %v696, 0
        %vm915 = vcmp.ne.s32.totalorder %v707, 0
        %vm916 = vcmp.ne.s32.totalorder %v718, 0
        %vm917 = vcmp.ne.s32.totalorder %v729, 0
        %vm918 = vcmp.ne.s32.totalorder %v740, 0
        %vm919 = vcmp.ne.s32.totalorder %v751, 0
        %vm920 = vcmp.ne.s32.totalorder %v762, 0
        %vm921 = vcmp.ne.s32.totalorder %v773, 0
        %vm922 = vcmp.ne.s32.totalorder %v784, 0
        %vm923 = vcmp.ne.s32.totalorder %v795, 0
        %vm924 = vcmp.ne.s32.totalorder %v806, 0
        %vm925 = vcmp.ne.s32.totalorder %v817, 0
        %vm926 = vcmp.ne.s32.totalorder %v828, 0
        %vm927 = vcmp.ne.s32.totalorder %v839, 0
        %vm928 = vcmp.ne.s32.totalorder %v850, 0
        %vm929 = vcmp.ne.s32.totalorder %v861, 0
        %vm930 = vcmp.ne.s32.totalorder %v872, 0
        %vm931 = vcmp.ne.s32.totalorder %v883, 0
        %vm932 = vcmp.lt.s32.totalorder %v366, 0
        %vm933 = vcmp.lt.s32.totalorder %v377, 0
        %vm934 = vcmp.lt.s32.totalorder %v388, 0
        %vm935 = vcmp.lt.s32.totalorder %v399, 0
        %vm936 = vcmp.lt.s32.totalorder %v410, 0
        %vm937 = vcmp.lt.s32.totalorder %v421, 0
        %vm938 = vcmp.lt.s32.totalorder %v432, 0
        %vm939 = vcmp.lt.s32.totalorder %v443, 0
        %vm940 = vcmp.lt.s32.totalorder %v454, 0
        %vm941 = vcmp.lt.s32.totalorder %v465, 0
        %vm942 = vcmp.lt.s32.totalorder %v476, 0
        %vm943 = vcmp.lt.s32.totalorder %v487, 0
        %vm944 = vcmp.lt.s32.totalorder %v498, 0
        %vm945 = vcmp.lt.s32.totalorder %v509, 0
        %vm946 = vcmp.lt.s32.totalorder %v520, 0
        %vm947 = vcmp.lt.s32.totalorder %v531, 0
        %vm948 = vcmp.lt.s32.totalorder %v542, 0
        %vm949 = vcmp.lt.s32.totalorder %v553, 0
        %vm950 = vcmp.lt.s32.totalorder %v564, 0
        %vm951 = vcmp.lt.s32.totalorder %v575, 0
        %vm952 = vcmp.lt.s32.totalorder %v586, 0
        %vm953 = vcmp.lt.s32.totalorder %v597, 0
        %vm954 = vcmp.lt.s32.totalorder %v608, 0
        %vm955 = vcmp.lt.s32.totalorder %v619, 0
        %vm956 = vcmp.lt.s32.totalorder %v630, 0
        %vm957 = vcmp.lt.s32.totalorder %v641, 0
        %vm958 = vcmp.lt.s32.totalorder %v652, 0
        %vm959 = vcmp.lt.s32.totalorder %v663, 0
        %vm960 = vcmp.lt.s32.totalorder %v674, 0
        %vm961 = vcmp.lt.s32.totalorder %v685, 0
        %vm962 = vcmp.lt.s32.totalorder %v696, 0
        %vm963 = vcmp.lt.s32.totalorder %v707, 0
        %vm964 = vcmp.lt.s32.totalorder %v718, 0
        %vm965 = vcmp.lt.s32.totalorder %v729, 0
        %vm966 = vcmp.lt.s32.totalorder %v740, 0
        %vm967 = vcmp.lt.s32.totalorder %v751, 0
        %vm968 = vcmp.lt.s32.totalorder %v762, 0
        %vm969 = vcmp.lt.s32.totalorder %v773, 0
        %vm970 = vcmp.lt.s32.totalorder %v784, 0
        %vm971 = vcmp.lt.s32.totalorder %v795, 0
        %vm972 = vcmp.lt.s32.totalorder %v806, 0
        %vm973 = vcmp.lt.s32.totalorder %v817, 0
        %vm974 = vcmp.lt.s32.totalorder %v828, 0
        %vm975 = vcmp.lt.s32.totalorder %v839, 0
        %vm976 = vcmp.lt.s32.totalorder %v850, 0
        %vm977 = vcmp.lt.s32.totalorder %v861, 0
        %vm978 = vcmp.lt.s32.totalorder %v872, 0
        %vm979 = vcmp.lt.s32.totalorder %v883, 0
        %vm980 = vmand %vm932, %vm884
        %vm981 = vmand %vm933, %vm885
        %vm982 = vmand %vm934, %vm886
        %vm983 = vmand %vm935, %vm887
        %vm984 = vmand %vm936, %vm888
        %vm985 = vmand %vm937, %vm889
        %vm986 = vmand %vm938, %vm890
        %vm987 = vmand %vm939, %vm891
        %vm988 = vmand %vm940, %vm892
        %vm989 = vmand %vm941, %vm893
        %vm990 = vmand %vm942, %vm894
        %vm991 = vmand %vm943, %vm895
        %vm992 = vmand %vm944, %vm896
        %vm993 = vmand %vm945, %vm897
        %vm994 = vmand %vm946, %vm898
        %vm995 = vmand %vm947, %vm899
        %vm996 = vmand %vm948, %vm900
        %vm997 = vmand %vm949, %vm901
        %vm998 = vmand %vm950, %vm902
        %vm999 = vmand %vm951, %vm903
        %vm1000 = vmand %vm952, %vm904
        %vm1001 = vmand %vm953, %vm905
        %vm1002 = vmand %vm954, %vm906
        %vm1003 = vmand %vm955, %vm907
        %vm1004 = vmand %vm956, %vm908
        %vm1005 = vmand %vm957, %vm909
        %vm1006 = vmand %vm958, %vm910
        %vm1007 = vmand %vm959, %vm911
        %vm1008 = vmand %vm960, %vm912
        %vm1009 = vmand %vm961, %vm913
        %vm1010 = vmand %vm962, %vm914
        %vm1011 = vmand %vm963, %vm915
        %vm1012 = vmand %vm964, %vm916
        %vm1013 = vmand %vm965, %vm917
        %vm1014 = vmand %vm966, %vm918
        %vm1015 = vmand %vm967, %vm919
        %vm1016 = vmand %vm968, %vm920
        %vm1017 = vmand %vm969, %vm921
        %vm1018 = vmand %vm970, %vm922
        %vm1019 = vmand %vm971, %vm923
        %vm1020 = vmand %vm972, %vm924
        %vm1021 = vmand %vm973, %vm925
        %vm1022 = vmand %vm974, %vm926
        %vm1023 = vmand %vm975, %vm927
        %vm1024 = vmand %vm976, %vm928
        %vm1025 = vmand %vm977, %vm929
        %vm1026 = vmand %vm978, %vm930
        %vm1027 = vmand %vm979, %vm931
        %v1028 = vadd.s32 %v366, 24
        %v1029 = vadd.s32 %v377, 24
        %v1030 = vadd.s32 %v388, 24
        %v1031 = vadd.s32 %v399, 24
        %v1032 = vadd.s32 %v410, 24
        %v1033 = vadd.s32 %v421, 24
        %v1034 = vadd.s32 %v432, 24
        %v1035 = vadd.s32 %v443, 24
        %v1036 = vadd.s32 %v454, 24
        %v1037 = vadd.s32 %v465, 24
        %v1038 = vadd.s32 %v476, 24
        %v1039 = vadd.s32 %v487, 24
        %v1040 = vadd.s32 %v498, 24
        %v1041 = vadd.s32 %v509, 24
        %v1042 = vadd.s32 %v520, 24
        %v1043 = vadd.s32 %v531, 24
        %v1044 = vadd.s32 %v542, 24
        %v1045 = vadd.s32 %v553, 24
        %v1046 = vadd.s32 %v564, 24
        %v1047 = vadd.s32 %v575, 24
        %v1048 = vadd.s32 %v586, 24
        %v1049 = vadd.s32 %v597, 24
        %v1050 = vadd.s32 %v608, 24
        %v1051 = vadd.s32 %v619, 24
        %v1052 = vadd.s32 %v630, 24
        %v1053 = vadd.s32 %v641, 24
        %v1054 = vadd.s32 %v652, 24
        %v1055 = vadd.s32 %v663, 24
        %v1056 = vadd.s32 %v674, 24
        %v1057 = vadd.s32 %v685, 24
        %v1058 = vadd.s32 %v696, 24
        %v1059 = vadd.s32 %v707, 24
        %v1060 = vadd.s32 %v718, 24
        %v1061 = vadd.s32 %v729, 24
        %v1062 = vadd.s32 %v740, 24
        %v1063 = vadd.s32 %v751, 24
        %v1064 = vadd.s32 %v762, 24
        %v1065 = vadd.s32 %v773, 24
        %v1066 = vadd.s32 %v784, 24
        %v1067 = vadd.s32 %v795, 24
        %v1068 = vadd.s32 %v806, 24
        %v1069 = vadd.s32 %v817, 24
        %v1070 = vadd.s32 %v828, 24
        %v1071 = vadd.s32 %v839, 24
        %v1072 = vadd.s32 %v850, 24
        %v1073 = vadd.s32 %v861, 24
        %v1074 = vadd.s32 %v872, 24
        %v1075 = vadd.s32 %v883, 24
        %v1076 = vsel %vm980, %v1028, %v366
        %v1077 = vsel %vm981, %v1029, %v377
        %v1078 = vsel %vm982, %v1030, %v388
        %v1079 = vsel %vm983, %v1031, %v399
        %v1080 = vsel %vm984, %v1032, %v410
        %v1081 = vsel %vm985, %v1033, %v421
        %v1082 = vsel %vm986, %v1034, %v432
        %v1083 = vsel %vm987, %v1035, %v443
        %v1084 = vsel %vm988, %v1036, %v454
        %v1085 = vsel %vm989, %v1037, %v465
        %v1086 = vsel %vm990, %v1038, %v476
        %v1087 = vsel %vm991, %v1039, %v487
        %v1088 = vsel %vm992, %v1040, %v498
        %v1089 = vsel %vm993, %v1041, %v509
        %v1090 = vsel %vm994, %v1042, %v520
        %v1091 = vsel %vm995, %v1043, %v531
        %v1092 = vsel %vm996, %v1044, %v542
        %v1093 = vsel %vm997, %v1045, %v553
        %v1094 = vsel %vm998, %v1046, %v564
        %v1095 = vsel %vm999, %v1047, %v575
        %v1096 = vsel %vm1000, %v1048, %v586
        %v1097 = vsel %vm1001, %v1049, %v597
        %v1098 = vsel %vm1002, %v1050, %v608
        %v1099 = vsel %vm1003, %v1051, %v619
        %v1100 = vsel %vm1004, %v1052, %v630
        %v1101 = vsel %vm1005, %v1053, %v641
        %v1102 = vsel %vm1006, %v1054, %v652
        %v1103 = vsel %vm1007, %v1055, %v663
        %v1104 = vsel %vm1008, %v1056, %v674
        %v1105 = vsel %vm1009, %v1057, %v685
        %v1106 = vsel %vm1010, %v1058, %v696
        %v1107 = vsel %vm1011, %v1059, %v707
        %v1108 = vsel %vm1012, %v1060, %v718
        %v1109 = vsel %vm1013, %v1061, %v729
        %v1110 = vsel %vm1014, %v1062, %v740
        %v1111 = vsel %vm1015, %v1063, %v751
        %v1112 = vsel %vm1016, %v1064, %v762
        %v1113 = vsel %vm1017, %v1065, %v773
        %v1114 = vsel %vm1018, %v1066, %v784
        %v1115 = vsel %vm1019, %v1067, %v795
        %v1116 = vsel %vm1020, %v1068, %v806
        %v1117 = vsel %vm1021, %v1069, %v817
        %v1118 = vsel %vm1022, %v1070, %v828
        %v1119 = vsel %vm1023, %v1071, %v839
        %v1120 = vsel %vm1024, %v1072, %v850
        %v1121 = vsel %vm1025, %v1073, %v861
        %v1122 = vsel %vm1026, %v1074, %v872
        %v1123 = vsel %vm1027, %v1075, %v883
        %vm1124 = vcmp.lt.s32.totalorder %v1076, 16
        %vm1125 = vcmp.lt.s32.totalorder %v1077, 16
        %vm1126 = vcmp.lt.s32.totalorder %v1078, 16
        %vm1127 = vcmp.lt.s32.totalorder %v1079, 16
        %vm1128 = vcmp.lt.s32.totalorder %v1080, 16
        %vm1129 = vcmp.lt.s32.totalorder %v1081, 16
        %vm1130 = vcmp.lt.s32.totalorder %v1082, 16
        %vm1131 = vcmp.lt.s32.totalorder %v1083, 16
        %vm1132 = vcmp.lt.s32.totalorder %v1084, 16
        %vm1133 = vcmp.lt.s32.totalorder %v1085, 16
        %vm1134 = vcmp.lt.s32.totalorder %v1086, 16
        %vm1135 = vcmp.lt.s32.totalorder %v1087, 16
        %vm1136 = vcmp.lt.s32.totalorder %v1088, 16
        %vm1137 = vcmp.lt.s32.totalorder %v1089, 16
        %vm1138 = vcmp.lt.s32.totalorder %v1090, 16
        %vm1139 = vcmp.lt.s32.totalorder %v1091, 16
        %vm1140 = vcmp.lt.s32.totalorder %v1092, 16
        %vm1141 = vcmp.lt.s32.totalorder %v1093, 16
        %vm1142 = vcmp.lt.s32.totalorder %v1094, 16
        %vm1143 = vcmp.lt.s32.totalorder %v1095, 16
        %vm1144 = vcmp.lt.s32.totalorder %v1096, 16
        %vm1145 = vcmp.lt.s32.totalorder %v1097, 16
        %vm1146 = vcmp.lt.s32.totalorder %v1098, 16
        %vm1147 = vcmp.lt.s32.totalorder %v1099, 16
        %vm1148 = vcmp.lt.s32.totalorder %v1100, 16
        %vm1149 = vcmp.lt.s32.totalorder %v1101, 16
        %vm1150 = vcmp.lt.s32.totalorder %v1102, 16
        %vm1151 = vcmp.lt.s32.totalorder %v1103, 16
        %vm1152 = vcmp.lt.s32.totalorder %v1104, 16
        %vm1153 = vcmp.lt.s32.totalorder %v1105, 16
        %vm1154 = vcmp.lt.s32.totalorder %v1106, 16
        %vm1155 = vcmp.lt.s32.totalorder %v1107, 16
        %vm1156 = vcmp.lt.s32.totalorder %v1108, 16
        %vm1157 = vcmp.lt.s32.totalorder %v1109, 16
        %vm1158 = vcmp.lt.s32.totalorder %v1110, 16
        %vm1159 = vcmp.lt.s32.totalorder %v1111, 16
        %vm1160 = vcmp.lt.s32.totalorder %v1112, 16
        %vm1161 = vcmp.lt.s32.totalorder %v1113, 16
        %vm1162 = vcmp.lt.s32.totalorder %v1114, 16
        %vm1163 = vcmp.lt.s32.totalorder %v1115, 16
        %vm1164 = vcmp.lt.s32.totalorder %v1116, 16
        %vm1165 = vcmp.lt.s32.totalorder %v1117, 16
        %vm1166 = vcmp.lt.s32.totalorder %v1118, 16
        %vm1167 = vcmp.lt.s32.totalorder %v1119, 16
        %vm1168 = vcmp.lt.s32.totalorder %v1120, 16
        %vm1169 = vcmp.lt.s32.totalorder %v1121, 16
        %vm1170 = vcmp.lt.s32.totalorder %v1122, 16
        %vm1171 = vcmp.lt.s32.totalorder %v1123, 16
        %v1172 = vsel %vm1124, 1, 0
        %v1173 = vsel %vm1125, 1, 0
        %v1174 = vsel %vm1126, 1, 0
        %v1175 = vsel %vm1127, 1, 0
        %v1176 = vsel %vm1128, 1, 0
        %v1177 = vsel %vm1129, 1, 0
        %v1178 = vsel %vm1130, 1, 0
        %v1179 = vsel %vm1131, 1, 0
        %v1180 = vsel %vm1132, 1, 0
        %v1181 = vsel %vm1133, 1, 0
        %v1182 = vsel %vm1134, 1, 0
        %v1183 = vsel %vm1135, 1, 0
        %v1184 = vsel %vm1136, 1, 0
        %v1185 = vsel %vm1137, 1, 0
        %v1186 = vsel %vm1138, 1, 0
        %v1187 = vsel %vm1139, 1, 0
        %v1188 = vsel %vm1140, 1, 0
        %v1189 = vsel %vm1141, 1, 0
        %v1190 = vsel %vm1142, 1, 0
        %v1191 = vsel %vm1143, 1, 0
        %v1192 = vsel %vm1144, 1, 0
        %v1193 = vsel %vm1145, 1, 0
        %v1194 = vsel %vm1146, 1, 0
        %v1195 = vsel %vm1147, 1, 0
        %v1196 = vsel %vm1148, 1, 0
        %v1197 = vsel %vm1149, 1, 0
        %v1198 = vsel %vm1150, 1, 0
        %v1199 = vsel %vm1151, 1, 0
        %v1200 = vsel %vm1152, 1, 0
        %v1201 = vsel %vm1153, 1, 0
        %v1202 = vsel %vm1154, 1, 0
        %v1203 = vsel %vm1155, 1, 0
        %v1204 = vsel %vm1156, 1, 0
        %v1205 = vsel %vm1157, 1, 0
        %v1206 = vsel %vm1158, 1, 0
        %v1207 = vsel %vm1159, 1, 0
        %v1208 = vsel %vm1160, 1, 0
        %v1209 = vsel %vm1161, 1, 0
        %v1210 = vsel %vm1162, 1, 0
        %v1211 = vsel %vm1163, 1, 0
        %v1212 = vsel %vm1164, 1, 0
        %v1213 = vsel %vm1165, 1, 0
        %v1214 = vsel %vm1166, 1, 0
        %v1215 = vsel %vm1167, 1, 0
        %v1216 = vsel %vm1168, 1, 0
        %v1217 = vsel %vm1169, 1, 0
        %v1218 = vsel %vm1170, 1, 0
        %v1219 = vsel %vm1171, 1, 0
        %v1220 = vcvt.s32.f32 %v1172
        %v1221 = vcvt.s32.f32 %v1173
        %v1222 = vcvt.s32.f32 %v1174
        %v1223 = vcvt.s32.f32 %v1175
        %v1224 = vcvt.s32.f32 %v1176
        %v1225 = vcvt.s32.f32 %v1177
        %v1226 = vcvt.s32.f32 %v1178
        %v1227 = vcvt.s32.f32 %v1179
        %v1228 = vcvt.s32.f32 %v1180
        %v1229 = vcvt.s32.f32 %v1181
        %v1230 = vcvt.s32.f32 %v1182
        %v1231 = vcvt.s32.f32 %v1183
        %v1232 = vcvt.s32.f32 %v1184
        %v1233 = vcvt.s32.f32 %v1185
        %v1234 = vcvt.s32.f32 %v1186
        %v1235 = vcvt.s32.f32 %v1187
        %v1236 = vcvt.s32.f32 %v1188
        %v1237 = vcvt.s32.f32 %v1189
        %v1238 = vcvt.s32.f32 %v1190
        %v1239 = vcvt.s32.f32 %v1191
        %v1240 = vcvt.s32.f32 %v1192
        %v1241 = vcvt.s32.f32 %v1193
        %v1242 = vcvt.s32.f32 %v1194
        %v1243 = vcvt.s32.f32 %v1195
        %v1244 = vcvt.s32.f32 %v1196
        %v1245 = vcvt.s32.f32 %v1197
        %v1246 = vcvt.s32.f32 %v1198
        %v1247 = vcvt.s32.f32 %v1199
        %v1248 = vcvt.s32.f32 %v1200
        %v1249 = vcvt.s32.f32 %v1201
        %v1250 = vcvt.s32.f32 %v1202
        %v1251 = vcvt.s32.f32 %v1203
        %v1252 = vcvt.s32.f32 %v1204
        %v1253 = vcvt.s32.f32 %v1205
        %v1254 = vcvt.s32.f32 %v1206
        %v1255 = vcvt.s32.f32 %v1207
        %v1256 = vcvt.s32.f32 %v1208
        %v1257 = vcvt.s32.f32 %v1209
        %v1258 = vcvt.s32.f32 %v1210
        %v1259 = vcvt.s32.f32 %v1211
        %v1260 = vcvt.s32.f32 %v1212
        %v1261 = vcvt.s32.f32 %v1213
        %v1262 = vcvt.s32.f32 %v1214
        %v1263 = vcvt.s32.f32 %v1215
        %v1264 = vcvt.s32.f32 %v1216
        %v1265 = vcvt.s32.f32 %v1217
        %v1266 = vcvt.s32.f32 %v1218
        %v1267 = vcvt.s32.f32 %v1219
        %v1268 = vld [vmem:[%s303] sm:$0xff]
        %v1269 = vld [vmem:[%s303 + $0x8] sm:$0xff]
        %v1270 = vld [vmem:[%s303 + $0x10] sm:$0xff]
        %v1271 = vld [vmem:[%s303 + $0x18] sm:$0xff]
        %v1272 = vld [vmem:[%s303 + $0x20] sm:$0xff]
        %v1273 = vld [vmem:[%s303 + $0x28] sm:$0xff]
        %v1274 = vld [vmem:[%s303 + $0x30] sm:$0xff]
        %v1275 = vld [vmem:[%s303 + $0x38] sm:$0xff]
        %v1276 = vld [vmem:[%s303 + $0x40] sm:$0xff]
        %v1277 = vld [vmem:[%s303 + $0x48] sm:$0xff]
        %v1278 = vld [vmem:[%s303 + $0x50] sm:$0xff]
        %v1279 = vld [vmem:[%s303 + $0x58] sm:$0xff]
        %v1280 = vld [vmem:[%s303 + $0x60] sm:$0xff]
        %v1281 = vld [vmem:[%s303 + $0x68] sm:$0xff]
        %v1282 = vld [vmem:[%s303 + $0x70] sm:$0xff]
        %v1283 = vld [vmem:[%s303 + $0x78] sm:$0xff]
        %v1284 = vld [vmem:[%s303 + $0x80] sm:$0xff]
        %v1285 = vld [vmem:[%s303 + $0x88] sm:$0xff]
        %v1286 = vld [vmem:[%s303 + $0x90] sm:$0xff]
        %v1287 = vld [vmem:[%s303 + $0x98] sm:$0xff]
        %v1288 = vld [vmem:[%s303 + $0xa0] sm:$0xff]
        %v1289 = vld [vmem:[%s303 + $0xa8] sm:$0xff]
        %v1290 = vld [vmem:[%s303 + $0xb0] sm:$0xff]
        %v1291 = vld [vmem:[%s303 + $0xb8] sm:$0xff]
        %v1292 = vld [vmem:[%s303 + $0xc0] sm:$0xff]
        %v1293 = vld [vmem:[%s303 + $0xc8] sm:$0xff]
        %v1294 = vld [vmem:[%s303 + $0xd0] sm:$0xff]
        %v1295 = vld [vmem:[%s303 + $0xd8] sm:$0xff]
        %v1296 = vld [vmem:[%s303 + $0xe0] sm:$0xff]
        %v1297 = vld [vmem:[%s303 + $0xe8] sm:$0xff]
        %v1298 = vld [vmem:[%s303 + $0xf0] sm:$0xff]
        %v1299 = vld [vmem:[%s303 + $0xf8] sm:$0xff]
        %v1300 = vld [vmem:[%s303 + $0x100] sm:$0xff]
        %v1301 = vld [vmem:[%s303 + $0x108] sm:$0xff]
        %v1302 = vld [vmem:[%s303 + $0x110] sm:$0xff]
        %v1303 = vld [vmem:[%s303 + $0x118] sm:$0xff]
        %v1304 = vld [vmem:[%s303 + $0x120] sm:$0xff]
        %v1305 = vld [vmem:[%s303 + $0x128] sm:$0xff]
        %v1306 = vld [vmem:[%s303 + $0x130] sm:$0xff]
        %v1307 = vld [vmem:[%s303 + $0x138] sm:$0xff]
        %v1308 = vld [vmem:[%s303 + $0x140] sm:$0xff]
        %v1309 = vld [vmem:[%s303 + $0x148] sm:$0xff]
        %v1310 = vld [vmem:[%s303 + $0x150] sm:$0xff]
        %v1311 = vld [vmem:[%s303 + $0x158] sm:$0xff]
        %v1312 = vld [vmem:[%s303 + $0x160] sm:$0xff]
        %v1313 = vld [vmem:[%s303 + $0x168] sm:$0xff]
        %v1314 = vld [vmem:[%s303 + $0x170] sm:$0xff]
        %v1315 = vld [vmem:[%s303 + $0x178] sm:$0xff]
        %v1316 = vld [vmem:[%s1] sm:$0xf]
        %s1317 = sadd.s32 0, 1
        %s1318 = scalar_lea.vmem %s303, %s1317
        %v1319 = vld [vmem:[%s1318] sm:$0xff]
        %v1320 = vld [vmem:[%s1318 + $0x8] sm:$0xff]
        %v1321 = vld [vmem:[%s1318 + $0x10] sm:$0xff]
        %v1322 = vld [vmem:[%s1318 + $0x18] sm:$0xff]
        %v1323 = vld [vmem:[%s1318 + $0x20] sm:$0xff]
        %v1324 = vld [vmem:[%s1318 + $0x28] sm:$0xff]
        %v1325 = vld [vmem:[%s1318 + $0x30] sm:$0xff]
        %v1326 = vld [vmem:[%s1318 + $0x38] sm:$0xff]
        %v1327 = vld [vmem:[%s1318 + $0x40] sm:$0xff]
        %v1328 = vld [vmem:[%s1318 + $0x48] sm:$0xff]
        %v1329 = vld [vmem:[%s1318 + $0x50] sm:$0xff]
        %v1330 = vld [vmem:[%s1318 + $0x58] sm:$0xff]
        %v1331 = vld [vmem:[%s1318 + $0x60] sm:$0xff]
        %v1332 = vld [vmem:[%s1318 + $0x68] sm:$0xff]
        %v1333 = vld [vmem:[%s1318 + $0x70] sm:$0xff]
        %v1334 = vld [vmem:[%s1318 + $0x78] sm:$0xff]
        %v1335 = vld [vmem:[%s1318 + $0x80] sm:$0xff]
        %v1336 = vld [vmem:[%s1318 + $0x88] sm:$0xff]
        %v1337 = vld [vmem:[%s1318 + $0x90] sm:$0xff]
        %v1338 = vld [vmem:[%s1318 + $0x98] sm:$0xff]
        %v1339 = vld [vmem:[%s1318 + $0xa0] sm:$0xff]
        %v1340 = vld [vmem:[%s1318 + $0xa8] sm:$0xff]
        %v1341 = vld [vmem:[%s1318 + $0xb0] sm:$0xff]
        %v1342 = vld [vmem:[%s1318 + $0xb8] sm:$0xff]
        %v1343 = vld [vmem:[%s1318 + $0xc0] sm:$0xff]
        %v1344 = vld [vmem:[%s1318 + $0xc8] sm:$0xff]
        %v1345 = vld [vmem:[%s1318 + $0xd0] sm:$0xff]
        %v1346 = vld [vmem:[%s1318 + $0xd8] sm:$0xff]
        %v1347 = vld [vmem:[%s1318 + $0xe0] sm:$0xff]
        %v1348 = vld [vmem:[%s1318 + $0xe8] sm:$0xff]
        %v1349 = vld [vmem:[%s1318 + $0xf0] sm:$0xff]
        %v1350 = vld [vmem:[%s1318 + $0xf8] sm:$0xff]
        %v1351 = vld [vmem:[%s1318 + $0x100] sm:$0xff]
        %v1352 = vld [vmem:[%s1318 + $0x108] sm:$0xff]
        %v1353 = vld [vmem:[%s1318 + $0x110] sm:$0xff]
        %v1354 = vld [vmem:[%s1318 + $0x118] sm:$0xff]
        %v1355 = vld [vmem:[%s1318 + $0x120] sm:$0xff]
        %v1356 = vld [vmem:[%s1318 + $0x128] sm:$0xff]
        %v1357 = vld [vmem:[%s1318 + $0x130] sm:$0xff]
        %v1358 = vld [vmem:[%s1318 + $0x138] sm:$0xff]
        %v1359 = vld [vmem:[%s1318 + $0x140] sm:$0xff]
        %v1360 = vld [vmem:[%s1318 + $0x148] sm:$0xff]
        %v1361 = vld [vmem:[%s1318 + $0x150] sm:$0xff]
        %v1362 = vld [vmem:[%s1318 + $0x158] sm:$0xff]
        %v1363 = vld [vmem:[%s1318 + $0x160] sm:$0xff]
        %v1364 = vld [vmem:[%s1318 + $0x168] sm:$0xff]
        %v1365 = vld [vmem:[%s1318 + $0x170] sm:$0xff]
        %v1366 = vld [vmem:[%s1318 + $0x178] sm:$0xff]
        %v1367 = vld [vmem:[%s1 + $0x4] sm:$0xf]
        %vm1368 = vcmask 31744
        %v1370 = vsel %vm1368, %v1319, 0
        %v1373 = vsel %vm1368, %v1320, 0
        %v1376 = vsel %vm1368, %v1321, 0
        %v1379 = vsel %vm1368, %v1322, 0
        %v1382 = vsel %vm1368, %v1323, 0
        %v1385 = vsel %vm1368, %v1324, 0
        %v1388 = vsel %vm1368, %v1325, 0
        %v1391 = vsel %vm1368, %v1326, 0
        %v1394 = vsel %vm1368, %v1327, 0
        %v1397 = vsel %vm1368, %v1328, 0
        %v1400 = vsel %vm1368, %v1329, 0
        %v1403 = vsel %vm1368, %v1330, 0
        %v1406 = vsel %vm1368, %v1331, 0
        %v1409 = vsel %vm1368, %v1332, 0
        %v1412 = vsel %vm1368, %v1333, 0
        %v1415 = vsel %vm1368, %v1334, 0
        %v1418 = vsel %vm1368, %v1335, 0
        %v1421 = vsel %vm1368, %v1336, 0
        %v1424 = vsel %vm1368, %v1337, 0
        %v1427 = vsel %vm1368, %v1338, 0
        %v1430 = vsel %vm1368, %v1339, 0
        %v1433 = vsel %vm1368, %v1340, 0
        %v1436 = vsel %vm1368, %v1341, 0
        %v1439 = vsel %vm1368, %v1342, 0
        %v1442 = vsel %vm1368, %v1343, 0
        %v1445 = vsel %vm1368, %v1344, 0
        %v1448 = vsel %vm1368, %v1345, 0
        %v1451 = vsel %vm1368, %v1346, 0
        %v1454 = vsel %vm1368, %v1347, 0
        %v1457 = vsel %vm1368, %v1348, 0
        %v1460 = vsel %vm1368, %v1349, 0
        %v1463 = vsel %vm1368, %v1350, 0
        %v1466 = vsel %vm1368, %v1351, 0
        %v1469 = vsel %vm1368, %v1352, 0
        %v1472 = vsel %vm1368, %v1353, 0
        %v1475 = vsel %vm1368, %v1354, 0
        %v1478 = vsel %vm1368, %v1355, 0
        %v1481 = vsel %vm1368, %v1356, 0
        %v1484 = vsel %vm1368, %v1357, 0
        %v1487 = vsel %vm1368, %v1358, 0
        %v1490 = vsel %vm1368, %v1359, 0
        %v1493 = vsel %vm1368, %v1360, 0
        %v1496 = vsel %vm1368, %v1361, 0
        %v1499 = vsel %vm1368, %v1362, 0
        %v1502 = vsel %vm1368, %v1363, 0
        %v1505 = vsel %vm1368, %v1364, 0
        %v1508 = vsel %vm1368, %v1365, 0
        %v1511 = vsel %vm1368, %v1366, 0
        %vm1513 = vcmask 1043456
        %v1515 = vsel %vm1513, %v1367, 0
        %1517 = vmatprep.subr.mxu0 0.0
        %1518 = vmatpush1.msra.mxu0 %v1515
        %1519 = vmatprep.subr.mxu0 0.0
        %1520 = vmatpush1.msra.mxu0 0.0
        %1521 = vmatprep.subr.mxu0 0.0
        %1522 = vmatpush1.msra.mxu0 0.0
        %1523 = vmatprep.subr.mxu0 0.0
        %1524 = vmatpush1.msra.mxu0 0.0
        %1525 = vmatprep.subr.mxu0 0.0
        %1526 = vmatpush1.msra.mxu0 0.0
        %1527 = vmatprep.subr.mxu0 0.0
        %1528 = vmatpush1.msra.mxu0 0.0
        %1529 = vmatprep.subr.mxu0 0.0
        %1530 = vmatpush1.msra.mxu0 0.0
        %1531 = vmatprep.subr.mxu0 0.0
        %1532 = vmatpush1.msra.mxu0 0.0
        %1533 = vmatprep.subr.mxu0 0.0
        %1534 = vmatpush1.msra.mxu0 0.0
        %1535 = vmatprep.subr.mxu0 0.0
        %1536 = vmatpush1.msra.mxu0 0.0
        %1537 = vmatprep.subr.mxu0 0.0
        %1538 = vmatpush1.msra.mxu0 0.0
        %1539 = vmatprep.subr.mxu0 0.0
        %1540 = vmatpush1.msra.mxu0 0.0
        %1541 = vmatprep.subr.mxu0 0.0
        %1542 = vmatpush1.msra.mxu0 0.0
        %1543 = vmatprep.subr.mxu0 0.0
        %1544 = vmatpush1.msra.mxu0 0.0
        %1545 = vmatprep.subr.mxu0 0.0
        %1546 = vmatpush1.msra.mxu0 0.0
        %1547 = vmatprep.subr.mxu0 0.0
        %1548 = vmatpush1.msra.mxu0 0.0
        %1549 = vmatprep.subr.mxu0 0.0
        %1550 = vmatpush1.msra.mxu0 0.0
        %1551 = vmatprep.subr.mxu0 0.0
        %1552 = vmatpush1.msra.mxu0 0.0
        %1553 = vmatprep.subr.mxu0 0.0
        %1554 = vmatpush1.msra.mxu0 0.0
        %1555 = vmatprep.subr.mxu0 0.0
        %1556 = vmatpush1.msra.mxu0 0.0
        %1557 = vmatprep.subr.mxu0 0.0
        %1558 = vmatpush1.msra.mxu0 0.0
        %1559 = vmatprep.subr.mxu0 0.0
        %1560 = vmatpush1.msra.mxu0 0.0
        %1561 = vmatprep.subr.mxu0 0.0
        %1562 = vmatpush1.msra.mxu0 0.0
        %1563 = vmatprep.subr.mxu0 0.0
        %1564 = vmatpush1.msra.mxu0 0.0
        %1565 = vmatprep.subr.mxu0 0.0
        %1566 = vmatpush1.msra.mxu0 0.0
        %1567 = vmatprep.subr.mxu0 0.0
        %1568 = vmatpush1.msra.mxu0 0.0
        %1569 = vmatprep.subr.mxu0 0.0
        %1570 = vmatpush1.msra.mxu0 0.0
        %1571 = vmatprep.subr.mxu0 0.0
        %1572 = vmatpush1.msra.mxu0 0.0
        %1573 = vmatprep.subr.mxu0 0.0
        %1574 = vmatpush1.msra.mxu0 0.0
        %1575 = vmatprep.subr.mxu0 0.0
        %1576 = vmatpush1.msra.mxu0 0.0
        %1577 = vmatprep.subr.mxu0 0.0
        %1578 = vmatpush1.msra.mxu0 0.0
        %1579 = vmatprep.subr.mxu0 0.0
        %1580 = vmatpush1.msra.mxu0 0.0
        %1581 = vmatprep.mubr.f32.mxu0 0.0
        %1582 = vmatmul.mubr.f32.gmra.mrb[0].mxu0 %v1370
        %v1583 = vpop.f32.mrb[0].mxu0
        %v1584 = vadd.f32 0.0, %v1583
        %v1585 = vpop.f32.mrb[0].mxu0
        %1586 = vmatprep.mubr.f32.mxu0 0.0
        %1587 = vmatmul.mubr.f32.gmra.mrb[0].mxu0 %v1373
        %v1588 = vpop.f32.mrb[0].mxu0
        %v1589 = vadd.f32 0.0, %v1588
        %v1590 = vpop.f32.mrb[0].mxu0
        %1591 = vmatprep.mubr.f32.mxu0 0.0
        %1592 = vmatmul.mubr.f32.gmra.mrb[0].mxu0 %v1376
        %v1593 = vpop.f32.mrb[0].mxu0
        %v1594 = vadd.f32 0.0, %v1593
        %v1595 = vpop.f32.mrb[0].mxu0
        %1596 = vmatprep.mubr.f32.mxu0 0.0
        %1597 = vmatmul.mubr.f32.gmra.mrb[0].mxu0 %v1379
        %v1598 = vpop.f32.mrb[0].mxu0
        %v1599 = vadd.f32 0.0, %v1598
        %v1600 = vpop.f32.mrb[0].mxu0
        %1601 = vmatprep.mubr.f32.mxu0 0.0
        %1602 = vmatmul.mubr.f32.gmra.mrb[0].mxu0 %v1382
        %v1603 = vpop.f32.mrb[0].mxu0
        %v1604 = vadd.f32 0.0, %v1603
        %v1605 = vpop.f32.mrb[0].mxu0
        %1606 = vmatprep.mubr.f32.mxu0 0.0
        %1607 = vmatmul.mubr.f32.gmra.mrb[0].mxu0 %v1385
        %v1608 = vpop.f32.mrb[0].mxu0
        %v1609 = vadd.f32 0.0, %v1608
        %v1610 = vpop.f32.mrb[0].mxu0
        %1611 = vmatprep.mubr.f32.mxu0 0.0
        %1612 = vmatmul.mubr.f32.gmra.mrb[0].mxu0 %v1388
        %v1613 = vpop.f32.mrb[0].mxu0
        %v1614 = vadd.f32 0.0, %v1613
        %v1615 = vpop.f32.mrb[0].mxu0
        %1616 = vmatprep.mubr.f32.mxu0 0.0
        %1617 = vmatmul.mubr.f32.gmra.mrb[0].mxu0 %v1391
        %v1618 = vpop.f32.mrb[0].mxu0
        %v1619 = vadd.f32 0.0, %v1618
        %v1620 = vpop.f32.mrb[0].mxu0
        %1621 = vmatprep.mubr.f32.mxu0 0.0
        %1622 = vmatmul.mubr.f32.gmra.mrb[0].mxu0 %v1394
        %v1623 = vpop.f32.mrb[0].mxu0
        %v1624 = vadd.f32 0.0, %v1623
        %v1625 = vpop.f32.mrb[0].mxu0
        %1626 = vmatprep.mubr.f32.mxu0 0.0
        %1627 = vmatmul.mubr.f32.gmra.mrb[0].mxu0 %v1397
        %v1628 = vpop.f32.mrb[0].mxu0
        %v1629 = vadd.f32 0.0, %v1628
        %v1630 = vpop.f32.mrb[0].mxu0
        %1631 = vmatprep.mubr.f32.mxu0 0.0
        %1632 = vmatmul.mubr.f32.gmra.mrb[0].mxu0 %v1400
        %v1633 = vpop.f32.mrb[0].mxu0
        %v1634 = vadd.f32 0.0, %v1633
        %v1635 = vpop.f32.mrb[0].mxu0
        %1636 = vmatprep.mubr.f32.mxu0 0.0
        %1637 = vmatmul.mubr.f32.gmra.mrb[0].mxu0 %v1403
        %v1638 = vpop.f32.mrb[0].mxu0
        %v1639 = vadd.f32 0.0, %v1638
        %v1640 = vpop.f32.mrb[0].mxu0
        %1641 = vmatprep.mubr.f32.mxu0 0.0
        %1642 = vmatmul.mubr.f32.gmra.mrb[0].mxu0 %v1406
        %v1643 = vpop.f32.mrb[0].mxu0
        %v1644 = vadd.f32 0.0, %v1643
        %v1645 = vpop.f32.mrb[0].mxu0
        %1646 = vmatprep.mubr.f32.mxu0 0.0
        %1647 = vmatmul.mubr.f32.gmra.mrb[0].mxu0 %v1409
        %v1648 = vpop.f32.mrb[0].mxu0
        %v1649 = vadd.f32 0.0, %v1648
        %v1650 = vpop.f32.mrb[0].mxu0
        %1651 = vmatprep.mubr.f32.mxu0 0.0
        %1652 = vmatmul.mubr.f32.gmra.mrb[0].mxu0 %v1412
        %v1653 = vpop.f32.mrb[0].mxu0
        %v1654 = vadd.f32 0.0, %v1653
        %v1655 = vpop.f32.mrb[0].mxu0
        %1656 = vmatprep.mubr.f32.mxu0 0.0
        %1657 = vmatmul.mubr.f32.gmra.mrb[0].mxu0 %v1415
        %v1658 = vpop.f32.mrb[0].mxu0
        %v1659 = vadd.f32 0.0, %v1658
        %v1660 = vpop.f32.mrb[0].mxu0
        %1661 = vmatprep.mubr.f32.mxu0 0.0
        %1662 = vmatmul.mubr.f32.gmra.mrb[0].mxu0 %v1418
        %v1663 = vpop.f32.mrb[0].mxu0
        %v1664 = vadd.f32 0.0, %v1663
        %v1665 = vpop.f32.mrb[0].mxu0
        %1666 = vmatprep.mubr.f32.mxu0 0.0
        %1667 = vmatmul.mubr.f32.gmra.mrb[0].mxu0 %v1421
        %v1668 = vpop.f32.mrb[0].mxu0
        %v1669 = vadd.f32 0.0, %v1668
        %v1670 = vpop.f32.mrb[0].mxu0
        %1671 = vmatprep.mubr.f32.mxu0 0.0
        %1672 = vmatmul.mubr.f32.gmra.mrb[0].mxu0 %v1424
        %v1673 = vpop.f32.mrb[0].mxu0
        %v1674 = vadd.f32 0.0, %v1673
        %v1675 = vpop.f32.mrb[0].mxu0
        %1676 = vmatprep.mubr.f32.mxu0 0.0
        %1677 = vmatmul.mubr.f32.gmra.mrb[0].mxu0 %v1427
        %v1678 = vpop.f32.mrb[0].mxu0
        %v1679 = vadd.f32 0.0, %v1678
        %v1680 = vpop.f32.mrb[0].mxu0
        %1681 = vmatprep.mubr.f32.mxu0 0.0
        %1682 = vmatmul.mubr.f32.gmra.mrb[0].mxu0 %v1430
        %v1683 = vpop.f32.mrb[0].mxu0
        %v1684 = vadd.f32 0.0, %v1683
        %v1685 = vpop.f32.mrb[0].mxu0
        %1686 = vmatprep.mubr.f32.mxu0 0.0
        %1687 = vmatmul.mubr.f32.gmra.mrb[0].mxu0 %v1433
        %v1688 = vpop.f32.mrb[0].mxu0
        %v1689 = vadd.f32 0.0, %v1688
        %v1690 = vpop.f32.mrb[0].mxu0
        %1691 = vmatprep.mubr.f32.mxu0 0.0
        %1692 = vmatmul.mubr.f32.gmra.mrb[0].mxu0 %v1436
        %v1693 = vpop.f32.mrb[0].mxu0
        %v1694 = vadd.f32 0.0, %v1693
        %v1695 = vpop.f32.mrb[0].mxu0
        %1696 = vmatprep.mubr.f32.mxu0 0.0
        %1697 = vmatmul.mubr.f32.gmra.mrb[0].mxu0 %v1439
        %v1698 = vpop.f32.mrb[0].mxu0
        %v1699 = vadd.f32 0.0, %v1698
        %v1700 = vpop.f32.mrb[0].mxu0
        %1701 = vmatprep.mubr.f32.mxu0 0.0
        %1702 = vmatmul.mubr.f32.gmra.mrb[0].mxu0 %v1442
        %v1703 = vpop.f32.mrb[0].mxu0
        %v1704 = vadd.f32 0.0, %v1703
        %v1705 = vpop.f32.mrb[0].mxu0
        %1706 = vmatprep.mubr.f32.mxu0 0.0
        %1707 = vmatmul.mubr.f32.gmra.mrb[0].mxu0 %v1445
        %v1708 = vpop.f32.mrb[0].mxu0
        %v1709 = vadd.f32 0.0, %v1708
        %v1710 = vpop.f32.mrb[0].mxu0
        %1711 = vmatprep.mubr.f32.mxu0 0.0
        %1712 = vmatmul.mubr.f32.gmra.mrb[0].mxu0 %v1448
        %v1713 = vpop.f32.mrb[0].mxu0
        %v1714 = vadd.f32 0.0, %v1713
        %v1715 = vpop.f32.mrb[0].mxu0
        %1716 = vmatprep.mubr.f32.mxu0 0.0
        %1717 = vmatmul.mubr.f32.gmra.mrb[0].mxu0 %v1451
        %v1718 = vpop.f32.mrb[0].mxu0
        %v1719 = vadd.f32 0.0, %v1718
        %v1720 = vpop.f32.mrb[0].mxu0
        %1721 = vmatprep.mubr.f32.mxu0 0.0
        %1722 = vmatmul.mubr.f32.gmra.mrb[0].mxu0 %v1454
        %v1723 = vpop.f32.mrb[0].mxu0
        %v1724 = vadd.f32 0.0, %v1723
        %v1725 = vpop.f32.mrb[0].mxu0
        %1726 = vmatprep.mubr.f32.mxu0 0.0
        %1727 = vmatmul.mubr.f32.gmra.mrb[0].mxu0 %v1457
        %v1728 = vpop.f32.mrb[0].mxu0
        %v1729 = vadd.f32 0.0, %v1728
        %v1730 = vpop.f32.mrb[0].mxu0
        %1731 = vmatprep.mubr.f32.mxu0 0.0
        %1732 = vmatmul.mubr.f32.gmra.mrb[0].mxu0 %v1460
        %v1733 = vpop.f32.mrb[0].mxu0
        %v1734 = vadd.f32 0.0, %v1733
        %v1735 = vpop.f32.mrb[0].mxu0
        %1736 = vmatprep.mubr.f32.mxu0 0.0
        %1737 = vmatmul.mubr.f32.gmra.mrb[0].mxu0 %v1463
        %v1738 = vpop.f32.mrb[0].mxu0
        %v1739 = vadd.f32 0.0, %v1738
        %v1740 = vpop.f32.mrb[0].mxu0
        %1741 = vmatprep.mubr.f32.mxu0 0.0
        %1742 = vmatmul.mubr.f32.gmra.mrb[0].mxu0 %v1466
        %v1743 = vpop.f32.mrb[0].mxu0
        %v1744 = vadd.f32 0.0, %v1743
        %v1745 = vpop.f32.mrb[0].mxu0
        %1746 = vmatprep.mubr.f32.mxu0 0.0
        %1747 = vmatmul.mubr.f32.gmra.mrb[0].mxu0 %v1469
        %v1748 = vpop.f32.mrb[0].mxu0
        %v1749 = vadd.f32 0.0, %v1748
        %v1750 = vpop.f32.mrb[0].mxu0
        %1751 = vmatprep.mubr.f32.mxu0 0.0
        %1752 = vmatmul.mubr.f32.gmra.mrb[0].mxu0 %v1472
        %v1753 = vpop.f32.mrb[0].mxu0
        %v1754 = vadd.f32 0.0, %v1753
        %v1755 = vpop.f32.mrb[0].mxu0
        %1756 = vmatprep.mubr.f32.mxu0 0.0
        %1757 = vmatmul.mubr.f32.gmra.mrb[0].mxu0 %v1475
        %v1758 = vpop.f32.mrb[0].mxu0
        %v1759 = vadd.f32 0.0, %v1758
        %v1760 = vpop.f32.mrb[0].mxu0
        %1761 = vmatprep.mubr.f32.mxu0 0.0
        %1762 = vmatmul.mubr.f32.gmra.mrb[0].mxu0 %v1478
        %v1763 = vpop.f32.mrb[0].mxu0
        %v1764 = vadd.f32 0.0, %v1763
        %v1765 = vpop.f32.mrb[0].mxu0
        %1766 = vmatprep.mubr.f32.mxu0 0.0
        %1767 = vmatmul.mubr.f32.gmra.mrb[0].mxu0 %v1481
        %v1768 = vpop.f32.mrb[0].mxu0
        %v1769 = vadd.f32 0.0, %v1768
        %v1770 = vpop.f32.mrb[0].mxu0
        %1771 = vmatprep.mubr.f32.mxu0 0.0
        %1772 = vmatmul.mubr.f32.gmra.mrb[0].mxu0 %v1484
        %v1773 = vpop.f32.mrb[0].mxu0
        %v1774 = vadd.f32 0.0, %v1773
        %v1775 = vpop.f32.mrb[0].mxu0
        %1776 = vmatprep.mubr.f32.mxu0 0.0
        %1777 = vmatmul.mubr.f32.gmra.mrb[0].mxu0 %v1487
        %v1778 = vpop.f32.mrb[0].mxu0
        %v1779 = vadd.f32 0.0, %v1778
        %v1780 = vpop.f32.mrb[0].mxu0
        %1781 = vmatprep.mubr.f32.mxu0 0.0
        %1782 = vmatmul.mubr.f32.gmra.mrb[0].mxu0 %v1490
        %v1783 = vpop.f32.mrb[0].mxu0
        %v1784 = vadd.f32 0.0, %v1783
        %v1785 = vpop.f32.mrb[0].mxu0
        %1786 = vmatprep.mubr.f32.mxu0 0.0
        %1787 = vmatmul.mubr.f32.gmra.mrb[0].mxu0 %v1493
        %v1788 = vpop.f32.mrb[0].mxu0
        %v1789 = vadd.f32 0.0, %v1788
        %v1790 = vpop.f32.mrb[0].mxu0
        %1791 = vmatprep.mubr.f32.mxu0 0.0
        %1792 = vmatmul.mubr.f32.gmra.mrb[0].mxu0 %v1496
        %v1793 = vpop.f32.mrb[0].mxu0
        %v1794 = vadd.f32 0.0, %v1793
        %v1795 = vpop.f32.mrb[0].mxu0
        %1796 = vmatprep.mubr.f32.mxu0 0.0
        %1797 = vmatmul.mubr.f32.gmra.mrb[0].mxu0 %v1499
        %v1798 = vpop.f32.mrb[0].mxu0
        %v1799 = vadd.f32 0.0, %v1798
        %v1800 = vpop.f32.mrb[0].mxu0
        %1801 = vmatprep.mubr.f32.mxu0 0.0
        %1802 = vmatmul.mubr.f32.gmra.mrb[0].mxu0 %v1502
        %v1803 = vpop.f32.mrb[0].mxu0
        %v1804 = vadd.f32 0.0, %v1803
        %v1805 = vpop.f32.mrb[0].mxu0
        %1806 = vmatprep.mubr.f32.mxu0 0.0
        %1807 = vmatmul.mubr.f32.gmra.mrb[0].mxu0 %v1505
        %v1808 = vpop.f32.mrb[0].mxu0
        %v1809 = vadd.f32 0.0, %v1808
        %v1810 = vpop.f32.mrb[0].mxu0
        %1811 = vmatprep.mubr.f32.mxu0 0.0
        %1812 = vmatmul.mubr.f32.gmra.mrb[0].mxu0 %v1508
        %v1813 = vpop.f32.mrb[0].mxu0
        %v1814 = vadd.f32 0.0, %v1813
        %v1815 = vpop.f32.mrb[0].mxu0
        %1816 = vmatprep.mubr.f32.mxu0 0.0
        %1817 = vmatmul.mubr.f32.gmra.mrb[0].mxu0 %v1511
        %v1818 = vpop.f32.mrb[0].mxu0
        %v1819 = vadd.f32 0.0, %v1818
        %v1820 = vpop.f32.mrb[0].mxu0
        %1821 = vdwg.mxu0
        %v1823 = vsel %vm1368, %v1268, 0
        %v1826 = vsel %vm1368, %v1269, 0
        %v1829 = vsel %vm1368, %v1270, 0
        %v1832 = vsel %vm1368, %v1271, 0
        %v1835 = vsel %vm1368, %v1272, 0
        %v1838 = vsel %vm1368, %v1273, 0
        %v1841 = vsel %vm1368, %v1274, 0
        %v1844 = vsel %vm1368, %v1275, 0
        %v1847 = vsel %vm1368, %v1276, 0
        %v1850 = vsel %vm1368, %v1277, 0
        %v1853 = vsel %vm1368, %v1278, 0
        %v1856 = vsel %vm1368, %v1279, 0
        %v1859 = vsel %vm1368, %v1280, 0
        %v1862 = vsel %vm1368, %v1281, 0
        %v1865 = vsel %vm1368, %v1282, 0
        %v1868 = vsel %vm1368, %v1283, 0
        %v1871 = vsel %vm1368, %v1284, 0
        %v1874 = vsel %vm1368, %v1285, 0
        %v1877 = vsel %vm1368, %v1286, 0
        %v1880 = vsel %vm1368, %v1287, 0
        %v1883 = vsel %vm1368, %v1288, 0
        %v1886 = vsel %vm1368, %v1289, 0
        %v1889 = vsel %vm1368, %v1290, 0
        %v1892 = vsel %vm1368, %v1291, 0
        %v1895 = vsel %vm1368, %v1292, 0
        %v1898 = vsel %vm1368, %v1293, 0
        %v1901 = vsel %vm1368, %v1294, 0
        %v1904 = vsel %vm1368, %v1295, 0
        %v1907 = vsel %vm1368, %v1296, 0
        %v1910 = vsel %vm1368, %v1297, 0
        %v1913 = vsel %vm1368, %v1298, 0
        %v1916 = vsel %vm1368, %v1299, 0
        %v1919 = vsel %vm1368, %v1300, 0
        %v1922 = vsel %vm1368, %v1301, 0
        %v1925 = vsel %vm1368, %v1302, 0
        %v1928 = vsel %vm1368, %v1303, 0
        %v1931 = vsel %vm1368, %v1304, 0
        %v1934 = vsel %vm1368, %v1305, 0
        %v1937 = vsel %vm1368, %v1306, 0
        %v1940 = vsel %vm1368, %v1307, 0
        %v1943 = vsel %vm1368, %v1308, 0
        %v1946 = vsel %vm1368, %v1309, 0
        %v1949 = vsel %vm1368, %v1310, 0
        %v1952 = vsel %vm1368, %v1311, 0
        %v1955 = vsel %vm1368, %v1312, 0
        %v1958 = vsel %vm1368, %v1313, 0
        %v1961 = vsel %vm1368, %v1314, 0
        %v1964 = vsel %vm1368, %v1315, 0
        %v1967 = vsel %vm1513, %v1316, 0
        %1969 = vmatprep.subr.mxu0 0.0
        %1970 = vmatpush1.msra.mxu0 %v1967
        %1971 = vmatprep.subr.mxu0 0.0
        %1972 = vmatpush1.msra.mxu0 0.0
        %1973 = vmatprep.subr.mxu0 0.0
        %1974 = vmatpush1.msra.mxu0 0.0
        %1975 = vmatprep.subr.mxu0 0.0
        %1976 = vmatpush1.msra.mxu0 0.0
        %1977 = vmatprep.subr.mxu0 0.0
        %1978 = vmatpush1.msra.mxu0 0.0
        %1979 = vmatprep.subr.mxu0 0.0
        %1980 = vmatpush1.msra.mxu0 0.0
        %1981 = vmatprep.subr.mxu0 0.0
        %1982 = vmatpush1.msra.mxu0 0.0
        %1983 = vmatprep.subr.mxu0 0.0
        %1984 = vmatpush1.msra.mxu0 0.0
        %1985 = vmatprep.subr.mxu0 0.0
        %1986 = vmatpush1.msra.mxu0 0.0
        %1987 = vmatprep.subr.mxu0 0.0
        %1988 = vmatpush1.msra.mxu0 0.0
        %1989 = vmatprep.subr.mxu0 0.0
        %1990 = vmatpush1.msra.mxu0 0.0
        %1991 = vmatprep.subr.mxu0 0.0
        %1992 = vmatpush1.msra.mxu0 0.0
        %1993 = vmatprep.subr.mxu0 0.0
        %1994 = vmatpush1.msra.mxu0 0.0
        %1995 = vmatprep.subr.mxu0 0.0
        %1996 = vmatpush1.msra.mxu0 0.0
        %1997 = vmatprep.subr.mxu0 0.0
        %1998 = vmatpush1.msra.mxu0 0.0
        %1999 = vmatprep.subr.mxu0 0.0
        %2000 = vmatpush1.msra.mxu0 0.0
        %2001 = vmatprep.subr.mxu0 0.0
        %2002 = vmatpush1.msra.mxu0 0.0
        %2003 = vmatprep.subr.mxu0 0.0
        %2004 = vmatpush1.msra.mxu0 0.0
        %2005 = vmatprep.subr.mxu0 0.0
        %2006 = vmatpush1.msra.mxu0 0.0
        %2007 = vmatprep.subr.mxu0 0.0
        %2008 = vmatpush1.msra.mxu0 0.0
        %2009 = vmatprep.subr.mxu0 0.0
        %2010 = vmatpush1.msra.mxu0 0.0
        %2011 = vmatprep.subr.mxu0 0.0
        %2012 = vmatpush1.msra.mxu0 0.0
        %2013 = vmatprep.subr.mxu0 0.0
        %2014 = vmatpush1.msra.mxu0 0.0
        %2015 = vmatprep.subr.mxu0 0.0
        %2016 = vmatpush1.msra.mxu0 0.0
        %2017 = vmatprep.subr.mxu0 0.0
        %2018 = vmatpush1.msra.mxu0 0.0
        %2019 = vmatprep.subr.mxu0 0.0
        %2020 = vmatpush1.msra.mxu0 0.0
        %2021 = vmatprep.subr.mxu0 0.0
        %2022 = vmatpush1.msra.mxu0 0.0
        %2023 = vmatprep.subr.mxu0 0.0
        %2024 = vmatpush1.msra.mxu0 0.0
        %2025 = vmatprep.subr.mxu0 0.0
        %2026 = vmatpush1.msra.mxu0 0.0
        %2027 = vmatprep.subr.mxu0 0.0
        %2028 = vmatpush1.msra.mxu0 0.0
        %2029 = vmatprep.subr.mxu0 0.0
        %2030 = vmatpush1.msra.mxu0 0.0
        %2031 = vmatprep.subr.mxu0 0.0
        %2032 = vmatpush1.msra.mxu0 0.0
        %2033 = vmatprep.mubr.f32.mxu0 0.0
        %2034 = vmatmul.mubr.f32.gmra.mrb[0].mxu0 %v1823
        %v2035 = vpop.f32.mrb[0].mxu0
        %v2036 = vadd.f32 %v1584, %v2035
        %v2037 = vpop.f32.mrb[0].mxu0
        %2038 = vmatprep.mubr.f32.mxu0 0.0
        %2039 = vmatmul.mubr.f32.gmra.mrb[0].mxu0 %v1826
        %v2040 = vpop.f32.mrb[0].mxu0
        %v2041 = vadd.f32 %v1589, %v2040
        %v2042 = vpop.f32.mrb[0].mxu0
        %2043 = vmatprep.mubr.f32.mxu0 0.0
        %2044 = vmatmul.mubr.f32.gmra.mrb[0].mxu0 %v1829
        %v2045 = vpop.f32.mrb[0].mxu0
        %v2046 = vadd.f32 %v1594, %v2045
        %v2047 = vpop.f32.mrb[0].mxu0
        %2048 = vmatprep.mubr.f32.mxu0 0.0
        %2049 = vmatmul.mubr.f32.gmra.mrb[0].mxu0 %v1832
        %v2050 = vpop.f32.mrb[0].mxu0
        %v2051 = vadd.f32 %v1599, %v2050
        %v2052 = vpop.f32.mrb[0].mxu0
        %2053 = vmatprep.mubr.f32.mxu0 0.0
        %2054 = vmatmul.mubr.f32.gmra.mrb[0].mxu0 %v1835
        %v2055 = vpop.f32.mrb[0].mxu0
        %v2056 = vadd.f32 %v1604, %v2055
        %v2057 = vpop.f32.mrb[0].mxu0
        %2058 = vmatprep.mubr.f32.mxu0 0.0
        %2059 = vmatmul.mubr.f32.gmra.mrb[0].mxu0 %v1838
        %v2060 = vpop.f32.mrb[0].mxu0
        %v2061 = vadd.f32 %v1609, %v2060
        %v2062 = vpop.f32.mrb[0].mxu0
        %2063 = vmatprep.mubr.f32.mxu0 0.0
        %2064 = vmatmul.mubr.f32.gmra.mrb[0].mxu0 %v1841
        %v2065 = vpop.f32.mrb[0].mxu0
        %v2066 = vadd.f32 %v1614, %v2065
        %v2067 = vpop.f32.mrb[0].mxu0
        %2068 = vmatprep.mubr.f32.mxu0 0.0
        %2069 = vmatmul.mubr.f32.gmra.mrb[0].mxu0 %v1844
        %v2070 = vpop.f32.mrb[0].mxu0
        %v2071 = vadd.f32 %v1619, %v2070
        %v2072 = vpop.f32.mrb[0].mxu0
        %2073 = vmatprep.mubr.f32.mxu0 0.0
        %2074 = vmatmul.mubr.f32.gmra.mrb[0].mxu0 %v1847
        %v2075 = vpop.f32.mrb[0].mxu0
        %v2076 = vadd.f32 %v1624, %v2075
        %v2077 = vpop.f32.mrb[0].mxu0
        %2078 = vmatprep.mubr.f32.mxu0 0.0
        %2079 = vmatmul.mubr.f32.gmra.mrb[0].mxu0 %v1850
        %v2080 = vpop.f32.mrb[0].mxu0
        %v2081 = vadd.f32 %v1629, %v2080
        %v2082 = vpop.f32.mrb[0].mxu0
        %2083 = vmatprep.mubr.f32.mxu0 0.0
        %2084 = vmatmul.mubr.f32.gmra.mrb[0].mxu0 %v1853
        %v2085 = vpop.f32.mrb[0].mxu0
        %v2086 = vadd.f32 %v1634, %v2085
        %v2087 = vpop.f32.mrb[0].mxu0
        %2088 = vmatprep.mubr.f32.mxu0 0.0
        %2089 = vmatmul.mubr.f32.gmra.mrb[0].mxu0 %v1856
        %v2090 = vpop.f32.mrb[0].mxu0
        %v2091 = vadd.f32 %v1639, %v2090
        %v2092 = vpop.f32.mrb[0].mxu0
        %2093 = vmatprep.mubr.f32.mxu0 0.0
        %2094 = vmatmul.mubr.f32.gmra.mrb[0].mxu0 %v1859
        %v2095 = vpop.f32.mrb[0].mxu0
        %v2096 = vadd.f32 %v1644, %v2095
        %v2097 = vpop.f32.mrb[0].mxu0
        %2098 = vmatprep.mubr.f32.mxu0 0.0
        %2099 = vmatmul.mubr.f32.gmra.mrb[0].mxu0 %v1862
        %v2100 = vpop.f32.mrb[0].mxu0
        %v2101 = vadd.f32 %v1649, %v2100
        %v2102 = vpop.f32.mrb[0].mxu0
        %2103 = vmatprep.mubr.f32.mxu0 0.0
        %2104 = vmatmul.mubr.f32.gmra.mrb[0].mxu0 %v1865
        %v2105 = vpop.f32.mrb[0].mxu0
        %v2106 = vadd.f32 %v1654, %v2105
        %v2107 = vpop.f32.mrb[0].mxu0
        %2108 = vmatprep.mubr.f32.mxu0 0.0
        %2109 = vmatmul.mubr.f32.gmra.mrb[0].mxu0 %v1868
        %v2110 = vpop.f32.mrb[0].mxu0
        %v2111 = vadd.f32 %v1659, %v2110
        %v2112 = vpop.f32.mrb[0].mxu0
        %2113 = vmatprep.mubr.f32.mxu0 0.0
        %2114 = vmatmul.mubr.f32.gmra.mrb[0].mxu0 %v1871
        %v2115 = vpop.f32.mrb[0].mxu0
        %v2116 = vadd.f32 %v1664, %v2115
        %v2117 = vpop.f32.mrb[0].mxu0
        %2118 = vmatprep.mubr.f32.mxu0 0.0
        %2119 = vmatmul.mubr.f32.gmra.mrb[0].mxu0 %v1874
        %v2120 = vpop.f32.mrb[0].mxu0
        %v2121 = vadd.f32 %v1669, %v2120
        %v2122 = vpop.f32.mrb[0].mxu0
        %2123 = vmatprep.mubr.f32.mxu0 0.0
        %2124 = vmatmul.mubr.f32.gmra.mrb[0].mxu0 %v1877
        %v2125 = vpop.f32.mrb[0].mxu0
        %v2126 = vadd.f32 %v1674, %v2125
        %v2127 = vpop.f32.mrb[0].mxu0
        %2128 = vmatprep.mubr.f32.mxu0 0.0
        %2129 = vmatmul.mubr.f32.gmra.mrb[0].mxu0 %v1880
        %v2130 = vpop.f32.mrb[0].mxu0
        %v2131 = vadd.f32 %v1679, %v2130
        %v2132 = vpop.f32.mrb[0].mxu0
        %2133 = vmatprep.mubr.f32.mxu0 0.0
        %2134 = vmatmul.mubr.f32.gmra.mrb[0].mxu0 %v1883
        %v2135 = vpop.f32.mrb[0].mxu0
        %v2136 = vadd.f32 %v1684, %v2135
        %v2137 = vpop.f32.mrb[0].mxu0
        %2138 = vmatprep.mubr.f32.mxu0 0.0
        %2139 = vmatmul.mubr.f32.gmra.mrb[0].mxu0 %v1886
        %v2140 = vpop.f32.mrb[0].mxu0
        %v2141 = vadd.f32 %v1689, %v2140
        %v2142 = vpop.f32.mrb[0].mxu0
        %2143 = vmatprep.mubr.f32.mxu0 0.0
        %2144 = vmatmul.mubr.f32.gmra.mrb[0].mxu0 %v1889
        %v2145 = vpop.f32.mrb[0].mxu0
        %v2146 = vadd.f32 %v1694, %v2145
        %v2147 = vpop.f32.mrb[0].mxu0
        %2148 = vmatprep.mubr.f32.mxu0 0.0
        %2149 = vmatmul.mubr.f32.gmra.mrb[0].mxu0 %v1892
        %v2150 = vpop.f32.mrb[0].mxu0
        %v2151 = vadd.f32 %v1699, %v2150
        %v2152 = vpop.f32.mrb[0].mxu0
        %2153 = vmatprep.mubr.f32.mxu0 0.0
        %2154 = vmatmul.mubr.f32.gmra.mrb[0].mxu0 %v1895
        %v2155 = vpop.f32.mrb[0].mxu0
        %v2156 = vadd.f32 %v1704, %v2155
        %v2157 = vpop.f32.mrb[0].mxu0
        %2158 = vmatprep.mubr.f32.mxu0 0.0
        %2159 = vmatmul.mubr.f32.gmra.mrb[0].mxu0 %v1898
        %v2160 = vpop.f32.mrb[0].mxu0
        %v2161 = vadd.f32 %v1709, %v2160
        %v2162 = vpop.f32.mrb[0].mxu0
        %2163 = vmatprep.mubr.f32.mxu0 0.0
        %2164 = vmatmul.mubr.f32.gmra.mrb[0].mxu0 %v1901
        %v2165 = vpop.f32.mrb[0].mxu0
        %v2166 = vadd.f32 %v1714, %v2165
        %v2167 = vpop.f32.mrb[0].mxu0
        %2168 = vmatprep.mubr.f32.mxu0 0.0
        %2169 = vmatmul.mubr.f32.gmra.mrb[0].mxu0 %v1904
        %v2170 = vpop.f32.mrb[0].mxu0
        %v2171 = vadd.f32 %v1719, %v2170
        %v2172 = vpop.f32.mrb[0].mxu0
        %2173 = vmatprep.mubr.f32.mxu0 0.0
        %2174 = vmatmul.mubr.f32.gmra.mrb[0].mxu0 %v1907
        %v2175 = vpop.f32.mrb[0].mxu0
        %v2176 = vadd.f32 %v1724, %v2175
        %v2177 = vpop.f32.mrb[0].mxu0
        %2178 = vmatprep.mubr.f32.mxu0 0.0
        %2179 = vmatmul.mubr.f32.gmra.mrb[0].mxu0 %v1910
        %v2180 = vpop.f32.mrb[0].mxu0
        %v2181 = vadd.f32 %v1729, %v2180
        %v2182 = vpop.f32.mrb[0].mxu0
        %2183 = vmatprep.mubr.f32.mxu0 0.0
        %2184 = vmatmul.mubr.f32.gmra.mrb[0].mxu0 %v1913
        %v2185 = vpop.f32.mrb[0].mxu0
        %v2186 = vadd.f32 %v1734, %v2185
        %v2187 = vpop.f32.mrb[0].mxu0
        %2188 = vmatprep.mubr.f32.mxu0 0.0
        %2189 = vmatmul.mubr.f32.gmra.mrb[0].mxu0 %v1916
        %v2190 = vpop.f32.mrb[0].mxu0
        %v2191 = vadd.f32 %v1739, %v2190
        %v2192 = vpop.f32.mrb[0].mxu0
        %2193 = vmatprep.mubr.f32.mxu0 0.0
        %2194 = vmatmul.mubr.f32.gmra.mrb[0].mxu0 %v1919
        %v2195 = vpop.f32.mrb[0].mxu0
        %v2196 = vadd.f32 %v1744, %v2195
        %v2197 = vpop.f32.mrb[0].mxu0
        %2198 = vmatprep.mubr.f32.mxu0 0.0
        %2199 = vmatmul.mubr.f32.gmra.mrb[0].mxu0 %v1922
        %v2200 = vpop.f32.mrb[0].mxu0
        %v2201 = vadd.f32 %v1749, %v2200
        %v2202 = vpop.f32.mrb[0].mxu0
        %2203 = vmatprep.mubr.f32.mxu0 0.0
        %2204 = vmatmul.mubr.f32.gmra.mrb[0].mxu0 %v1925
        %v2205 = vpop.f32.mrb[0].mxu0
        %v2206 = vadd.f32 %v1754, %v2205
        %v2207 = vpop.f32.mrb[0].mxu0
        %2208 = vmatprep.mubr.f32.mxu0 0.0
        %2209 = vmatmul.mubr.f32.gmra.mrb[0].mxu0 %v1928
        %v2210 = vpop.f32.mrb[0].mxu0
        %v2211 = vadd.f32 %v1759, %v2210
        %v2212 = vpop.f32.mrb[0].mxu0
        %2213 = vmatprep.mubr.f32.mxu0 0.0
        %2214 = vmatmul.mubr.f32.gmra.mrb[0].mxu0 %v1931
        %v2215 = vpop.f32.mrb[0].mxu0
        %v2216 = vadd.f32 %v1764, %v2215
        %v2217 = vpop.f32.mrb[0].mxu0
        %2218 = vmatprep.mubr.f32.mxu0 0.0
        %2219 = vmatmul.mubr.f32.gmra.mrb[0].mxu0 %v1934
        %v2220 = vpop.f32.mrb[0].mxu0
        %v2221 = vadd.f32 %v1769, %v2220
        %v2222 = vpop.f32.mrb[0].mxu0
        %2223 = vmatprep.mubr.f32.mxu0 0.0
        %2224 = vmatmul.mubr.f32.gmra.mrb[0].mxu0 %v1937
        %v2225 = vpop.f32.mrb[0].mxu0
        %v2226 = vadd.f32 %v1774, %v2225
        %v2227 = vpop.f32.mrb[0].mxu0
        %2228 = vmatprep.mubr.f32.mxu0 0.0
        %2229 = vmatmul.mubr.f32.gmra.mrb[0].mxu0 %v1940
        %v2230 = vpop.f32.mrb[0].mxu0
        %v2231 = vadd.f32 %v1779, %v2230
        %v2232 = vpop.f32.mrb[0].mxu0
        %2233 = vmatprep.mubr.f32.mxu0 0.0
        %2234 = vmatmul.mubr.f32.gmra.mrb[0].mxu0 %v1943
        %v2235 = vpop.f32.mrb[0].mxu0
        %v2236 = vadd.f32 %v1784, %v2235
        %v2237 = vpop.f32.mrb[0].mxu0
        %2238 = vmatprep.mubr.f32.mxu0 0.0
        %2239 = vmatmul.mubr.f32.gmra.mrb[0].mxu0 %v1946
        %v2240 = vpop.f32.mrb[0].mxu0
        %v2241 = vadd.f32 %v1789, %v2240
        %v2242 = vpop.f32.mrb[0].mxu0
        %2243 = vmatprep.mubr.f32.mxu0 0.0
        %2244 = vmatmul.mubr.f32.gmra.mrb[0].mxu0 %v1949
        %v2245 = vpop.f32.mrb[0].mxu0
        %v2246 = vadd.f32 %v1794, %v2245
        %v2247 = vpop.f32.mrb[0].mxu0
        %2248 = vmatprep.mubr.f32.mxu0 0.0
        %2249 = vmatmul.mubr.f32.gmra.mrb[0].mxu0 %v1952
        %v2250 = vpop.f32.mrb[0].mxu0
        %v2251 = vadd.f32 %v1799, %v2250
        %v2252 = vpop.f32.mrb[0].mxu0
        %2253 = vmatprep.mubr.f32.mxu0 0.0
        %2254 = vmatmul.mubr.f32.gmra.mrb[0].mxu0 %v1955
        %v2255 = vpop.f32.mrb[0].mxu0
        %v2256 = vadd.f32 %v1804, %v2255
        %v2257 = vpop.f32.mrb[0].mxu0
        %2258 = vmatprep.mubr.f32.mxu0 0.0
        %2259 = vmatmul.mubr.f32.gmra.mrb[0].mxu0 %v1958
        %v2260 = vpop.f32.mrb[0].mxu0
        %v2261 = vadd.f32 %v1809, %v2260
        %v2262 = vpop.f32.mrb[0].mxu0
        %2263 = vmatprep.mubr.f32.mxu0 0.0
        %2264 = vmatmul.mubr.f32.gmra.mrb[0].mxu0 %v1961
        %v2265 = vpop.f32.mrb[0].mxu0
        %v2266 = vadd.f32 %v1814, %v2265
        %v2267 = vpop.f32.mrb[0].mxu0
        %2268 = vmatprep.mubr.f32.mxu0 0.0
        %2269 = vmatmul.mubr.f32.gmra.mrb[0].mxu0 %v1964
        %v2270 = vpop.f32.mrb[0].mxu0
        %v2271 = vadd.f32 %v1819, %v2270
        %v2272 = vpop.f32.mrb[0].mxu0
        %2273 = vdwg.mxu0
        %s2274 = sadd.s32 0, 2
        %s2275 = scalar_lea.vmem %s303, %s2274
        %v2276 = vld [vmem:[%s2275] sm:$0xff]
        %v2277 = vld [vmem:[%s2275 + $0x8] sm:$0xff]
        %v2278 = vld [vmem:[%s2275 + $0x10] sm:$0xff]
        %v2279 = vld [vmem:[%s2275 + $0x18] sm:$0xff]
        %v2280 = vld [vmem:[%s2275 + $0x20] sm:$0xff]
        %v2281 = vld [vmem:[%s2275 + $0x28] sm:$0xff]
        %v2282 = vld [vmem:[%s2275 + $0x30] sm:$0xff]
        %v2283 = vld [vmem:[%s2275 + $0x38] sm:$0xff]
        %v2284 = vld [vmem:[%s2275 + $0x40] sm:$0xff]
        %v2285 = vld [vmem:[%s2275 + $0x48] sm:$0xff]
        %v2286 = vld [vmem:[%s2275 + $0x50] sm:$0xff]
        %v2287 = vld [vmem:[%s2275 + $0x58] sm:$0xff]
        %v2288 = vld [vmem:[%s2275 + $0x60] sm:$0xff]
        %v2289 = vld [vmem:[%s2275 + $0x68] sm:$0xff]
        %v2290 = vld [vmem:[%s2275 + $0x70] sm:$0xff]
        %v2291 = vld [vmem:[%s2275 + $0x78] sm:$0xff]
        %v2292 = vld [vmem:[%s2275 + $0x80] sm:$0xff]
        %v2293 = vld [vmem:[%s2275 + $0x88] sm:$0xff]
        %v2294 = vld [vmem:[%s2275 + $0x90] sm:$0xff]
        %v2295 = vld [vmem:[%s2275 + $0x98] sm:$0xff]
        %v2296 = vld [vmem:[%s2275 + $0xa0] sm:$0xff]
        %v2297 = vld [vmem:[%s2275 + $0xa8] sm:$0xff]
        %v2298 = vld [vmem:[%s2275 + $0xb0] sm:$0xff]
        %v2299 = vld [vmem:[%s2275 + $0xb8] sm:$0xff]
        %v2300 = vld [vmem:[%s2275 + $0xc0] sm:$0xff]
        %v2301 = vld [vmem:[%s2275 + $0xc8] sm:$0xff]
        %v2302 = vld [vmem:[%s2275 + $0xd0] sm:$0xff]
        %v2303 = vld [vmem:[%s2275 + $0xd8] sm:$0xff]
        %v2304 = vld [vmem:[%s2275 + $0xe0] sm:$0xff]
        %v2305 = vld [vmem:[%s2275 + $0xe8] sm:$0xff]
        %v2306 = vld [vmem:[%s2275 + $0xf0] sm:$0xff]
        %v2307 = vld [vmem:[%s2275 + $0xf8] sm:$0xff]
        %v2308 = vld [vmem:[%s2275 + $0x100] sm:$0xff]
        %v2309 = vld [vmem:[%s2275 + $0x108] sm:$0xff]
        %v2310 = vld [vmem:[%s2275 + $0x110] sm:$0xff]
        %v2311 = vld [vmem:[%s2275 + $0x118] sm:$0xff]
        %v2312 = vld [vmem:[%s2275 + $0x120] sm:$0xff]
        %v2313 = vld [vmem:[%s2275 + $0x128] sm:$0xff]
        %v2314 = vld [vmem:[%s2275 + $0x130] sm:$0xff]
        %v2315 = vld [vmem:[%s2275 + $0x138] sm:$0xff]
        %v2316 = vld [vmem:[%s2275 + $0x140] sm:$0xff]
        %v2317 = vld [vmem:[%s2275 + $0x148] sm:$0xff]
        %v2318 = vld [vmem:[%s2275 + $0x150] sm:$0xff]
        %v2319 = vld [vmem:[%s2275 + $0x158] sm:$0xff]
        %v2320 = vld [vmem:[%s2275 + $0x160] sm:$0xff]
        %v2321 = vld [vmem:[%s2275 + $0x168] sm:$0xff]
        %v2322 = vld [vmem:[%s2275 + $0x170] sm:$0xff]
        %v2323 = vld [vmem:[%s2275 + $0x178] sm:$0xff]
        %v2324 = vld [vmem:[%s1 + $0x8] sm:$0xf]
        %v2326 = vsel %vm1368, %v2276, 0
        %v2329 = vsel %vm1368, %v2277, 0
        %v2332 = vsel %vm1368, %v2278, 0
        %v2335 = vsel %vm1368, %v2279, 0
        %v2338 = vsel %vm1368, %v2280, 0
        %v2341 = vsel %vm1368, %v2281, 0
        %v2344 = vsel %vm1368, %v2282, 0
        %v2347 = vsel %vm1368, %v2283, 0
        %v2350 = vsel %vm1368, %v2284, 0
        %v2353 = vsel %vm1368, %v2285, 0
        %v2356 = vsel %vm1368, %v2286, 0
        %v2359 = vsel %vm1368, %v2287, 0
        %v2362 = vsel %vm1368, %v2288, 0
        %v2365 = vsel %vm1368, %v2289, 0
        %v2368 = vsel %vm1368, %v2290, 0
        %v2371 = vsel %vm1368, %v2291, 0
        %v2374 = vsel %vm1368, %v2292, 0
        %v2377 = vsel %vm1368, %v2293, 0
        %v2380 = vsel %vm1368, %v2294, 0
        %v2383 = vsel %vm1368, %v2295, 0
        %v2386 = vsel %vm1368, %v2296, 0
        %v2389 = vsel %vm1368, %v2297, 0
        %v2392 = vsel %vm1368, %v2298, 0
        %v2395 = vsel %vm1368, %v2299, 0
        %v2398 = vsel %vm1368, %v2300, 0
        %v2401 = vsel %vm1368, %v2301, 0
        %v2404 = vsel %vm1368, %v2302, 0
        %v2407 = vsel %vm1368, %v2303, 0
        %v2410 = vsel %vm1368, %v2304, 0
        %v2413 = vsel %vm1368, %v2305, 0
        %v2416 = vsel %vm1368, %v2306, 0
        %v2419 = vsel %vm1368, %v2307, 0
        %v2422 = vsel %vm1368, %v2308, 0
        %v2425 = vsel %vm1368, %v2309, 0
        %v2428 = vsel %vm1368, %v2310, 0
        %v2431 = vsel %vm1368, %v2311, 0
        %v2434 = vsel %vm1368, %v2312, 0
        %v2437 = vsel %vm1368, %v2313, 0
        %v2440 = vsel %vm1368, %v2314, 0
        %v2443 = vsel %vm1368, %v2315, 0
        %v2446 = vsel %vm1368, %v2316, 0
        %v2449 = vsel %vm1368, %v2317, 0
        %v2452 = vsel %vm1368, %v2318, 0
        %v2455 = vsel %vm1368, %v2319, 0
        %v2458 = vsel %vm1368, %v2320, 0
        %v2461 = vsel %vm1368, %v2321, 0
        %v2464 = vsel %vm1368, %v2322, 0
        %v2467 = vsel %vm1368, %v2323, 0
        %v2470 = vsel %vm1513, %v2324, 0
        %2472 = vmatprep.subr.mxu0 0.0
        %2473 = vmatpush1.msra.mxu0 %v2470
        %2474 = vmatprep.subr.mxu0 0.0
        %2475 = vmatpush1.msra.mxu0 0.0
        %2476 = vmatprep.subr.mxu0 0.0
        %2477 = vmatpush1.msra.mxu0 0.0
        %2478 = vmatprep.subr.mxu0 0.0
        %2479 = vmatpush1.msra.mxu0 0.0
        %2480 = vmatprep.subr.mxu0 0.0
        %2481 = vmatpush1.msra.mxu0 0.0
        %2482 = vmatprep.subr.mxu0 0.0
        %2483 = vmatpush1.msra.mxu0 0.0
        %2484 = vmatprep.subr.mxu0 0.0
        %2485 = vmatpush1.msra.mxu0 0.0
        %2486 = vmatprep.subr.mxu0 0.0
        %2487 = vmatpush1.msra.mxu0 0.0
        %2488 = vmatprep.subr.mxu0 0.0
        %2489 = vmatpush1.msra.mxu0 0.0
        %2490 = vmatprep.subr.mxu0 0.0
        %2491 = vmatpush1.msra.mxu0 0.0
        %2492 = vmatprep.subr.mxu0 0.0
        %2493 = vmatpush1.msra.mxu0 0.0
        %2494 = vmatprep.subr.mxu0 0.0
        %2495 = vmatpush1.msra.mxu0 0.0
        %2496 = vmatprep.subr.mxu0 0.0
        %2497 = vmatpush1.msra.mxu0 0.0
        %2498 = vmatprep.subr.mxu0 0.0
        %2499 = vmatpush1.msra.mxu0 0.0
        %2500 = vmatprep.subr.mxu0 0.0
        %2501 = vmatpush1.msra.mxu0 0.0
        %2502 = vmatprep.subr.mxu0 0.0
        %2503 = vmatpush1.msra.mxu0 0.0
        %2504 = vmatprep.subr.mxu0 0.0
        %2505 = vmatpush1.msra.mxu0 0.0
        %2506 = vmatprep.subr.mxu0 0.0
        %2507 = vmatpush1.msra.mxu0 0.0
        %2508 = vmatprep.subr.mxu0 0.0
        %2509 = vmatpush1.msra.mxu0 0.0
        %2510 = vmatprep.subr.mxu0 0.0
        %2511 = vmatpush1.msra.mxu0 0.0
        %2512 = vmatprep.subr.mxu0 0.0
        %2513 = vmatpush1.msra.mxu0 0.0
        %2514 = vmatprep.subr.mxu0 0.0
        %2515 = vmatpush1.msra.mxu0 0.0
        %2516 = vmatprep.subr.mxu0 0.0
        %2517 = vmatpush1.msra.mxu0 0.0
        %2518 = vmatprep.subr.mxu0 0.0
        %2519 = vmatpush1.msra.mxu0 0.0
        %2520 = vmatprep.subr.mxu0 0.0
        %2521 = vmatpush1.msra.mxu0 0.0
        %2522 = vmatprep.subr.mxu0 0.0
        %2523 = vmatpush1.msra.mxu0 0.0
        %2524 = vmatprep.subr.mxu0 0.0
        %2525 = vmatpush1.msra.mxu0 0.0
        %2526 = vmatprep.subr.mxu0 0.0
        %2527 = vmatpush1.msra.mxu0 0.0
        %2528 = vmatprep.subr.mxu0 0.0
        %2529 = vmatpush1.msra.mxu0 0.0
        %2530 = vmatprep.subr.mxu0 0.0
        %2531 = vmatpush1.msra.mxu0 0.0
        %2532 = vmatprep.subr.mxu0 0.0
        %2533 = vmatpush1.msra.mxu0 0.0
        %2534 = vmatprep.subr.mxu0 0.0
        %2535 = vmatpush1.msra.mxu0 0.0
        %2536 = vmatprep.mubr.f32.mxu0 0.0
        %2537 = vmatmul.mubr.f32.gmra.mrb[0].mxu0 %v2326
        %v2538 = vpop.f32.mrb[0].mxu0
        %v2539 = vadd.f32 0.0, %v2538
        %v2540 = vpop.f32.mrb[0].mxu0
        %2541 = vmatprep.mubr.f32.mxu0 0.0
        %2542 = vmatmul.mubr.f32.gmra.mrb[0].mxu0 %v2329
        %v2543 = vpop.f32.mrb[0].mxu0
        %v2544 = vadd.f32 0.0, %v2543
        %v2545 = vpop.f32.mrb[0].mxu0
        %2546 = vmatprep.mubr.f32.mxu0 0.0
        %2547 = vmatmul.mubr.f32.gmra.mrb[0].mxu0 %v2332
        %v2548 = vpop.f32.mrb[0].mxu0
        %v2549 = vadd.f32 0.0, %v2548
        %v2550 = vpop.f32.mrb[0].mxu0
        %2551 = vmatprep.mubr.f32.mxu0 0.0
        %2552 = vmatmul.mubr.f32.gmra.mrb[0].mxu0 %v2335
        %v2553 = vpop.f32.mrb[0].mxu0
        %v2554 = vadd.f32 0.0, %v2553
        %v2555 = vpop.f32.mrb[0].mxu0
        %2556 = vmatprep.mubr.f32.mxu0 0.0
        %2557 = vmatmul.mubr.f32.gmra.mrb[0].mxu0 %v2338
        %v2558 = vpop.f32.mrb[0].mxu0
        %v2559 = vadd.f32 0.0, %v2558
        %v2560 = vpop.f32.mrb[0].mxu0
        %2561 = vmatprep.mubr.f32.mxu0 0.0
        %2562 = vmatmul.mubr.f32.gmra.mrb[0].mxu0 %v2341
        %v2563 = vpop.f32.mrb[0].mxu0
        %v2564 = vadd.f32 0.0, %v2563
        %v2565 = vpop.f32.mrb[0].mxu0
        %2566 = vmatprep.mubr.f32.mxu0 0.0
        %2567 = vmatmul.mubr.f32.gmra.mrb[0].mxu0 %v2344
        %v2568 = vpop.f32.mrb[0].mxu0
        %v2569 = vadd.f32 0.0, %v2568
        %v2570 = vpop.f32.mrb[0].mxu0
        %2571 = vmatprep.mubr.f32.mxu0 0.0
        %2572 = vmatmul.mubr.f32.gmra.mrb[0].mxu0 %v2347
        %v2573 = vpop.f32.mrb[0].mxu0
        %v2574 = vadd.f32 0.0, %v2573
        %v2575 = vpop.f32.mrb[0].mxu0
        %2576 = vmatprep.mubr.f32.mxu0 0.0
        %2577 = vmatmul.mubr.f32.gmra.mrb[0].mxu0 %v2350
        %v2578 = vpop.f32.mrb[0].mxu0
        %v2579 = vadd.f32 0.0, %v2578
        %v2580 = vpop.f32.mrb[0].mxu0
        %2581 = vmatprep.mubr.f32.mxu0 0.0
        %2582 = vmatmul.mubr.f32.gmra.mrb[0].mxu0 %v2353
        %v2583 = vpop.f32.mrb[0].mxu0
        %v2584 = vadd.f32 0.0, %v2583
        %v2585 = vpop.f32.mrb[0].mxu0
        %2586 = vmatprep.mubr.f32.mxu0 0.0
        %2587 = vmatmul.mubr.f32.gmra.mrb[0].mxu0 %v2356
        %v2588 = vpop.f32.mrb[0].mxu0
        %v2589 = vadd.f32 0.0, %v2588
        %v2590 = vpop.f32.mrb[0].mxu0
        %2591 = vmatprep.mubr.f32.mxu0 0.0
        %2592 = vmatmul.mubr.f32.gmra.mrb[0].mxu0 %v2359
        %v2593 = vpop.f32.mrb[0].mxu0
        %v2594 = vadd.f32 0.0, %v2593
        %v2595 = vpop.f32.mrb[0].mxu0
        %2596 = vmatprep.mubr.f32.mxu0 0.0
        %2597 = vmatmul.mubr.f32.gmra.mrb[0].mxu0 %v2362
        %v2598 = vpop.f32.mrb[0].mxu0
        %v2599 = vadd.f32 0.0, %v2598
        %v2600 = vpop.f32.mrb[0].mxu0
        %2601 = vmatprep.mubr.f32.mxu0 0.0
        %2602 = vmatmul.mubr.f32.gmra.mrb[0].mxu0 %v2365
        %v2603 = vpop.f32.mrb[0].mxu0
        %v2604 = vadd.f32 0.0, %v2603
        %v2605 = vpop.f32.mrb[0].mxu0
        %2606 = vmatprep.mubr.f32.mxu0 0.0
        %2607 = vmatmul.mubr.f32.gmra.mrb[0].mxu0 %v2368
        %v2608 = vpop.f32.mrb[0].mxu0
        %v2609 = vadd.f32 0.0, %v2608
        %v2610 = vpop.f32.mrb[0].mxu0
        %2611 = vmatprep.mubr.f32.mxu0 0.0
        %2612 = vmatmul.mubr.f32.gmra.mrb[0].mxu0 %v2371
        %v2613 = vpop.f32.mrb[0].mxu0
        %v2614 = vadd.f32 0.0, %v2613
        %v2615 = vpop.f32.mrb[0].mxu0
        %2616 = vmatprep.mubr.f32.mxu0 0.0
        %2617 = vmatmul.mubr.f32.gmra.mrb[0].mxu0 %v2374
        %v2618 = vpop.f32.mrb[0].mxu0
        %v2619 = vadd.f32 0.0, %v2618
        %v2620 = vpop.f32.mrb[0].mxu0
        %2621 = vmatprep.mubr.f32.mxu0 0.0
        %2622 = vmatmul.mubr.f32.gmra.mrb[0].mxu0 %v2377
        %v2623 = vpop.f32.mrb[0].mxu0
        %v2624 = vadd.f32 0.0, %v2623
        %v2625 = vpop.f32.mrb[0].mxu0
        %2626 = vmatprep.mubr.f32.mxu0 0.0
        %2627 = vmatmul.mubr.f32.gmra.mrb[0].mxu0 %v2380
        %v2628 = vpop.f32.mrb[0].mxu0
        %v2629 = vadd.f32 0.0, %v2628
        %v2630 = vpop.f32.mrb[0].mxu0
        %2631 = vmatprep.mubr.f32.mxu0 0.0
        %2632 = vmatmul.mubr.f32.gmra.mrb[0].mxu0 %v2383
        %v2633 = vpop.f32.mrb[0].mxu0
        %v2634 = vadd.f32 0.0, %v2633
        %v2635 = vpop.f32.mrb[0].mxu0
        %2636 = vmatprep.mubr.f32.mxu0 0.0
        %2637 = vmatmul.mubr.f32.gmra.mrb[0].mxu0 %v2386
        %v2638 = vpop.f32.mrb[0].mxu0
        %v2639 = vadd.f32 0.0, %v2638
        %v2640 = vpop.f32.mrb[0].mxu0
        %2641 = vmatprep.mubr.f32.mxu0 0.0
        %2642 = vmatmul.mubr.f32.gmra.mrb[0].mxu0 %v2389
        %v2643 = vpop.f32.mrb[0].mxu0
        %v2644 = vadd.f32 0.0, %v2643
        %v2645 = vpop.f32.mrb[0].mxu0
        %2646 = vmatprep.mubr.f32.mxu0 0.0
        %2647 = vmatmul.mubr.f32.gmra.mrb[0].mxu0 %v2392
        %v2648 = vpop.f32.mrb[0].mxu0
        %v2649 = vadd.f32 0.0, %v2648
        %v2650 = vpop.f32.mrb[0].mxu0
        %2651 = vmatprep.mubr.f32.mxu0 0.0
        %2652 = vmatmul.mubr.f32.gmra.mrb[0].mxu0 %v2395
        %v2653 = vpop.f32.mrb[0].mxu0
        %v2654 = vadd.f32 0.0, %v2653
        %v2655 = vpop.f32.mrb[0].mxu0
        %2656 = vmatprep.mubr.f32.mxu0 0.0
        %2657 = vmatmul.mubr.f32.gmra.mrb[0].mxu0 %v2398
        %v2658 = vpop.f32.mrb[0].mxu0
        %v2659 = vadd.f32 0.0, %v2658
        %v2660 = vpop.f32.mrb[0].mxu0
        %2661 = vmatprep.mubr.f32.mxu0 0.0
        %2662 = vmatmul.mubr.f32.gmra.mrb[0].mxu0 %v2401
        %v2663 = vpop.f32.mrb[0].mxu0
        %v2664 = vadd.f32 0.0, %v2663
        %v2665 = vpop.f32.mrb[0].mxu0
        %2666 = vmatprep.mubr.f32.mxu0 0.0
        %2667 = vmatmul.mubr.f32.gmra.mrb[0].mxu0 %v2404
        %v2668 = vpop.f32.mrb[0].mxu0
        %v2669 = vadd.f32 0.0, %v2668
        %v2670 = vpop.f32.mrb[0].mxu0
        %2671 = vmatprep.mubr.f32.mxu0 0.0
        %2672 = vmatmul.mubr.f32.gmra.mrb[0].mxu0 %v2407
        %v2673 = vpop.f32.mrb[0].mxu0
        %v2674 = vadd.f32 0.0, %v2673
        %v2675 = vpop.f32.mrb[0].mxu0
        %2676 = vmatprep.mubr.f32.mxu0 0.0
        %2677 = vmatmul.mubr.f32.gmra.mrb[0].mxu0 %v2410
        %v2678 = vpop.f32.mrb[0].mxu0
        %v2679 = vadd.f32 0.0, %v2678
        %v2680 = vpop.f32.mrb[0].mxu0
        %2681 = vmatprep.mubr.f32.mxu0 0.0
        %2682 = vmatmul.mubr.f32.gmra.mrb[0].mxu0 %v2413
        %v2683 = vpop.f32.mrb[0].mxu0
        %v2684 = vadd.f32 0.0, %v2683
        %v2685 = vpop.f32.mrb[0].mxu0
        %2686 = vmatprep.mubr.f32.mxu0 0.0
        %2687 = vmatmul.mubr.f32.gmra.mrb[0].mxu0 %v2416
        %v2688 = vpop.f32.mrb[0].mxu0
        %v2689 = vadd.f32 0.0, %v2688
        %v2690 = vpop.f32.mrb[0].mxu0
        %2691 = vmatprep.mubr.f32.mxu0 0.0
        %2692 = vmatmul.mubr.f32.gmra.mrb[0].mxu0 %v2419
        %v2693 = vpop.f32.mrb[0].mxu0
        %v2694 = vadd.f32 0.0, %v2693
        %v2695 = vpop.f32.mrb[0].mxu0
        %2696 = vmatprep.mubr.f32.mxu0 0.0
        %2697 = vmatmul.mubr.f32.gmra.mrb[0].mxu0 %v2422
        %v2698 = vpop.f32.mrb[0].mxu0
        %v2699 = vadd.f32 0.0, %v2698
        %v2700 = vpop.f32.mrb[0].mxu0
        %2701 = vmatprep.mubr.f32.mxu0 0.0
        %2702 = vmatmul.mubr.f32.gmra.mrb[0].mxu0 %v2425
        %v2703 = vpop.f32.mrb[0].mxu0
        %v2704 = vadd.f32 0.0, %v2703
        %v2705 = vpop.f32.mrb[0].mxu0
        %2706 = vmatprep.mubr.f32.mxu0 0.0
        %2707 = vmatmul.mubr.f32.gmra.mrb[0].mxu0 %v2428
        %v2708 = vpop.f32.mrb[0].mxu0
        %v2709 = vadd.f32 0.0, %v2708
        %v2710 = vpop.f32.mrb[0].mxu0
        %2711 = vmatprep.mubr.f32.mxu0 0.0
        %2712 = vmatmul.mubr.f32.gmra.mrb[0].mxu0 %v2431
        %v2713 = vpop.f32.mrb[0].mxu0
        %v2714 = vadd.f32 0.0, %v2713
        %v2715 = vpop.f32.mrb[0].mxu0
        %2716 = vmatprep.mubr.f32.mxu0 0.0
        %2717 = vmatmul.mubr.f32.gmra.mrb[0].mxu0 %v2434
        %v2718 = vpop.f32.mrb[0].mxu0
        %v2719 = vadd.f32 0.0, %v2718
        %v2720 = vpop.f32.mrb[0].mxu0
        %2721 = vmatprep.mubr.f32.mxu0 0.0
        %2722 = vmatmul.mubr.f32.gmra.mrb[0].mxu0 %v2437
        %v2723 = vpop.f32.mrb[0].mxu0
        %v2724 = vadd.f32 0.0, %v2723
        %v2725 = vpop.f32.mrb[0].mxu0
        %2726 = vmatprep.mubr.f32.mxu0 0.0
        %2727 = vmatmul.mubr.f32.gmra.mrb[0].mxu0 %v2440
        %v2728 = vpop.f32.mrb[0].mxu0
        %v2729 = vadd.f32 0.0, %v2728
        %v2730 = vpop.f32.mrb[0].mxu0
        %2731 = vmatprep.mubr.f32.mxu0 0.0
        %2732 = vmatmul.mubr.f32.gmra.mrb[0].mxu0 %v2443
        %v2733 = vpop.f32.mrb[0].mxu0
        %v2734 = vadd.f32 0.0, %v2733
        %v2735 = vpop.f32.mrb[0].mxu0
        %2736 = vmatprep.mubr.f32.mxu0 0.0
        %2737 = vmatmul.mubr.f32.gmra.mrb[0].mxu0 %v2446
        %v2738 = vpop.f32.mrb[0].mxu0
        %v2739 = vadd.f32 0.0, %v2738
        %v2740 = vpop.f32.mrb[0].mxu0
        %2741 = vmatprep.mubr.f32.mxu0 0.0
        %2742 = vmatmul.mubr.f32.gmra.mrb[0].mxu0 %v2449
        %v2743 = vpop.f32.mrb[0].mxu0
        %v2744 = vadd.f32 0.0, %v2743
        %v2745 = vpop.f32.mrb[0].mxu0
        %2746 = vmatprep.mubr.f32.mxu0 0.0
        %2747 = vmatmul.mubr.f32.gmra.mrb[0].mxu0 %v2452
        %v2748 = vpop.f32.mrb[0].mxu0
        %v2749 = vadd.f32 0.0, %v2748
        %v2750 = vpop.f32.mrb[0].mxu0
        %2751 = vmatprep.mubr.f32.mxu0 0.0
        %2752 = vmatmul.mubr.f32.gmra.mrb[0].mxu0 %v2455
        %v2753 = vpop.f32.mrb[0].mxu0
        %v2754 = vadd.f32 0.0, %v2753
        %v2755 = vpop.f32.mrb[0].mxu0
        %2756 = vmatprep.mubr.f32.mxu0 0.0
        %2757 = vmatmul.mubr.f32.gmra.mrb[0].mxu0 %v2458
        %v2758 = vpop.f32.mrb[0].mxu0
        %v2759 = vadd.f32 0.0, %v2758
        %v2760 = vpop.f32.mrb[0].mxu0
        %2761 = vmatprep.mubr.f32.mxu0 0.0
        %2762 = vmatmul.mubr.f32.gmra.mrb[0].mxu0 %v2461
        %v2763 = vpop.f32.mrb[0].mxu0
        %v2764 = vadd.f32 0.0, %v2763
        %v2765 = vpop.f32.mrb[0].mxu0
        %2766 = vmatprep.mubr.f32.mxu0 0.0
        %2767 = vmatmul.mubr.f32.gmra.mrb[0].mxu0 %v2464
        %v2768 = vpop.f32.mrb[0].mxu0
        %v2769 = vadd.f32 0.0, %v2768
        %v2770 = vpop.f32.mrb[0].mxu0
        %2771 = vmatprep.mubr.f32.mxu0 0.0
        %2772 = vmatmul.mubr.f32.gmra.mrb[0].mxu0 %v2467
        %v2773 = vpop.f32.mrb[0].mxu0
        %v2774 = vadd.f32 0.0, %v2773
        %v2775 = vpop.f32.mrb[0].mxu0
        %2776 = vdwg.mxu0
        %v2777 = vadd.f32 %v2036, %v2539
        %v2778 = vadd.f32 %v2041, %v2544
        %v2779 = vadd.f32 %v2046, %v2549
        %v2780 = vadd.f32 %v2051, %v2554
        %v2781 = vadd.f32 %v2056, %v2559
        %v2782 = vadd.f32 %v2061, %v2564
        %v2783 = vadd.f32 %v2066, %v2569
        %v2784 = vadd.f32 %v2071, %v2574
        %v2785 = vadd.f32 %v2076, %v2579
        %v2786 = vadd.f32 %v2081, %v2584
        %v2787 = vadd.f32 %v2086, %v2589
        %v2788 = vadd.f32 %v2091, %v2594
        %v2789 = vadd.f32 %v2096, %v2599
        %v2790 = vadd.f32 %v2101, %v2604
        %v2791 = vadd.f32 %v2106, %v2609
        %v2792 = vadd.f32 %v2111, %v2614
        %v2793 = vadd.f32 %v2116, %v2619
        %v2794 = vadd.f32 %v2121, %v2624
        %v2795 = vadd.f32 %v2126, %v2629
        %v2796 = vadd.f32 %v2131, %v2634
        %v2797 = vadd.f32 %v2136, %v2639
        %v2798 = vadd.f32 %v2141, %v2644
        %v2799 = vadd.f32 %v2146, %v2649
        %v2800 = vadd.f32 %v2151, %v2654
        %v2801 = vadd.f32 %v2156, %v2659
        %v2802 = vadd.f32 %v2161, %v2664
        %v2803 = vadd.f32 %v2166, %v2669
        %v2804 = vadd.f32 %v2171, %v2674
        %v2805 = vadd.f32 %v2176, %v2679
        %v2806 = vadd.f32 %v2181, %v2684
        %v2807 = vadd.f32 %v2186, %v2689
        %v2808 = vadd.f32 %v2191, %v2694
        %v2809 = vadd.f32 %v2196, %v2699
        %v2810 = vadd.f32 %v2201, %v2704
        %v2811 = vadd.f32 %v2206, %v2709
        %v2812 = vadd.f32 %v2211, %v2714
        %v2813 = vadd.f32 %v2216, %v2719
        %v2814 = vadd.f32 %v2221, %v2724
        %v2815 = vadd.f32 %v2226, %v2729
        %v2816 = vadd.f32 %v2231, %v2734
        %v2817 = vadd.f32 %v2236, %v2739
        %v2818 = vadd.f32 %v2241, %v2744
        %v2819 = vadd.f32 %v2246, %v2749
        %v2820 = vadd.f32 %v2251, %v2754
        %v2821 = vadd.f32 %v2256, %v2759
        %v2822 = vadd.f32 %v2261, %v2764
        %v2823 = vadd.f32 %v2266, %v2769
        %v2824 = vadd.f32 %v2271, %v2774
        %s2825 = sadd.s32 0, 24
        %s2826 = scalar_lea.vmem %s303, %s2825
        %v2827 = vld [vmem:[%s2826] sm:$0xff]
        %v2828 = vld [vmem:[%s2826 + $0x8] sm:$0xff]
        %v2829 = vld [vmem:[%s2826 + $0x10] sm:$0xff]
        %v2830 = vld [vmem:[%s2826 + $0x18] sm:$0xff]
        %v2831 = vld [vmem:[%s2826 + $0x20] sm:$0xff]
        %v2832 = vld [vmem:[%s2826 + $0x28] sm:$0xff]
        %v2833 = vld [vmem:[%s2826 + $0x30] sm:$0xff]
        %v2834 = vld [vmem:[%s2826 + $0x38] sm:$0xff]
        %v2835 = vld [vmem:[%s2826 + $0x40] sm:$0xff]
        %v2836 = vld [vmem:[%s2826 + $0x48] sm:$0xff]
        %v2837 = vld [vmem:[%s2826 + $0x50] sm:$0xff]
        %v2838 = vld [vmem:[%s2826 + $0x58] sm:$0xff]
        %v2839 = vld [vmem:[%s2826 + $0x60] sm:$0xff]
        %v2840 = vld [vmem:[%s2826 + $0x68] sm:$0xff]
        %v2841 = vld [vmem:[%s2826 + $0x70] sm:$0xff]
        %v2842 = vld [vmem:[%s2826 + $0x78] sm:$0xff]
        %v2843 = vld [vmem:[%s2826 + $0x80] sm:$0xff]
        %v2844 = vld [vmem:[%s2826 + $0x88] sm:$0xff]
        %v2845 = vld [vmem:[%s2826 + $0x90] sm:$0xff]
        %v2846 = vld [vmem:[%s2826 + $0x98] sm:$0xff]
        %v2847 = vld [vmem:[%s2826 + $0xa0] sm:$0xff]
        %v2848 = vld [vmem:[%s2826 + $0xa8] sm:$0xff]
        %v2849 = vld [vmem:[%s2826 + $0xb0] sm:$0xff]
        %v2850 = vld [vmem:[%s2826 + $0xb8] sm:$0xff]
        %v2851 = vld [vmem:[%s2826 + $0xc0] sm:$0xff]
        %v2852 = vld [vmem:[%s2826 + $0xc8] sm:$0xff]
        %v2853 = vld [vmem:[%s2826 + $0xd0] sm:$0xff]
        %v2854 = vld [vmem:[%s2826 + $0xd8] sm:$0xff]
        %v2855 = vld [vmem:[%s2826 + $0xe0] sm:$0xff]
        %v2856 = vld [vmem:[%s2826 + $0xe8] sm:$0xff]
        %v2857 = vld [vmem:[%s2826 + $0xf0] sm:$0xff]
        %v2858 = vld [vmem:[%s2826 + $0xf8] sm:$0xff]
        %v2859 = vld [vmem:[%s2826 + $0x100] sm:$0xff]
        %v2860 = vld [vmem:[%s2826 + $0x108] sm:$0xff]
        %v2861 = vld [vmem:[%s2826 + $0x110] sm:$0xff]
        %v2862 = vld [vmem:[%s2826 + $0x118] sm:$0xff]
        %v2863 = vld [vmem:[%s2826 + $0x120] sm:$0xff]
        %v2864 = vld [vmem:[%s2826 + $0x128] sm:$0xff]
        %v2865 = vld [vmem:[%s2826 + $0x130] sm:$0xff]
        %v2866 = vld [vmem:[%s2826 + $0x138] sm:$0xff]
        %v2867 = vld [vmem:[%s2826 + $0x140] sm:$0xff]
        %v2868 = vld [vmem:[%s2826 + $0x148] sm:$0xff]
        %v2869 = vld [vmem:[%s2826 + $0x150] sm:$0xff]
        %v2870 = vld [vmem:[%s2826 + $0x158] sm:$0xff]
        %v2871 = vld [vmem:[%s2826 + $0x160] sm:$0xff]
        %v2872 = vld [vmem:[%s2826 + $0x168] sm:$0xff]
        %v2873 = vld [vmem:[%s2826 + $0x170] sm:$0xff]
        %v2874 = vld [vmem:[%s2826 + $0x178] sm:$0xff]
        %v2875 = vld [vmem:[%s1 + $0xc] sm:$0xf]
        %v2877 = vsel %vm1368, %v2827, 0
        %v2880 = vsel %vm1368, %v2828, 0
        %v2883 = vsel %vm1368, %v2829, 0
        %v2886 = vsel %vm1368, %v2830, 0
        %v2889 = vsel %vm1368, %v2831, 0
        %v2892 = vsel %vm1368, %v2832, 0
        %v2895 = vsel %vm1368, %v2833, 0
        %v2898 = vsel %vm1368, %v2834, 0
        %v2901 = vsel %vm1368, %v2835, 0
        %v2904 = vsel %vm1368, %v2836, 0
        %v2907 = vsel %vm1368, %v2837, 0
        %v2910 = vsel %vm1368, %v2838, 0
        %v2913 = vsel %vm1368, %v2839, 0
        %v2916 = vsel %vm1368, %v2840, 0
        %v2919 = vsel %vm1368, %v2841, 0
        %v2922 = vsel %vm1368, %v2842, 0
        %v2925 = vsel %vm1368, %v2843, 0
        %v2928 = vsel %vm1368, %v2844, 0
        %v2931 = vsel %vm1368, %v2845, 0
        %v2934 = vsel %vm1368, %v2846, 0
        %v2937 = vsel %vm1368, %v2847, 0
        %v2940 = vsel %vm1368, %v2848, 0
        %v2943 = vsel %vm1368, %v2849, 0
        %v2946 = vsel %vm1368, %v2850, 0
        %v2949 = vsel %vm1368, %v2851, 0
        %v2952 = vsel %vm1368, %v2852, 0
        %v2955 = vsel %vm1368, %v2853, 0
        %v2958 = vsel %vm1368, %v2854, 0
        %v2961 = vsel %vm1368, %v2855, 0
        %v2964 = vsel %vm1368, %v2856, 0
        %v2967 = vsel %vm1368, %v2857, 0
        %v2970 = vsel %vm1368, %v2858, 0
        %v2973 = vsel %vm1368, %v2859, 0
        %v2976 = vsel %vm1368, %v2860, 0
        %v2979 = vsel %vm1368, %v2861, 0
        %v2982 = vsel %vm1368, %v2862, 0
        %v2985 = vsel %vm1368, %v2863, 0
        %v2988 = vsel %vm1368, %v2864, 0
        %v2991 = vsel %vm1368, %v2865, 0
        %v2994 = vsel %vm1368, %v2866, 0
        %v2997 = vsel %vm1368, %v2867, 0
        %v3000 = vsel %vm1368, %v2868, 0
        %v3003 = vsel %vm1368, %v2869, 0
        %v3006 = vsel %vm1368, %v2870, 0
        %v3009 = vsel %vm1368, %v2871, 0
        %v3012 = vsel %vm1368, %v2872, 0
        %v3015 = vsel %vm1368, %v2873, 0
        %v3018 = vsel %vm1368, %v2874, 0
        %v3021 = vsel %vm1513, %v2875, 0
        %3023 = vmatprep.subr.mxu0 0.0
        %3024 = vmatpush1.msra.mxu0 %v3021
        %3025 = vmatprep.subr.mxu0 0.0
        %3026 = vmatpush1.msra.mxu0 0.0
        %3027 = vmatprep.subr.mxu0 0.0
        %3028 = vmatpush1.msra.mxu0 0.0
        %3029 = vmatprep.subr.mxu0 0.0
        %3030 = vmatpush1.msra.mxu0 0.0
        %3031 = vmatprep.subr.mxu0 0.0
        %3032 = vmatpush1.msra.mxu0 0.0
        %3033 = vmatprep.subr.mxu0 0.0
        %3034 = vmatpush1.msra.mxu0 0.0
        %3035 = vmatprep.subr.mxu0 0.0
        %3036 = vmatpush1.msra.mxu0 0.0
        %3037 = vmatprep.subr.mxu0 0.0
        %3038 = vmatpush1.msra.mxu0 0.0
        %3039 = vmatprep.subr.mxu0 0.0
        %3040 = vmatpush1.msra.mxu0 0.0
        %3041 = vmatprep.subr.mxu0 0.0
        %3042 = vmatpush1.msra.mxu0 0.0
        %3043 = vmatprep.subr.mxu0 0.0
        %3044 = vmatpush1.msra.mxu0 0.0
        %3045 = vmatprep.subr.mxu0 0.0
        %3046 = vmatpush1.msra.mxu0 0.0
        %3047 = vmatprep.subr.mxu0 0.0
        %3048 = vmatpush1.msra.mxu0 0.0
        %3049 = vmatprep.subr.mxu0 0.0
        %3050 = vmatpush1.msra.mxu0 0.0
        %3051 = vmatprep.subr.mxu0 0.0
        %3052 = vmatpush1.msra.mxu0 0.0
        %3053 = vmatprep.subr.mxu0 0.0
        %3054 = vmatpush1.msra.mxu0 0.0
        %3055 = vmatprep.subr.mxu0 0.0
        %3056 = vmatpush1.msra.mxu0 0.0
        %3057 = vmatprep.subr.mxu0 0.0
        %3058 = vmatpush1.msra.mxu0 0.0
        %3059 = vmatprep.subr.mxu0 0.0
        %3060 = vmatpush1.msra.mxu0 0.0
        %3061 = vmatprep.subr.mxu0 0.0
        %3062 = vmatpush1.msra.mxu0 0.0
        %3063 = vmatprep.subr.mxu0 0.0
        %3064 = vmatpush1.msra.mxu0 0.0
        %3065 = vmatprep.subr.mxu0 0.0
        %3066 = vmatpush1.msra.mxu0 0.0
        %3067 = vmatprep.subr.mxu0 0.0
        %3068 = vmatpush1.msra.mxu0 0.0
        %3069 = vmatprep.subr.mxu0 0.0
        %3070 = vmatpush1.msra.mxu0 0.0
        %3071 = vmatprep.subr.mxu0 0.0
        %3072 = vmatpush1.msra.mxu0 0.0
        %3073 = vmatprep.subr.mxu0 0.0
        %3074 = vmatpush1.msra.mxu0 0.0
        %3075 = vmatprep.subr.mxu0 0.0
        %3076 = vmatpush1.msra.mxu0 0.0
        %3077 = vmatprep.subr.mxu0 0.0
        %3078 = vmatpush1.msra.mxu0 0.0
        %3079 = vmatprep.subr.mxu0 0.0
        %3080 = vmatpush1.msra.mxu0 0.0
        %3081 = vmatprep.subr.mxu0 0.0
        %3082 = vmatpush1.msra.mxu0 0.0
        %3083 = vmatprep.subr.mxu0 0.0
        %3084 = vmatpush1.msra.mxu0 0.0
        %3085 = vmatprep.subr.mxu0 0.0
        %3086 = vmatpush1.msra.mxu0 0.0
        %3087 = vmatprep.mubr.f32.mxu0 0.0
        %3088 = vmatmul.mubr.f32.gmra.mrb[0].mxu0 %v2877
        %v3089 = vpop.f32.mrb[0].mxu0
        %v3090 = vadd.f32 0.0, %v3089
        %v3091 = vpop.f32.mrb[0].mxu0
        %3092 = vmatprep.mubr.f32.mxu0 0.0
        %3093 = vmatmul.mubr.f32.gmra.mrb[0].mxu0 %v2880
        %v3094 = vpop.f32.mrb[0].mxu0
        %v3095 = vadd.f32 0.0, %v3094
        %v3096 = vpop.f32.mrb[0].mxu0
        %3097 = vmatprep.mubr.f32.mxu0 0.0
        %3098 = vmatmul.mubr.f32.gmra.mrb[0].mxu0 %v2883
        %v3099 = vpop.f32.mrb[0].mxu0
        %v3100 = vadd.f32 0.0, %v3099
        %v3101 = vpop.f32.mrb[0].mxu0
        %3102 = vmatprep.mubr.f32.mxu0 0.0
        %3103 = vmatmul.mubr.f32.gmra.mrb[0].mxu0 %v2886
        %v3104 = vpop.f32.mrb[0].mxu0
        %v3105 = vadd.f32 0.0, %v3104
        %v3106 = vpop.f32.mrb[0].mxu0
        %3107 = vmatprep.mubr.f32.mxu0 0.0
        %3108 = vmatmul.mubr.f32.gmra.mrb[0].mxu0 %v2889
        %v3109 = vpop.f32.mrb[0].mxu0
        %v3110 = vadd.f32 0.0, %v3109
        %v3111 = vpop.f32.mrb[0].mxu0
        %3112 = vmatprep.mubr.f32.mxu0 0.0
        %3113 = vmatmul.mubr.f32.gmra.mrb[0].mxu0 %v2892
        %v3114 = vpop.f32.mrb[0].mxu0
        %v3115 = vadd.f32 0.0, %v3114
        %v3116 = vpop.f32.mrb[0].mxu0
        %3117 = vmatprep.mubr.f32.mxu0 0.0
        %3118 = vmatmul.mubr.f32.gmra.mrb[0].mxu0 %v2895
        %v3119 = vpop.f32.mrb[0].mxu0
        %v3120 = vadd.f32 0.0, %v3119
        %v3121 = vpop.f32.mrb[0].mxu0
        %3122 = vmatprep.mubr.f32.mxu0 0.0
        %3123 = vmatmul.mubr.f32.gmra.mrb[0].mxu0 %v2898
        %v3124 = vpop.f32.mrb[0].mxu0
        %v3125 = vadd.f32 0.0, %v3124
        %v3126 = vpop.f32.mrb[0].mxu0
        %3127 = vmatprep.mubr.f32.mxu0 0.0
        %3128 = vmatmul.mubr.f32.gmra.mrb[0].mxu0 %v2901
        %v3129 = vpop.f32.mrb[0].mxu0
        %v3130 = vadd.f32 0.0, %v3129
        %v3131 = vpop.f32.mrb[0].mxu0
        %3132 = vmatprep.mubr.f32.mxu0 0.0
        %3133 = vmatmul.mubr.f32.gmra.mrb[0].mxu0 %v2904
        %v3134 = vpop.f32.mrb[0].mxu0
        %v3135 = vadd.f32 0.0, %v3134
        %v3136 = vpop.f32.mrb[0].mxu0
        %3137 = vmatprep.mubr.f32.mxu0 0.0
        %3138 = vmatmul.mubr.f32.gmra.mrb[0].mxu0 %v2907
        %v3139 = vpop.f32.mrb[0].mxu0
        %v3140 = vadd.f32 0.0, %v3139
        %v3141 = vpop.f32.mrb[0].mxu0
        %3142 = vmatprep.mubr.f32.mxu0 0.0
        %3143 = vmatmul.mubr.f32.gmra.mrb[0].mxu0 %v2910
        %v3144 = vpop.f32.mrb[0].mxu0
        %v3145 = vadd.f32 0.0, %v3144
        %v3146 = vpop.f32.mrb[0].mxu0
        %3147 = vmatprep.mubr.f32.mxu0 0.0
        %3148 = vmatmul.mubr.f32.gmra.mrb[0].mxu0 %v2913
        %v3149 = vpop.f32.mrb[0].mxu0
        %v3150 = vadd.f32 0.0, %v3149
        %v3151 = vpop.f32.mrb[0].mxu0
        %3152 = vmatprep.mubr.f32.mxu0 0.0
        %3153 = vmatmul.mubr.f32.gmra.mrb[0].mxu0 %v2916
        %v3154 = vpop.f32.mrb[0].mxu0
        %v3155 = vadd.f32 0.0, %v3154
        %v3156 = vpop.f32.mrb[0].mxu0
        %3157 = vmatprep.mubr.f32.mxu0 0.0
        %3158 = vmatmul.mubr.f32.gmra.mrb[0].mxu0 %v2919
        %v3159 = vpop.f32.mrb[0].mxu0
        %v3160 = vadd.f32 0.0, %v3159
        %v3161 = vpop.f32.mrb[0].mxu0
        %3162 = vmatprep.mubr.f32.mxu0 0.0
        %3163 = vmatmul.mubr.f32.gmra.mrb[0].mxu0 %v2922
        %v3164 = vpop.f32.mrb[0].mxu0
        %v3165 = vadd.f32 0.0, %v3164
        %v3166 = vpop.f32.mrb[0].mxu0
        %3167 = vmatprep.mubr.f32.mxu0 0.0
        %3168 = vmatmul.mubr.f32.gmra.mrb[0].mxu0 %v2925
        %v3169 = vpop.f32.mrb[0].mxu0
        %v3170 = vadd.f32 0.0, %v3169
        %v3171 = vpop.f32.mrb[0].mxu0
        %3172 = vmatprep.mubr.f32.mxu0 0.0
        %3173 = vmatmul.mubr.f32.gmra.mrb[0].mxu0 %v2928
        %v3174 = vpop.f32.mrb[0].mxu0
        %v3175 = vadd.f32 0.0, %v3174
        %v3176 = vpop.f32.mrb[0].mxu0
        %3177 = vmatprep.mubr.f32.mxu0 0.0
        %3178 = vmatmul.mubr.f32.gmra.mrb[0].mxu0 %v2931
        %v3179 = vpop.f32.mrb[0].mxu0
        %v3180 = vadd.f32 0.0, %v3179
        %v3181 = vpop.f32.mrb[0].mxu0
        %3182 = vmatprep.mubr.f32.mxu0 0.0
        %3183 = vmatmul.mubr.f32.gmra.mrb[0].mxu0 %v2934
        %v3184 = vpop.f32.mrb[0].mxu0
        %v3185 = vadd.f32 0.0, %v3184
        %v3186 = vpop.f32.mrb[0].mxu0
        %3187 = vmatprep.mubr.f32.mxu0 0.0
        %3188 = vmatmul.mubr.f32.gmra.mrb[0].mxu0 %v2937
        %v3189 = vpop.f32.mrb[0].mxu0
        %v3190 = vadd.f32 0.0, %v3189
        %v3191 = vpop.f32.mrb[0].mxu0
        %3192 = vmatprep.mubr.f32.mxu0 0.0
        %3193 = vmatmul.mubr.f32.gmra.mrb[0].mxu0 %v2940
        %v3194 = vpop.f32.mrb[0].mxu0
        %v3195 = vadd.f32 0.0, %v3194
        %v3196 = vpop.f32.mrb[0].mxu0
        %3197 = vmatprep.mubr.f32.mxu0 0.0
        %3198 = vmatmul.mubr.f32.gmra.mrb[0].mxu0 %v2943
        %v3199 = vpop.f32.mrb[0].mxu0
        %v3200 = vadd.f32 0.0, %v3199
        %v3201 = vpop.f32.mrb[0].mxu0
        %3202 = vmatprep.mubr.f32.mxu0 0.0
        %3203 = vmatmul.mubr.f32.gmra.mrb[0].mxu0 %v2946
        %v3204 = vpop.f32.mrb[0].mxu0
        %v3205 = vadd.f32 0.0, %v3204
        %v3206 = vpop.f32.mrb[0].mxu0
        %3207 = vmatprep.mubr.f32.mxu0 0.0
        %3208 = vmatmul.mubr.f32.gmra.mrb[0].mxu0 %v2949
        %v3209 = vpop.f32.mrb[0].mxu0
        %v3210 = vadd.f32 0.0, %v3209
        %v3211 = vpop.f32.mrb[0].mxu0
        %3212 = vmatprep.mubr.f32.mxu0 0.0
        %3213 = vmatmul.mubr.f32.gmra.mrb[0].mxu0 %v2952
        %v3214 = vpop.f32.mrb[0].mxu0
        %v3215 = vadd.f32 0.0, %v3214
        %v3216 = vpop.f32.mrb[0].mxu0
        %3217 = vmatprep.mubr.f32.mxu0 0.0
        %3218 = vmatmul.mubr.f32.gmra.mrb[0].mxu0 %v2955
        %v3219 = vpop.f32.mrb[0].mxu0
        %v3220 = vadd.f32 0.0, %v3219
        %v3221 = vpop.f32.mrb[0].mxu0
        %3222 = vmatprep.mubr.f32.mxu0 0.0
        %3223 = vmatmul.mubr.f32.gmra.mrb[0].mxu0 %v2958
        %v3224 = vpop.f32.mrb[0].mxu0
        %v3225 = vadd.f32 0.0, %v3224
        %v3226 = vpop.f32.mrb[0].mxu0
        %3227 = vmatprep.mubr.f32.mxu0 0.0
        %3228 = vmatmul.mubr.f32.gmra.mrb[0].mxu0 %v2961
        %v3229 = vpop.f32.mrb[0].mxu0
        %v3230 = vadd.f32 0.0, %v3229
        %v3231 = vpop.f32.mrb[0].mxu0
        %3232 = vmatprep.mubr.f32.mxu0 0.0
        %3233 = vmatmul.mubr.f32.gmra.mrb[0].mxu0 %v2964
        %v3234 = vpop.f32.mrb[0].mxu0
        %v3235 = vadd.f32 0.0, %v3234
        %v3236 = vpop.f32.mrb[0].mxu0
        %3237 = vmatprep.mubr.f32.mxu0 0.0
        %3238 = vmatmul.mubr.f32.gmra.mrb[0].mxu0 %v2967
        %v3239 = vpop.f32.mrb[0].mxu0
        %v3240 = vadd.f32 0.0, %v3239
        %v3241 = vpop.f32.mrb[0].mxu0
        %3242 = vmatprep.mubr.f32.mxu0 0.0
        %3243 = vmatmul.mubr.f32.gmra.mrb[0].mxu0 %v2970
        %v3244 = vpop.f32.mrb[0].mxu0
        %v3245 = vadd.f32 0.0, %v3244
        %v3246 = vpop.f32.mrb[0].mxu0
        %3247 = vmatprep.mubr.f32.mxu0 0.0
        %3248 = vmatmul.mubr.f32.gmra.mrb[0].mxu0 %v2973
        %v3249 = vpop.f32.mrb[0].mxu0
        %v3250 = vadd.f32 0.0, %v3249
        %v3251 = vpop.f32.mrb[0].mxu0
        %3252 = vmatprep.mubr.f32.mxu0 0.0
        %3253 = vmatmul.mubr.f32.gmra.mrb[0].mxu0 %v2976
        %v3254 = vpop.f32.mrb[0].mxu0
        %v3255 = vadd.f32 0.0, %v3254
        %v3256 = vpop.f32.mrb[0].mxu0
        %3257 = vmatprep.mubr.f32.mxu0 0.0
        %3258 = vmatmul.mubr.f32.gmra.mrb[0].mxu0 %v2979
        %v3259 = vpop.f32.mrb[0].mxu0
        %v3260 = vadd.f32 0.0, %v3259
        %v3261 = vpop.f32.mrb[0].mxu0
        %3262 = vmatprep.mubr.f32.mxu0 0.0
        %3263 = vmatmul.mubr.f32.gmra.mrb[0].mxu0 %v2982
        %v3264 = vpop.f32.mrb[0].mxu0
        %v3265 = vadd.f32 0.0, %v3264
        %v3266 = vpop.f32.mrb[0].mxu0
        %3267 = vmatprep.mubr.f32.mxu0 0.0
        %3268 = vmatmul.mubr.f32.gmra.mrb[0].mxu0 %v2985
        %v3269 = vpop.f32.mrb[0].mxu0
        %v3270 = vadd.f32 0.0, %v3269
        %v3271 = vpop.f32.mrb[0].mxu0
        %3272 = vmatprep.mubr.f32.mxu0 0.0
        %3273 = vmatmul.mubr.f32.gmra.mrb[0].mxu0 %v2988
        %v3274 = vpop.f32.mrb[0].mxu0
        %v3275 = vadd.f32 0.0, %v3274
        %v3276 = vpop.f32.mrb[0].mxu0
        %3277 = vmatprep.mubr.f32.mxu0 0.0
        %3278 = vmatmul.mubr.f32.gmra.mrb[0].mxu0 %v2991
        %v3279 = vpop.f32.mrb[0].mxu0
        %v3280 = vadd.f32 0.0, %v3279
        %v3281 = vpop.f32.mrb[0].mxu0
        %3282 = vmatprep.mubr.f32.mxu0 0.0
        %3283 = vmatmul.mubr.f32.gmra.mrb[0].mxu0 %v2994
        %v3284 = vpop.f32.mrb[0].mxu0
        %v3285 = vadd.f32 0.0, %v3284
        %v3286 = vpop.f32.mrb[0].mxu0
        %3287 = vmatprep.mubr.f32.mxu0 0.0
        %3288 = vmatmul.mubr.f32.gmra.mrb[0].mxu0 %v2997
        %v3289 = vpop.f32.mrb[0].mxu0
        %v3290 = vadd.f32 0.0, %v3289
        %v3291 = vpop.f32.mrb[0].mxu0
        %3292 = vmatprep.mubr.f32.mxu0 0.0
        %3293 = vmatmul.mubr.f32.gmra.mrb[0].mxu0 %v3000
        %v3294 = vpop.f32.mrb[0].mxu0
        %v3295 = vadd.f32 0.0, %v3294
        %v3296 = vpop.f32.mrb[0].mxu0
        %3297 = vmatprep.mubr.f32.mxu0 0.0
        %3298 = vmatmul.mubr.f32.gmra.mrb[0].mxu0 %v3003
        %v3299 = vpop.f32.mrb[0].mxu0
        %v3300 = vadd.f32 0.0, %v3299
        %v3301 = vpop.f32.mrb[0].mxu0
        %3302 = vmatprep.mubr.f32.mxu0 0.0
        %3303 = vmatmul.mubr.f32.gmra.mrb[0].mxu0 %v3006
        %v3304 = vpop.f32.mrb[0].mxu0
        %v3305 = vadd.f32 0.0, %v3304
        %v3306 = vpop.f32.mrb[0].mxu0
        %3307 = vmatprep.mubr.f32.mxu0 0.0
        %3308 = vmatmul.mubr.f32.gmra.mrb[0].mxu0 %v3009
        %v3309 = vpop.f32.mrb[0].mxu0
        %v3310 = vadd.f32 0.0, %v3309
        %v3311 = vpop.f32.mrb[0].mxu0
        %3312 = vmatprep.mubr.f32.mxu0 0.0
        %3313 = vmatmul.mubr.f32.gmra.mrb[0].mxu0 %v3012
        %v3314 = vpop.f32.mrb[0].mxu0
        %v3315 = vadd.f32 0.0, %v3314
        %v3316 = vpop.f32.mrb[0].mxu0
        %3317 = vmatprep.mubr.f32.mxu0 0.0
        %3318 = vmatmul.mubr.f32.gmra.mrb[0].mxu0 %v3015
        %v3319 = vpop.f32.mrb[0].mxu0
        %v3320 = vadd.f32 0.0, %v3319
        %v3321 = vpop.f32.mrb[0].mxu0
        %3322 = vmatprep.mubr.f32.mxu0 0.0
        %3323 = vmatmul.mubr.f32.gmra.mrb[0].mxu0 %v3018
        %v3324 = vpop.f32.mrb[0].mxu0
        %v3325 = vadd.f32 0.0, %v3324
        %v3326 = vpop.f32.mrb[0].mxu0
        %3327 = vdwg.mxu0
        %v3328 = vadd.f32 %v2777, %v3090
        %v3329 = vadd.f32 %v2778, %v3095
        %v3330 = vadd.f32 %v2779, %v3100
        %v3331 = vadd.f32 %v2780, %v3105
        %v3332 = vadd.f32 %v2781, %v3110
        %v3333 = vadd.f32 %v2782, %v3115
        %v3334 = vadd.f32 %v2783, %v3120
        %v3335 = vadd.f32 %v2784, %v3125
        %v3336 = vadd.f32 %v2785, %v3130
        %v3337 = vadd.f32 %v2786, %v3135
        %v3338 = vadd.f32 %v2787, %v3140
        %v3339 = vadd.f32 %v2788, %v3145
        %v3340 = vadd.f32 %v2789, %v3150
        %v3341 = vadd.f32 %v2790, %v3155
        %v3342 = vadd.f32 %v2791, %v3160
        %v3343 = vadd.f32 %v2792, %v3165
        %v3344 = vadd.f32 %v2793, %v3170
        %v3345 = vadd.f32 %v2794, %v3175
        %v3346 = vadd.f32 %v2795, %v3180
        %v3347 = vadd.f32 %v2796, %v3185
        %v3348 = vadd.f32 %v2797, %v3190
        %v3349 = vadd.f32 %v2798, %v3195
        %v3350 = vadd.f32 %v2799, %v3200
        %v3351 = vadd.f32 %v2800, %v3205
        %v3352 = vadd.f32 %v2801, %v3210
        %v3353 = vadd.f32 %v2802, %v3215
        %v3354 = vadd.f32 %v2803, %v3220
        %v3355 = vadd.f32 %v2804, %v3225
        %v3356 = vadd.f32 %v2805, %v3230
        %v3357 = vadd.f32 %v2806, %v3235
        %v3358 = vadd.f32 %v2807, %v3240
        %v3359 = vadd.f32 %v2808, %v3245
        %v3360 = vadd.f32 %v2809, %v3250
        %v3361 = vadd.f32 %v2810, %v3255
        %v3362 = vadd.f32 %v2811, %v3260
        %v3363 = vadd.f32 %v2812, %v3265
        %v3364 = vadd.f32 %v2813, %v3270
        %v3365 = vadd.f32 %v2814, %v3275
        %v3366 = vadd.f32 %v2815, %v3280
        %v3367 = vadd.f32 %v2816, %v3285
        %v3368 = vadd.f32 %v2817, %v3290
        %v3369 = vadd.f32 %v2818, %v3295
        %v3370 = vadd.f32 %v2819, %v3300
        %v3371 = vadd.f32 %v2820, %v3305
        %v3372 = vadd.f32 %v2821, %v3310
        %v3373 = vadd.f32 %v2822, %v3315
        %v3374 = vadd.f32 %v2823, %v3320
        %v3375 = vadd.f32 %v2824, %v3325
        %s3376 = sadd.s32 0, 25
        %s3377 = scalar_lea.vmem %s303, %s3376
        %v3378 = vld [vmem:[%s3377] sm:$0xff]
        %v3379 = vld [vmem:[%s3377 + $0x8] sm:$0xff]
        %v3380 = vld [vmem:[%s3377 + $0x10] sm:$0xff]
        %v3381 = vld [vmem:[%s3377 + $0x18] sm:$0xff]
        %v3382 = vld [vmem:[%s3377 + $0x20] sm:$0xff]
        %v3383 = vld [vmem:[%s3377 + $0x28] sm:$0xff]
        %v3384 = vld [vmem:[%s3377 + $0x30] sm:$0xff]
        %v3385 = vld [vmem:[%s3377 + $0x38] sm:$0xff]
        %v3386 = vld [vmem:[%s3377 + $0x40] sm:$0xff]
        %v3387 = vld [vmem:[%s3377 + $0x48] sm:$0xff]
        %v3388 = vld [vmem:[%s3377 + $0x50] sm:$0xff]
        %v3389 = vld [vmem:[%s3377 + $0x58] sm:$0xff]
        %v3390 = vld [vmem:[%s3377 + $0x60] sm:$0xff]
        %v3391 = vld [vmem:[%s3377 + $0x68] sm:$0xff]
        %v3392 = vld [vmem:[%s3377 + $0x70] sm:$0xff]
        %v3393 = vld [vmem:[%s3377 + $0x78] sm:$0xff]
        %v3394 = vld [vmem:[%s3377 + $0x80] sm:$0xff]
        %v3395 = vld [vmem:[%s3377 + $0x88] sm:$0xff]
        %v3396 = vld [vmem:[%s3377 + $0x90] sm:$0xff]
        %v3397 = vld [vmem:[%s3377 + $0x98] sm:$0xff]
        %v3398 = vld [vmem:[%s3377 + $0xa0] sm:$0xff]
        %v3399 = vld [vmem:[%s3377 + $0xa8] sm:$0xff]
        %v3400 = vld [vmem:[%s3377 + $0xb0] sm:$0xff]
        %v3401 = vld [vmem:[%s3377 + $0xb8] sm:$0xff]
        %v3402 = vld [vmem:[%s3377 + $0xc0] sm:$0xff]
        %v3403 = vld [vmem:[%s3377 + $0xc8] sm:$0xff]
        %v3404 = vld [vmem:[%s3377 + $0xd0] sm:$0xff]
        %v3405 = vld [vmem:[%s3377 + $0xd8] sm:$0xff]
        %v3406 = vld [vmem:[%s3377 + $0xe0] sm:$0xff]
        %v3407 = vld [vmem:[%s3377 + $0xe8] sm:$0xff]
        %v3408 = vld [vmem:[%s3377 + $0xf0] sm:$0xff]
        %v3409 = vld [vmem:[%s3377 + $0xf8] sm:$0xff]
        %v3410 = vld [vmem:[%s3377 + $0x100] sm:$0xff]
        %v3411 = vld [vmem:[%s3377 + $0x108] sm:$0xff]
        %v3412 = vld [vmem:[%s3377 + $0x110] sm:$0xff]
        %v3413 = vld [vmem:[%s3377 + $0x118] sm:$0xff]
        %v3414 = vld [vmem:[%s3377 + $0x120] sm:$0xff]
        %v3415 = vld [vmem:[%s3377 + $0x128] sm:$0xff]
        %v3416 = vld [vmem:[%s3377 + $0x130] sm:$0xff]
        %v3417 = vld [vmem:[%s3377 + $0x138] sm:$0xff]
        %v3418 = vld [vmem:[%s3377 + $0x140] sm:$0xff]
        %v3419 = vld [vmem:[%s3377 + $0x148] sm:$0xff]
        %v3420 = vld [vmem:[%s3377 + $0x150] sm:$0xff]
        %v3421 = vld [vmem:[%s3377 + $0x158] sm:$0xff]
        %v3422 = vld [vmem:[%s3377 + $0x160] sm:$0xff]
        %v3423 = vld [vmem:[%s3377 + $0x168] sm:$0xff]
        %v3424 = vld [vmem:[%s3377 + $0x170] sm:$0xff]
        %v3425 = vld [vmem:[%s3377 + $0x178] sm:$0xff]
        %v3426 = vld [vmem:[%s1 + $0x10] sm:$0xf]
        %v3428 = vsel %vm1368, %v3378, 0
        %v3431 = vsel %vm1368, %v3379, 0
        %v3434 = vsel %vm1368, %v3380, 0
        %v3437 = vsel %vm1368, %v3381, 0
        %v3440 = vsel %vm1368, %v3382, 0
        %v3443 = vsel %vm1368, %v3383, 0
        %v3446 = vsel %vm1368, %v3384, 0
        %v3449 = vsel %vm1368, %v3385, 0
        %v3452 = vsel %vm1368, %v3386, 0
        %v3455 = vsel %vm1368, %v3387, 0
        %v3458 = vsel %vm1368, %v3388, 0
        %v3461 = vsel %vm1368, %v3389, 0
        %v3464 = vsel %vm1368, %v3390, 0
        %v3467 = vsel %vm1368, %v3391, 0
        %v3470 = vsel %vm1368, %v3392, 0
        %v3473 = vsel %vm1368, %v3393, 0
        %v3476 = vsel %vm1368, %v3394, 0
        %v3479 = vsel %vm1368, %v3395, 0
        %v3482 = vsel %vm1368, %v3396, 0
        %v3485 = vsel %vm1368, %v3397, 0
        %v3488 = vsel %vm1368, %v3398, 0
        %v3491 = vsel %vm1368, %v3399, 0
        %v3494 = vsel %vm1368, %v3400, 0
        %v3497 = vsel %vm1368, %v3401, 0
        %v3500 = vsel %vm1368, %v3402, 0
        %v3503 = vsel %vm1368, %v3403, 0
        %v3506 = vsel %vm1368, %v3404, 0
        %v3509 = vsel %vm1368, %v3405, 0
        %v3512 = vsel %vm1368, %v3406, 0
        %v3515 = vsel %vm1368, %v3407, 0
        %v3518 = vsel %vm1368, %v3408, 0
        %v3521 = vsel %vm1368, %v3409, 0
        %v3524 = vsel %vm1368, %v3410, 0
        %v3527 = vsel %vm1368, %v3411, 0
        %v3530 = vsel %vm1368, %v3412, 0
        %v3533 = vsel %vm1368, %v3413, 0
        %v3536 = vsel %vm1368, %v3414, 0
        %v3539 = vsel %vm1368, %v3415, 0
        %v3542 = vsel %vm1368, %v3416, 0
        %v3545 = vsel %vm1368, %v3417, 0
        %v3548 = vsel %vm1368, %v3418, 0
        %v3551 = vsel %vm1368, %v3419, 0
        %v3554 = vsel %vm1368, %v3420, 0
        %v3557 = vsel %vm1368, %v3421, 0
        %v3560 = vsel %vm1368, %v3422, 0
        %v3563 = vsel %vm1368, %v3423, 0
        %v3566 = vsel %vm1368, %v3424, 0
        %v3569 = vsel %vm1368, %v3425, 0
        %v3572 = vsel %vm1513, %v3426, 0
        %3574 = vmatprep.subr.mxu0 0.0
        %3575 = vmatpush1.msra.mxu0 %v3572
        %3576 = vmatprep.subr.mxu0 0.0
        %3577 = vmatpush1.msra.mxu0 0.0
        %3578 = vmatprep.subr.mxu0 0.0
        %3579 = vmatpush1.msra.mxu0 0.0
        %3580 = vmatprep.subr.mxu0 0.0
        %3581 = vmatpush1.msra.mxu0 0.0
        %3582 = vmatprep.subr.mxu0 0.0
        %3583 = vmatpush1.msra.mxu0 0.0
        %3584 = vmatprep.subr.mxu0 0.0
        %3585 = vmatpush1.msra.mxu0 0.0
        %3586 = vmatprep.subr.mxu0 0.0
        %3587 = vmatpush1.msra.mxu0 0.0
        %3588 = vmatprep.subr.mxu0 0.0
        %3589 = vmatpush1.msra.mxu0 0.0
        %3590 = vmatprep.subr.mxu0 0.0
        %3591 = vmatpush1.msra.mxu0 0.0
        %3592 = vmatprep.subr.mxu0 0.0
        %3593 = vmatpush1.msra.mxu0 0.0
        %3594 = vmatprep.subr.mxu0 0.0
        %3595 = vmatpush1.msra.mxu0 0.0
        %3596 = vmatprep.subr.mxu0 0.0
        %3597 = vmatpush1.msra.mxu0 0.0
        %3598 = vmatprep.subr.mxu0 0.0
        %3599 = vmatpush1.msra.mxu0 0.0
        %3600 = vmatprep.subr.mxu0 0.0
        %3601 = vmatpush1.msra.mxu0 0.0
        %3602 = vmatprep.subr.mxu0 0.0
        %3603 = vmatpush1.msra.mxu0 0.0
        %3604 = vmatprep.subr.mxu0 0.0
        %3605 = vmatpush1.msra.mxu0 0.0
        %3606 = vmatprep.subr.mxu0 0.0
        %3607 = vmatpush1.msra.mxu0 0.0
        %3608 = vmatprep.subr.mxu0 0.0
        %3609 = vmatpush1.msra.mxu0 0.0
        %3610 = vmatprep.subr.mxu0 0.0
        %3611 = vmatpush1.msra.mxu0 0.0
        %3612 = vmatprep.subr.mxu0 0.0
        %3613 = vmatpush1.msra.mxu0 0.0
        %3614 = vmatprep.subr.mxu0 0.0
        %3615 = vmatpush1.msra.mxu0 0.0
        %3616 = vmatprep.subr.mxu0 0.0
        %3617 = vmatpush1.msra.mxu0 0.0
        %3618 = vmatprep.subr.mxu0 0.0
        %3619 = vmatpush1.msra.mxu0 0.0
        %3620 = vmatprep.subr.mxu0 0.0
        %3621 = vmatpush1.msra.mxu0 0.0
        %3622 = vmatprep.subr.mxu0 0.0
        %3623 = vmatpush1.msra.mxu0 0.0
        %3624 = vmatprep.subr.mxu0 0.0
        %3625 = vmatpush1.msra.mxu0 0.0
        %3626 = vmatprep.subr.mxu0 0.0
        %3627 = vmatpush1.msra.mxu0 0.0
        %3628 = vmatprep.subr.mxu0 0.0
        %3629 = vmatpush1.msra.mxu0 0.0
        %3630 = vmatprep.subr.mxu0 0.0
        %3631 = vmatpush1.msra.mxu0 0.0
        %3632 = vmatprep.subr.mxu0 0.0
        %3633 = vmatpush1.msra.mxu0 0.0
        %3634 = vmatprep.subr.mxu0 0.0
        %3635 = vmatpush1.msra.mxu0 0.0
        %3636 = vmatprep.subr.mxu0 0.0
        %3637 = vmatpush1.msra.mxu0 0.0
        %3638 = vmatprep.mubr.f32.mxu0 0.0
        %3639 = vmatmul.mubr.f32.gmra.mrb[0].mxu0 %v3428
        %v3640 = vpop.f32.mrb[0].mxu0
        %v3641 = vadd.f32 0.0, %v3640
        %v3642 = vpop.f32.mrb[0].mxu0
        %3643 = vmatprep.mubr.f32.mxu0 0.0
        %3644 = vmatmul.mubr.f32.gmra.mrb[0].mxu0 %v3431
        %v3645 = vpop.f32.mrb[0].mxu0
        %v3646 = vadd.f32 0.0, %v3645
        %v3647 = vpop.f32.mrb[0].mxu0
        %3648 = vmatprep.mubr.f32.mxu0 0.0
        %3649 = vmatmul.mubr.f32.gmra.mrb[0].mxu0 %v3434
        %v3650 = vpop.f32.mrb[0].mxu0
        %v3651 = vadd.f32 0.0, %v3650
        %v3652 = vpop.f32.mrb[0].mxu0
        %3653 = vmatprep.mubr.f32.mxu0 0.0
        %3654 = vmatmul.mubr.f32.gmra.mrb[0].mxu0 %v3437
        %v3655 = vpop.f32.mrb[0].mxu0
        %v3656 = vadd.f32 0.0, %v3655
        %v3657 = vpop.f32.mrb[0].mxu0
        %3658 = vmatprep.mubr.f32.mxu0 0.0
        %3659 = vmatmul.mubr.f32.gmra.mrb[0].mxu0 %v3440
        %v3660 = vpop.f32.mrb[0].mxu0
        %v3661 = vadd.f32 0.0, %v3660
        %v3662 = vpop.f32.mrb[0].mxu0
        %3663 = vmatprep.mubr.f32.mxu0 0.0
        %3664 = vmatmul.mubr.f32.gmra.mrb[0].mxu0 %v3443
        %v3665 = vpop.f32.mrb[0].mxu0
        %v3666 = vadd.f32 0.0, %v3665
        %v3667 = vpop.f32.mrb[0].mxu0
        %3668 = vmatprep.mubr.f32.mxu0 0.0
        %3669 = vmatmul.mubr.f32.gmra.mrb[0].mxu0 %v3446
        %v3670 = vpop.f32.mrb[0].mxu0
        %v3671 = vadd.f32 0.0, %v3670
        %v3672 = vpop.f32.mrb[0].mxu0
        %3673 = vmatprep.mubr.f32.mxu0 0.0
        %3674 = vmatmul.mubr.f32.gmra.mrb[0].mxu0 %v3449
        %v3675 = vpop.f32.mrb[0].mxu0
        %v3676 = vadd.f32 0.0, %v3675
        %v3677 = vpop.f32.mrb[0].mxu0
        %3678 = vmatprep.mubr.f32.mxu0 0.0
        %3679 = vmatmul.mubr.f32.gmra.mrb[0].mxu0 %v3452
        %v3680 = vpop.f32.mrb[0].mxu0
        %v3681 = vadd.f32 0.0, %v3680
        %v3682 = vpop.f32.mrb[0].mxu0
        %3683 = vmatprep.mubr.f32.mxu0 0.0
        %3684 = vmatmul.mubr.f32.gmra.mrb[0].mxu0 %v3455
        %v3685 = vpop.f32.mrb[0].mxu0
        %v3686 = vadd.f32 0.0, %v3685
        %v3687 = vpop.f32.mrb[0].mxu0
        %3688 = vmatprep.mubr.f32.mxu0 0.0
        %3689 = vmatmul.mubr.f32.gmra.mrb[0].mxu0 %v3458
        %v3690 = vpop.f32.mrb[0].mxu0
        %v3691 = vadd.f32 0.0, %v3690
        %v3692 = vpop.f32.mrb[0].mxu0
        %3693 = vmatprep.mubr.f32.mxu0 0.0
        %3694 = vmatmul.mubr.f32.gmra.mrb[0].mxu0 %v3461
        %v3695 = vpop.f32.mrb[0].mxu0
        %v3696 = vadd.f32 0.0, %v3695
        %v3697 = vpop.f32.mrb[0].mxu0
        %3698 = vmatprep.mubr.f32.mxu0 0.0
        %3699 = vmatmul.mubr.f32.gmra.mrb[0].mxu0 %v3464
        %v3700 = vpop.f32.mrb[0].mxu0
        %v3701 = vadd.f32 0.0, %v3700
        %v3702 = vpop.f32.mrb[0].mxu0
        %3703 = vmatprep.mubr.f32.mxu0 0.0
        %3704 = vmatmul.mubr.f32.gmra.mrb[0].mxu0 %v3467
        %v3705 = vpop.f32.mrb[0].mxu0
        %v3706 = vadd.f32 0.0, %v3705
        %v3707 = vpop.f32.mrb[0].mxu0
        %3708 = vmatprep.mubr.f32.mxu0 0.0
        %3709 = vmatmul.mubr.f32.gmra.mrb[0].mxu0 %v3470
        %v3710 = vpop.f32.mrb[0].mxu0
        %v3711 = vadd.f32 0.0, %v3710
        %v3712 = vpop.f32.mrb[0].mxu0
        %3713 = vmatprep.mubr.f32.mxu0 0.0
        %3714 = vmatmul.mubr.f32.gmra.mrb[0].mxu0 %v3473
        %v3715 = vpop.f32.mrb[0].mxu0
        %v3716 = vadd.f32 0.0, %v3715
        %v3717 = vpop.f32.mrb[0].mxu0
        %3718 = vmatprep.mubr.f32.mxu0 0.0
        %3719 = vmatmul.mubr.f32.gmra.mrb[0].mxu0 %v3476
        %v3720 = vpop.f32.mrb[0].mxu0
        %v3721 = vadd.f32 0.0, %v3720
        %v3722 = vpop.f32.mrb[0].mxu0
        %3723 = vmatprep.mubr.f32.mxu0 0.0
        %3724 = vmatmul.mubr.f32.gmra.mrb[0].mxu0 %v3479
        %v3725 = vpop.f32.mrb[0].mxu0
        %v3726 = vadd.f32 0.0, %v3725
        %v3727 = vpop.f32.mrb[0].mxu0
        %3728 = vmatprep.mubr.f32.mxu0 0.0
        %3729 = vmatmul.mubr.f32.gmra.mrb[0].mxu0 %v3482
        %v3730 = vpop.f32.mrb[0].mxu0
        %v3731 = vadd.f32 0.0, %v3730
        %v3732 = vpop.f32.mrb[0].mxu0
        %3733 = vmatprep.mubr.f32.mxu0 0.0
        %3734 = vmatmul.mubr.f32.gmra.mrb[0].mxu0 %v3485
        %v3735 = vpop.f32.mrb[0].mxu0
        %v3736 = vadd.f32 0.0, %v3735
        %v3737 = vpop.f32.mrb[0].mxu0
        %3738 = vmatprep.mubr.f32.mxu0 0.0
        %3739 = vmatmul.mubr.f32.gmra.mrb[0].mxu0 %v3488
        %v3740 = vpop.f32.mrb[0].mxu0
        %v3741 = vadd.f32 0.0, %v3740
        %v3742 = vpop.f32.mrb[0].mxu0
        %3743 = vmatprep.mubr.f32.mxu0 0.0
        %3744 = vmatmul.mubr.f32.gmra.mrb[0].mxu0 %v3491
        %v3745 = vpop.f32.mrb[0].mxu0
        %v3746 = vadd.f32 0.0, %v3745
        %v3747 = vpop.f32.mrb[0].mxu0
        %3748 = vmatprep.mubr.f32.mxu0 0.0
        %3749 = vmatmul.mubr.f32.gmra.mrb[0].mxu0 %v3494
        %v3750 = vpop.f32.mrb[0].mxu0
        %v3751 = vadd.f32 0.0, %v3750
        %v3752 = vpop.f32.mrb[0].mxu0
        %3753 = vmatprep.mubr.f32.mxu0 0.0
        %3754 = vmatmul.mubr.f32.gmra.mrb[0].mxu0 %v3497
        %v3755 = vpop.f32.mrb[0].mxu0
        %v3756 = vadd.f32 0.0, %v3755
        %v3757 = vpop.f32.mrb[0].mxu0
        %3758 = vmatprep.mubr.f32.mxu0 0.0
        %3759 = vmatmul.mubr.f32.gmra.mrb[0].mxu0 %v3500
        %v3760 = vpop.f32.mrb[0].mxu0
        %v3761 = vadd.f32 0.0, %v3760
        %v3762 = vpop.f32.mrb[0].mxu0
        %3763 = vmatprep.mubr.f32.mxu0 0.0
        %3764 = vmatmul.mubr.f32.gmra.mrb[0].mxu0 %v3503
        %v3765 = vpop.f32.mrb[0].mxu0
        %v3766 = vadd.f32 0.0, %v3765
        %v3767 = vpop.f32.mrb[0].mxu0
        %3768 = vmatprep.mubr.f32.mxu0 0.0
        %3769 = vmatmul.mubr.f32.gmra.mrb[0].mxu0 %v3506
        %v3770 = vpop.f32.mrb[0].mxu0
        %v3771 = vadd.f32 0.0, %v3770
        %v3772 = vpop.f32.mrb[0].mxu0
        %3773 = vmatprep.mubr.f32.mxu0 0.0
        %3774 = vmatmul.mubr.f32.gmra.mrb[0].mxu0 %v3509
        %v3775 = vpop.f32.mrb[0].mxu0
        %v3776 = vadd.f32 0.0, %v3775
        %v3777 = vpop.f32.mrb[0].mxu0
        %3778 = vmatprep.mubr.f32.mxu0 0.0
        %3779 = vmatmul.mubr.f32.gmra.mrb[0].mxu0 %v3512
        %v3780 = vpop.f32.mrb[0].mxu0
        %v3781 = vadd.f32 0.0, %v3780
        %v3782 = vpop.f32.mrb[0].mxu0
        %3783 = vmatprep.mubr.f32.mxu0 0.0
        %3784 = vmatmul.mubr.f32.gmra.mrb[0].mxu0 %v3515
        %v3785 = vpop.f32.mrb[0].mxu0
        %v3786 = vadd.f32 0.0, %v3785
        %v3787 = vpop.f32.mrb[0].mxu0
        %3788 = vmatprep.mubr.f32.mxu0 0.0
        %3789 = vmatmul.mubr.f32.gmra.mrb[0].mxu0 %v3518
        %v3790 = vpop.f32.mrb[0].mxu0
        %v3791 = vadd.f32 0.0, %v3790
        %v3792 = vpop.f32.mrb[0].mxu0
        %3793 = vmatprep.mubr.f32.mxu0 0.0
        %3794 = vmatmul.mubr.f32.gmra.mrb[0].mxu0 %v3521
        %v3795 = vpop.f32.mrb[0].mxu0
        %v3796 = vadd.f32 0.0, %v3795
        %v3797 = vpop.f32.mrb[0].mxu0
        %3798 = vmatprep.mubr.f32.mxu0 0.0
        %3799 = vmatmul.mubr.f32.gmra.mrb[0].mxu0 %v3524
        %v3800 = vpop.f32.mrb[0].mxu0
        %v3801 = vadd.f32 0.0, %v3800
        %v3802 = vpop.f32.mrb[0].mxu0
        %3803 = vmatprep.mubr.f32.mxu0 0.0
        %3804 = vmatmul.mubr.f32.gmra.mrb[0].mxu0 %v3527
        %v3805 = vpop.f32.mrb[0].mxu0
        %v3806 = vadd.f32 0.0, %v3805
        %v3807 = vpop.f32.mrb[0].mxu0
        %3808 = vmatprep.mubr.f32.mxu0 0.0
        %3809 = vmatmul.mubr.f32.gmra.mrb[0].mxu0 %v3530
        %v3810 = vpop.f32.mrb[0].mxu0
        %v3811 = vadd.f32 0.0, %v3810
        %v3812 = vpop.f32.mrb[0].mxu0
        %3813 = vmatprep.mubr.f32.mxu0 0.0
        %3814 = vmatmul.mubr.f32.gmra.mrb[0].mxu0 %v3533
        %v3815 = vpop.f32.mrb[0].mxu0
        %v3816 = vadd.f32 0.0, %v3815
        %v3817 = vpop.f32.mrb[0].mxu0
        %3818 = vmatprep.mubr.f32.mxu0 0.0
        %3819 = vmatmul.mubr.f32.gmra.mrb[0].mxu0 %v3536
        %v3820 = vpop.f32.mrb[0].mxu0
        %v3821 = vadd.f32 0.0, %v3820
        %v3822 = vpop.f32.mrb[0].mxu0
        %3823 = vmatprep.mubr.f32.mxu0 0.0
        %3824 = vmatmul.mubr.f32.gmra.mrb[0].mxu0 %v3539
        %v3825 = vpop.f32.mrb[0].mxu0
        %v3826 = vadd.f32 0.0, %v3825
        %v3827 = vpop.f32.mrb[0].mxu0
        %3828 = vmatprep.mubr.f32.mxu0 0.0
        %3829 = vmatmul.mubr.f32.gmra.mrb[0].mxu0 %v3542
        %v3830 = vpop.f32.mrb[0].mxu0
        %v3831 = vadd.f32 0.0, %v3830
        %v3832 = vpop.f32.mrb[0].mxu0
        %3833 = vmatprep.mubr.f32.mxu0 0.0
        %3834 = vmatmul.mubr.f32.gmra.mrb[0].mxu0 %v3545
        %v3835 = vpop.f32.mrb[0].mxu0
        %v3836 = vadd.f32 0.0, %v3835
        %v3837 = vpop.f32.mrb[0].mxu0
        %3838 = vmatprep.mubr.f32.mxu0 0.0
        %3839 = vmatmul.mubr.f32.gmra.mrb[0].mxu0 %v3548
        %v3840 = vpop.f32.mrb[0].mxu0
        %v3841 = vadd.f32 0.0, %v3840
        %v3842 = vpop.f32.mrb[0].mxu0
        %3843 = vmatprep.mubr.f32.mxu0 0.0
        %3844 = vmatmul.mubr.f32.gmra.mrb[0].mxu0 %v3551
        %v3845 = vpop.f32.mrb[0].mxu0
        %v3846 = vadd.f32 0.0, %v3845
        %v3847 = vpop.f32.mrb[0].mxu0
        %3848 = vmatprep.mubr.f32.mxu0 0.0
        %3849 = vmatmul.mubr.f32.gmra.mrb[0].mxu0 %v3554
        %v3850 = vpop.f32.mrb[0].mxu0
        %v3851 = vadd.f32 0.0, %v3850
        %v3852 = vpop.f32.mrb[0].mxu0
        %3853 = vmatprep.mubr.f32.mxu0 0.0
        %3854 = vmatmul.mubr.f32.gmra.mrb[0].mxu0 %v3557
        %v3855 = vpop.f32.mrb[0].mxu0
        %v3856 = vadd.f32 0.0, %v3855
        %v3857 = vpop.f32.mrb[0].mxu0
        %3858 = vmatprep.mubr.f32.mxu0 0.0
        %3859 = vmatmul.mubr.f32.gmra.mrb[0].mxu0 %v3560
        %v3860 = vpop.f32.mrb[0].mxu0
        %v3861 = vadd.f32 0.0, %v3860
        %v3862 = vpop.f32.mrb[0].mxu0
        %3863 = vmatprep.mubr.f32.mxu0 0.0
        %3864 = vmatmul.mubr.f32.gmra.mrb[0].mxu0 %v3563
        %v3865 = vpop.f32.mrb[0].mxu0
        %v3866 = vadd.f32 0.0, %v3865
        %v3867 = vpop.f32.mrb[0].mxu0
        %3868 = vmatprep.mubr.f32.mxu0 0.0
        %3869 = vmatmul.mubr.f32.gmra.mrb[0].mxu0 %v3566
        %v3870 = vpop.f32.mrb[0].mxu0
        %v3871 = vadd.f32 0.0, %v3870
        %v3872 = vpop.f32.mrb[0].mxu0
        %3873 = vmatprep.mubr.f32.mxu0 0.0
        %3874 = vmatmul.mubr.f32.gmra.mrb[0].mxu0 %v3569
        %v3875 = vpop.f32.mrb[0].mxu0
        %v3876 = vadd.f32 0.0, %v3875
        %v3877 = vpop.f32.mrb[0].mxu0
        %3878 = vdwg.mxu0
        %v3879 = vadd.f32 %v3328, %v3641
        %v3880 = vadd.f32 %v3329, %v3646
        %v3881 = vadd.f32 %v3330, %v3651
        %v3882 = vadd.f32 %v3331, %v3656
        %v3883 = vadd.f32 %v3332, %v3661
        %v3884 = vadd.f32 %v3333, %v3666
        %v3885 = vadd.f32 %v3334, %v3671
        %v3886 = vadd.f32 %v3335, %v3676
        %v3887 = vadd.f32 %v3336, %v3681
        %v3888 = vadd.f32 %v3337, %v3686
        %v3889 = vadd.f32 %v3338, %v3691
        %v3890 = vadd.f32 %v3339, %v3696
        %v3891 = vadd.f32 %v3340, %v3701
        %v3892 = vadd.f32 %v3341, %v3706
        %v3893 = vadd.f32 %v3342, %v3711
        %v3894 = vadd.f32 %v3343, %v3716
        %v3895 = vadd.f32 %v3344, %v3721
        %v3896 = vadd.f32 %v3345, %v3726
        %v3897 = vadd.f32 %v3346, %v3731
        %v3898 = vadd.f32 %v3347, %v3736
        %v3899 = vadd.f32 %v3348, %v3741
        %v3900 = vadd.f32 %v3349, %v3746
        %v3901 = vadd.f32 %v3350, %v3751
        %v3902 = vadd.f32 %v3351, %v3756
        %v3903 = vadd.f32 %v3352, %v3761
        %v3904 = vadd.f32 %v3353, %v3766
        %v3905 = vadd.f32 %v3354, %v3771
        %v3906 = vadd.f32 %v3355, %v3776
        %v3907 = vadd.f32 %v3356, %v3781
        %v3908 = vadd.f32 %v3357, %v3786
        %v3909 = vadd.f32 %v3358, %v3791
        %v3910 = vadd.f32 %v3359, %v3796
        %v3911 = vadd.f32 %v3360, %v3801
        %v3912 = vadd.f32 %v3361, %v3806
        %v3913 = vadd.f32 %v3362, %v3811
        %v3914 = vadd.f32 %v3363, %v3816
        %v3915 = vadd.f32 %v3364, %v3821
        %v3916 = vadd.f32 %v3365, %v3826
        %v3917 = vadd.f32 %v3366, %v3831
        %v3918 = vadd.f32 %v3367, %v3836
        %v3919 = vadd.f32 %v3368, %v3841
        %v3920 = vadd.f32 %v3369, %v3846
        %v3921 = vadd.f32 %v3370, %v3851
        %v3922 = vadd.f32 %v3371, %v3856
        %v3923 = vadd.f32 %v3372, %v3861
        %v3924 = vadd.f32 %v3373, %v3866
        %v3925 = vadd.f32 %v3374, %v3871
        %v3926 = vadd.f32 %v3375, %v3876
        %s3927 = sadd.s32 0, 26
        %s3928 = scalar_lea.vmem %s303, %s3927
        %v3929 = vld [vmem:[%s3928] sm:$0xff]
        %v3930 = vld [vmem:[%s3928 + $0x8] sm:$0xff]
        %v3931 = vld [vmem:[%s3928 + $0x10] sm:$0xff]
        %v3932 = vld [vmem:[%s3928 + $0x18] sm:$0xff]
        %v3933 = vld [vmem:[%s3928 + $0x20] sm:$0xff]
        %v3934 = vld [vmem:[%s3928 + $0x28] sm:$0xff]
        %v3935 = vld [vmem:[%s3928 + $0x30] sm:$0xff]
        %v3936 = vld [vmem:[%s3928 + $0x38] sm:$0xff]
        %v3937 = vld [vmem:[%s3928 + $0x40] sm:$0xff]
        %v3938 = vld [vmem:[%s3928 + $0x48] sm:$0xff]
        %v3939 = vld [vmem:[%s3928 + $0x50] sm:$0xff]
        %v3940 = vld [vmem:[%s3928 + $0x58] sm:$0xff]
        %v3941 = vld [vmem:[%s3928 + $0x60] sm:$0xff]
        %v3942 = vld [vmem:[%s3928 + $0x68] sm:$0xff]
        %v3943 = vld [vmem:[%s3928 + $0x70] sm:$0xff]
        %v3944 = vld [vmem:[%s3928 + $0x78] sm:$0xff]
        %v3945 = vld [vmem:[%s3928 + $0x80] sm:$0xff]
        %v3946 = vld [vmem:[%s3928 + $0x88] sm:$0xff]
        %v3947 = vld [vmem:[%s3928 + $0x90] sm:$0xff]
        %v3948 = vld [vmem:[%s3928 + $0x98] sm:$0xff]
        %v3949 = vld [vmem:[%s3928 + $0xa0] sm:$0xff]
        %v3950 = vld [vmem:[%s3928 + $0xa8] sm:$0xff]
        %v3951 = vld [vmem:[%s3928 + $0xb0] sm:$0xff]
        %v3952 = vld [vmem:[%s3928 + $0xb8] sm:$0xff]
        %v3953 = vld [vmem:[%s3928 + $0xc0] sm:$0xff]
        %v3954 = vld [vmem:[%s3928 + $0xc8] sm:$0xff]
        %v3955 = vld [vmem:[%s3928 + $0xd0] sm:$0xff]
        %v3956 = vld [vmem:[%s3928 + $0xd8] sm:$0xff]
        %v3957 = vld [vmem:[%s3928 + $0xe0] sm:$0xff]
        %v3958 = vld [vmem:[%s3928 + $0xe8] sm:$0xff]
        %v3959 = vld [vmem:[%s3928 + $0xf0] sm:$0xff]
        %v3960 = vld [vmem:[%s3928 + $0xf8] sm:$0xff]
        %v3961 = vld [vmem:[%s3928 + $0x100] sm:$0xff]
        %v3962 = vld [vmem:[%s3928 + $0x108] sm:$0xff]
        %v3963 = vld [vmem:[%s3928 + $0x110] sm:$0xff]
        %v3964 = vld [vmem:[%s3928 + $0x118] sm:$0xff]
        %v3965 = vld [vmem:[%s3928 + $0x120] sm:$0xff]
        %v3966 = vld [vmem:[%s3928 + $0x128] sm:$0xff]
        %v3967 = vld [vmem:[%s3928 + $0x130] sm:$0xff]
        %v3968 = vld [vmem:[%s3928 + $0x138] sm:$0xff]
        %v3969 = vld [vmem:[%s3928 + $0x140] sm:$0xff]
        %v3970 = vld [vmem:[%s3928 + $0x148] sm:$0xff]
        %v3971 = vld [vmem:[%s3928 + $0x150] sm:$0xff]
        %v3972 = vld [vmem:[%s3928 + $0x158] sm:$0xff]
        %v3973 = vld [vmem:[%s3928 + $0x160] sm:$0xff]
        %v3974 = vld [vmem:[%s3928 + $0x168] sm:$0xff]
        %v3975 = vld [vmem:[%s3928 + $0x170] sm:$0xff]
        %v3976 = vld [vmem:[%s3928 + $0x178] sm:$0xff]
        %v3977 = vld [vmem:[%s1 + $0x14] sm:$0xf]
        %v3979 = vsel %vm1368, %v3929, 0
        %v3982 = vsel %vm1368, %v3930, 0
        %v3985 = vsel %vm1368, %v3931, 0
        %v3988 = vsel %vm1368, %v3932, 0
        %v3991 = vsel %vm1368, %v3933, 0
        %v3994 = vsel %vm1368, %v3934, 0
        %v3997 = vsel %vm1368, %v3935, 0
        %v4000 = vsel %vm1368, %v3936, 0
        %v4003 = vsel %vm1368, %v3937, 0
        %v4006 = vsel %vm1368, %v3938, 0
        %v4009 = vsel %vm1368, %v3939, 0
        %v4012 = vsel %vm1368, %v3940, 0
        %v4015 = vsel %vm1368, %v3941, 0
        %v4018 = vsel %vm1368, %v3942, 0
        %v4021 = vsel %vm1368, %v3943, 0
        %v4024 = vsel %vm1368, %v3944, 0
        %v4027 = vsel %vm1368, %v3945, 0
        %v4030 = vsel %vm1368, %v3946, 0
        %v4033 = vsel %vm1368, %v3947, 0
        %v4036 = vsel %vm1368, %v3948, 0
        %v4039 = vsel %vm1368, %v3949, 0
        %v4042 = vsel %vm1368, %v3950, 0
        %v4045 = vsel %vm1368, %v3951, 0
        %v4048 = vsel %vm1368, %v3952, 0
        %v4051 = vsel %vm1368, %v3953, 0
        %v4054 = vsel %vm1368, %v3954, 0
        %v4057 = vsel %vm1368, %v3955, 0
        %v4060 = vsel %vm1368, %v3956, 0
        %v4063 = vsel %vm1368, %v3957, 0
        %v4066 = vsel %vm1368, %v3958, 0
        %v4069 = vsel %vm1368, %v3959, 0
        %v4072 = vsel %vm1368, %v3960, 0
        %v4075 = vsel %vm1368, %v3961, 0
        %v4078 = vsel %vm1368, %v3962, 0
        %v4081 = vsel %vm1368, %v3963, 0
        %v4084 = vsel %vm1368, %v3964, 0
        %v4087 = vsel %vm1368, %v3965, 0
        %v4090 = vsel %vm1368, %v3966, 0
        %v4093 = vsel %vm1368, %v3967, 0
        %v4096 = vsel %vm1368, %v3968, 0
        %v4099 = vsel %vm1368, %v3969, 0
        %v4102 = vsel %vm1368, %v3970, 0
        %v4105 = vsel %vm1368, %v3971, 0
        %v4108 = vsel %vm1368, %v3972, 0
        %v4111 = vsel %vm1368, %v3973, 0
        %v4114 = vsel %vm1368, %v3974, 0
        %v4117 = vsel %vm1368, %v3975, 0
        %v4120 = vsel %vm1368, %v3976, 0
        %v4123 = vsel %vm1513, %v3977, 0
        %4125 = vmatprep.subr.mxu0 0.0
        %4126 = vmatpush1.msra.mxu0 %v4123
        %4127 = vmatprep.subr.mxu0 0.0
        %4128 = vmatpush1.msra.mxu0 0.0
        %4129 = vmatprep.subr.mxu0 0.0
        %4130 = vmatpush1.msra.mxu0 0.0
        %4131 = vmatprep.subr.mxu0 0.0
        %4132 = vmatpush1.msra.mxu0 0.0
        %4133 = vmatprep.subr.mxu0 0.0
        %4134 = vmatpush1.msra.mxu0 0.0
        %4135 = vmatprep.subr.mxu0 0.0
        %4136 = vmatpush1.msra.mxu0 0.0
        %4137 = vmatprep.subr.mxu0 0.0
        %4138 = vmatpush1.msra.mxu0 0.0
        %4139 = vmatprep.subr.mxu0 0.0
        %4140 = vmatpush1.msra.mxu0 0.0
        %4141 = vmatprep.subr.mxu0 0.0
        %4142 = vmatpush1.msra.mxu0 0.0
        %4143 = vmatprep.subr.mxu0 0.0
        %4144 = vmatpush1.msra.mxu0 0.0
        %4145 = vmatprep.subr.mxu0 0.0
        %4146 = vmatpush1.msra.mxu0 0.0
        %4147 = vmatprep.subr.mxu0 0.0
        %4148 = vmatpush1.msra.mxu0 0.0
        %4149 = vmatprep.subr.mxu0 0.0
        %4150 = vmatpush1.msra.mxu0 0.0
        %4151 = vmatprep.subr.mxu0 0.0
        %4152 = vmatpush1.msra.mxu0 0.0
        %4153 = vmatprep.subr.mxu0 0.0
        %4154 = vmatpush1.msra.mxu0 0.0
        %4155 = vmatprep.subr.mxu0 0.0
        %4156 = vmatpush1.msra.mxu0 0.0
        %4157 = vmatprep.subr.mxu0 0.0
        %4158 = vmatpush1.msra.mxu0 0.0
        %4159 = vmatprep.subr.mxu0 0.0
        %4160 = vmatpush1.msra.mxu0 0.0
        %4161 = vmatprep.subr.mxu0 0.0
        %4162 = vmatpush1.msra.mxu0 0.0
        %4163 = vmatprep.subr.mxu0 0.0
        %4164 = vmatpush1.msra.mxu0 0.0
        %4165 = vmatprep.subr.mxu0 0.0
        %4166 = vmatpush1.msra.mxu0 0.0
        %4167 = vmatprep.subr.mxu0 0.0
        %4168 = vmatpush1.msra.mxu0 0.0
        %4169 = vmatprep.subr.mxu0 0.0
        %4170 = vmatpush1.msra.mxu0 0.0
        %4171 = vmatprep.subr.mxu0 0.0
        %4172 = vmatpush1.msra.mxu0 0.0
        %4173 = vmatprep.subr.mxu0 0.0
        %4174 = vmatpush1.msra.mxu0 0.0
        %4175 = vmatprep.subr.mxu0 0.0
        %4176 = vmatpush1.msra.mxu0 0.0
        %4177 = vmatprep.subr.mxu0 0.0
        %4178 = vmatpush1.msra.mxu0 0.0
        %4179 = vmatprep.subr.mxu0 0.0
        %4180 = vmatpush1.msra.mxu0 0.0
        %4181 = vmatprep.subr.mxu0 0.0
        %4182 = vmatpush1.msra.mxu0 0.0
        %4183 = vmatprep.subr.mxu0 0.0
        %4184 = vmatpush1.msra.mxu0 0.0
        %4185 = vmatprep.subr.mxu0 0.0
        %4186 = vmatpush1.msra.mxu0 0.0
        %4187 = vmatprep.subr.mxu0 0.0
        %4188 = vmatpush1.msra.mxu0 0.0
        %4189 = vmatprep.mubr.f32.mxu0 0.0
        %4190 = vmatmul.mubr.f32.gmra.mrb[0].mxu0 %v3979
        %v4191 = vpop.f32.mrb[0].mxu0
        %v4192 = vadd.f32 0.0, %v4191
        %v4193 = vpop.f32.mrb[0].mxu0
        %4194 = vmatprep.mubr.f32.mxu0 0.0
        %4195 = vmatmul.mubr.f32.gmra.mrb[0].mxu0 %v3982
        %v4196 = vpop.f32.mrb[0].mxu0
        %v4197 = vadd.f32 0.0, %v4196
        %v4198 = vpop.f32.mrb[0].mxu0
        %4199 = vmatprep.mubr.f32.mxu0 0.0
        %4200 = vmatmul.mubr.f32.gmra.mrb[0].mxu0 %v3985
        %v4201 = vpop.f32.mrb[0].mxu0
        %v4202 = vadd.f32 0.0, %v4201
        %v4203 = vpop.f32.mrb[0].mxu0
        %4204 = vmatprep.mubr.f32.mxu0 0.0
        %4205 = vmatmul.mubr.f32.gmra.mrb[0].mxu0 %v3988
        %v4206 = vpop.f32.mrb[0].mxu0
        %v4207 = vadd.f32 0.0, %v4206
        %v4208 = vpop.f32.mrb[0].mxu0
        %4209 = vmatprep.mubr.f32.mxu0 0.0
        %4210 = vmatmul.mubr.f32.gmra.mrb[0].mxu0 %v3991
        %v4211 = vpop.f32.mrb[0].mxu0
        %v4212 = vadd.f32 0.0, %v4211
        %v4213 = vpop.f32.mrb[0].mxu0
        %4214 = vmatprep.mubr.f32.mxu0 0.0
        %4215 = vmatmul.mubr.f32.gmra.mrb[0].mxu0 %v3994
        %v4216 = vpop.f32.mrb[0].mxu0
        %v4217 = vadd.f32 0.0, %v4216
        %v4218 = vpop.f32.mrb[0].mxu0
        %4219 = vmatprep.mubr.f32.mxu0 0.0
        %4220 = vmatmul.mubr.f32.gmra.mrb[0].mxu0 %v3997
        %v4221 = vpop.f32.mrb[0].mxu0
        %v4222 = vadd.f32 0.0, %v4221
        %v4223 = vpop.f32.mrb[0].mxu0
        %4224 = vmatprep.mubr.f32.mxu0 0.0
        %4225 = vmatmul.mubr.f32.gmra.mrb[0].mxu0 %v4000
        %v4226 = vpop.f32.mrb[0].mxu0
        %v4227 = vadd.f32 0.0, %v4226
        %v4228 = vpop.f32.mrb[0].mxu0
        %4229 = vmatprep.mubr.f32.mxu0 0.0
        %4230 = vmatmul.mubr.f32.gmra.mrb[0].mxu0 %v4003
        %v4231 = vpop.f32.mrb[0].mxu0
        %v4232 = vadd.f32 0.0, %v4231
        %v4233 = vpop.f32.mrb[0].mxu0
        %4234 = vmatprep.mubr.f32.mxu0 0.0
        %4235 = vmatmul.mubr.f32.gmra.mrb[0].mxu0 %v4006
        %v4236 = vpop.f32.mrb[0].mxu0
        %v4237 = vadd.f32 0.0, %v4236
        %v4238 = vpop.f32.mrb[0].mxu0
        %4239 = vmatprep.mubr.f32.mxu0 0.0
        %4240 = vmatmul.mubr.f32.gmra.mrb[0].mxu0 %v4009
        %v4241 = vpop.f32.mrb[0].mxu0
        %v4242 = vadd.f32 0.0, %v4241
        %v4243 = vpop.f32.mrb[0].mxu0
        %4244 = vmatprep.mubr.f32.mxu0 0.0
        %4245 = vmatmul.mubr.f32.gmra.mrb[0].mxu0 %v4012
        %v4246 = vpop.f32.mrb[0].mxu0
        %v4247 = vadd.f32 0.0, %v4246
        %v4248 = vpop.f32.mrb[0].mxu0
        %4249 = vmatprep.mubr.f32.mxu0 0.0
        %4250 = vmatmul.mubr.f32.gmra.mrb[0].mxu0 %v4015
        %v4251 = vpop.f32.mrb[0].mxu0
        %v4252 = vadd.f32 0.0, %v4251
        %v4253 = vpop.f32.mrb[0].mxu0
        %4254 = vmatprep.mubr.f32.mxu0 0.0
        %4255 = vmatmul.mubr.f32.gmra.mrb[0].mxu0 %v4018
        %v4256 = vpop.f32.mrb[0].mxu0
        %v4257 = vadd.f32 0.0, %v4256
        %v4258 = vpop.f32.mrb[0].mxu0
        %4259 = vmatprep.mubr.f32.mxu0 0.0
        %4260 = vmatmul.mubr.f32.gmra.mrb[0].mxu0 %v4021
        %v4261 = vpop.f32.mrb[0].mxu0
        %v4262 = vadd.f32 0.0, %v4261
        %v4263 = vpop.f32.mrb[0].mxu0
        %4264 = vmatprep.mubr.f32.mxu0 0.0
        %4265 = vmatmul.mubr.f32.gmra.mrb[0].mxu0 %v4024
        %v4266 = vpop.f32.mrb[0].mxu0
        %v4267 = vadd.f32 0.0, %v4266
        %v4268 = vpop.f32.mrb[0].mxu0
        %4269 = vmatprep.mubr.f32.mxu0 0.0
        %4270 = vmatmul.mubr.f32.gmra.mrb[0].mxu0 %v4027
        %v4271 = vpop.f32.mrb[0].mxu0
        %v4272 = vadd.f32 0.0, %v4271
        %v4273 = vpop.f32.mrb[0].mxu0
        %4274 = vmatprep.mubr.f32.mxu0 0.0
        %4275 = vmatmul.mubr.f32.gmra.mrb[0].mxu0 %v4030
        %v4276 = vpop.f32.mrb[0].mxu0
        %v4277 = vadd.f32 0.0, %v4276
        %v4278 = vpop.f32.mrb[0].mxu0
        %4279 = vmatprep.mubr.f32.mxu0 0.0
        %4280 = vmatmul.mubr.f32.gmra.mrb[0].mxu0 %v4033
        %v4281 = vpop.f32.mrb[0].mxu0
        %v4282 = vadd.f32 0.0, %v4281
        %v4283 = vpop.f32.mrb[0].mxu0
        %4284 = vmatprep.mubr.f32.mxu0 0.0
        %4285 = vmatmul.mubr.f32.gmra.mrb[0].mxu0 %v4036
        %v4286 = vpop.f32.mrb[0].mxu0
        %v4287 = vadd.f32 0.0, %v4286
        %v4288 = vpop.f32.mrb[0].mxu0
        %4289 = vmatprep.mubr.f32.mxu0 0.0
        %4290 = vmatmul.mubr.f32.gmra.mrb[0].mxu0 %v4039
        %v4291 = vpop.f32.mrb[0].mxu0
        %v4292 = vadd.f32 0.0, %v4291
        %v4293 = vpop.f32.mrb[0].mxu0
        %4294 = vmatprep.mubr.f32.mxu0 0.0
        %4295 = vmatmul.mubr.f32.gmra.mrb[0].mxu0 %v4042
        %v4296 = vpop.f32.mrb[0].mxu0
        %v4297 = vadd.f32 0.0, %v4296
        %v4298 = vpop.f32.mrb[0].mxu0
        %4299 = vmatprep.mubr.f32.mxu0 0.0
        %4300 = vmatmul.mubr.f32.gmra.mrb[0].mxu0 %v4045
        %v4301 = vpop.f32.mrb[0].mxu0
        %v4302 = vadd.f32 0.0, %v4301
        %v4303 = vpop.f32.mrb[0].mxu0
        %4304 = vmatprep.mubr.f32.mxu0 0.0
        %4305 = vmatmul.mubr.f32.gmra.mrb[0].mxu0 %v4048
        %v4306 = vpop.f32.mrb[0].mxu0
        %v4307 = vadd.f32 0.0, %v4306
        %v4308 = vpop.f32.mrb[0].mxu0
        %4309 = vmatprep.mubr.f32.mxu0 0.0
        %4310 = vmatmul.mubr.f32.gmra.mrb[0].mxu0 %v4051
        %v4311 = vpop.f32.mrb[0].mxu0
        %v4312 = vadd.f32 0.0, %v4311
        %v4313 = vpop.f32.mrb[0].mxu0
        %4314 = vmatprep.mubr.f32.mxu0 0.0
        %4315 = vmatmul.mubr.f32.gmra.mrb[0].mxu0 %v4054
        %v4316 = vpop.f32.mrb[0].mxu0
        %v4317 = vadd.f32 0.0, %v4316
        %v4318 = vpop.f32.mrb[0].mxu0
        %4319 = vmatprep.mubr.f32.mxu0 0.0
        %4320 = vmatmul.mubr.f32.gmra.mrb[0].mxu0 %v4057
        %v4321 = vpop.f32.mrb[0].mxu0
        %v4322 = vadd.f32 0.0, %v4321
        %v4323 = vpop.f32.mrb[0].mxu0
        %4324 = vmatprep.mubr.f32.mxu0 0.0
        %4325 = vmatmul.mubr.f32.gmra.mrb[0].mxu0 %v4060
        %v4326 = vpop.f32.mrb[0].mxu0
        %v4327 = vadd.f32 0.0, %v4326
        %v4328 = vpop.f32.mrb[0].mxu0
        %4329 = vmatprep.mubr.f32.mxu0 0.0
        %4330 = vmatmul.mubr.f32.gmra.mrb[0].mxu0 %v4063
        %v4331 = vpop.f32.mrb[0].mxu0
        %v4332 = vadd.f32 0.0, %v4331
        %v4333 = vpop.f32.mrb[0].mxu0
        %4334 = vmatprep.mubr.f32.mxu0 0.0
        %4335 = vmatmul.mubr.f32.gmra.mrb[0].mxu0 %v4066
        %v4336 = vpop.f32.mrb[0].mxu0
        %v4337 = vadd.f32 0.0, %v4336
        %v4338 = vpop.f32.mrb[0].mxu0
        %4339 = vmatprep.mubr.f32.mxu0 0.0
        %4340 = vmatmul.mubr.f32.gmra.mrb[0].mxu0 %v4069
        %v4341 = vpop.f32.mrb[0].mxu0
        %v4342 = vadd.f32 0.0, %v4341
        %v4343 = vpop.f32.mrb[0].mxu0
        %4344 = vmatprep.mubr.f32.mxu0 0.0
        %4345 = vmatmul.mubr.f32.gmra.mrb[0].mxu0 %v4072
        %v4346 = vpop.f32.mrb[0].mxu0
        %v4347 = vadd.f32 0.0, %v4346
        %v4348 = vpop.f32.mrb[0].mxu0
        %4349 = vmatprep.mubr.f32.mxu0 0.0
        %4350 = vmatmul.mubr.f32.gmra.mrb[0].mxu0 %v4075
        %v4351 = vpop.f32.mrb[0].mxu0
        %v4352 = vadd.f32 0.0, %v4351
        %v4353 = vpop.f32.mrb[0].mxu0
        %4354 = vmatprep.mubr.f32.mxu0 0.0
        %4355 = vmatmul.mubr.f32.gmra.mrb[0].mxu0 %v4078
        %v4356 = vpop.f32.mrb[0].mxu0
        %v4357 = vadd.f32 0.0, %v4356
        %v4358 = vpop.f32.mrb[0].mxu0
        %4359 = vmatprep.mubr.f32.mxu0 0.0
        %4360 = vmatmul.mubr.f32.gmra.mrb[0].mxu0 %v4081
        %v4361 = vpop.f32.mrb[0].mxu0
        %v4362 = vadd.f32 0.0, %v4361
        %v4363 = vpop.f32.mrb[0].mxu0
        %4364 = vmatprep.mubr.f32.mxu0 0.0
        %4365 = vmatmul.mubr.f32.gmra.mrb[0].mxu0 %v4084
        %v4366 = vpop.f32.mrb[0].mxu0
        %v4367 = vadd.f32 0.0, %v4366
        %v4368 = vpop.f32.mrb[0].mxu0
        %4369 = vmatprep.mubr.f32.mxu0 0.0
        %4370 = vmatmul.mubr.f32.gmra.mrb[0].mxu0 %v4087
        %v4371 = vpop.f32.mrb[0].mxu0
        %v4372 = vadd.f32 0.0, %v4371
        %v4373 = vpop.f32.mrb[0].mxu0
        %4374 = vmatprep.mubr.f32.mxu0 0.0
        %4375 = vmatmul.mubr.f32.gmra.mrb[0].mxu0 %v4090
        %v4376 = vpop.f32.mrb[0].mxu0
        %v4377 = vadd.f32 0.0, %v4376
        %v4378 = vpop.f32.mrb[0].mxu0
        %4379 = vmatprep.mubr.f32.mxu0 0.0
        %4380 = vmatmul.mubr.f32.gmra.mrb[0].mxu0 %v4093
        %v4381 = vpop.f32.mrb[0].mxu0
        %v4382 = vadd.f32 0.0, %v4381
        %v4383 = vpop.f32.mrb[0].mxu0
        %4384 = vmatprep.mubr.f32.mxu0 0.0
        %4385 = vmatmul.mubr.f32.gmra.mrb[0].mxu0 %v4096
        %v4386 = vpop.f32.mrb[0].mxu0
        %v4387 = vadd.f32 0.0, %v4386
        %v4388 = vpop.f32.mrb[0].mxu0
        %4389 = vmatprep.mubr.f32.mxu0 0.0
        %4390 = vmatmul.mubr.f32.gmra.mrb[0].mxu0 %v4099
        %v4391 = vpop.f32.mrb[0].mxu0
        %v4392 = vadd.f32 0.0, %v4391
        %v4393 = vpop.f32.mrb[0].mxu0
        %4394 = vmatprep.mubr.f32.mxu0 0.0
        %4395 = vmatmul.mubr.f32.gmra.mrb[0].mxu0 %v4102
        %v4396 = vpop.f32.mrb[0].mxu0
        %v4397 = vadd.f32 0.0, %v4396
        %v4398 = vpop.f32.mrb[0].mxu0
        %4399 = vmatprep.mubr.f32.mxu0 0.0
        %4400 = vmatmul.mubr.f32.gmra.mrb[0].mxu0 %v4105
        %v4401 = vpop.f32.mrb[0].mxu0
        %v4402 = vadd.f32 0.0, %v4401
        %v4403 = vpop.f32.mrb[0].mxu0
        %4404 = vmatprep.mubr.f32.mxu0 0.0
        %4405 = vmatmul.mubr.f32.gmra.mrb[0].mxu0 %v4108
        %v4406 = vpop.f32.mrb[0].mxu0
        %v4407 = vadd.f32 0.0, %v4406
        %v4408 = vpop.f32.mrb[0].mxu0
        %4409 = vmatprep.mubr.f32.mxu0 0.0
        %4410 = vmatmul.mubr.f32.gmra.mrb[0].mxu0 %v4111
        %v4411 = vpop.f32.mrb[0].mxu0
        %v4412 = vadd.f32 0.0, %v4411
        %v4413 = vpop.f32.mrb[0].mxu0
        %4414 = vmatprep.mubr.f32.mxu0 0.0
        %4415 = vmatmul.mubr.f32.gmra.mrb[0].mxu0 %v4114
        %v4416 = vpop.f32.mrb[0].mxu0
        %v4417 = vadd.f32 0.0, %v4416
        %v4418 = vpop.f32.mrb[0].mxu0
        %4419 = vmatprep.mubr.f32.mxu0 0.0
        %4420 = vmatmul.mubr.f32.gmra.mrb[0].mxu0 %v4117
        %v4421 = vpop.f32.mrb[0].mxu0
        %v4422 = vadd.f32 0.0, %v4421
        %v4423 = vpop.f32.mrb[0].mxu0
        %4424 = vmatprep.mubr.f32.mxu0 0.0
        %4425 = vmatmul.mubr.f32.gmra.mrb[0].mxu0 %v4120
        %v4426 = vpop.f32.mrb[0].mxu0
        %v4427 = vadd.f32 0.0, %v4426
        %v4428 = vpop.f32.mrb[0].mxu0
        %4429 = vdwg.mxu0
        %v4430 = vadd.f32 %v3879, %v4192
        %v4431 = vadd.f32 %v3880, %v4197
        %v4432 = vadd.f32 %v3881, %v4202
        %v4433 = vadd.f32 %v3882, %v4207
        %v4434 = vadd.f32 %v3883, %v4212
        %v4435 = vadd.f32 %v3884, %v4217
        %v4436 = vadd.f32 %v3885, %v4222
        %v4437 = vadd.f32 %v3886, %v4227
        %v4438 = vadd.f32 %v3887, %v4232
        %v4439 = vadd.f32 %v3888, %v4237
        %v4440 = vadd.f32 %v3889, %v4242
        %v4441 = vadd.f32 %v3890, %v4247
        %v4442 = vadd.f32 %v3891, %v4252
        %v4443 = vadd.f32 %v3892, %v4257
        %v4444 = vadd.f32 %v3893, %v4262
        %v4445 = vadd.f32 %v3894, %v4267
        %v4446 = vadd.f32 %v3895, %v4272
        %v4447 = vadd.f32 %v3896, %v4277
        %v4448 = vadd.f32 %v3897, %v4282
        %v4449 = vadd.f32 %v3898, %v4287
        %v4450 = vadd.f32 %v3899, %v4292
        %v4451 = vadd.f32 %v3900, %v4297
        %v4452 = vadd.f32 %v3901, %v4302
        %v4453 = vadd.f32 %v3902, %v4307
        %v4454 = vadd.f32 %v3903, %v4312
        %v4455 = vadd.f32 %v3904, %v4317
        %v4456 = vadd.f32 %v3905, %v4322
        %v4457 = vadd.f32 %v3906, %v4327
        %v4458 = vadd.f32 %v3907, %v4332
        %v4459 = vadd.f32 %v3908, %v4337
        %v4460 = vadd.f32 %v3909, %v4342
        %v4461 = vadd.f32 %v3910, %v4347
        %v4462 = vadd.f32 %v3911, %v4352
        %v4463 = vadd.f32 %v3912, %v4357
        %v4464 = vadd.f32 %v3913, %v4362
        %v4465 = vadd.f32 %v3914, %v4367
        %v4466 = vadd.f32 %v3915, %v4372
        %v4467 = vadd.f32 %v3916, %v4377
        %v4468 = vadd.f32 %v3917, %v4382
        %v4469 = vadd.f32 %v3918, %v4387
        %v4470 = vadd.f32 %v3919, %v4392
        %v4471 = vadd.f32 %v3920, %v4397
        %v4472 = vadd.f32 %v3921, %v4402
        %v4473 = vadd.f32 %v3922, %v4407
        %v4474 = vadd.f32 %v3923, %v4412
        %v4475 = vadd.f32 %v3924, %v4417
        %v4476 = vadd.f32 %v3925, %v4422
        %v4477 = vadd.f32 %v3926, %v4427
        %s4478 = sadd.s32 0, 48
        %s4479 = scalar_lea.vmem %s303, %s4478
        %v4480 = vld [vmem:[%s4479] sm:$0xff]
        %v4481 = vld [vmem:[%s4479 + $0x8] sm:$0xff]
        %v4482 = vld [vmem:[%s4479 + $0x10] sm:$0xff]
        %v4483 = vld [vmem:[%s4479 + $0x18] sm:$0xff]
        %v4484 = vld [vmem:[%s4479 + $0x20] sm:$0xff]
        %v4485 = vld [vmem:[%s4479 + $0x28] sm:$0xff]
        %v4486 = vld [vmem:[%s4479 + $0x30] sm:$0xff]
        %v4487 = vld [vmem:[%s4479 + $0x38] sm:$0xff]
        %v4488 = vld [vmem:[%s4479 + $0x40] sm:$0xff]
        %v4489 = vld [vmem:[%s4479 + $0x48] sm:$0xff]
        %v4490 = vld [vmem:[%s4479 + $0x50] sm:$0xff]
        %v4491 = vld [vmem:[%s4479 + $0x58] sm:$0xff]
        %v4492 = vld [vmem:[%s4479 + $0x60] sm:$0xff]
        %v4493 = vld [vmem:[%s4479 + $0x68] sm:$0xff]
        %v4494 = vld [vmem:[%s4479 + $0x70] sm:$0xff]
        %v4495 = vld [vmem:[%s4479 + $0x78] sm:$0xff]
        %v4496 = vld [vmem:[%s4479 + $0x80] sm:$0xff]
        %v4497 = vld [vmem:[%s4479 + $0x88] sm:$0xff]
        %v4498 = vld [vmem:[%s4479 + $0x90] sm:$0xff]
        %v4499 = vld [vmem:[%s4479 + $0x98] sm:$0xff]
        %v4500 = vld [vmem:[%s4479 + $0xa0] sm:$0xff]
        %v4501 = vld [vmem:[%s4479 + $0xa8] sm:$0xff]
        %v4502 = vld [vmem:[%s4479 + $0xb0] sm:$0xff]
        %v4503 = vld [vmem:[%s4479 + $0xb8] sm:$0xff]
        %v4504 = vld [vmem:[%s4479 + $0xc0] sm:$0xff]
        %v4505 = vld [vmem:[%s4479 + $0xc8] sm:$0xff]
        %v4506 = vld [vmem:[%s4479 + $0xd0] sm:$0xff]
        %v4507 = vld [vmem:[%s4479 + $0xd8] sm:$0xff]
        %v4508 = vld [vmem:[%s4479 + $0xe0] sm:$0xff]
        %v4509 = vld [vmem:[%s4479 + $0xe8] sm:$0xff]
        %v4510 = vld [vmem:[%s4479 + $0xf0] sm:$0xff]
        %v4511 = vld [vmem:[%s4479 + $0xf8] sm:$0xff]
        %v4512 = vld [vmem:[%s4479 + $0x100] sm:$0xff]
        %v4513 = vld [vmem:[%s4479 + $0x108] sm:$0xff]
        %v4514 = vld [vmem:[%s4479 + $0x110] sm:$0xff]
        %v4515 = vld [vmem:[%s4479 + $0x118] sm:$0xff]
        %v4516 = vld [vmem:[%s4479 + $0x120] sm:$0xff]
        %v4517 = vld [vmem:[%s4479 + $0x128] sm:$0xff]
        %v4518 = vld [vmem:[%s4479 + $0x130] sm:$0xff]
        %v4519 = vld [vmem:[%s4479 + $0x138] sm:$0xff]
        %v4520 = vld [vmem:[%s4479 + $0x140] sm:$0xff]
        %v4521 = vld [vmem:[%s4479 + $0x148] sm:$0xff]
        %v4522 = vld [vmem:[%s4479 + $0x150] sm:$0xff]
        %v4523 = vld [vmem:[%s4479 + $0x158] sm:$0xff]
        %v4524 = vld [vmem:[%s4479 + $0x160] sm:$0xff]
        %v4525 = vld [vmem:[%s4479 + $0x168] sm:$0xff]
        %v4526 = vld [vmem:[%s4479 + $0x170] sm:$0xff]
        %v4527 = vld [vmem:[%s4479 + $0x178] sm:$0xff]
        %v4528 = vld [vmem:[%s1 + $0x18] sm:$0xf]
        %v4530 = vsel %vm1368, %v4480, 0
        %v4533 = vsel %vm1368, %v4481, 0
        %v4536 = vsel %vm1368, %v4482, 0
        %v4539 = vsel %vm1368, %v4483, 0
        %v4542 = vsel %vm1368, %v4484, 0
        %v4545 = vsel %vm1368, %v4485, 0
        %v4548 = vsel %vm1368, %v4486, 0
        %v4551 = vsel %vm1368, %v4487, 0
        %v4554 = vsel %vm1368, %v4488, 0
        %v4557 = vsel %vm1368, %v4489, 0
        %v4560 = vsel %vm1368, %v4490, 0
        %v4563 = vsel %vm1368, %v4491, 0
        %v4566 = vsel %vm1368, %v4492, 0
        %v4569 = vsel %vm1368, %v4493, 0
        %v4572 = vsel %vm1368, %v4494, 0
        %v4575 = vsel %vm1368, %v4495, 0
        %v4578 = vsel %vm1368, %v4496, 0
        %v4581 = vsel %vm1368, %v4497, 0
        %v4584 = vsel %vm1368, %v4498, 0
        %v4587 = vsel %vm1368, %v4499, 0
        %v4590 = vsel %vm1368, %v4500, 0
        %v4593 = vsel %vm1368, %v4501, 0
        %v4596 = vsel %vm1368, %v4502, 0
        %v4599 = vsel %vm1368, %v4503, 0
        %v4602 = vsel %vm1368, %v4504, 0
        %v4605 = vsel %vm1368, %v4505, 0
        %v4608 = vsel %vm1368, %v4506, 0
        %v4611 = vsel %vm1368, %v4507, 0
        %v4614 = vsel %vm1368, %v4508, 0
        %v4617 = vsel %vm1368, %v4509, 0
        %v4620 = vsel %vm1368, %v4510, 0
        %v4623 = vsel %vm1368, %v4511, 0
        %v4626 = vsel %vm1368, %v4512, 0
        %v4629 = vsel %vm1368, %v4513, 0
        %v4632 = vsel %vm1368, %v4514, 0
        %v4635 = vsel %vm1368, %v4515, 0
        %v4638 = vsel %vm1368, %v4516, 0
        %v4641 = vsel %vm1368, %v4517, 0
        %v4644 = vsel %vm1368, %v4518, 0
        %v4647 = vsel %vm1368, %v4519, 0
        %v4650 = vsel %vm1368, %v4520, 0
        %v4653 = vsel %vm1368, %v4521, 0
        %v4656 = vsel %vm1368, %v4522, 0
        %v4659 = vsel %vm1368, %v4523, 0
        %v4662 = vsel %vm1368, %v4524, 0
        %v4665 = vsel %vm1368, %v4525, 0
        %v4668 = vsel %vm1368, %v4526, 0
        %v4671 = vsel %vm1368, %v4527, 0
        %v4674 = vsel %vm1513, %v4528, 0
        %4676 = vmatprep.subr.mxu0 0.0
        %4677 = vmatpush1.msra.mxu0 %v4674
        %4678 = vmatprep.subr.mxu0 0.0
        %4679 = vmatpush1.msra.mxu0 0.0
        %4680 = vmatprep.subr.mxu0 0.0
        %4681 = vmatpush1.msra.mxu0 0.0
        %4682 = vmatprep.subr.mxu0 0.0
        %4683 = vmatpush1.msra.mxu0 0.0
        %4684 = vmatprep.subr.mxu0 0.0
        %4685 = vmatpush1.msra.mxu0 0.0
        %4686 = vmatprep.subr.mxu0 0.0
        %4687 = vmatpush1.msra.mxu0 0.0
        %4688 = vmatprep.subr.mxu0 0.0
        %4689 = vmatpush1.msra.mxu0 0.0
        %4690 = vmatprep.subr.mxu0 0.0
        %4691 = vmatpush1.msra.mxu0 0.0
        %4692 = vmatprep.subr.mxu0 0.0
        %4693 = vmatpush1.msra.mxu0 0.0
        %4694 = vmatprep.subr.mxu0 0.0
        %4695 = vmatpush1.msra.mxu0 0.0
        %4696 = vmatprep.subr.mxu0 0.0
        %4697 = vmatpush1.msra.mxu0 0.0
        %4698 = vmatprep.subr.mxu0 0.0
        %4699 = vmatpush1.msra.mxu0 0.0
        %4700 = vmatprep.subr.mxu0 0.0
        %4701 = vmatpush1.msra.mxu0 0.0
        %4702 = vmatprep.subr.mxu0 0.0
        %4703 = vmatpush1.msra.mxu0 0.0
        %4704 = vmatprep.subr.mxu0 0.0
        %4705 = vmatpush1.msra.mxu0 0.0
        %4706 = vmatprep.subr.mxu0 0.0
        %4707 = vmatpush1.msra.mxu0 0.0
        %4708 = vmatprep.subr.mxu0 0.0
        %4709 = vmatpush1.msra.mxu0 0.0
        %4710 = vmatprep.subr.mxu0 0.0
        %4711 = vmatpush1.msra.mxu0 0.0
        %4712 = vmatprep.subr.mxu0 0.0
        %4713 = vmatpush1.msra.mxu0 0.0
        %4714 = vmatprep.subr.mxu0 0.0
        %4715 = vmatpush1.msra.mxu0 0.0
        %4716 = vmatprep.subr.mxu0 0.0
        %4717 = vmatpush1.msra.mxu0 0.0
        %4718 = vmatprep.subr.mxu0 0.0
        %4719 = vmatpush1.msra.mxu0 0.0
        %4720 = vmatprep.subr.mxu0 0.0
        %4721 = vmatpush1.msra.mxu0 0.0
        %4722 = vmatprep.subr.mxu0 0.0
        %4723 = vmatpush1.msra.mxu0 0.0
        %4724 = vmatprep.subr.mxu0 0.0
        %4725 = vmatpush1.msra.mxu0 0.0
        %4726 = vmatprep.subr.mxu0 0.0
        %4727 = vmatpush1.msra.mxu0 0.0
        %4728 = vmatprep.subr.mxu0 0.0
        %4729 = vmatpush1.msra.mxu0 0.0
        %4730 = vmatprep.subr.mxu0 0.0
        %4731 = vmatpush1.msra.mxu0 0.0
        %4732 = vmatprep.subr.mxu0 0.0
        %4733 = vmatpush1.msra.mxu0 0.0
        %4734 = vmatprep.subr.mxu0 0.0
        %4735 = vmatpush1.msra.mxu0 0.0
        %4736 = vmatprep.subr.mxu0 0.0
        %4737 = vmatpush1.msra.mxu0 0.0
        %4738 = vmatprep.subr.mxu0 0.0
        %4739 = vmatpush1.msra.mxu0 0.0
        %4740 = vmatprep.mubr.f32.mxu0 0.0
        %4741 = vmatmul.mubr.f32.gmra.mrb[0].mxu0 %v4530
        %v4742 = vpop.f32.mrb[0].mxu0
        %v4743 = vadd.f32 0.0, %v4742
        %v4744 = vpop.f32.mrb[0].mxu0
        %4745 = vmatprep.mubr.f32.mxu0 0.0
        %4746 = vmatmul.mubr.f32.gmra.mrb[0].mxu0 %v4533
        %v4747 = vpop.f32.mrb[0].mxu0
        %v4748 = vadd.f32 0.0, %v4747
        %v4749 = vpop.f32.mrb[0].mxu0
        %4750 = vmatprep.mubr.f32.mxu0 0.0
        %4751 = vmatmul.mubr.f32.gmra.mrb[0].mxu0 %v4536
        %v4752 = vpop.f32.mrb[0].mxu0
        %v4753 = vadd.f32 0.0, %v4752
        %v4754 = vpop.f32.mrb[0].mxu0
        %4755 = vmatprep.mubr.f32.mxu0 0.0
        %4756 = vmatmul.mubr.f32.gmra.mrb[0].mxu0 %v4539
        %v4757 = vpop.f32.mrb[0].mxu0
        %v4758 = vadd.f32 0.0, %v4757
        %v4759 = vpop.f32.mrb[0].mxu0
        %4760 = vmatprep.mubr.f32.mxu0 0.0
        %4761 = vmatmul.mubr.f32.gmra.mrb[0].mxu0 %v4542
        %v4762 = vpop.f32.mrb[0].mxu0
        %v4763 = vadd.f32 0.0, %v4762
        %v4764 = vpop.f32.mrb[0].mxu0
        %4765 = vmatprep.mubr.f32.mxu0 0.0
        %4766 = vmatmul.mubr.f32.gmra.mrb[0].mxu0 %v4545
        %v4767 = vpop.f32.mrb[0].mxu0
        %v4768 = vadd.f32 0.0, %v4767
        %v4769 = vpop.f32.mrb[0].mxu0
        %4770 = vmatprep.mubr.f32.mxu0 0.0
        %4771 = vmatmul.mubr.f32.gmra.mrb[0].mxu0 %v4548
        %v4772 = vpop.f32.mrb[0].mxu0
        %v4773 = vadd.f32 0.0, %v4772
        %v4774 = vpop.f32.mrb[0].mxu0
        %4775 = vmatprep.mubr.f32.mxu0 0.0
        %4776 = vmatmul.mubr.f32.gmra.mrb[0].mxu0 %v4551
        %v4777 = vpop.f32.mrb[0].mxu0
        %v4778 = vadd.f32 0.0, %v4777
        %v4779 = vpop.f32.mrb[0].mxu0
        %4780 = vmatprep.mubr.f32.mxu0 0.0
        %4781 = vmatmul.mubr.f32.gmra.mrb[0].mxu0 %v4554
        %v4782 = vpop.f32.mrb[0].mxu0
        %v4783 = vadd.f32 0.0, %v4782
        %v4784 = vpop.f32.mrb[0].mxu0
        %4785 = vmatprep.mubr.f32.mxu0 0.0
        %4786 = vmatmul.mubr.f32.gmra.mrb[0].mxu0 %v4557
        %v4787 = vpop.f32.mrb[0].mxu0
        %v4788 = vadd.f32 0.0, %v4787
        %v4789 = vpop.f32.mrb[0].mxu0
        %4790 = vmatprep.mubr.f32.mxu0 0.0
        %4791 = vmatmul.mubr.f32.gmra.mrb[0].mxu0 %v4560
        %v4792 = vpop.f32.mrb[0].mxu0
        %v4793 = vadd.f32 0.0, %v4792
        %v4794 = vpop.f32.mrb[0].mxu0
        %4795 = vmatprep.mubr.f32.mxu0 0.0
        %4796 = vmatmul.mubr.f32.gmra.mrb[0].mxu0 %v4563
        %v4797 = vpop.f32.mrb[0].mxu0
        %v4798 = vadd.f32 0.0, %v4797
        %v4799 = vpop.f32.mrb[0].mxu0
        %4800 = vmatprep.mubr.f32.mxu0 0.0
        %4801 = vmatmul.mubr.f32.gmra.mrb[0].mxu0 %v4566
        %v4802 = vpop.f32.mrb[0].mxu0
        %v4803 = vadd.f32 0.0, %v4802
        %v4804 = vpop.f32.mrb[0].mxu0
        %4805 = vmatprep.mubr.f32.mxu0 0.0
        %4806 = vmatmul.mubr.f32.gmra.mrb[0].mxu0 %v4569
        %v4807 = vpop.f32.mrb[0].mxu0
        %v4808 = vadd.f32 0.0, %v4807
        %v4809 = vpop.f32.mrb[0].mxu0
        %4810 = vmatprep.mubr.f32.mxu0 0.0
        %4811 = vmatmul.mubr.f32.gmra.mrb[0].mxu0 %v4572
        %v4812 = vpop.f32.mrb[0].mxu0
        %v4813 = vadd.f32 0.0, %v4812
        %v4814 = vpop.f32.mrb[0].mxu0
        %4815 = vmatprep.mubr.f32.mxu0 0.0
        %4816 = vmatmul.mubr.f32.gmra.mrb[0].mxu0 %v4575
        %v4817 = vpop.f32.mrb[0].mxu0
        %v4818 = vadd.f32 0.0, %v4817
        %v4819 = vpop.f32.mrb[0].mxu0
        %4820 = vmatprep.mubr.f32.mxu0 0.0
        %4821 = vmatmul.mubr.f32.gmra.mrb[0].mxu0 %v4578
        %v4822 = vpop.f32.mrb[0].mxu0
        %v4823 = vadd.f32 0.0, %v4822
        %v4824 = vpop.f32.mrb[0].mxu0
        %4825 = vmatprep.mubr.f32.mxu0 0.0
        %4826 = vmatmul.mubr.f32.gmra.mrb[0].mxu0 %v4581
        %v4827 = vpop.f32.mrb[0].mxu0
        %v4828 = vadd.f32 0.0, %v4827
        %v4829 = vpop.f32.mrb[0].mxu0
        %4830 = vmatprep.mubr.f32.mxu0 0.0
        %4831 = vmatmul.mubr.f32.gmra.mrb[0].mxu0 %v4584
        %v4832 = vpop.f32.mrb[0].mxu0
        %v4833 = vadd.f32 0.0, %v4832
        %v4834 = vpop.f32.mrb[0].mxu0
        %4835 = vmatprep.mubr.f32.mxu0 0.0
        %4836 = vmatmul.mubr.f32.gmra.mrb[0].mxu0 %v4587
        %v4837 = vpop.f32.mrb[0].mxu0
        %v4838 = vadd.f32 0.0, %v4837
        %v4839 = vpop.f32.mrb[0].mxu0
        %4840 = vmatprep.mubr.f32.mxu0 0.0
        %4841 = vmatmul.mubr.f32.gmra.mrb[0].mxu0 %v4590
        %v4842 = vpop.f32.mrb[0].mxu0
        %v4843 = vadd.f32 0.0, %v4842
        %v4844 = vpop.f32.mrb[0].mxu0
        %4845 = vmatprep.mubr.f32.mxu0 0.0
        %4846 = vmatmul.mubr.f32.gmra.mrb[0].mxu0 %v4593
        %v4847 = vpop.f32.mrb[0].mxu0
        %v4848 = vadd.f32 0.0, %v4847
        %v4849 = vpop.f32.mrb[0].mxu0
        %4850 = vmatprep.mubr.f32.mxu0 0.0
        %4851 = vmatmul.mubr.f32.gmra.mrb[0].mxu0 %v4596
        %v4852 = vpop.f32.mrb[0].mxu0
        %v4853 = vadd.f32 0.0, %v4852
        %v4854 = vpop.f32.mrb[0].mxu0
        %4855 = vmatprep.mubr.f32.mxu0 0.0
        %4856 = vmatmul.mubr.f32.gmra.mrb[0].mxu0 %v4599
        %v4857 = vpop.f32.mrb[0].mxu0
        %v4858 = vadd.f32 0.0, %v4857
        %v4859 = vpop.f32.mrb[0].mxu0
        %4860 = vmatprep.mubr.f32.mxu0 0.0
        %4861 = vmatmul.mubr.f32.gmra.mrb[0].mxu0 %v4602
        %v4862 = vpop.f32.mrb[0].mxu0
        %v4863 = vadd.f32 0.0, %v4862
        %v4864 = vpop.f32.mrb[0].mxu0
        %4865 = vmatprep.mubr.f32.mxu0 0.0
        %4866 = vmatmul.mubr.f32.gmra.mrb[0].mxu0 %v4605
        %v4867 = vpop.f32.mrb[0].mxu0
        %v4868 = vadd.f32 0.0, %v4867
        %v4869 = vpop.f32.mrb[0].mxu0
        %4870 = vmatprep.mubr.f32.mxu0 0.0
        %4871 = vmatmul.mubr.f32.gmra.mrb[0].mxu0 %v4608
        %v4872 = vpop.f32.mrb[0].mxu0
        %v4873 = vadd.f32 0.0, %v4872
        %v4874 = vpop.f32.mrb[0].mxu0
        %4875 = vmatprep.mubr.f32.mxu0 0.0
        %4876 = vmatmul.mubr.f32.gmra.mrb[0].mxu0 %v4611
        %v4877 = vpop.f32.mrb[0].mxu0
        %v4878 = vadd.f32 0.0, %v4877
        %v4879 = vpop.f32.mrb[0].mxu0
        %4880 = vmatprep.mubr.f32.mxu0 0.0
        %4881 = vmatmul.mubr.f32.gmra.mrb[0].mxu0 %v4614
        %v4882 = vpop.f32.mrb[0].mxu0
        %v4883 = vadd.f32 0.0, %v4882
        %v4884 = vpop.f32.mrb[0].mxu0
        %4885 = vmatprep.mubr.f32.mxu0 0.0
        %4886 = vmatmul.mubr.f32.gmra.mrb[0].mxu0 %v4617
        %v4887 = vpop.f32.mrb[0].mxu0
        %v4888 = vadd.f32 0.0, %v4887
        %v4889 = vpop.f32.mrb[0].mxu0
        %4890 = vmatprep.mubr.f32.mxu0 0.0
        %4891 = vmatmul.mubr.f32.gmra.mrb[0].mxu0 %v4620
        %v4892 = vpop.f32.mrb[0].mxu0
        %v4893 = vadd.f32 0.0, %v4892
        %v4894 = vpop.f32.mrb[0].mxu0
        %4895 = vmatprep.mubr.f32.mxu0 0.0
        %4896 = vmatmul.mubr.f32.gmra.mrb[0].mxu0 %v4623
        %v4897 = vpop.f32.mrb[0].mxu0
        %v4898 = vadd.f32 0.0, %v4897
        %v4899 = vpop.f32.mrb[0].mxu0
        %4900 = vmatprep.mubr.f32.mxu0 0.0
        %4901 = vmatmul.mubr.f32.gmra.mrb[0].mxu0 %v4626
        %v4902 = vpop.f32.mrb[0].mxu0
        %v4903 = vadd.f32 0.0, %v4902
        %v4904 = vpop.f32.mrb[0].mxu0
        %4905 = vmatprep.mubr.f32.mxu0 0.0
        %4906 = vmatmul.mubr.f32.gmra.mrb[0].mxu0 %v4629
        %v4907 = vpop.f32.mrb[0].mxu0
        %v4908 = vadd.f32 0.0, %v4907
        %v4909 = vpop.f32.mrb[0].mxu0
        %4910 = vmatprep.mubr.f32.mxu0 0.0
        %4911 = vmatmul.mubr.f32.gmra.mrb[0].mxu0 %v4632
        %v4912 = vpop.f32.mrb[0].mxu0
        %v4913 = vadd.f32 0.0, %v4912
        %v4914 = vpop.f32.mrb[0].mxu0
        %4915 = vmatprep.mubr.f32.mxu0 0.0
        %4916 = vmatmul.mubr.f32.gmra.mrb[0].mxu0 %v4635
        %v4917 = vpop.f32.mrb[0].mxu0
        %v4918 = vadd.f32 0.0, %v4917
        %v4919 = vpop.f32.mrb[0].mxu0
        %4920 = vmatprep.mubr.f32.mxu0 0.0
        %4921 = vmatmul.mubr.f32.gmra.mrb[0].mxu0 %v4638
        %v4922 = vpop.f32.mrb[0].mxu0
        %v4923 = vadd.f32 0.0, %v4922
        %v4924 = vpop.f32.mrb[0].mxu0
        %4925 = vmatprep.mubr.f32.mxu0 0.0
        %4926 = vmatmul.mubr.f32.gmra.mrb[0].mxu0 %v4641
        %v4927 = vpop.f32.mrb[0].mxu0
        %v4928 = vadd.f32 0.0, %v4927
        %v4929 = vpop.f32.mrb[0].mxu0
        %4930 = vmatprep.mubr.f32.mxu0 0.0
        %4931 = vmatmul.mubr.f32.gmra.mrb[0].mxu0 %v4644
        %v4932 = vpop.f32.mrb[0].mxu0
        %v4933 = vadd.f32 0.0, %v4932
        %v4934 = vpop.f32.mrb[0].mxu0
        %4935 = vmatprep.mubr.f32.mxu0 0.0
        %4936 = vmatmul.mubr.f32.gmra.mrb[0].mxu0 %v4647
        %v4937 = vpop.f32.mrb[0].mxu0
        %v4938 = vadd.f32 0.0, %v4937
        %v4939 = vpop.f32.mrb[0].mxu0
        %4940 = vmatprep.mubr.f32.mxu0 0.0
        %4941 = vmatmul.mubr.f32.gmra.mrb[0].mxu0 %v4650
        %v4942 = vpop.f32.mrb[0].mxu0
        %v4943 = vadd.f32 0.0, %v4942
        %v4944 = vpop.f32.mrb[0].mxu0
        %4945 = vmatprep.mubr.f32.mxu0 0.0
        %4946 = vmatmul.mubr.f32.gmra.mrb[0].mxu0 %v4653
        %v4947 = vpop.f32.mrb[0].mxu0
        %v4948 = vadd.f32 0.0, %v4947
        %v4949 = vpop.f32.mrb[0].mxu0
        %4950 = vmatprep.mubr.f32.mxu0 0.0
        %4951 = vmatmul.mubr.f32.gmra.mrb[0].mxu0 %v4656
        %v4952 = vpop.f32.mrb[0].mxu0
        %v4953 = vadd.f32 0.0, %v4952
        %v4954 = vpop.f32.mrb[0].mxu0
        %4955 = vmatprep.mubr.f32.mxu0 0.0
        %4956 = vmatmul.mubr.f32.gmra.mrb[0].mxu0 %v4659
        %v4957 = vpop.f32.mrb[0].mxu0
        %v4958 = vadd.f32 0.0, %v4957
        %v4959 = vpop.f32.mrb[0].mxu0
        %4960 = vmatprep.mubr.f32.mxu0 0.0
        %4961 = vmatmul.mubr.f32.gmra.mrb[0].mxu0 %v4662
        %v4962 = vpop.f32.mrb[0].mxu0
        %v4963 = vadd.f32 0.0, %v4962
        %v4964 = vpop.f32.mrb[0].mxu0
        %4965 = vmatprep.mubr.f32.mxu0 0.0
        %4966 = vmatmul.mubr.f32.gmra.mrb[0].mxu0 %v4665
        %v4967 = vpop.f32.mrb[0].mxu0
        %v4968 = vadd.f32 0.0, %v4967
        %v4969 = vpop.f32.mrb[0].mxu0
        %4970 = vmatprep.mubr.f32.mxu0 0.0
        %4971 = vmatmul.mubr.f32.gmra.mrb[0].mxu0 %v4668
        %v4972 = vpop.f32.mrb[0].mxu0
        %v4973 = vadd.f32 0.0, %v4972
        %v4974 = vpop.f32.mrb[0].mxu0
        %4975 = vmatprep.mubr.f32.mxu0 0.0
        %4976 = vmatmul.mubr.f32.gmra.mrb[0].mxu0 %v4671
        %v4977 = vpop.f32.mrb[0].mxu0
        %v4978 = vadd.f32 0.0, %v4977
        %v4979 = vpop.f32.mrb[0].mxu0
        %4980 = vdwg.mxu0
        %v4981 = vadd.f32 %v4430, %v4743
        %v4982 = vadd.f32 %v4431, %v4748
        %v4983 = vadd.f32 %v4432, %v4753
        %v4984 = vadd.f32 %v4433, %v4758
        %v4985 = vadd.f32 %v4434, %v4763
        %v4986 = vadd.f32 %v4435, %v4768
        %v4987 = vadd.f32 %v4436, %v4773
        %v4988 = vadd.f32 %v4437, %v4778
        %v4989 = vadd.f32 %v4438, %v4783
        %v4990 = vadd.f32 %v4439, %v4788
        %v4991 = vadd.f32 %v4440, %v4793
        %v4992 = vadd.f32 %v4441, %v4798
        %v4993 = vadd.f32 %v4442, %v4803
        %v4994 = vadd.f32 %v4443, %v4808
        %v4995 = vadd.f32 %v4444, %v4813
        %v4996 = vadd.f32 %v4445, %v4818
        %v4997 = vadd.f32 %v4446, %v4823
        %v4998 = vadd.f32 %v4447, %v4828
        %v4999 = vadd.f32 %v4448, %v4833
        %v5000 = vadd.f32 %v4449, %v4838
        %v5001 = vadd.f32 %v4450, %v4843
        %v5002 = vadd.f32 %v4451, %v4848
        %v5003 = vadd.f32 %v4452, %v4853
        %v5004 = vadd.f32 %v4453, %v4858
        %v5005 = vadd.f32 %v4454, %v4863
        %v5006 = vadd.f32 %v4455, %v4868
        %v5007 = vadd.f32 %v4456, %v4873
        %v5008 = vadd.f32 %v4457, %v4878
        %v5009 = vadd.f32 %v4458, %v4883
        %v5010 = vadd.f32 %v4459, %v4888
        %v5011 = vadd.f32 %v4460, %v4893
        %v5012 = vadd.f32 %v4461, %v4898
        %v5013 = vadd.f32 %v4462, %v4903
        %v5014 = vadd.f32 %v4463, %v4908
        %v5015 = vadd.f32 %v4464, %v4913
        %v5016 = vadd.f32 %v4465, %v4918
        %v5017 = vadd.f32 %v4466, %v4923
        %v5018 = vadd.f32 %v4467, %v4928
        %v5019 = vadd.f32 %v4468, %v4933
        %v5020 = vadd.f32 %v4469, %v4938
        %v5021 = vadd.f32 %v4470, %v4943
        %v5022 = vadd.f32 %v4471, %v4948
        %v5023 = vadd.f32 %v4472, %v4953
        %v5024 = vadd.f32 %v4473, %v4958
        %v5025 = vadd.f32 %v4474, %v4963
        %v5026 = vadd.f32 %v4475, %v4968
        %v5027 = vadd.f32 %v4476, %v4973
        %v5028 = vadd.f32 %v4477, %v4978
        %s5029 = sadd.s32 0, 49
        %s5030 = scalar_lea.vmem %s303, %s5029
        %v5031 = vld [vmem:[%s5030] sm:$0xff]
        %v5032 = vld [vmem:[%s5030 + $0x8] sm:$0xff]
        %v5033 = vld [vmem:[%s5030 + $0x10] sm:$0xff]
        %v5034 = vld [vmem:[%s5030 + $0x18] sm:$0xff]
        %v5035 = vld [vmem:[%s5030 + $0x20] sm:$0xff]
        %v5036 = vld [vmem:[%s5030 + $0x28] sm:$0xff]
        %v5037 = vld [vmem:[%s5030 + $0x30] sm:$0xff]
        %v5038 = vld [vmem:[%s5030 + $0x38] sm:$0xff]
        %v5039 = vld [vmem:[%s5030 + $0x40] sm:$0xff]
        %v5040 = vld [vmem:[%s5030 + $0x48] sm:$0xff]
        %v5041 = vld [vmem:[%s5030 + $0x50] sm:$0xff]
        %v5042 = vld [vmem:[%s5030 + $0x58] sm:$0xff]
        %v5043 = vld [vmem:[%s5030 + $0x60] sm:$0xff]
        %v5044 = vld [vmem:[%s5030 + $0x68] sm:$0xff]
        %v5045 = vld [vmem:[%s5030 + $0x70] sm:$0xff]
        %v5046 = vld [vmem:[%s5030 + $0x78] sm:$0xff]
        %v5047 = vld [vmem:[%s5030 + $0x80] sm:$0xff]
        %v5048 = vld [vmem:[%s5030 + $0x88] sm:$0xff]
        %v5049 = vld [vmem:[%s5030 + $0x90] sm:$0xff]
        %v5050 = vld [vmem:[%s5030 + $0x98] sm:$0xff]
        %v5051 = vld [vmem:[%s5030 + $0xa0] sm:$0xff]
        %v5052 = vld [vmem:[%s5030 + $0xa8] sm:$0xff]
        %v5053 = vld [vmem:[%s5030 + $0xb0] sm:$0xff]
        %v5054 = vld [vmem:[%s5030 + $0xb8] sm:$0xff]
        %v5055 = vld [vmem:[%s5030 + $0xc0] sm:$0xff]
        %v5056 = vld [vmem:[%s5030 + $0xc8] sm:$0xff]
        %v5057 = vld [vmem:[%s5030 + $0xd0] sm:$0xff]
        %v5058 = vld [vmem:[%s5030 + $0xd8] sm:$0xff]
        %v5059 = vld [vmem:[%s5030 + $0xe0] sm:$0xff]
        %v5060 = vld [vmem:[%s5030 + $0xe8] sm:$0xff]
        %v5061 = vld [vmem:[%s5030 + $0xf0] sm:$0xff]
        %v5062 = vld [vmem:[%s5030 + $0xf8] sm:$0xff]
        %v5063 = vld [vmem:[%s5030 + $0x100] sm:$0xff]
        %v5064 = vld [vmem:[%s5030 + $0x108] sm:$0xff]
        %v5065 = vld [vmem:[%s5030 + $0x110] sm:$0xff]
        %v5066 = vld [vmem:[%s5030 + $0x118] sm:$0xff]
        %v5067 = vld [vmem:[%s5030 + $0x120] sm:$0xff]
        %v5068 = vld [vmem:[%s5030 + $0x128] sm:$0xff]
        %v5069 = vld [vmem:[%s5030 + $0x130] sm:$0xff]
        %v5070 = vld [vmem:[%s5030 + $0x138] sm:$0xff]
        %v5071 = vld [vmem:[%s5030 + $0x140] sm:$0xff]
        %v5072 = vld [vmem:[%s5030 + $0x148] sm:$0xff]
        %v5073 = vld [vmem:[%s5030 + $0x150] sm:$0xff]
        %v5074 = vld [vmem:[%s5030 + $0x158] sm:$0xff]
        %v5075 = vld [vmem:[%s5030 + $0x160] sm:$0xff]
        %v5076 = vld [vmem:[%s5030 + $0x168] sm:$0xff]
        %v5077 = vld [vmem:[%s5030 + $0x170] sm:$0xff]
        %v5078 = vld [vmem:[%s5030 + $0x178] sm:$0xff]
        %v5079 = vld [vmem:[%s1 + $0x1c] sm:$0xf]
        %v5081 = vsel %vm1368, %v5031, 0
        %v5084 = vsel %vm1368, %v5032, 0
        %v5087 = vsel %vm1368, %v5033, 0
        %v5090 = vsel %vm1368, %v5034, 0
        %v5093 = vsel %vm1368, %v5035, 0
        %v5096 = vsel %vm1368, %v5036, 0
        %v5099 = vsel %vm1368, %v5037, 0
        %v5102 = vsel %vm1368, %v5038, 0
        %v5105 = vsel %vm1368, %v5039, 0
        %v5108 = vsel %vm1368, %v5040, 0
        %v5111 = vsel %vm1368, %v5041, 0
        %v5114 = vsel %vm1368, %v5042, 0
        %v5117 = vsel %vm1368, %v5043, 0
        %v5120 = vsel %vm1368, %v5044, 0
        %v5123 = vsel %vm1368, %v5045, 0
        %v5126 = vsel %vm1368, %v5046, 0
        %v5129 = vsel %vm1368, %v5047, 0
        %v5132 = vsel %vm1368, %v5048, 0
        %v5135 = vsel %vm1368, %v5049, 0
        %v5138 = vsel %vm1368, %v5050, 0
        %v5141 = vsel %vm1368, %v5051, 0
        %v5144 = vsel %vm1368, %v5052, 0
        %v5147 = vsel %vm1368, %v5053, 0
        %v5150 = vsel %vm1368, %v5054, 0
        %v5153 = vsel %vm1368, %v5055, 0
        %v5156 = vsel %vm1368, %v5056, 0
        %v5159 = vsel %vm1368, %v5057, 0
        %v5162 = vsel %vm1368, %v5058, 0
        %v5165 = vsel %vm1368, %v5059, 0
        %v5168 = vsel %vm1368, %v5060, 0
        %v5171 = vsel %vm1368, %v5061, 0
        %v5174 = vsel %vm1368, %v5062, 0
        %v5177 = vsel %vm1368, %v5063, 0
        %v5180 = vsel %vm1368, %v5064, 0
        %v5183 = vsel %vm1368, %v5065, 0
        %v5186 = vsel %vm1368, %v5066, 0
        %v5189 = vsel %vm1368, %v5067, 0
        %v5192 = vsel %vm1368, %v5068, 0
        %v5195 = vsel %vm1368, %v5069, 0
        %v5198 = vsel %vm1368, %v5070, 0
        %v5201 = vsel %vm1368, %v5071, 0
        %v5204 = vsel %vm1368, %v5072, 0
        %v5207 = vsel %vm1368, %v5073, 0
        %v5210 = vsel %vm1368, %v5074, 0
        %v5213 = vsel %vm1368, %v5075, 0
        %v5216 = vsel %vm1368, %v5076, 0
        %v5219 = vsel %vm1368, %v5077, 0
        %v5222 = vsel %vm1368, %v5078, 0
        %v5225 = vsel %vm1513, %v5079, 0
        %5227 = vmatprep.subr.mxu0 0.0
        %5228 = vmatpush1.msra.mxu0 %v5225
        %5229 = vmatprep.subr.mxu0 0.0
        %5230 = vmatpush1.msra.mxu0 0.0
        %5231 = vmatprep.subr.mxu0 0.0
        %5232 = vmatpush1.msra.mxu0 0.0
        %5233 = vmatprep.subr.mxu0 0.0
        %5234 = vmatpush1.msra.mxu0 0.0
        %5235 = vmatprep.subr.mxu0 0.0
        %5236 = vmatpush1.msra.mxu0 0.0
        %5237 = vmatprep.subr.mxu0 0.0
        %5238 = vmatpush1.msra.mxu0 0.0
        %5239 = vmatprep.subr.mxu0 0.0
        %5240 = vmatpush1.msra.mxu0 0.0
        %5241 = vmatprep.subr.mxu0 0.0
        %5242 = vmatpush1.msra.mxu0 0.0
        %5243 = vmatprep.subr.mxu0 0.0
        %5244 = vmatpush1.msra.mxu0 0.0
        %5245 = vmatprep.subr.mxu0 0.0
        %5246 = vmatpush1.msra.mxu0 0.0
        %5247 = vmatprep.subr.mxu0 0.0
        %5248 = vmatpush1.msra.mxu0 0.0
        %5249 = vmatprep.subr.mxu0 0.0
        %5250 = vmatpush1.msra.mxu0 0.0
        %5251 = vmatprep.subr.mxu0 0.0
        %5252 = vmatpush1.msra.mxu0 0.0
        %5253 = vmatprep.subr.mxu0 0.0
        %5254 = vmatpush1.msra.mxu0 0.0
        %5255 = vmatprep.subr.mxu0 0.0
        %5256 = vmatpush1.msra.mxu0 0.0
        %5257 = vmatprep.subr.mxu0 0.0
        %5258 = vmatpush1.msra.mxu0 0.0
        %5259 = vmatprep.subr.mxu0 0.0
        %5260 = vmatpush1.msra.mxu0 0.0
        %5261 = vmatprep.subr.mxu0 0.0
        %5262 = vmatpush1.msra.mxu0 0.0
        %5263 = vmatprep.subr.mxu0 0.0
        %5264 = vmatpush1.msra.mxu0 0.0
        %5265 = vmatprep.subr.mxu0 0.0
        %5266 = vmatpush1.msra.mxu0 0.0
        %5267 = vmatprep.subr.mxu0 0.0
        %5268 = vmatpush1.msra.mxu0 0.0
        %5269 = vmatprep.subr.mxu0 0.0
        %5270 = vmatpush1.msra.mxu0 0.0
        %5271 = vmatprep.subr.mxu0 0.0
        %5272 = vmatpush1.msra.mxu0 0.0
        %5273 = vmatprep.subr.mxu0 0.0
        %5274 = vmatpush1.msra.mxu0 0.0
        %5275 = vmatprep.subr.mxu0 0.0
        %5276 = vmatpush1.msra.mxu0 0.0
        %5277 = vmatprep.subr.mxu0 0.0
        %5278 = vmatpush1.msra.mxu0 0.0
        %5279 = vmatprep.subr.mxu0 0.0
        %5280 = vmatpush1.msra.mxu0 0.0
        %5281 = vmatprep.subr.mxu0 0.0
        %5282 = vmatpush1.msra.mxu0 0.0
        %5283 = vmatprep.subr.mxu0 0.0
        %5284 = vmatpush1.msra.mxu0 0.0
        %5285 = vmatprep.subr.mxu0 0.0
        %5286 = vmatpush1.msra.mxu0 0.0
        %5287 = vmatprep.subr.mxu0 0.0
        %5288 = vmatpush1.msra.mxu0 0.0
        %5289 = vmatprep.subr.mxu0 0.0
        %5290 = vmatpush1.msra.mxu0 0.0
        %5291 = vmatprep.mubr.f32.mxu0 0.0
        %5292 = vmatmul.mubr.f32.gmra.mrb[0].mxu0 %v5081
        %v5293 = vpop.f32.mrb[0].mxu0
        %v5294 = vadd.f32 0.0, %v5293
        %v5295 = vpop.f32.mrb[0].mxu0
        %5296 = vmatprep.mubr.f32.mxu0 0.0
        %5297 = vmatmul.mubr.f32.gmra.mrb[0].mxu0 %v5084
        %v5298 = vpop.f32.mrb[0].mxu0
        %v5299 = vadd.f32 0.0, %v5298
        %v5300 = vpop.f32.mrb[0].mxu0
        %5301 = vmatprep.mubr.f32.mxu0 0.0
        %5302 = vmatmul.mubr.f32.gmra.mrb[0].mxu0 %v5087
        %v5303 = vpop.f32.mrb[0].mxu0
        %v5304 = vadd.f32 0.0, %v5303
        %v5305 = vpop.f32.mrb[0].mxu0
        %5306 = vmatprep.mubr.f32.mxu0 0.0
        %5307 = vmatmul.mubr.f32.gmra.mrb[0].mxu0 %v5090
        %v5308 = vpop.f32.mrb[0].mxu0
        %v5309 = vadd.f32 0.0, %v5308
        %v5310 = vpop.f32.mrb[0].mxu0
        %5311 = vmatprep.mubr.f32.mxu0 0.0
        %5312 = vmatmul.mubr.f32.gmra.mrb[0].mxu0 %v5093
        %v5313 = vpop.f32.mrb[0].mxu0
        %v5314 = vadd.f32 0.0, %v5313
        %v5315 = vpop.f32.mrb[0].mxu0
        %5316 = vmatprep.mubr.f32.mxu0 0.0
        %5317 = vmatmul.mubr.f32.gmra.mrb[0].mxu0 %v5096
        %v5318 = vpop.f32.mrb[0].mxu0
        %v5319 = vadd.f32 0.0, %v5318
        %v5320 = vpop.f32.mrb[0].mxu0
        %5321 = vmatprep.mubr.f32.mxu0 0.0
        %5322 = vmatmul.mubr.f32.gmra.mrb[0].mxu0 %v5099
        %v5323 = vpop.f32.mrb[0].mxu0
        %v5324 = vadd.f32 0.0, %v5323
        %v5325 = vpop.f32.mrb[0].mxu0
        %5326 = vmatprep.mubr.f32.mxu0 0.0
        %5327 = vmatmul.mubr.f32.gmra.mrb[0].mxu0 %v5102
        %v5328 = vpop.f32.mrb[0].mxu0
        %v5329 = vadd.f32 0.0, %v5328
        %v5330 = vpop.f32.mrb[0].mxu0
        %5331 = vmatprep.mubr.f32.mxu0 0.0
        %5332 = vmatmul.mubr.f32.gmra.mrb[0].mxu0 %v5105
        %v5333 = vpop.f32.mrb[0].mxu0
        %v5334 = vadd.f32 0.0, %v5333
        %v5335 = vpop.f32.mrb[0].mxu0
        %5336 = vmatprep.mubr.f32.mxu0 0.0
        %5337 = vmatmul.mubr.f32.gmra.mrb[0].mxu0 %v5108
        %v5338 = vpop.f32.mrb[0].mxu0
        %v5339 = vadd.f32 0.0, %v5338
        %v5340 = vpop.f32.mrb[0].mxu0
        %5341 = vmatprep.mubr.f32.mxu0 0.0
        %5342 = vmatmul.mubr.f32.gmra.mrb[0].mxu0 %v5111
        %v5343 = vpop.f32.mrb[0].mxu0
        %v5344 = vadd.f32 0.0, %v5343
        %v5345 = vpop.f32.mrb[0].mxu0
        %5346 = vmatprep.mubr.f32.mxu0 0.0
        %5347 = vmatmul.mubr.f32.gmra.mrb[0].mxu0 %v5114
        %v5348 = vpop.f32.mrb[0].mxu0
        %v5349 = vadd.f32 0.0, %v5348
        %v5350 = vpop.f32.mrb[0].mxu0
        %5351 = vmatprep.mubr.f32.mxu0 0.0
        %5352 = vmatmul.mubr.f32.gmra.mrb[0].mxu0 %v5117
        %v5353 = vpop.f32.mrb[0].mxu0
        %v5354 = vadd.f32 0.0, %v5353
        %v5355 = vpop.f32.mrb[0].mxu0
        %5356 = vmatprep.mubr.f32.mxu0 0.0
        %5357 = vmatmul.mubr.f32.gmra.mrb[0].mxu0 %v5120
        %v5358 = vpop.f32.mrb[0].mxu0
        %v5359 = vadd.f32 0.0, %v5358
        %v5360 = vpop.f32.mrb[0].mxu0
        %5361 = vmatprep.mubr.f32.mxu0 0.0
        %5362 = vmatmul.mubr.f32.gmra.mrb[0].mxu0 %v5123
        %v5363 = vpop.f32.mrb[0].mxu0
        %v5364 = vadd.f32 0.0, %v5363
        %v5365 = vpop.f32.mrb[0].mxu0
        %5366 = vmatprep.mubr.f32.mxu0 0.0
        %5367 = vmatmul.mubr.f32.gmra.mrb[0].mxu0 %v5126
        %v5368 = vpop.f32.mrb[0].mxu0
        %v5369 = vadd.f32 0.0, %v5368
        %v5370 = vpop.f32.mrb[0].mxu0
        %5371 = vmatprep.mubr.f32.mxu0 0.0
        %5372 = vmatmul.mubr.f32.gmra.mrb[0].mxu0 %v5129
        %v5373 = vpop.f32.mrb[0].mxu0
        %v5374 = vadd.f32 0.0, %v5373
        %v5375 = vpop.f32.mrb[0].mxu0
        %5376 = vmatprep.mubr.f32.mxu0 0.0
        %5377 = vmatmul.mubr.f32.gmra.mrb[0].mxu0 %v5132
        %v5378 = vpop.f32.mrb[0].mxu0
        %v5379 = vadd.f32 0.0, %v5378
        %v5380 = vpop.f32.mrb[0].mxu0
        %5381 = vmatprep.mubr.f32.mxu0 0.0
        %5382 = vmatmul.mubr.f32.gmra.mrb[0].mxu0 %v5135
        %v5383 = vpop.f32.mrb[0].mxu0
        %v5384 = vadd.f32 0.0, %v5383
        %v5385 = vpop.f32.mrb[0].mxu0
        %5386 = vmatprep.mubr.f32.mxu0 0.0
        %5387 = vmatmul.mubr.f32.gmra.mrb[0].mxu0 %v5138
        %v5388 = vpop.f32.mrb[0].mxu0
        %v5389 = vadd.f32 0.0, %v5388
        %v5390 = vpop.f32.mrb[0].mxu0
        %5391 = vmatprep.mubr.f32.mxu0 0.0
        %5392 = vmatmul.mubr.f32.gmra.mrb[0].mxu0 %v5141
        %v5393 = vpop.f32.mrb[0].mxu0
        %v5394 = vadd.f32 0.0, %v5393
        %v5395 = vpop.f32.mrb[0].mxu0
        %5396 = vmatprep.mubr.f32.mxu0 0.0
        %5397 = vmatmul.mubr.f32.gmra.mrb[0].mxu0 %v5144
        %v5398 = vpop.f32.mrb[0].mxu0
        %v5399 = vadd.f32 0.0, %v5398
        %v5400 = vpop.f32.mrb[0].mxu0
        %5401 = vmatprep.mubr.f32.mxu0 0.0
        %5402 = vmatmul.mubr.f32.gmra.mrb[0].mxu0 %v5147
        %v5403 = vpop.f32.mrb[0].mxu0
        %v5404 = vadd.f32 0.0, %v5403
        %v5405 = vpop.f32.mrb[0].mxu0
        %5406 = vmatprep.mubr.f32.mxu0 0.0
        %5407 = vmatmul.mubr.f32.gmra.mrb[0].mxu0 %v5150
        %v5408 = vpop.f32.mrb[0].mxu0
        %v5409 = vadd.f32 0.0, %v5408
        %v5410 = vpop.f32.mrb[0].mxu0
        %5411 = vmatprep.mubr.f32.mxu0 0.0
        %5412 = vmatmul.mubr.f32.gmra.mrb[0].mxu0 %v5153
        %v5413 = vpop.f32.mrb[0].mxu0
        %v5414 = vadd.f32 0.0, %v5413
        %v5415 = vpop.f32.mrb[0].mxu0
        %5416 = vmatprep.mubr.f32.mxu0 0.0
        %5417 = vmatmul.mubr.f32.gmra.mrb[0].mxu0 %v5156
        %v5418 = vpop.f32.mrb[0].mxu0
        %v5419 = vadd.f32 0.0, %v5418
        %v5420 = vpop.f32.mrb[0].mxu0
        %5421 = vmatprep.mubr.f32.mxu0 0.0
        %5422 = vmatmul.mubr.f32.gmra.mrb[0].mxu0 %v5159
        %v5423 = vpop.f32.mrb[0].mxu0
        %v5424 = vadd.f32 0.0, %v5423
        %v5425 = vpop.f32.mrb[0].mxu0
        %5426 = vmatprep.mubr.f32.mxu0 0.0
        %5427 = vmatmul.mubr.f32.gmra.mrb[0].mxu0 %v5162
        %v5428 = vpop.f32.mrb[0].mxu0
        %v5429 = vadd.f32 0.0, %v5428
        %v5430 = vpop.f32.mrb[0].mxu0
        %5431 = vmatprep.mubr.f32.mxu0 0.0
        %5432 = vmatmul.mubr.f32.gmra.mrb[0].mxu0 %v5165
        %v5433 = vpop.f32.mrb[0].mxu0
        %v5434 = vadd.f32 0.0, %v5433
        %v5435 = vpop.f32.mrb[0].mxu0
        %5436 = vmatprep.mubr.f32.mxu0 0.0
        %5437 = vmatmul.mubr.f32.gmra.mrb[0].mxu0 %v5168
        %v5438 = vpop.f32.mrb[0].mxu0
        %v5439 = vadd.f32 0.0, %v5438
        %v5440 = vpop.f32.mrb[0].mxu0
        %5441 = vmatprep.mubr.f32.mxu0 0.0
        %5442 = vmatmul.mubr.f32.gmra.mrb[0].mxu0 %v5171
        %v5443 = vpop.f32.mrb[0].mxu0
        %v5444 = vadd.f32 0.0, %v5443
        %v5445 = vpop.f32.mrb[0].mxu0
        %5446 = vmatprep.mubr.f32.mxu0 0.0
        %5447 = vmatmul.mubr.f32.gmra.mrb[0].mxu0 %v5174
        %v5448 = vpop.f32.mrb[0].mxu0
        %v5449 = vadd.f32 0.0, %v5448
        %v5450 = vpop.f32.mrb[0].mxu0
        %5451 = vmatprep.mubr.f32.mxu0 0.0
        %5452 = vmatmul.mubr.f32.gmra.mrb[0].mxu0 %v5177
        %v5453 = vpop.f32.mrb[0].mxu0
        %v5454 = vadd.f32 0.0, %v5453
        %v5455 = vpop.f32.mrb[0].mxu0
        %5456 = vmatprep.mubr.f32.mxu0 0.0
        %5457 = vmatmul.mubr.f32.gmra.mrb[0].mxu0 %v5180
        %v5458 = vpop.f32.mrb[0].mxu0
        %v5459 = vadd.f32 0.0, %v5458
        %v5460 = vpop.f32.mrb[0].mxu0
        %5461 = vmatprep.mubr.f32.mxu0 0.0
        %5462 = vmatmul.mubr.f32.gmra.mrb[0].mxu0 %v5183
        %v5463 = vpop.f32.mrb[0].mxu0
        %v5464 = vadd.f32 0.0, %v5463
        %v5465 = vpop.f32.mrb[0].mxu0
        %5466 = vmatprep.mubr.f32.mxu0 0.0
        %5467 = vmatmul.mubr.f32.gmra.mrb[0].mxu0 %v5186
        %v5468 = vpop.f32.mrb[0].mxu0
        %v5469 = vadd.f32 0.0, %v5468
        %v5470 = vpop.f32.mrb[0].mxu0
        %5471 = vmatprep.mubr.f32.mxu0 0.0
        %5472 = vmatmul.mubr.f32.gmra.mrb[0].mxu0 %v5189
        %v5473 = vpop.f32.mrb[0].mxu0
        %v5474 = vadd.f32 0.0, %v5473
        %v5475 = vpop.f32.mrb[0].mxu0
        %5476 = vmatprep.mubr.f32.mxu0 0.0
        %5477 = vmatmul.mubr.f32.gmra.mrb[0].mxu0 %v5192
        %v5478 = vpop.f32.mrb[0].mxu0
        %v5479 = vadd.f32 0.0, %v5478
        %v5480 = vpop.f32.mrb[0].mxu0
        %5481 = vmatprep.mubr.f32.mxu0 0.0
        %5482 = vmatmul.mubr.f32.gmra.mrb[0].mxu0 %v5195
        %v5483 = vpop.f32.mrb[0].mxu0
        %v5484 = vadd.f32 0.0, %v5483
        %v5485 = vpop.f32.mrb[0].mxu0
        %5486 = vmatprep.mubr.f32.mxu0 0.0
        %5487 = vmatmul.mubr.f32.gmra.mrb[0].mxu0 %v5198
        %v5488 = vpop.f32.mrb[0].mxu0
        %v5489 = vadd.f32 0.0, %v5488
        %v5490 = vpop.f32.mrb[0].mxu0
        %5491 = vmatprep.mubr.f32.mxu0 0.0
        %5492 = vmatmul.mubr.f32.gmra.mrb[0].mxu0 %v5201
        %v5493 = vpop.f32.mrb[0].mxu0
        %v5494 = vadd.f32 0.0, %v5493
        %v5495 = vpop.f32.mrb[0].mxu0
        %5496 = vmatprep.mubr.f32.mxu0 0.0
        %5497 = vmatmul.mubr.f32.gmra.mrb[0].mxu0 %v5204
        %v5498 = vpop.f32.mrb[0].mxu0
        %v5499 = vadd.f32 0.0, %v5498
        %v5500 = vpop.f32.mrb[0].mxu0
        %5501 = vmatprep.mubr.f32.mxu0 0.0
        %5502 = vmatmul.mubr.f32.gmra.mrb[0].mxu0 %v5207
        %v5503 = vpop.f32.mrb[0].mxu0
        %v5504 = vadd.f32 0.0, %v5503
        %v5505 = vpop.f32.mrb[0].mxu0
        %5506 = vmatprep.mubr.f32.mxu0 0.0
        %5507 = vmatmul.mubr.f32.gmra.mrb[0].mxu0 %v5210
        %v5508 = vpop.f32.mrb[0].mxu0
        %v5509 = vadd.f32 0.0, %v5508
        %v5510 = vpop.f32.mrb[0].mxu0
        %5511 = vmatprep.mubr.f32.mxu0 0.0
        %5512 = vmatmul.mubr.f32.gmra.mrb[0].mxu0 %v5213
        %v5513 = vpop.f32.mrb[0].mxu0
        %v5514 = vadd.f32 0.0, %v5513
        %v5515 = vpop.f32.mrb[0].mxu0
        %5516 = vmatprep.mubr.f32.mxu0 0.0
        %5517 = vmatmul.mubr.f32.gmra.mrb[0].mxu0 %v5216
        %v5518 = vpop.f32.mrb[0].mxu0
        %v5519 = vadd.f32 0.0, %v5518
        %v5520 = vpop.f32.mrb[0].mxu0
        %5521 = vmatprep.mubr.f32.mxu0 0.0
        %5522 = vmatmul.mubr.f32.gmra.mrb[0].mxu0 %v5219
        %v5523 = vpop.f32.mrb[0].mxu0
        %v5524 = vadd.f32 0.0, %v5523
        %v5525 = vpop.f32.mrb[0].mxu0
        %5526 = vmatprep.mubr.f32.mxu0 0.0
        %5527 = vmatmul.mubr.f32.gmra.mrb[0].mxu0 %v5222
        %v5528 = vpop.f32.mrb[0].mxu0
        %v5529 = vadd.f32 0.0, %v5528
        %v5530 = vpop.f32.mrb[0].mxu0
        %5531 = vdwg.mxu0
        %v5532 = vadd.f32 %v4981, %v5294
        %v5533 = vadd.f32 %v4982, %v5299
        %v5534 = vadd.f32 %v4983, %v5304
        %v5535 = vadd.f32 %v4984, %v5309
        %v5536 = vadd.f32 %v4985, %v5314
        %v5537 = vadd.f32 %v4986, %v5319
        %v5538 = vadd.f32 %v4987, %v5324
        %v5539 = vadd.f32 %v4988, %v5329
        %v5540 = vadd.f32 %v4989, %v5334
        %v5541 = vadd.f32 %v4990, %v5339
        %v5542 = vadd.f32 %v4991, %v5344
        %v5543 = vadd.f32 %v4992, %v5349
        %v5544 = vadd.f32 %v4993, %v5354
        %v5545 = vadd.f32 %v4994, %v5359
        %v5546 = vadd.f32 %v4995, %v5364
        %v5547 = vadd.f32 %v4996, %v5369
        %v5548 = vadd.f32 %v4997, %v5374
        %v5549 = vadd.f32 %v4998, %v5379
        %v5550 = vadd.f32 %v4999, %v5384
        %v5551 = vadd.f32 %v5000, %v5389
        %v5552 = vadd.f32 %v5001, %v5394
        %v5553 = vadd.f32 %v5002, %v5399
        %v5554 = vadd.f32 %v5003, %v5404
        %v5555 = vadd.f32 %v5004, %v5409
        %v5556 = vadd.f32 %v5005, %v5414
        %v5557 = vadd.f32 %v5006, %v5419
        %v5558 = vadd.f32 %v5007, %v5424
        %v5559 = vadd.f32 %v5008, %v5429
        %v5560 = vadd.f32 %v5009, %v5434
        %v5561 = vadd.f32 %v5010, %v5439
        %v5562 = vadd.f32 %v5011, %v5444
        %v5563 = vadd.f32 %v5012, %v5449
        %v5564 = vadd.f32 %v5013, %v5454
        %v5565 = vadd.f32 %v5014, %v5459
        %v5566 = vadd.f32 %v5015, %v5464
        %v5567 = vadd.f32 %v5016, %v5469
        %v5568 = vadd.f32 %v5017, %v5474
        %v5569 = vadd.f32 %v5018, %v5479
        %v5570 = vadd.f32 %v5019, %v5484
        %v5571 = vadd.f32 %v5020, %v5489
        %v5572 = vadd.f32 %v5021, %v5494
        %v5573 = vadd.f32 %v5022, %v5499
        %v5574 = vadd.f32 %v5023, %v5504
        %v5575 = vadd.f32 %v5024, %v5509
        %v5576 = vadd.f32 %v5025, %v5514
        %v5577 = vadd.f32 %v5026, %v5519
        %v5578 = vadd.f32 %v5027, %v5524
        %v5579 = vadd.f32 %v5028, %v5529
        %s5580 = sadd.s32 0, 50
        %s5581 = scalar_lea.vmem %s303, %s5580
        %v5582 = vld [vmem:[%s5581] sm:$0xff]
        %v5583 = vld [vmem:[%s5581 + $0x8] sm:$0xff]
        %v5584 = vld [vmem:[%s5581 + $0x10] sm:$0xff]
        %v5585 = vld [vmem:[%s5581 + $0x18] sm:$0xff]
        %v5586 = vld [vmem:[%s5581 + $0x20] sm:$0xff]
        %v5587 = vld [vmem:[%s5581 + $0x28] sm:$0xff]
        %v5588 = vld [vmem:[%s5581 + $0x30] sm:$0xff]
        %v5589 = vld [vmem:[%s5581 + $0x38] sm:$0xff]
        %v5590 = vld [vmem:[%s5581 + $0x40] sm:$0xff]
        %v5591 = vld [vmem:[%s5581 + $0x48] sm:$0xff]
        %v5592 = vld [vmem:[%s5581 + $0x50] sm:$0xff]
        %v5593 = vld [vmem:[%s5581 + $0x58] sm:$0xff]
        %v5594 = vld [vmem:[%s5581 + $0x60] sm:$0xff]
        %v5595 = vld [vmem:[%s5581 + $0x68] sm:$0xff]
        %v5596 = vld [vmem:[%s5581 + $0x70] sm:$0xff]
        %v5597 = vld [vmem:[%s5581 + $0x78] sm:$0xff]
        %v5598 = vld [vmem:[%s5581 + $0x80] sm:$0xff]
        %v5599 = vld [vmem:[%s5581 + $0x88] sm:$0xff]
        %v5600 = vld [vmem:[%s5581 + $0x90] sm:$0xff]
        %v5601 = vld [vmem:[%s5581 + $0x98] sm:$0xff]
        %v5602 = vld [vmem:[%s5581 + $0xa0] sm:$0xff]
        %v5603 = vld [vmem:[%s5581 + $0xa8] sm:$0xff]
        %v5604 = vld [vmem:[%s5581 + $0xb0] sm:$0xff]
        %v5605 = vld [vmem:[%s5581 + $0xb8] sm:$0xff]
        %v5606 = vld [vmem:[%s5581 + $0xc0] sm:$0xff]
        %v5607 = vld [vmem:[%s5581 + $0xc8] sm:$0xff]
        %v5608 = vld [vmem:[%s5581 + $0xd0] sm:$0xff]
        %v5609 = vld [vmem:[%s5581 + $0xd8] sm:$0xff]
        %v5610 = vld [vmem:[%s5581 + $0xe0] sm:$0xff]
        %v5611 = vld [vmem:[%s5581 + $0xe8] sm:$0xff]
        %v5612 = vld [vmem:[%s5581 + $0xf0] sm:$0xff]
        %v5613 = vld [vmem:[%s5581 + $0xf8] sm:$0xff]
        %v5614 = vld [vmem:[%s5581 + $0x100] sm:$0xff]
        %v5615 = vld [vmem:[%s5581 + $0x108] sm:$0xff]
        %v5616 = vld [vmem:[%s5581 + $0x110] sm:$0xff]
        %v5617 = vld [vmem:[%s5581 + $0x118] sm:$0xff]
        %v5618 = vld [vmem:[%s5581 + $0x120] sm:$0xff]
        %v5619 = vld [vmem:[%s5581 + $0x128] sm:$0xff]
        %v5620 = vld [vmem:[%s5581 + $0x130] sm:$0xff]
        %v5621 = vld [vmem:[%s5581 + $0x138] sm:$0xff]
        %v5622 = vld [vmem:[%s5581 + $0x140] sm:$0xff]
        %v5623 = vld [vmem:[%s5581 + $0x148] sm:$0xff]
        %v5624 = vld [vmem:[%s5581 + $0x150] sm:$0xff]
        %v5625 = vld [vmem:[%s5581 + $0x158] sm:$0xff]
        %v5626 = vld [vmem:[%s5581 + $0x160] sm:$0xff]
        %v5627 = vld [vmem:[%s5581 + $0x168] sm:$0xff]
        %v5628 = vld [vmem:[%s5581 + $0x170] sm:$0xff]
        %v5629 = vld [vmem:[%s5581 + $0x178] sm:$0xff]
        %v5630 = vld [vmem:[%s1 + $0x20] sm:$0xf]
        %v5632 = vsel %vm1368, %v5582, 0
        %v5635 = vsel %vm1368, %v5583, 0
        %v5638 = vsel %vm1368, %v5584, 0
        %v5641 = vsel %vm1368, %v5585, 0
        %v5644 = vsel %vm1368, %v5586, 0
        %v5647 = vsel %vm1368, %v5587, 0
        %v5650 = vsel %vm1368, %v5588, 0
        %v5653 = vsel %vm1368, %v5589, 0
        %v5656 = vsel %vm1368, %v5590, 0
        %v5659 = vsel %vm1368, %v5591, 0
        %v5662 = vsel %vm1368, %v5592, 0
        %v5665 = vsel %vm1368, %v5593, 0
        %v5668 = vsel %vm1368, %v5594, 0
        %v5671 = vsel %vm1368, %v5595, 0
        %v5674 = vsel %vm1368, %v5596, 0
        %v5677 = vsel %vm1368, %v5597, 0
        %v5680 = vsel %vm1368, %v5598, 0
        %v5683 = vsel %vm1368, %v5599, 0
        %v5686 = vsel %vm1368, %v5600, 0
        %v5689 = vsel %vm1368, %v5601, 0
        %v5692 = vsel %vm1368, %v5602, 0
        %v5695 = vsel %vm1368, %v5603, 0
        %v5698 = vsel %vm1368, %v5604, 0
        %v5701 = vsel %vm1368, %v5605, 0
        %v5704 = vsel %vm1368, %v5606, 0
        %v5707 = vsel %vm1368, %v5607, 0
        %v5710 = vsel %vm1368, %v5608, 0
        %v5713 = vsel %vm1368, %v5609, 0
        %v5716 = vsel %vm1368, %v5610, 0
        %v5719 = vsel %vm1368, %v5611, 0
        %v5722 = vsel %vm1368, %v5612, 0
        %v5725 = vsel %vm1368, %v5613, 0
        %v5728 = vsel %vm1368, %v5614, 0
        %v5731 = vsel %vm1368, %v5615, 0
        %v5734 = vsel %vm1368, %v5616, 0
        %v5737 = vsel %vm1368, %v5617, 0
        %v5740 = vsel %vm1368, %v5618, 0
        %v5743 = vsel %vm1368, %v5619, 0
        %v5746 = vsel %vm1368, %v5620, 0
        %v5749 = vsel %vm1368, %v5621, 0
        %v5752 = vsel %vm1368, %v5622, 0
        %v5755 = vsel %vm1368, %v5623, 0
        %v5758 = vsel %vm1368, %v5624, 0
        %v5761 = vsel %vm1368, %v5625, 0
        %v5764 = vsel %vm1368, %v5626, 0
        %v5767 = vsel %vm1368, %v5627, 0
        %v5770 = vsel %vm1368, %v5628, 0
        %v5773 = vsel %vm1368, %v5629, 0
        %v5776 = vsel %vm1513, %v5630, 0
        %5778 = vmatprep.subr.mxu0 0.0
        %5779 = vmatpush1.msra.mxu0 %v5776
        %5780 = vmatprep.subr.mxu0 0.0
        %5781 = vmatpush1.msra.mxu0 0.0
        %5782 = vmatprep.subr.mxu0 0.0
        %5783 = vmatpush1.msra.mxu0 0.0
        %5784 = vmatprep.subr.mxu0 0.0
        %5785 = vmatpush1.msra.mxu0 0.0
        %5786 = vmatprep.subr.mxu0 0.0
        %5787 = vmatpush1.msra.mxu0 0.0
        %5788 = vmatprep.subr.mxu0 0.0
        %5789 = vmatpush1.msra.mxu0 0.0
        %5790 = vmatprep.subr.mxu0 0.0
        %5791 = vmatpush1.msra.mxu0 0.0
        %5792 = vmatprep.subr.mxu0 0.0
        %5793 = vmatpush1.msra.mxu0 0.0
        %5794 = vmatprep.subr.mxu0 0.0
        %5795 = vmatpush1.msra.mxu0 0.0
        %5796 = vmatprep.subr.mxu0 0.0
        %5797 = vmatpush1.msra.mxu0 0.0
        %5798 = vmatprep.subr.mxu0 0.0
        %5799 = vmatpush1.msra.mxu0 0.0
        %5800 = vmatprep.subr.mxu0 0.0
        %5801 = vmatpush1.msra.mxu0 0.0
        %5802 = vmatprep.subr.mxu0 0.0
        %5803 = vmatpush1.msra.mxu0 0.0
        %5804 = vmatprep.subr.mxu0 0.0
        %5805 = vmatpush1.msra.mxu0 0.0
        %5806 = vmatprep.subr.mxu0 0.0
        %5807 = vmatpush1.msra.mxu0 0.0
        %5808 = vmatprep.subr.mxu0 0.0
        %5809 = vmatpush1.msra.mxu0 0.0
        %5810 = vmatprep.subr.mxu0 0.0
        %5811 = vmatpush1.msra.mxu0 0.0
        %5812 = vmatprep.subr.mxu0 0.0
        %5813 = vmatpush1.msra.mxu0 0.0
        %5814 = vmatprep.subr.mxu0 0.0
        %5815 = vmatpush1.msra.mxu0 0.0
        %5816 = vmatprep.subr.mxu0 0.0
        %5817 = vmatpush1.msra.mxu0 0.0
        %5818 = vmatprep.subr.mxu0 0.0
        %5819 = vmatpush1.msra.mxu0 0.0
        %5820 = vmatprep.subr.mxu0 0.0
        %5821 = vmatpush1.msra.mxu0 0.0
        %5822 = vmatprep.subr.mxu0 0.0
        %5823 = vmatpush1.msra.mxu0 0.0
        %5824 = vmatprep.subr.mxu0 0.0
        %5825 = vmatpush1.msra.mxu0 0.0
        %5826 = vmatprep.subr.mxu0 0.0
        %5827 = vmatpush1.msra.mxu0 0.0
        %5828 = vmatprep.subr.mxu0 0.0
        %5829 = vmatpush1.msra.mxu0 0.0
        %5830 = vmatprep.subr.mxu0 0.0
        %5831 = vmatpush1.msra.mxu0 0.0
        %5832 = vmatprep.subr.mxu0 0.0
        %5833 = vmatpush1.msra.mxu0 0.0
        %5834 = vmatprep.subr.mxu0 0.0
        %5835 = vmatpush1.msra.mxu0 0.0
        %5836 = vmatprep.subr.mxu0 0.0
        %5837 = vmatpush1.msra.mxu0 0.0
        %5838 = vmatprep.subr.mxu0 0.0
        %5839 = vmatpush1.msra.mxu0 0.0
        %5840 = vmatprep.subr.mxu0 0.0
        %5841 = vmatpush1.msra.mxu0 0.0
        %5842 = vmatprep.mubr.f32.mxu0 0.0
        %5843 = vmatmul.mubr.f32.gmra.mrb[0].mxu0 %v5632
        %v5844 = vpop.f32.mrb[0].mxu0
        %v5845 = vadd.f32 0.0, %v5844
        %v5846 = vpop.f32.mrb[0].mxu0
        %5847 = vmatprep.mubr.f32.mxu0 0.0
        %5848 = vmatmul.mubr.f32.gmra.mrb[0].mxu0 %v5635
        %v5849 = vpop.f32.mrb[0].mxu0
        %v5850 = vadd.f32 0.0, %v5849
        %v5851 = vpop.f32.mrb[0].mxu0
        %5852 = vmatprep.mubr.f32.mxu0 0.0
        %5853 = vmatmul.mubr.f32.gmra.mrb[0].mxu0 %v5638
        %v5854 = vpop.f32.mrb[0].mxu0
        %v5855 = vadd.f32 0.0, %v5854
        %v5856 = vpop.f32.mrb[0].mxu0
        %5857 = vmatprep.mubr.f32.mxu0 0.0
        %5858 = vmatmul.mubr.f32.gmra.mrb[0].mxu0 %v5641
        %v5859 = vpop.f32.mrb[0].mxu0
        %v5860 = vadd.f32 0.0, %v5859
        %v5861 = vpop.f32.mrb[0].mxu0
        %5862 = vmatprep.mubr.f32.mxu0 0.0
        %5863 = vmatmul.mubr.f32.gmra.mrb[0].mxu0 %v5644
        %v5864 = vpop.f32.mrb[0].mxu0
        %v5865 = vadd.f32 0.0, %v5864
        %v5866 = vpop.f32.mrb[0].mxu0
        %5867 = vmatprep.mubr.f32.mxu0 0.0
        %5868 = vmatmul.mubr.f32.gmra.mrb[0].mxu0 %v5647
        %v5869 = vpop.f32.mrb[0].mxu0
        %v5870 = vadd.f32 0.0, %v5869
        %v5871 = vpop.f32.mrb[0].mxu0
        %5872 = vmatprep.mubr.f32.mxu0 0.0
        %5873 = vmatmul.mubr.f32.gmra.mrb[0].mxu0 %v5650
        %v5874 = vpop.f32.mrb[0].mxu0
        %v5875 = vadd.f32 0.0, %v5874
        %v5876 = vpop.f32.mrb[0].mxu0
        %5877 = vmatprep.mubr.f32.mxu0 0.0
        %5878 = vmatmul.mubr.f32.gmra.mrb[0].mxu0 %v5653
        %v5879 = vpop.f32.mrb[0].mxu0
        %v5880 = vadd.f32 0.0, %v5879
        %v5881 = vpop.f32.mrb[0].mxu0
        %5882 = vmatprep.mubr.f32.mxu0 0.0
        %5883 = vmatmul.mubr.f32.gmra.mrb[0].mxu0 %v5656
        %v5884 = vpop.f32.mrb[0].mxu0
        %v5885 = vadd.f32 0.0, %v5884
        %v5886 = vpop.f32.mrb[0].mxu0
        %5887 = vmatprep.mubr.f32.mxu0 0.0
        %5888 = vmatmul.mubr.f32.gmra.mrb[0].mxu0 %v5659
        %v5889 = vpop.f32.mrb[0].mxu0
        %v5890 = vadd.f32 0.0, %v5889
        %v5891 = vpop.f32.mrb[0].mxu0
        %5892 = vmatprep.mubr.f32.mxu0 0.0
        %5893 = vmatmul.mubr.f32.gmra.mrb[0].mxu0 %v5662
        %v5894 = vpop.f32.mrb[0].mxu0
        %v5895 = vadd.f32 0.0, %v5894
        %v5896 = vpop.f32.mrb[0].mxu0
        %5897 = vmatprep.mubr.f32.mxu0 0.0
        %5898 = vmatmul.mubr.f32.gmra.mrb[0].mxu0 %v5665
        %v5899 = vpop.f32.mrb[0].mxu0
        %v5900 = vadd.f32 0.0, %v5899
        %v5901 = vpop.f32.mrb[0].mxu0
        %5902 = vmatprep.mubr.f32.mxu0 0.0
        %5903 = vmatmul.mubr.f32.gmra.mrb[0].mxu0 %v5668
        %v5904 = vpop.f32.mrb[0].mxu0
        %v5905 = vadd.f32 0.0, %v5904
        %v5906 = vpop.f32.mrb[0].mxu0
        %5907 = vmatprep.mubr.f32.mxu0 0.0
        %5908 = vmatmul.mubr.f32.gmra.mrb[0].mxu0 %v5671
        %v5909 = vpop.f32.mrb[0].mxu0
        %v5910 = vadd.f32 0.0, %v5909
        %v5911 = vpop.f32.mrb[0].mxu0
        %5912 = vmatprep.mubr.f32.mxu0 0.0
        %5913 = vmatmul.mubr.f32.gmra.mrb[0].mxu0 %v5674
        %v5914 = vpop.f32.mrb[0].mxu0
        %v5915 = vadd.f32 0.0, %v5914
        %v5916 = vpop.f32.mrb[0].mxu0
        %5917 = vmatprep.mubr.f32.mxu0 0.0
        %5918 = vmatmul.mubr.f32.gmra.mrb[0].mxu0 %v5677
        %v5919 = vpop.f32.mrb[0].mxu0
        %v5920 = vadd.f32 0.0, %v5919
        %v5921 = vpop.f32.mrb[0].mxu0
        %5922 = vmatprep.mubr.f32.mxu0 0.0
        %5923 = vmatmul.mubr.f32.gmra.mrb[0].mxu0 %v5680
        %v5924 = vpop.f32.mrb[0].mxu0
        %v5925 = vadd.f32 0.0, %v5924
        %v5926 = vpop.f32.mrb[0].mxu0
        %5927 = vmatprep.mubr.f32.mxu0 0.0
        %5928 = vmatmul.mubr.f32.gmra.mrb[0].mxu0 %v5683
        %v5929 = vpop.f32.mrb[0].mxu0
        %v5930 = vadd.f32 0.0, %v5929
        %v5931 = vpop.f32.mrb[0].mxu0
        %5932 = vmatprep.mubr.f32.mxu0 0.0
        %5933 = vmatmul.mubr.f32.gmra.mrb[0].mxu0 %v5686
        %v5934 = vpop.f32.mrb[0].mxu0
        %v5935 = vadd.f32 0.0, %v5934
        %v5936 = vpop.f32.mrb[0].mxu0
        %5937 = vmatprep.mubr.f32.mxu0 0.0
        %5938 = vmatmul.mubr.f32.gmra.mrb[0].mxu0 %v5689
        %v5939 = vpop.f32.mrb[0].mxu0
        %v5940 = vadd.f32 0.0, %v5939
        %v5941 = vpop.f32.mrb[0].mxu0
        %5942 = vmatprep.mubr.f32.mxu0 0.0
        %5943 = vmatmul.mubr.f32.gmra.mrb[0].mxu0 %v5692
        %v5944 = vpop.f32.mrb[0].mxu0
        %v5945 = vadd.f32 0.0, %v5944
        %v5946 = vpop.f32.mrb[0].mxu0
        %5947 = vmatprep.mubr.f32.mxu0 0.0
        %5948 = vmatmul.mubr.f32.gmra.mrb[0].mxu0 %v5695
        %v5949 = vpop.f32.mrb[0].mxu0
        %v5950 = vadd.f32 0.0, %v5949
        %v5951 = vpop.f32.mrb[0].mxu0
        %5952 = vmatprep.mubr.f32.mxu0 0.0
        %5953 = vmatmul.mubr.f32.gmra.mrb[0].mxu0 %v5698
        %v5954 = vpop.f32.mrb[0].mxu0
        %v5955 = vadd.f32 0.0, %v5954
        %v5956 = vpop.f32.mrb[0].mxu0
        %5957 = vmatprep.mubr.f32.mxu0 0.0
        %5958 = vmatmul.mubr.f32.gmra.mrb[0].mxu0 %v5701
        %v5959 = vpop.f32.mrb[0].mxu0
        %v5960 = vadd.f32 0.0, %v5959
        %v5961 = vpop.f32.mrb[0].mxu0
        %5962 = vmatprep.mubr.f32.mxu0 0.0
        %5963 = vmatmul.mubr.f32.gmra.mrb[0].mxu0 %v5704
        %v5964 = vpop.f32.mrb[0].mxu0
        %v5965 = vadd.f32 0.0, %v5964
        %v5966 = vpop.f32.mrb[0].mxu0
        %5967 = vmatprep.mubr.f32.mxu0 0.0
        %5968 = vmatmul.mubr.f32.gmra.mrb[0].mxu0 %v5707
        %v5969 = vpop.f32.mrb[0].mxu0
        %v5970 = vadd.f32 0.0, %v5969
        %v5971 = vpop.f32.mrb[0].mxu0
        %5972 = vmatprep.mubr.f32.mxu0 0.0
        %5973 = vmatmul.mubr.f32.gmra.mrb[0].mxu0 %v5710
        %v5974 = vpop.f32.mrb[0].mxu0
        %v5975 = vadd.f32 0.0, %v5974
        %v5976 = vpop.f32.mrb[0].mxu0
        %5977 = vmatprep.mubr.f32.mxu0 0.0
        %5978 = vmatmul.mubr.f32.gmra.mrb[0].mxu0 %v5713
        %v5979 = vpop.f32.mrb[0].mxu0
        %v5980 = vadd.f32 0.0, %v5979
        %v5981 = vpop.f32.mrb[0].mxu0
        %5982 = vmatprep.mubr.f32.mxu0 0.0
        %5983 = vmatmul.mubr.f32.gmra.mrb[0].mxu0 %v5716
        %v5984 = vpop.f32.mrb[0].mxu0
        %v5985 = vadd.f32 0.0, %v5984
        %v5986 = vpop.f32.mrb[0].mxu0
        %5987 = vmatprep.mubr.f32.mxu0 0.0
        %5988 = vmatmul.mubr.f32.gmra.mrb[0].mxu0 %v5719
        %v5989 = vpop.f32.mrb[0].mxu0
        %v5990 = vadd.f32 0.0, %v5989
        %v5991 = vpop.f32.mrb[0].mxu0
        %5992 = vmatprep.mubr.f32.mxu0 0.0
        %5993 = vmatmul.mubr.f32.gmra.mrb[0].mxu0 %v5722
        %v5994 = vpop.f32.mrb[0].mxu0
        %v5995 = vadd.f32 0.0, %v5994
        %v5996 = vpop.f32.mrb[0].mxu0
        %5997 = vmatprep.mubr.f32.mxu0 0.0
        %5998 = vmatmul.mubr.f32.gmra.mrb[0].mxu0 %v5725
        %v5999 = vpop.f32.mrb[0].mxu0
        %v6000 = vadd.f32 0.0, %v5999
        %v6001 = vpop.f32.mrb[0].mxu0
        %6002 = vmatprep.mubr.f32.mxu0 0.0
        %6003 = vmatmul.mubr.f32.gmra.mrb[0].mxu0 %v5728
        %v6004 = vpop.f32.mrb[0].mxu0
        %v6005 = vadd.f32 0.0, %v6004
        %v6006 = vpop.f32.mrb[0].mxu0
        %6007 = vmatprep.mubr.f32.mxu0 0.0
        %6008 = vmatmul.mubr.f32.gmra.mrb[0].mxu0 %v5731
        %v6009 = vpop.f32.mrb[0].mxu0
        %v6010 = vadd.f32 0.0, %v6009
        %v6011 = vpop.f32.mrb[0].mxu0
        %6012 = vmatprep.mubr.f32.mxu0 0.0
        %6013 = vmatmul.mubr.f32.gmra.mrb[0].mxu0 %v5734
        %v6014 = vpop.f32.mrb[0].mxu0
        %v6015 = vadd.f32 0.0, %v6014
        %v6016 = vpop.f32.mrb[0].mxu0
        %6017 = vmatprep.mubr.f32.mxu0 0.0
        %6018 = vmatmul.mubr.f32.gmra.mrb[0].mxu0 %v5737
        %v6019 = vpop.f32.mrb[0].mxu0
        %v6020 = vadd.f32 0.0, %v6019
        %v6021 = vpop.f32.mrb[0].mxu0
        %6022 = vmatprep.mubr.f32.mxu0 0.0
        %6023 = vmatmul.mubr.f32.gmra.mrb[0].mxu0 %v5740
        %v6024 = vpop.f32.mrb[0].mxu0
        %v6025 = vadd.f32 0.0, %v6024
        %v6026 = vpop.f32.mrb[0].mxu0
        %6027 = vmatprep.mubr.f32.mxu0 0.0
        %6028 = vmatmul.mubr.f32.gmra.mrb[0].mxu0 %v5743
        %v6029 = vpop.f32.mrb[0].mxu0
        %v6030 = vadd.f32 0.0, %v6029
        %v6031 = vpop.f32.mrb[0].mxu0
        %6032 = vmatprep.mubr.f32.mxu0 0.0
        %6033 = vmatmul.mubr.f32.gmra.mrb[0].mxu0 %v5746
        %v6034 = vpop.f32.mrb[0].mxu0
        %v6035 = vadd.f32 0.0, %v6034
        %v6036 = vpop.f32.mrb[0].mxu0
        %6037 = vmatprep.mubr.f32.mxu0 0.0
        %6038 = vmatmul.mubr.f32.gmra.mrb[0].mxu0 %v5749
        %v6039 = vpop.f32.mrb[0].mxu0
        %v6040 = vadd.f32 0.0, %v6039
        %v6041 = vpop.f32.mrb[0].mxu0
        %6042 = vmatprep.mubr.f32.mxu0 0.0
        %6043 = vmatmul.mubr.f32.gmra.mrb[0].mxu0 %v5752
        %v6044 = vpop.f32.mrb[0].mxu0
        %v6045 = vadd.f32 0.0, %v6044
        %v6046 = vpop.f32.mrb[0].mxu0
        %6047 = vmatprep.mubr.f32.mxu0 0.0
        %6048 = vmatmul.mubr.f32.gmra.mrb[0].mxu0 %v5755
        %v6049 = vpop.f32.mrb[0].mxu0
        %v6050 = vadd.f32 0.0, %v6049
        %v6051 = vpop.f32.mrb[0].mxu0
        %6052 = vmatprep.mubr.f32.mxu0 0.0
        %6053 = vmatmul.mubr.f32.gmra.mrb[0].mxu0 %v5758
        %v6054 = vpop.f32.mrb[0].mxu0
        %v6055 = vadd.f32 0.0, %v6054
        %v6056 = vpop.f32.mrb[0].mxu0
        %6057 = vmatprep.mubr.f32.mxu0 0.0
        %6058 = vmatmul.mubr.f32.gmra.mrb[0].mxu0 %v5761
        %v6059 = vpop.f32.mrb[0].mxu0
        %v6060 = vadd.f32 0.0, %v6059
        %v6061 = vpop.f32.mrb[0].mxu0
        %6062 = vmatprep.mubr.f32.mxu0 0.0
        %6063 = vmatmul.mubr.f32.gmra.mrb[0].mxu0 %v5764
        %v6064 = vpop.f32.mrb[0].mxu0
        %v6065 = vadd.f32 0.0, %v6064
        %v6066 = vpop.f32.mrb[0].mxu0
        %6067 = vmatprep.mubr.f32.mxu0 0.0
        %6068 = vmatmul.mubr.f32.gmra.mrb[0].mxu0 %v5767
        %v6069 = vpop.f32.mrb[0].mxu0
        %v6070 = vadd.f32 0.0, %v6069
        %v6071 = vpop.f32.mrb[0].mxu0
        %6072 = vmatprep.mubr.f32.mxu0 0.0
        %6073 = vmatmul.mubr.f32.gmra.mrb[0].mxu0 %v5770
        %v6074 = vpop.f32.mrb[0].mxu0
        %v6075 = vadd.f32 0.0, %v6074
        %v6076 = vpop.f32.mrb[0].mxu0
        %6077 = vmatprep.mubr.f32.mxu0 0.0
        %6078 = vmatmul.mubr.f32.gmra.mrb[0].mxu0 %v5773
        %v6079 = vpop.f32.mrb[0].mxu0
        %v6080 = vadd.f32 0.0, %v6079
        %v6081 = vpop.f32.mrb[0].mxu0
        %6082 = vdwg.mxu0
        %v6083 = vadd.f32 %v5532, %v5845
        %v6084 = vadd.f32 %v5533, %v5850
        %v6085 = vadd.f32 %v5534, %v5855
        %v6086 = vadd.f32 %v5535, %v5860
        %v6087 = vadd.f32 %v5536, %v5865
        %v6088 = vadd.f32 %v5537, %v5870
        %v6089 = vadd.f32 %v5538, %v5875
        %v6090 = vadd.f32 %v5539, %v5880
        %v6091 = vadd.f32 %v5540, %v5885
        %v6092 = vadd.f32 %v5541, %v5890
        %v6093 = vadd.f32 %v5542, %v5895
        %v6094 = vadd.f32 %v5543, %v5900
        %v6095 = vadd.f32 %v5544, %v5905
        %v6096 = vadd.f32 %v5545, %v5910
        %v6097 = vadd.f32 %v5546, %v5915
        %v6098 = vadd.f32 %v5547, %v5920
        %v6099 = vadd.f32 %v5548, %v5925
        %v6100 = vadd.f32 %v5549, %v5930
        %v6101 = vadd.f32 %v5550, %v5935
        %v6102 = vadd.f32 %v5551, %v5940
        %v6103 = vadd.f32 %v5552, %v5945
        %v6104 = vadd.f32 %v5553, %v5950
        %v6105 = vadd.f32 %v5554, %v5955
        %v6106 = vadd.f32 %v5555, %v5960
        %v6107 = vadd.f32 %v5556, %v5965
        %v6108 = vadd.f32 %v5557, %v5970
        %v6109 = vadd.f32 %v5558, %v5975
        %v6110 = vadd.f32 %v5559, %v5980
        %v6111 = vadd.f32 %v5560, %v5985
        %v6112 = vadd.f32 %v5561, %v5990
        %v6113 = vadd.f32 %v5562, %v5995
        %v6114 = vadd.f32 %v5563, %v6000
        %v6115 = vadd.f32 %v5564, %v6005
        %v6116 = vadd.f32 %v5565, %v6010
        %v6117 = vadd.f32 %v5566, %v6015
        %v6118 = vadd.f32 %v5567, %v6020
        %v6119 = vadd.f32 %v5568, %v6025
        %v6120 = vadd.f32 %v5569, %v6030
        %v6121 = vadd.f32 %v5570, %v6035
        %v6122 = vadd.f32 %v5571, %v6040
        %v6123 = vadd.f32 %v5572, %v6045
        %v6124 = vadd.f32 %v5573, %v6050
        %v6125 = vadd.f32 %v5574, %v6055
        %v6126 = vadd.f32 %v5575, %v6060
        %v6127 = vadd.f32 %v5576, %v6065
        %v6128 = vadd.f32 %v5577, %v6070
        %v6129 = vadd.f32 %v5578, %v6075
        %v6130 = vadd.f32 %v5579, %v6080
        %v6131 = vlaneseq
        %v6132 = vshrl.u32 %v6131, 7
        %v6133 = vsub.s32 0, %v6132
        %v6134 = vrot.slane %v304, %v6133
        %v6135 = vadd.f32 %v6083, %v6134
        %v6136 = vadd.f32 %v6084, %v6134
        %v6137 = vadd.f32 %v6085, %v6134
        %v6138 = vadd.f32 %v6086, %v6134
        %v6139 = vadd.f32 %v6087, %v6134
        %v6140 = vadd.f32 %v6088, %v6134
        %v6141 = vadd.f32 %v6089, %v6134
        %v6142 = vadd.f32 %v6090, %v6134
        %v6143 = vadd.f32 %v6091, %v6134
        %v6144 = vadd.f32 %v6092, %v6134
        %v6145 = vadd.f32 %v6093, %v6134
        %v6146 = vadd.f32 %v6094, %v6134
        %v6147 = vadd.f32 %v6095, %v6134
        %v6148 = vadd.f32 %v6096, %v6134
        %v6149 = vadd.f32 %v6097, %v6134
        %v6150 = vadd.f32 %v6098, %v6134
        %v6151 = vadd.f32 %v6099, %v6134
        %v6152 = vadd.f32 %v6100, %v6134
        %v6153 = vadd.f32 %v6101, %v6134
        %v6154 = vadd.f32 %v6102, %v6134
        %v6155 = vadd.f32 %v6103, %v6134
        %v6156 = vadd.f32 %v6104, %v6134
        %v6157 = vadd.f32 %v6105, %v6134
        %v6158 = vadd.f32 %v6106, %v6134
        %v6159 = vadd.f32 %v6107, %v6134
        %v6160 = vadd.f32 %v6108, %v6134
        %v6161 = vadd.f32 %v6109, %v6134
        %v6162 = vadd.f32 %v6110, %v6134
        %v6163 = vadd.f32 %v6111, %v6134
        %v6164 = vadd.f32 %v6112, %v6134
        %v6165 = vadd.f32 %v6113, %v6134
        %v6166 = vadd.f32 %v6114, %v6134
        %v6167 = vadd.f32 %v6115, %v6134
        %v6168 = vadd.f32 %v6116, %v6134
        %v6169 = vadd.f32 %v6117, %v6134
        %v6170 = vadd.f32 %v6118, %v6134
        %v6171 = vadd.f32 %v6119, %v6134
        %v6172 = vadd.f32 %v6120, %v6134
        %v6173 = vadd.f32 %v6121, %v6134
        %v6174 = vadd.f32 %v6122, %v6134
        %v6175 = vadd.f32 %v6123, %v6134
        %v6176 = vadd.f32 %v6124, %v6134
        %v6177 = vadd.f32 %v6125, %v6134
        %v6178 = vadd.f32 %v6126, %v6134
        %v6179 = vadd.f32 %v6127, %v6134
        %v6180 = vadd.f32 %v6128, %v6134
        %v6181 = vadd.f32 %v6129, %v6134
        %v6182 = vadd.f32 %v6130, %v6134
        %v6183 = vmul.f32 %v6135, %v1220
        %v6184 = vmul.f32 %v6136, %v1221
        %v6185 = vmul.f32 %v6137, %v1222
        %v6186 = vmul.f32 %v6138, %v1223
        %v6187 = vmul.f32 %v6139, %v1224
        %v6188 = vmul.f32 %v6140, %v1225
        %v6189 = vmul.f32 %v6141, %v1226
        %v6190 = vmul.f32 %v6142, %v1227
        %v6191 = vmul.f32 %v6143, %v1228
        %v6192 = vmul.f32 %v6144, %v1229
        %v6193 = vmul.f32 %v6145, %v1230
        %v6194 = vmul.f32 %v6146, %v1231
        %v6195 = vmul.f32 %v6147, %v1232
        %v6196 = vmul.f32 %v6148, %v1233
        %v6197 = vmul.f32 %v6149, %v1234
        %v6198 = vmul.f32 %v6150, %v1235
        %v6199 = vmul.f32 %v6151, %v1236
        %v6200 = vmul.f32 %v6152, %v1237
        %v6201 = vmul.f32 %v6153, %v1238
        %v6202 = vmul.f32 %v6154, %v1239
        %v6203 = vmul.f32 %v6155, %v1240
        %v6204 = vmul.f32 %v6156, %v1241
        %v6205 = vmul.f32 %v6157, %v1242
        %v6206 = vmul.f32 %v6158, %v1243
        %v6207 = vmul.f32 %v6159, %v1244
        %v6208 = vmul.f32 %v6160, %v1245
        %v6209 = vmul.f32 %v6161, %v1246
        %v6210 = vmul.f32 %v6162, %v1247
        %v6211 = vmul.f32 %v6163, %v1248
        %v6212 = vmul.f32 %v6164, %v1249
        %v6213 = vmul.f32 %v6165, %v1250
        %v6214 = vmul.f32 %v6166, %v1251
        %v6215 = vmul.f32 %v6167, %v1252
        %v6216 = vmul.f32 %v6168, %v1253
        %v6217 = vmul.f32 %v6169, %v1254
        %v6218 = vmul.f32 %v6170, %v1255
        %v6219 = vmul.f32 %v6171, %v1256
        %v6220 = vmul.f32 %v6172, %v1257
        %v6221 = vmul.f32 %v6173, %v1258
        %v6222 = vmul.f32 %v6174, %v1259
        %v6223 = vmul.f32 %v6175, %v1260
        %v6224 = vmul.f32 %v6176, %v1261
        %v6225 = vmul.f32 %v6177, %v1262
        %v6226 = vmul.f32 %v6178, %v1263
        %v6227 = vmul.f32 %v6179, %v1264
        %v6228 = vmul.f32 %v6180, %v1265
        %v6229 = vmul.f32 %v6181, %v1266
        %v6230 = vmul.f32 %v6182, %v1267
        %vm6231 = vcmask 261120
        %6232 = vst.msk [vmem:[#allocation2] sm:$0xff] %vm6231, %v6183
        %6233 = vst.msk [vmem:[#allocation2 + $0x8] sm:$0xff] %vm6231, %v6184
        %6234 = vst.msk [vmem:[#allocation2 + $0x10] sm:$0xff] %vm6231, %v6185
        %6235 = vst.msk [vmem:[#allocation2 + $0x18] sm:$0xff] %vm6231, %v6186
        %6236 = vst.msk [vmem:[#allocation2 + $0x20] sm:$0xff] %vm6231, %v6187
        %6237 = vst.msk [vmem:[#allocation2 + $0x28] sm:$0xff] %vm6231, %v6188
        %6238 = vst.msk [vmem:[#allocation2 + $0x30] sm:$0xff] %vm6231, %v6189
        %6239 = vst.msk [vmem:[#allocation2 + $0x38] sm:$0xff] %vm6231, %v6190
        %6240 = vst.msk [vmem:[#allocation2 + $0x40] sm:$0xff] %vm6231, %v6191
        %6241 = vst.msk [vmem:[#allocation2 + $0x48] sm:$0xff] %vm6231, %v6192
        %6242 = vst.msk [vmem:[#allocation2 + $0x50] sm:$0xff] %vm6231, %v6193
        %6243 = vst.msk [vmem:[#allocation2 + $0x58] sm:$0xff] %vm6231, %v6194
        %6244 = vst.msk [vmem:[#allocation2 + $0x60] sm:$0xff] %vm6231, %v6195
        %6245 = vst.msk [vmem:[#allocation2 + $0x68] sm:$0xff] %vm6231, %v6196
        %6246 = vst.msk [vmem:[#allocation2 + $0x70] sm:$0xff] %vm6231, %v6197
        %6247 = vst.msk [vmem:[#allocation2 + $0x78] sm:$0xff] %vm6231, %v6198
        %6248 = vst.msk [vmem:[#allocation2 + $0x80] sm:$0xff] %vm6231, %v6199
        %6249 = vst.msk [vmem:[#allocation2 + $0x88] sm:$0xff] %vm6231, %v6200
        %6250 = vst.msk [vmem:[#allocation2 + $0x90] sm:$0xff] %vm6231, %v6201
        %6251 = vst.msk [vmem:[#allocation2 + $0x98] sm:$0xff] %vm6231, %v6202
        %6252 = vst.msk [vmem:[#allocation2 + $0xa0] sm:$0xff] %vm6231, %v6203
        %6253 = vst.msk [vmem:[#allocation2 + $0xa8] sm:$0xff] %vm6231, %v6204
        %6254 = vst.msk [vmem:[#allocation2 + $0xb0] sm:$0xff] %vm6231, %v6205
        %6255 = vst.msk [vmem:[#allocation2 + $0xb8] sm:$0xff] %vm6231, %v6206
        %6256 = vst.msk [vmem:[#allocation2 + $0xc0] sm:$0xff] %vm6231, %v6207
        %6257 = vst.msk [vmem:[#allocation2 + $0xc8] sm:$0xff] %vm6231, %v6208
        %6258 = vst.msk [vmem:[#allocation2 + $0xd0] sm:$0xff] %vm6231, %v6209
        %6259 = vst.msk [vmem:[#allocation2 + $0xd8] sm:$0xff] %vm6231, %v6210
        %6260 = vst.msk [vmem:[#allocation2 + $0xe0] sm:$0xff] %vm6231, %v6211
        %6261 = vst.msk [vmem:[#allocation2 + $0xe8] sm:$0xff] %vm6231, %v6212
        %6262 = vst.msk [vmem:[#allocation2 + $0xf0] sm:$0xff] %vm6231, %v6213
        %6263 = vst.msk [vmem:[#allocation2 + $0xf8] sm:$0xff] %vm6231, %v6214
        %6264 = vst.msk [vmem:[#allocation2 + $0x100] sm:$0xff] %vm6231, %v6215
        %6265 = vst.msk [vmem:[#allocation2 + $0x108] sm:$0xff] %vm6231, %v6216
        %6266 = vst.msk [vmem:[#allocation2 + $0x110] sm:$0xff] %vm6231, %v6217
        %6267 = vst.msk [vmem:[#allocation2 + $0x118] sm:$0xff] %vm6231, %v6218
        %6268 = vst.msk [vmem:[#allocation2 + $0x120] sm:$0xff] %vm6231, %v6219
        %6269 = vst.msk [vmem:[#allocation2 + $0x128] sm:$0xff] %vm6231, %v6220
        %6270 = vst.msk [vmem:[#allocation2 + $0x130] sm:$0xff] %vm6231, %v6221
        %6271 = vst.msk [vmem:[#allocation2 + $0x138] sm:$0xff] %vm6231, %v6222
        %6272 = vst.msk [vmem:[#allocation2 + $0x140] sm:$0xff] %vm6231, %v6223
        %6273 = vst.msk [vmem:[#allocation2 + $0x148] sm:$0xff] %vm6231, %v6224
        %6274 = vst.msk [vmem:[#allocation2 + $0x150] sm:$0xff] %vm6231, %v6225
        %6275 = vst.msk [vmem:[#allocation2 + $0x158] sm:$0xff] %vm6231, %v6226
        %6276 = vst.msk [vmem:[#allocation2 + $0x160] sm:$0xff] %vm6231, %v6227
        %6277 = vst.msk [vmem:[#allocation2 + $0x168] sm:$0xff] %vm6231, %v6228
        %6278 = vst.msk [vmem:[#allocation2 + $0x170] sm:$0xff] %vm6231, %v6229
        %6279 = vst.msk [vmem:[#allocation2 + $0x178] sm:$0xff] %vm6231, %v6230
        %v6280 = vsel %vm6231, %v6183, 0.0
        %v6281 = vsel %vm6231, %v6184, 0.0
        %v6282 = vadd.f32 %v6280, %v6281
        %v6283 = vsel %vm6231, %v6185, 0.0
        %v6284 = vadd.f32 %v6282, %v6283
        %v6285 = vsel %vm6231, %v6186, 0.0
        %v6286 = vadd.f32 %v6284, %v6285
        %v6287 = vsel %vm6231, %v6187, 0.0
        %v6288 = vadd.f32 %v6286, %v6287
        %v6289 = vsel %vm6231, %v6188, 0.0
        %v6290 = vadd.f32 %v6288, %v6289
        %v6291 = vsel %vm6231, %v6189, 0.0
        %v6292 = vadd.f32 %v6290, %v6291
        %v6293 = vsel %vm6231, %v6190, 0.0
        %v6294 = vadd.f32 %v6292, %v6293
        %v6295 = vsel %vm6231, %v6191, 0.0
        %v6296 = vadd.f32 %v6294, %v6295
        %v6297 = vsel %vm6231, %v6192, 0.0
        %v6298 = vadd.f32 %v6296, %v6297
        %v6299 = vsel %vm6231, %v6193, 0.0
        %v6300 = vadd.f32 %v6298, %v6299
        %v6301 = vsel %vm6231, %v6194, 0.0
        %v6302 = vadd.f32 %v6300, %v6301
        %v6303 = vsel %vm6231, %v6195, 0.0
        %v6304 = vadd.f32 %v6302, %v6303
        %v6305 = vsel %vm6231, %v6196, 0.0
        %v6306 = vadd.f32 %v6304, %v6305
        %v6307 = vsel %vm6231, %v6197, 0.0
        %v6308 = vadd.f32 %v6306, %v6307
        %v6309 = vsel %vm6231, %v6198, 0.0
        %v6310 = vadd.f32 %v6308, %v6309
        %v6311 = vsel %vm6231, %v6199, 0.0
        %v6312 = vadd.f32 %v6310, %v6311
        %v6313 = vsel %vm6231, %v6200, 0.0
        %v6314 = vadd.f32 %v6312, %v6313
        %v6315 = vsel %vm6231, %v6201, 0.0
        %v6316 = vadd.f32 %v6314, %v6315
        %v6317 = vsel %vm6231, %v6202, 0.0
        %v6318 = vadd.f32 %v6316, %v6317
        %v6319 = vsel %vm6231, %v6203, 0.0
        %v6320 = vadd.f32 %v6318, %v6319
        %v6321 = vsel %vm6231, %v6204, 0.0
        %v6322 = vadd.f32 %v6320, %v6321
        %v6323 = vsel %vm6231, %v6205, 0.0
        %v6324 = vadd.f32 %v6322, %v6323
        %v6325 = vsel %vm6231, %v6206, 0.0
        %v6326 = vadd.f32 %v6324, %v6325
        %v6327 = vsel %vm6231, %v6207, 0.0
        %v6328 = vadd.f32 %v6326, %v6327
        %v6329 = vsel %vm6231, %v6208, 0.0
        %v6330 = vadd.f32 %v6328, %v6329
        %v6331 = vsel %vm6231, %v6209, 0.0
        %v6332 = vadd.f32 %v6330, %v6331
        %v6333 = vsel %vm6231, %v6210, 0.0
        %v6334 = vadd.f32 %v6332, %v6333
        %v6335 = vsel %vm6231, %v6211, 0.0
        %v6336 = vadd.f32 %v6334, %v6335
        %v6337 = vsel %vm6231, %v6212, 0.0
        %v6338 = vadd.f32 %v6336, %v6337
        %v6339 = vsel %vm6231, %v6213, 0.0
        %v6340 = vadd.f32 %v6338, %v6339
        %v6341 = vsel %vm6231, %v6214, 0.0
        %v6342 = vadd.f32 %v6340, %v6341
        %v6343 = vsel %vm6231, %v6215, 0.0
        %v6344 = vadd.f32 %v6342, %v6343
        %v6345 = vsel %vm6231, %v6216, 0.0
        %v6346 = vadd.f32 %v6344, %v6345
        %v6347 = vsel %vm6231, %v6217, 0.0
        %v6348 = vadd.f32 %v6346, %v6347
        %v6349 = vsel %vm6231, %v6218, 0.0
        %v6350 = vadd.f32 %v6348, %v6349
        %v6351 = vsel %vm6231, %v6219, 0.0
        %v6352 = vadd.f32 %v6350, %v6351
        %v6353 = vsel %vm6231, %v6220, 0.0
        %v6354 = vadd.f32 %v6352, %v6353
        %v6355 = vsel %vm6231, %v6221, 0.0
        %v6356 = vadd.f32 %v6354, %v6355
        %v6357 = vsel %vm6231, %v6222, 0.0
        %v6358 = vadd.f32 %v6356, %v6357
        %v6359 = vsel %vm6231, %v6223, 0.0
        %v6360 = vadd.f32 %v6358, %v6359
        %v6361 = vsel %vm6231, %v6224, 0.0
        %v6362 = vadd.f32 %v6360, %v6361
        %v6363 = vsel %vm6231, %v6225, 0.0
        %v6364 = vadd.f32 %v6362, %v6363
        %v6365 = vsel %vm6231, %v6226, 0.0
        %v6366 = vadd.f32 %v6364, %v6365
        %v6367 = vsel %vm6231, %v6227, 0.0
        %v6368 = vadd.f32 %v6366, %v6367
        %v6369 = vsel %vm6231, %v6228, 0.0
        %v6370 = vadd.f32 %v6368, %v6369
        %v6371 = vsel %vm6231, %v6229, 0.0
        %v6372 = vadd.f32 %v6370, %v6371
        %v6373 = vsel %vm6231, %v6230, 0.0
        %v6374 = vadd.f32 %v6372, %v6373
        %v6375 = vrot.slane %v6374, 4
        %v6376 = vadd.f32 %v6374, %v6375
        %v6377 = vrot.slane %v6376, 2
        %v6378 = vadd.f32 %v6376, %v6377
        %v6379 = vrot.slane %v6378, 1
        %v6380 = vadd.f32 %v6378, %v6379
        %v6381 = vadd.f32 %v6380, 0.0
        %v6382 = vmul.f32 %v6183, %v6183
        %v6383 = vmul.f32 %v6184, %v6184
        %v6384 = vmul.f32 %v6185, %v6185
        %v6385 = vmul.f32 %v6186, %v6186
        %v6386 = vmul.f32 %v6187, %v6187
        %v6387 = vmul.f32 %v6188, %v6188
        %v6388 = vmul.f32 %v6189, %v6189
        %v6389 = vmul.f32 %v6190, %v6190
        %v6390 = vmul.f32 %v6191, %v6191
        %v6391 = vmul.f32 %v6192, %v6192
        %v6392 = vmul.f32 %v6193, %v6193
        %v6393 = vmul.f32 %v6194, %v6194
        %v6394 = vmul.f32 %v6195, %v6195
        %v6395 = vmul.f32 %v6196, %v6196
        %v6396 = vmul.f32 %v6197, %v6197
        %v6397 = vmul.f32 %v6198, %v6198
        %v6398 = vmul.f32 %v6199, %v6199
        %v6399 = vmul.f32 %v6200, %v6200
        %v6400 = vmul.f32 %v6201, %v6201
        %v6401 = vmul.f32 %v6202, %v6202
        %v6402 = vmul.f32 %v6203, %v6203
        %v6403 = vmul.f32 %v6204, %v6204
        %v6404 = vmul.f32 %v6205, %v6205
        %v6405 = vmul.f32 %v6206, %v6206
        %v6406 = vmul.f32 %v6207, %v6207
        %v6407 = vmul.f32 %v6208, %v6208
        %v6408 = vmul.f32 %v6209, %v6209
        %v6409 = vmul.f32 %v6210, %v6210
        %v6410 = vmul.f32 %v6211, %v6211
        %v6411 = vmul.f32 %v6212, %v6212
        %v6412 = vmul.f32 %v6213, %v6213
        %v6413 = vmul.f32 %v6214, %v6214
        %v6414 = vmul.f32 %v6215, %v6215
        %v6415 = vmul.f32 %v6216, %v6216
        %v6416 = vmul.f32 %v6217, %v6217
        %v6417 = vmul.f32 %v6218, %v6218
        %v6418 = vmul.f32 %v6219, %v6219
        %v6419 = vmul.f32 %v6220, %v6220
        %v6420 = vmul.f32 %v6221, %v6221
        %v6421 = vmul.f32 %v6222, %v6222
        %v6422 = vmul.f32 %v6223, %v6223
        %v6423 = vmul.f32 %v6224, %v6224
        %v6424 = vmul.f32 %v6225, %v6225
        %v6425 = vmul.f32 %v6226, %v6226
        %v6426 = vmul.f32 %v6227, %v6227
        %v6427 = vmul.f32 %v6228, %v6228
        %v6428 = vmul.f32 %v6229, %v6229
        %v6429 = vmul.f32 %v6230, %v6230
        %v6430 = vsel %vm6231, %v6382, 0.0
        %v6431 = vsel %vm6231, %v6383, 0.0
        %v6432 = vadd.f32 %v6430, %v6431
        %v6433 = vsel %vm6231, %v6384, 0.0
        %v6434 = vadd.f32 %v6432, %v6433
        %v6435 = vsel %vm6231, %v6385, 0.0
        %v6436 = vadd.f32 %v6434, %v6435
        %v6437 = vsel %vm6231, %v6386, 0.0
        %v6438 = vadd.f32 %v6436, %v6437
        %v6439 = vsel %vm6231, %v6387, 0.0
        %v6440 = vadd.f32 %v6438, %v6439
        %v6441 = vsel %vm6231, %v6388, 0.0
        %v6442 = vadd.f32 %v6440, %v6441
        %v6443 = vsel %vm6231, %v6389, 0.0
        %v6444 = vadd.f32 %v6442, %v6443
        %v6445 = vsel %vm6231, %v6390, 0.0
        %v6446 = vadd.f32 %v6444, %v6445
        %v6447 = vsel %vm6231, %v6391, 0.0
        %v6448 = vadd.f32 %v6446, %v6447
        %v6449 = vsel %vm6231, %v6392, 0.0
        %v6450 = vadd.f32 %v6448, %v6449
        %v6451 = vsel %vm6231, %v6393, 0.0
        %v6452 = vadd.f32 %v6450, %v6451
        %v6453 = vsel %vm6231, %v6394, 0.0
        %v6454 = vadd.f32 %v6452, %v6453
        %v6455 = vsel %vm6231, %v6395, 0.0
        %v6456 = vadd.f32 %v6454, %v6455
        %v6457 = vsel %vm6231, %v6396, 0.0
        %v6458 = vadd.f32 %v6456, %v6457
        %v6459 = vsel %vm6231, %v6397, 0.0
        %v6460 = vadd.f32 %v6458, %v6459
        %v6461 = vsel %vm6231, %v6398, 0.0
        %v6462 = vadd.f32 %v6460, %v6461
        %v6463 = vsel %vm6231, %v6399, 0.0
        %v6464 = vadd.f32 %v6462, %v6463
        %v6465 = vsel %vm6231, %v6400, 0.0
        %v6466 = vadd.f32 %v6464, %v6465
        %v6467 = vsel %vm6231, %v6401, 0.0
        %v6468 = vadd.f32 %v6466, %v6467
        %v6469 = vsel %vm6231, %v6402, 0.0
        %v6470 = vadd.f32 %v6468, %v6469
        %v6471 = vsel %vm6231, %v6403, 0.0
        %v6472 = vadd.f32 %v6470, %v6471
        %v6473 = vsel %vm6231, %v6404, 0.0
        %v6474 = vadd.f32 %v6472, %v6473
        %v6475 = vsel %vm6231, %v6405, 0.0
        %v6476 = vadd.f32 %v6474, %v6475
        %v6477 = vsel %vm6231, %v6406, 0.0
        %v6478 = vadd.f32 %v6476, %v6477
        %v6479 = vsel %vm6231, %v6407, 0.0
        %v6480 = vadd.f32 %v6478, %v6479
        %v6481 = vsel %vm6231, %v6408, 0.0
        %v6482 = vadd.f32 %v6480, %v6481
        %v6483 = vsel %vm6231, %v6409, 0.0
        %v6484 = vadd.f32 %v6482, %v6483
        %v6485 = vsel %vm6231, %v6410, 0.0
        %v6486 = vadd.f32 %v6484, %v6485
        %v6487 = vsel %vm6231, %v6411, 0.0
        %v6488 = vadd.f32 %v6486, %v6487
        %v6489 = vsel %vm6231, %v6412, 0.0
        %v6490 = vadd.f32 %v6488, %v6489
        %v6491 = vsel %vm6231, %v6413, 0.0
        %v6492 = vadd.f32 %v6490, %v6491
        %v6493 = vsel %vm6231, %v6414, 0.0
        %v6494 = vadd.f32 %v6492, %v6493
        %v6495 = vsel %vm6231, %v6415, 0.0
        %v6496 = vadd.f32 %v6494, %v6495
        %v6497 = vsel %vm6231, %v6416, 0.0
        %v6498 = vadd.f32 %v6496, %v6497
        %v6499 = vsel %vm6231, %v6417, 0.0
        %v6500 = vadd.f32 %v6498, %v6499
        %v6501 = vsel %vm6231, %v6418, 0.0
        %v6502 = vadd.f32 %v6500, %v6501
        %v6503 = vsel %vm6231, %v6419, 0.0
        %v6504 = vadd.f32 %v6502, %v6503
        %v6505 = vsel %vm6231, %v6420, 0.0
        %v6506 = vadd.f32 %v6504, %v6505
        %v6507 = vsel %vm6231, %v6421, 0.0
        %v6508 = vadd.f32 %v6506, %v6507
        %v6509 = vsel %vm6231, %v6422, 0.0
        %v6510 = vadd.f32 %v6508, %v6509
        %v6511 = vsel %vm6231, %v6423, 0.0
        %v6512 = vadd.f32 %v6510, %v6511
        %v6513 = vsel %vm6231, %v6424, 0.0
        %v6514 = vadd.f32 %v6512, %v6513
        %v6515 = vsel %vm6231, %v6425, 0.0
        %v6516 = vadd.f32 %v6514, %v6515
        %v6517 = vsel %vm6231, %v6426, 0.0
        %v6518 = vadd.f32 %v6516, %v6517
        %v6519 = vsel %vm6231, %v6427, 0.0
        %v6520 = vadd.f32 %v6518, %v6519
        %v6521 = vsel %vm6231, %v6428, 0.0
        %v6522 = vadd.f32 %v6520, %v6521
        %v6523 = vsel %vm6231, %v6429, 0.0
        %v6524 = vadd.f32 %v6522, %v6523
        %v6525 = vrot.slane %v6524, 4
        %v6526 = vadd.f32 %v6524, %v6525
        %v6527 = vrot.slane %v6526, 2
        %v6528 = vadd.f32 %v6526, %v6527
        %v6529 = vrot.slane %v6528, 1
        %v6530 = vadd.f32 %v6528, %v6529
        %v6531 = vadd.f32 %v6530, 0.0
        %v6532 = vld [vmem:[%s3] sm:$0xff]
        %v6533 = vld [vmem:[%s3 + $0x8] sm:$0xff]
        %v6534 = vld [vmem:[%s3 + $0x10] sm:$0xff]
        %v6535 = vld [vmem:[%s3 + $0x18] sm:$0xff]
        %v6537 = vsel %vm6231, %v6381, 0
        %6539 = vmatprep.subr.mxu0 0.0
        %6540 = vmatpush1.msra.mxu0 %v6532
        %6541 = vmatprep.subr.mxu0 0.0
        %6542 = vmatpush1.msra.mxu0 %v6533
        %6543 = vmatprep.subr.mxu0 0.0
        %6544 = vmatpush1.msra.mxu0 %v6534
        %6545 = vmatprep.subr.mxu0 0.0
        %6546 = vmatpush1.msra.mxu0 %v6535
        %6547 = vmatprep.subr.mxu0 0.0
        %6548 = vmatpush1.msra.mxu0 0.0
        %6549 = vmatprep.subr.mxu0 0.0
        %6550 = vmatpush1.msra.mxu0 0.0
        %6551 = vmatprep.subr.mxu0 0.0
        %6552 = vmatpush1.msra.mxu0 0.0
        %6553 = vmatprep.subr.mxu0 0.0
        %6554 = vmatpush1.msra.mxu0 0.0
        %6555 = vmatprep.subr.mxu0 0.0
        %6556 = vmatpush1.msra.mxu0 0.0
        %6557 = vmatprep.subr.mxu0 0.0
        %6558 = vmatpush1.msra.mxu0 0.0
        %6559 = vmatprep.subr.mxu0 0.0
        %6560 = vmatpush1.msra.mxu0 0.0
        %6561 = vmatprep.subr.mxu0 0.0
        %6562 = vmatpush1.msra.mxu0 0.0
        %6563 = vmatprep.subr.mxu0 0.0
        %6564 = vmatpush1.msra.mxu0 0.0
        %6565 = vmatprep.subr.mxu0 0.0
        %6566 = vmatpush1.msra.mxu0 0.0
        %6567 = vmatprep.subr.mxu0 0.0
        %6568 = vmatpush1.msra.mxu0 0.0
        %6569 = vmatprep.subr.mxu0 0.0
        %6570 = vmatpush1.msra.mxu0 0.0
        %6571 = vmatprep.subr.mxu0 0.0
        %6572 = vmatpush1.msra.mxu0 0.0
        %6573 = vmatprep.subr.mxu0 0.0
        %6574 = vmatpush1.msra.mxu0 0.0
        %6575 = vmatprep.subr.mxu0 0.0
        %6576 = vmatpush1.msra.mxu0 0.0
        %6577 = vmatprep.subr.mxu0 0.0
        %6578 = vmatpush1.msra.mxu0 0.0
        %6579 = vmatprep.subr.mxu0 0.0
        %6580 = vmatpush1.msra.mxu0 0.0
        %6581 = vmatprep.subr.mxu0 0.0
        %6582 = vmatpush1.msra.mxu0 0.0
        %6583 = vmatprep.subr.mxu0 0.0
        %6584 = vmatpush1.msra.mxu0 0.0
        %6585 = vmatprep.subr.mxu0 0.0
        %6586 = vmatpush1.msra.mxu0 0.0
        %6587 = vmatprep.subr.mxu0 0.0
        %6588 = vmatpush1.msra.mxu0 0.0
        %6589 = vmatprep.subr.mxu0 0.0
        %6590 = vmatpush1.msra.mxu0 0.0
        %6591 = vmatprep.subr.mxu0 0.0
        %6592 = vmatpush1.msra.mxu0 0.0
        %6593 = vmatprep.subr.mxu0 0.0
        %6594 = vmatpush1.msra.mxu0 0.0
        %6595 = vmatprep.subr.mxu0 0.0
        %6596 = vmatpush1.msra.mxu0 0.0
        %6597 = vmatprep.subr.mxu0 0.0
        %6598 = vmatpush1.msra.mxu0 0.0
        %6599 = vmatprep.subr.mxu0 0.0
        %6600 = vmatpush1.msra.mxu0 0.0
        %6601 = vmatprep.subr.mxu0 0.0
        %6602 = vmatpush1.msra.mxu0 0.0
        %6603 = vmatprep.mubr.f32.mxu0 0.0
        %6604 = vmatmul.mubr.f32.gmra.mrb[0].mxu0 %v6537
        %v6605 = vpop.f32.mrb[0].mxu0
        %v6606 = vadd.f32 0.0, %v6605
        %v6607 = vpop.f32.mrb[0].mxu0
        %6608 = vdwg.mxu0
        %v6609 = vrcp.pop 256.0
        %v6610 = vmul.f32 %v6606, %v6609
        %v6612 = vsel %vm6231, %v6531, 0
        %6614 = vmatprep.subr.mxu0 0.0
        %6615 = vmatpush1.msra.mxu0 %v6532
        %6616 = vmatprep.subr.mxu0 0.0
        %6617 = vmatpush1.msra.mxu0 %v6533
        %6618 = vmatprep.subr.mxu0 0.0
        %6619 = vmatpush1.msra.mxu0 %v6534
        %6620 = vmatprep.subr.mxu0 0.0
        %6621 = vmatpush1.msra.mxu0 %v6535
        %6622 = vmatprep.subr.mxu0 0.0
        %6623 = vmatpush1.msra.mxu0 0.0
        %6624 = vmatprep.subr.mxu0 0.0
        %6625 = vmatpush1.msra.mxu0 0.0
        %6626 = vmatprep.subr.mxu0 0.0
        %6627 = vmatpush1.msra.mxu0 0.0
        %6628 = vmatprep.subr.mxu0 0.0
        %6629 = vmatpush1.msra.mxu0 0.0
        %6630 = vmatprep.subr.mxu0 0.0
        %6631 = vmatpush1.msra.mxu0 0.0
        %6632 = vmatprep.subr.mxu0 0.0
        %6633 = vmatpush1.msra.mxu0 0.0
        %6634 = vmatprep.subr.mxu0 0.0
        %6635 = vmatpush1.msra.mxu0 0.0
        %6636 = vmatprep.subr.mxu0 0.0
        %6637 = vmatpush1.msra.mxu0 0.0
        %6638 = vmatprep.subr.mxu0 0.0
        %6639 = vmatpush1.msra.mxu0 0.0
        %6640 = vmatprep.subr.mxu0 0.0
        %6641 = vmatpush1.msra.mxu0 0.0
        %6642 = vmatprep.subr.mxu0 0.0
        %6643 = vmatpush1.msra.mxu0 0.0
        %6644 = vmatprep.subr.mxu0 0.0
        %6645 = vmatpush1.msra.mxu0 0.0
        %6646 = vmatprep.subr.mxu0 0.0
        %6647 = vmatpush1.msra.mxu0 0.0
        %6648 = vmatprep.subr.mxu0 0.0
        %6649 = vmatpush1.msra.mxu0 0.0
        %6650 = vmatprep.subr.mxu0 0.0
        %6651 = vmatpush1.msra.mxu0 0.0
        %6652 = vmatprep.subr.mxu0 0.0
        %6653 = vmatpush1.msra.mxu0 0.0
        %6654 = vmatprep.subr.mxu0 0.0
        %6655 = vmatpush1.msra.mxu0 0.0
        %6656 = vmatprep.subr.mxu0 0.0
        %6657 = vmatpush1.msra.mxu0 0.0
        %6658 = vmatprep.subr.mxu0 0.0
        %6659 = vmatpush1.msra.mxu0 0.0
        %6660 = vmatprep.subr.mxu0 0.0
        %6661 = vmatpush1.msra.mxu0 0.0
        %6662 = vmatprep.subr.mxu0 0.0
        %6663 = vmatpush1.msra.mxu0 0.0
        %6664 = vmatprep.subr.mxu0 0.0
        %6665 = vmatpush1.msra.mxu0 0.0
        %6666 = vmatprep.subr.mxu0 0.0
        %6667 = vmatpush1.msra.mxu0 0.0
        %6668 = vmatprep.subr.mxu0 0.0
        %6669 = vmatpush1.msra.mxu0 0.0
        %6670 = vmatprep.subr.mxu0 0.0
        %6671 = vmatpush1.msra.mxu0 0.0
        %6672 = vmatprep.subr.mxu0 0.0
        %6673 = vmatpush1.msra.mxu0 0.0
        %6674 = vmatprep.subr.mxu0 0.0
        %6675 = vmatpush1.msra.mxu0 0.0
        %6676 = vmatprep.subr.mxu0 0.0
        %6677 = vmatpush1.msra.mxu0 0.0
        %6678 = vmatprep.mubr.f32.mxu0 0.0
        %6679 = vmatmul.mubr.f32.gmra.mrb[0].mxu0 %v6612
        %v6680 = vpop.f32.mrb[0].mxu0
        %v6681 = vadd.f32 0.0, %v6680
        %v6682 = vpop.f32.mrb[0].mxu0
        %6683 = vdwg.mxu0
        %v6684 = vmul.f32 %v6681, %v6609
        %v6685 = vmul.f32 %v6610, %v6610
        %v6686 = vsub.f32 %v6684, %v6685
        %v6687 = vadd.f32 %v6686, 1e-05
        %v6688 = vrsqrt.pop %v6687
        %v6690 = vsel %vm6231, %v6610, 0
        %v6693 = vsel %vm6231, %v6532, 0
        %v6696 = vsel %vm6231, %v6533, 0
        %v6699 = vsel %vm6231, %v6534, 0
        %v6702 = vsel %vm6231, %v6535, 0
        %6704 = vmatprep.subr.mxu0 0.0
        %6705 = vmatpush1.xpose.msra.mxu0 %v6693
        %6706 = vmatprep.subr.mxu0 0.0
        %6707 = vmatpush1.xpose.msra.mxu0 %v6696
        %6708 = vmatprep.subr.mxu0 0.0
        %6709 = vmatpush1.xpose.msra.mxu0 %v6699
        %6710 = vmatprep.subr.mxu0 0.0
        %6711 = vmatpush1.xpose.msra.mxu0 %v6702
        %6712 = vmatprep.subr.mxu0 0.0
        %6713 = vmatpush1.xpose.msra.mxu0 0.0
        %6714 = vmatprep.subr.mxu0 0.0
        %6715 = vmatpush1.xpose.msra.mxu0 0.0
        %6716 = vmatprep.subr.mxu0 0.0
        %6717 = vmatpush1.xpose.msra.mxu0 0.0
        %6718 = vmatprep.subr.mxu0 0.0
        %6719 = vmatpush1.xpose.msra.mxu0 0.0
        %6720 = vmatprep.subr.mxu0 0.0
        %6721 = vmatpush1.xpose.msra.mxu0 0.0
        %6722 = vmatprep.subr.mxu0 0.0
        %6723 = vmatpush1.xpose.msra.mxu0 0.0
        %6724 = vmatprep.subr.mxu0 0.0
        %6725 = vmatpush1.xpose.msra.mxu0 0.0
        %6726 = vmatprep.subr.mxu0 0.0
        %6727 = vmatpush1.xpose.msra.mxu0 0.0
        %6728 = vmatprep.subr.mxu0 0.0
        %6729 = vmatpush1.xpose.msra.mxu0 0.0
        %6730 = vmatprep.subr.mxu0 0.0
        %6731 = vmatpush1.xpose.msra.mxu0 0.0
        %6732 = vmatprep.subr.mxu0 0.0
        %6733 = vmatpush1.xpose.msra.mxu0 0.0
        %6734 = vmatprep.subr.mxu0 0.0
        %6735 = vmatpush1.xpose.msra.mxu0 0.0
        %6736 = vmatprep.subr.mxu0 0.0
        %6737 = vmatpush1.xpose.msra.mxu0 0.0
        %6738 = vmatprep.subr.mxu0 0.0
        %6739 = vmatpush1.xpose.msra.mxu0 0.0
        %6740 = vmatprep.subr.mxu0 0.0
        %6741 = vmatpush1.xpose.msra.mxu0 0.0
        %6742 = vmatprep.subr.mxu0 0.0
        %6743 = vmatpush1.xpose.msra.mxu0 0.0
        %6744 = vmatprep.subr.mxu0 0.0
        %6745 = vmatpush1.xpose.msra.mxu0 0.0
        %6746 = vmatprep.subr.mxu0 0.0
        %6747 = vmatpush1.xpose.msra.mxu0 0.0
        %6748 = vmatprep.subr.mxu0 0.0
        %6749 = vmatpush1.xpose.msra.mxu0 0.0
        %6750 = vmatprep.subr.mxu0 0.0
        %6751 = vmatpush1.xpose.msra.mxu0 0.0
        %6752 = vmatprep.subr.mxu0 0.0
        %6753 = vmatpush1.xpose.msra.mxu0 0.0
        %6754 = vmatprep.subr.mxu0 0.0
        %6755 = vmatpush1.xpose.msra.mxu0 0.0
        %6756 = vmatprep.subr.mxu0 0.0
        %6757 = vmatpush1.xpose.msra.mxu0 0.0
        %6758 = vmatprep.subr.mxu0 0.0
        %6759 = vmatpush1.xpose.msra.mxu0 0.0
        %6760 = vmatprep.subr.mxu0 0.0
        %6761 = vmatpush1.xpose.msra.mxu0 0.0
        %6762 = vmatprep.subr.mxu0 0.0
        %6763 = vmatpush1.xpose.msra.mxu0 0.0
        %6764 = vmatprep.subr.mxu0 0.0
        %6765 = vmatpush1.xpose.msra.mxu0 0.0
        %6766 = vmatprep.subr.mxu0 0.0
        %6767 = vmatpush1.xpose.msra.mxu0 0.0
        %6768 = vmatprep.mubr.f32.mxu0 0.0
        %6769 = vmatmul.mubr.f32.gmra.mrb[0].mxu0 %v6690
        %v6770 = vpop.f32.mrb[0].mxu0
        %v6771 = vadd.f32 0.0, %v6770
        %v6772 = vpop.f32.mrb[0].mxu0
        %6773 = vdwg.mxu0
        %v6775 = vsel %vm6231, %v6688, 0
        %6777 = vmatprep.subr.mxu0 0.0
        %6778 = vmatpush1.xpose.msra.mxu0 %v6693
        %6779 = vmatprep.subr.mxu0 0.0
        %6780 = vmatpush1.xpose.msra.mxu0 %v6696
        %6781 = vmatprep.subr.mxu0 0.0
        %6782 = vmatpush1.xpose.msra.mxu0 %v6699
        %6783 = vmatprep.subr.mxu0 0.0
        %6784 = vmatpush1.xpose.msra.mxu0 %v6702
        %6785 = vmatprep.subr.mxu0 0.0
        %6786 = vmatpush1.xpose.msra.mxu0 0.0
        %6787 = vmatprep.subr.mxu0 0.0
        %6788 = vmatpush1.xpose.msra.mxu0 0.0
        %6789 = vmatprep.subr.mxu0 0.0
        %6790 = vmatpush1.xpose.msra.mxu0 0.0
        %6791 = vmatprep.subr.mxu0 0.0
        %6792 = vmatpush1.xpose.msra.mxu0 0.0
        %6793 = vmatprep.subr.mxu0 0.0
        %6794 = vmatpush1.xpose.msra.mxu0 0.0
        %6795 = vmatprep.subr.mxu0 0.0
        %6796 = vmatpush1.xpose.msra.mxu0 0.0
        %6797 = vmatprep.subr.mxu0 0.0
        %6798 = vmatpush1.xpose.msra.mxu0 0.0
        %6799 = vmatprep.subr.mxu0 0.0
        %6800 = vmatpush1.xpose.msra.mxu0 0.0
        %6801 = vmatprep.subr.mxu0 0.0
        %6802 = vmatpush1.xpose.msra.mxu0 0.0
        %6803 = vmatprep.subr.mxu0 0.0
        %6804 = vmatpush1.xpose.msra.mxu0 0.0
        %6805 = vmatprep.subr.mxu0 0.0
        %6806 = vmatpush1.xpose.msra.mxu0 0.0
        %6807 = vmatprep.subr.mxu0 0.0
        %6808 = vmatpush1.xpose.msra.mxu0 0.0
        %6809 = vmatprep.subr.mxu0 0.0
        %6810 = vmatpush1.xpose.msra.mxu0 0.0
        %6811 = vmatprep.subr.mxu0 0.0
        %6812 = vmatpush1.xpose.msra.mxu0 0.0
        %6813 = vmatprep.subr.mxu0 0.0
        %6814 = vmatpush1.xpose.msra.mxu0 0.0
        %6815 = vmatprep.subr.mxu0 0.0
        %6816 = vmatpush1.xpose.msra.mxu0 0.0
        %6817 = vmatprep.subr.mxu0 0.0
        %6818 = vmatpush1.xpose.msra.mxu0 0.0
        %6819 = vmatprep.subr.mxu0 0.0
        %6820 = vmatpush1.xpose.msra.mxu0 0.0
        %6821 = vmatprep.subr.mxu0 0.0
        %6822 = vmatpush1.xpose.msra.mxu0 0.0
        %6823 = vmatprep.subr.mxu0 0.0
        %6824 = vmatpush1.xpose.msra.mxu0 0.0
        %6825 = vmatprep.subr.mxu0 0.0
        %6826 = vmatpush1.xpose.msra.mxu0 0.0
        %6827 = vmatprep.subr.mxu0 0.0
        %6828 = vmatpush1.xpose.msra.mxu0 0.0
        %6829 = vmatprep.subr.mxu0 0.0
        %6830 = vmatpush1.xpose.msra.mxu0 0.0
        %6831 = vmatprep.subr.mxu0 0.0
        %6832 = vmatpush1.xpose.msra.mxu0 0.0
        %6833 = vmatprep.subr.mxu0 0.0
        %6834 = vmatpush1.xpose.msra.mxu0 0.0
        %6835 = vmatprep.subr.mxu0 0.0
        %6836 = vmatpush1.xpose.msra.mxu0 0.0
        %6837 = vmatprep.subr.mxu0 0.0
        %6838 = vmatpush1.xpose.msra.mxu0 0.0
        %6839 = vmatprep.subr.mxu0 0.0
        %6840 = vmatpush1.xpose.msra.mxu0 0.0
        %6841 = vmatprep.mubr.f32.mxu0 0.0
        %6842 = vmatmul.mubr.f32.gmra.mrb[0].mxu0 %v6775
        %v6843 = vpop.f32.mrb[0].mxu0
        %v6844 = vadd.f32 0.0, %v6843
        %v6845 = vpop.f32.mrb[0].mxu0
        %6846 = vdwg.mxu0
        %v6847 = vmul.f32 %v6844, %v305
        %v6848 = vmul.f32 %v6771, %v6847
        %v6849 = vsub.f32 %v306, %v6848
        %v6850 = vld [vmem:[%s4] sm:$0xff]
        %v6851 = vld [vmem:[%s4 + $0x8] sm:$0xff]
        loop: start=0, step=1, limit=16
        $region57: #{upsample_block.1} parent=47 // loop_pre_header
          _
        $region58: #{upsample_block.1} parent=47 // loop_header
          %s6853 = sphi 0, %s6857
          %p6854 = scmp.ge.s32.totalorder %s6853, 16
        $region59: #{upsample_block.1} parent=47 // loop_header_branch
          %6856 = sbr.rel (%p6854) target = $region63
        $region60: #{upsample_block.1} parent=47 // loop_body
          %s6858 = smul.u32 %s6853, 24
          %s6859 = scalar_lea.vmem [#allocation2], %s6858
          %v6860 = vld [vmem:[%s6859] sm:$0xff]
          %v6861 = vld [vmem:[%s6859 + $0x8] sm:$0xff]
          %v6862 = vlaneseq
          %v6863 = vshrl.u32 %v6862, 7
          %v6864 = vsub.s32 0, %v6863
          %v6865 = vrot.slane %v6847, %v6864
          %v6866 = vmul.f32 %v6860, %v6865
          %v6867 = vmul.f32 %v6861, %v6865
          %v6868 = vlaneseq
          %v6869 = vshrl.u32 %v6868, 7
          %v6870 = vsub.s32 0, %v6869
          %v6871 = vrot.slane %v6849, %v6870
          %v6872 = vadd.f32 %v6866, %v6871
          %v6873 = vadd.f32 %v6867, %v6871
          %v6874 = vmax.f32 %v6872, 0.0
          %v6875 = vmax.f32 %v6873, 0.0
          %6876 = vxpose.xlu0.b32.start [1/16] %v6874, 128
          %6877 = vxpose.xlu0.b32.cont [2/16] %v6875, 128
          %6878 = vxpose.xlu0.b32.cont [3/16] 0.0, 128
          %6879 = vxpose.xlu0.b32.cont [4/16] 0.0, 128
          %6880 = vxpose.xlu0.b32.cont [5/16] 0.0, 128
          %6881 = vxpose.xlu0.b32.cont [6/16] 0.0, 128
          %6882 = vxpose.xlu0.b32.cont [7/16] 0.0, 128
          %6883 = vxpose.xlu0.b32.cont [8/16] 0.0, 128
          %6884 = vxpose.xlu0.b32.cont [9/16] 0.0, 128
          %6885 = vxpose.xlu0.b32.cont [10/16] 0.0, 128
          %6886 = vxpose.xlu0.b32.cont [11/16] 0.0, 128
          %6887 = vxpose.xlu0.b32.cont [12/16] 0.0, 128
          %6888 = vxpose.xlu0.b32.cont [13/16] 0.0, 128
          %6889 = vxpose.xlu0.b32.cont [14/16] 0.0, 128
          %6890 = vxpose.xlu0.b32.cont [15/16] 0.0, 128
          %6891 = vxpose.xlu0.b32.end [16/16] 0.0, 128
          %v6892 = vpop.trf.xlu0
          %v6893 = vpop.trf.xlu0
          %v6894 = vpop.trf.xlu0
          %v6895 = vpop.trf.xlu0
          %v6896 = vpop.trf.xlu0
          %v6897 = vpop.trf.xlu0
          %v6898 = vpop.trf.xlu0
          %v6899 = vpop.trf.xlu0
          %v6900 = vpop.trf.xlu0
          %v6901 = vpop.trf.xlu0
          %v6902 = vpop.trf.xlu0
          %v6903 = vpop.trf.xlu0
          %v6904 = vpop.trf.xlu0
          %v6905 = vpop.trf.xlu0
          %v6906 = vpop.trf.xlu0
          %v6907 = vpop.trf.xlu0
          %vm6908 = vcmask 130048
          %v6910 = vsel %vm6908, %v6892, 0
          %v6913 = vsel %vm6908, %v6893, 0
          %v6916 = vsel %vm6908, %v6894, 0
          %v6919 = vsel %vm6908, %v6895, 0
          %6921 = vmatprep.subr.mxu0 0.0
          %6922 = vmatpush1.msra.mxu0 %v6850
          %6923 = vmatprep.subr.mxu0 0.0
          %6924 = vmatpush1.msra.mxu0 %v6851
          %6925 = vmatprep.subr.mxu0 0.0
          %6926 = vmatpush1.msra.mxu0 0.0
          %6927 = vmatprep.subr.mxu0 0.0
          %6928 = vmatpush1.msra.mxu0 0.0
          %6929 = vmatprep.subr.mxu0 0.0
          %6930 = vmatpush1.msra.mxu0 0.0
          %6931 = vmatprep.subr.mxu0 0.0
          %6932 = vmatpush1.msra.mxu0 0.0
          %6933 = vmatprep.subr.mxu0 0.0
          %6934 = vmatpush1.msra.mxu0 0.0
          %6935 = vmatprep.subr.mxu0 0.0
          %6936 = vmatpush1.msra.mxu0 0.0
          %6937 = vmatprep.subr.mxu0 0.0
          %6938 = vmatpush1.msra.mxu0 0.0
          %6939 = vmatprep.subr.mxu0 0.0
          %6940 = vmatpush1.msra.mxu0 0.0
          %6941 = vmatprep.subr.mxu0 0.0
          %6942 = vmatpush1.msra.mxu0 0.0
          %6943 = vmatprep.subr.mxu0 0.0
          %6944 = vmatpush1.msra.mxu0 0.0
          %6945 = vmatprep.subr.mxu0 0.0
          %6946 = vmatpush1.msra.mxu0 0.0
          %6947 = vmatprep.subr.mxu0 0.0
          %6948 = vmatpush1.msra.mxu0 0.0
          %6949 = vmatprep.subr.mxu0 0.0
          %6950 = vmatpush1.msra.mxu0 0.0
          %6951 = vmatprep.subr.mxu0 0.0
          %6952 = vmatpush1.msra.mxu0 0.0
          %6953 = vmatprep.subr.mxu0 0.0
          %6954 = vmatpush1.msra.mxu0 0.0
          %6955 = vmatprep.subr.mxu0 0.0
          %6956 = vmatpush1.msra.mxu0 0.0
          %6957 = vmatprep.subr.mxu0 0.0
          %6958 = vmatpush1.msra.mxu0 0.0
          %6959 = vmatprep.subr.mxu0 0.0
          %6960 = vmatpush1.msra.mxu0 0.0
          %6961 = vmatprep.subr.mxu0 0.0
          %6962 = vmatpush1.msra.mxu0 0.0
          %6963 = vmatprep.subr.mxu0 0.0
          %6964 = vmatpush1.msra.mxu0 0.0
          %6965 = vmatprep.subr.mxu0 0.0
          %6966 = vmatpush1.msra.mxu0 0.0
          %6967 = vmatprep.subr.mxu0 0.0
          %6968 = vmatpush1.msra.mxu0 0.0
          %6969 = vmatprep.subr.mxu0 0.0
          %6970 = vmatpush1.msra.mxu0 0.0
          %6971 = vmatprep.subr.mxu0 0.0
          %6972 = vmatpush1.msra.mxu0 0.0
          %6973 = vmatprep.subr.mxu0 0.0
          %6974 = vmatpush1.msra.mxu0 0.0
          %6975 = vmatprep.subr.mxu0 0.0
          %6976 = vmatpush1.msra.mxu0 0.0
          %6977 = vmatprep.subr.mxu0 0.0
          %6978 = vmatpush1.msra.mxu0 0.0
          %6979 = vmatprep.subr.mxu0 0.0
          %6980 = vmatpush1.msra.mxu0 0.0
          %6981 = vmatprep.subr.mxu0 0.0
          %6982 = vmatpush1.msra.mxu0 0.0
          %6983 = vmatprep.subr.mxu0 0.0
          %6984 = vmatpush1.msra.mxu0 0.0
          %6985 = vmatprep.mubr.f32.mxu0 0.0
          %6986 = vmatmul.mubr.f32.gmra.mrb[0].mxu0 %v6910
          %v6987 = vpop.f32.mrb[0].mxu0
          %v6988 = vadd.f32 0.0, %v6987
          %v6989 = vpop.f32.mrb[0].mxu0
          %6990 = vmatprep.mubr.f32.mxu0 0.0
          %6991 = vmatmul.mubr.f32.gmra.mrb[0].mxu0 %v6913
          %v6992 = vpop.f32.mrb[0].mxu0
          %v6993 = vadd.f32 0.0, %v6992
          %v6994 = vpop.f32.mrb[0].mxu0
          %6995 = vmatprep.mubr.f32.mxu0 0.0
          %6996 = vmatmul.mubr.f32.gmra.mrb[0].mxu0 %v6916
          %v6997 = vpop.f32.mrb[0].mxu0
          %v6998 = vadd.f32 0.0, %v6997
          %v6999 = vpop.f32.mrb[0].mxu0
          %7000 = vmatprep.mubr.f32.mxu0 0.0
          %7001 = vmatmul.mubr.f32.gmra.mrb[0].mxu0 %v6919
          %v7002 = vpop.f32.mrb[0].mxu0
          %v7003 = vadd.f32 0.0, %v7002
          %v7004 = vpop.f32.mrb[0].mxu0
          %7005 = vdwg.mxu0
          %s7006 = smul.u32 %s6853, 32
          %s7007 = scalar_lea.vmem [#allocation3], %s7006
          %7008 = vst.msk [vmem:[%s7007] sm:$0xff] %vm6231, %v6988
          %7009 = vst.msk [vmem:[%s7007 + $0x8] sm:$0xff] %vm6231, %v6993
          %7010 = vst.msk [vmem:[%s7007 + $0x10] sm:$0xff] %vm6231, %v6998
          %7011 = vst.msk [vmem:[%s7007 + $0x18] sm:$0xff] %vm6231, %v7003
        $region61: #{upsample_block.1} parent=47 // loop_footer
          %s6857 = sadd.s32 1, %s6853
        $region62: #{upsample_block.1} parent=47 // loop_footer_branch
          %6852 = sbr.rel target = $region58
        $region63: #{upsample_block.1} parent=47 // loop_exit
          _
        loop: start=0, step=1, limit=32
        $region64: #{upsample_block.1} parent=47 // loop_pre_header
          _
        $region65: #{upsample_block.1} parent=47 // loop_header
          %s7013 = sphi 0, %s7017
          %p7014 = scmp.ge.s32.totalorder %s7013, 32
        $region66: #{upsample_block.1} parent=47 // loop_header_branch
          %7016 = sbr.rel (%p7014) target = $region70
        $region67: #{upsample_block.1} parent=47 // loop_body
          %s7018 = smul.u32 %s7013, 2
          %s7019 = sld [smem:[#allocation4 + %s7018]]
          %s7020 = sadd.s32 %s7018, 1
          %s7021 = sld [smem:[#allocation4 + %s7020]]
          %s7022 = sld [smem:[#allocation7 + %s7018]]
          %s7023 = sld [smem:[#allocation7 + %s7020]]
          %s7024 = smul.u32 %s7019, 32
          %s7025 = scalar_lea.vmem [#allocation3], %s7024
          %v7026 = vld [vmem:[%s7025] sm:$0xff]
          %v7027 = vld [vmem:[%s7025 + $0x8] sm:$0xff]
          %v7028 = vld [vmem:[%s7025 + $0x10] sm:$0xff]
          %v7029 = vld [vmem:[%s7025 + $0x18] sm:$0xff]
          %v7030 = vstv %s7022
          %v7031 = vmul.f32 %v7030, %v7026
          %v7032 = vmul.f32 %v7030, %v7027
          %v7033 = vmul.f32 %v7030, %v7028
          %v7034 = vmul.f32 %v7030, %v7029
          %s7035 = smul.u32 %s7021, 32
          %s7036 = scalar_lea.vmem [#allocation3], %s7035
          %v7037 = vld [vmem:[%s7036] sm:$0xff]
          %v7038 = vld [vmem:[%s7036 + $0x8] sm:$0xff]
          %v7039 = vld [vmem:[%s7036 + $0x10] sm:$0xff]
          %v7040 = vld [vmem:[%s7036 + $0x18] sm:$0xff]
          %v7041 = vstv %s7023
          %v7042 = vmul.f32 %v7041, %v7037
          %v7043 = vmul.f32 %v7041, %v7038
          %v7044 = vmul.f32 %v7041, %v7039
          %v7045 = vmul.f32 %v7041, %v7040
          %v7046 = vadd.f32 %v7031, %v7042
          %v7047 = vadd.f32 %v7032, %v7043
          %v7048 = vadd.f32 %v7033, %v7044
          %v7049 = vadd.f32 %v7034, %v7045
          %v7054 = vcombine.high %v7046, %v7046
          %v7056 = vunpack.c.l.s4 1966171168
          %v7057 = vunpack.c.0.s8 %v7056
          %v7058 = vlaneseq
          %v7059 = vshrl.u32 %v7058, 7
          %v7060 = vsub.s32 %v7057, %v7059
          %v7061 = vrot.slane %v7046, %v7060
          %v7063 = vunpack.c.l.s4 1966171168
          %v7064 = vunpack.c.0.s8 %v7063
          %v7065 = vlaneseq
          %v7066 = vshrl.u32 %v7065, 7
          %v7067 = vsub.s32 %v7064, %v7066
          %v7068 = vrot.slane %v7054, %v7067
          %v7069 = vcombine.high %v7061, %v7061
          %v7070 = vcombine.high %v7068, %v7068
          %v7072 = vunpack.c.l.s4 1966171168
          %v7073 = vunpack.c.0.s8 %v7072
          %v7074 = vlaneseq
          %v7075 = vshrl.u32 %v7074, 7
          %v7076 = vsub.s32 %v7073, %v7075
          %v7077 = vrot.slane %v7061, %v7076
          %v7079 = vunpack.c.l.s4 1966171168
          %v7080 = vunpack.c.0.s8 %v7079
          %v7081 = vlaneseq
          %v7082 = vshrl.u32 %v7081, 7
          %v7083 = vsub.s32 %v7080, %v7082
          %v7084 = vrot.slane %v7068, %v7083
          %v7086 = vunpack.c.l.s4 1966171168
          %v7087 = vunpack.c.0.s8 %v7086
          %v7088 = vlaneseq
          %v7089 = vshrl.u32 %v7088, 7
          %v7090 = vsub.s32 %v7087, %v7089
          %v7091 = vrot.slane %v7069, %v7090
          %v7093 = vunpack.c.l.s4 1966171168
          %v7094 = vunpack.c.0.s8 %v7093
          %v7095 = vlaneseq
          %v7096 = vshrl.u32 %v7095, 7
          %v7097 = vsub.s32 %v7094, %v7096
          %v7098 = vrot.slane %v7070, %v7097
          %v7099 = vcombine.high %v7077, %v7077
          %v7100 = vcombine.high %v7084, %v7084
          %v7101 = vcombine.high %v7091, %v7091
          %v7102 = vcombine.high %v7098, %v7098
          %v7103 = vcombine.high %v7047, %v7047
          %v7105 = vunpack.c.l.s4 1966171168
          %v7106 = vunpack.c.0.s8 %v7105
          %v7107 = vlaneseq
          %v7108 = vshrl.u32 %v7107, 7
          %v7109 = vsub.s32 %v7106, %v7108
          %v7110 = vrot.slane %v7047, %v7109
          %v7112 = vunpack.c.l.s4 1966171168
          %v7113 = vunpack.c.0.s8 %v7112
          %v7114 = vlaneseq
          %v7115 = vshrl.u32 %v7114, 7
          %v7116 = vsub.s32 %v7113, %v7115
          %v7117 = vrot.slane %v7103, %v7116
          %v7118 = vcombine.high %v7110, %v7110
          %v7119 = vcombine.high %v7117, %v7117
          %v7121 = vunpack.c.l.s4 1966171168
          %v7122 = vunpack.c.0.s8 %v7121
          %v7123 = vlaneseq
          %v7124 = vshrl.u32 %v7123, 7
          %v7125 = vsub.s32 %v7122, %v7124
          %v7126 = vrot.slane %v7110, %v7125
          %v7128 = vunpack.c.l.s4 1966171168
          %v7129 = vunpack.c.0.s8 %v7128
          %v7130 = vlaneseq
          %v7131 = vshrl.u32 %v7130, 7
          %v7132 = vsub.s32 %v7129, %v7131
          %v7133 = vrot.slane %v7117, %v7132
          %v7135 = vunpack.c.l.s4 1966171168
          %v7136 = vunpack.c.0.s8 %v7135
          %v7137 = vlaneseq
          %v7138 = vshrl.u32 %v7137, 7
          %v7139 = vsub.s32 %v7136, %v7138
          %v7140 = vrot.slane %v7118, %v7139
          %v7142 = vunpack.c.l.s4 1966171168
          %v7143 = vunpack.c.0.s8 %v7142
          %v7144 = vlaneseq
          %v7145 = vshrl.u32 %v7144, 7
          %v7146 = vsub.s32 %v7143, %v7145
          %v7147 = vrot.slane %v7119, %v7146
          %v7148 = vcombine.high %v7126, %v7126
          %v7149 = vcombine.high %v7133, %v7133
          %v7150 = vcombine.high %v7140, %v7140
          %v7151 = vcombine.high %v7147, %v7147
          %v7152 = vcombine.high %v7048, %v7048
          %v7154 = vunpack.c.l.s4 1966171168
          %v7155 = vunpack.c.0.s8 %v7154
          %v7156 = vlaneseq
          %v7157 = vshrl.u32 %v7156, 7
          %v7158 = vsub.s32 %v7155, %v7157
          %v7159 = vrot.slane %v7048, %v7158
          %v7161 = vunpack.c.l.s4 1966171168
          %v7162 = vunpack.c.0.s8 %v7161
          %v7163 = vlaneseq
          %v7164 = vshrl.u32 %v7163, 7
          %v7165 = vsub.s32 %v7162, %v7164
          %v7166 = vrot.slane %v7152, %v7165
          %v7167 = vcombine.high %v7159, %v7159
          %v7168 = vcombine.high %v7166, %v7166
          %v7170 = vunpack.c.l.s4 1966171168
          %v7171 = vunpack.c.0.s8 %v7170
          %v7172 = vlaneseq
          %v7173 = vshrl.u32 %v7172, 7
          %v7174 = vsub.s32 %v7171, %v7173
          %v7175 = vrot.slane %v7159, %v7174
          %v7177 = vunpack.c.l.s4 1966171168
          %v7178 = vunpack.c.0.s8 %v7177
          %v7179 = vlaneseq
          %v7180 = vshrl.u32 %v7179, 7
          %v7181 = vsub.s32 %v7178, %v7180
          %v7182 = vrot.slane %v7166, %v7181
          %v7184 = vunpack.c.l.s4 1966171168
          %v7185 = vunpack.c.0.s8 %v7184
          %v7186 = vlaneseq
          %v7187 = vshrl.u32 %v7186, 7
          %v7188 = vsub.s32 %v7185, %v7187
          %v7189 = vrot.slane %v7167, %v7188
          %v7191 = vunpack.c.l.s4 1966171168
          %v7192 = vunpack.c.0.s8 %v7191
          %v7193 = vlaneseq
          %v7194 = vshrl.u32 %v7193, 7
          %v7195 = vsub.s32 %v7192, %v7194
          %v7196 = vrot.slane %v7168, %v7195
          %v7197 = vcombine.high %v7175, %v7175
          %v7198 = vcombine.high %v7182, %v7182
          %v7199 = vcombine.high %v7189, %v7189
          %v7200 = vcombine.high %v7196, %v7196
          %v7201 = vcombine.high %v7049, %v7049
          %v7203 = vunpack.c.l.s4 1966171168
          %v7204 = vunpack.c.0.s8 %v7203
          %v7205 = vlaneseq
          %v7206 = vshrl.u32 %v7205, 7
          %v7207 = vsub.s32 %v7204, %v7206
          %v7208 = vrot.slane %v7049, %v7207
          %v7210 = vunpack.c.l.s4 1966171168
          %v7211 = vunpack.c.0.s8 %v7210
          %v7212 = vlaneseq
          %v7213 = vshrl.u32 %v7212, 7
          %v7214 = vsub.s32 %v7211, %v7213
          %v7215 = vrot.slane %v7201, %v7214
          %v7216 = vcombine.high %v7208, %v7208
          %v7217 = vcombine.high %v7215, %v7215
          %v7219 = vunpack.c.l.s4 1966171168
          %v7220 = vunpack.c.0.s8 %v7219
          %v7221 = vlaneseq
          %v7222 = vshrl.u32 %v7221, 7
          %v7223 = vsub.s32 %v7220, %v7222
          %v7224 = vrot.slane %v7208, %v7223
          %v7226 = vunpack.c.l.s4 1966171168
          %v7227 = vunpack.c.0.s8 %v7226
          %v7228 = vlaneseq
          %v7229 = vshrl.u32 %v7228, 7
          %v7230 = vsub.s32 %v7227, %v7229
          %v7231 = vrot.slane %v7215, %v7230
          %v7233 = vunpack.c.l.s4 1966171168
          %v7234 = vunpack.c.0.s8 %v7233
          %v7235 = vlaneseq
          %v7236 = vshrl.u32 %v7235, 7
          %v7237 = vsub.s32 %v7234, %v7236
          %v7238 = vrot.slane %v7216, %v7237
          %v7240 = vunpack.c.l.s4 1966171168
          %v7241 = vunpack.c.0.s8 %v7240
          %v7242 = vlaneseq
          %v7243 = vshrl.u32 %v7242, 7
          %v7244 = vsub.s32 %v7241, %v7243
          %v7245 = vrot.slane %v7217, %v7244
          %v7246 = vcombine.high %v7224, %v7224
          %v7247 = vcombine.high %v7231, %v7231
          %v7248 = vcombine.high %v7238, %v7238
          %v7249 = vcombine.high %v7245, %v7245
          %s7282 = scalar_lea.vmem %s298, %s7013 [#allocation9]
          %vm7283 = vcmask 253952
          %7284 = vst.msk [vmem:[%s7282] sm:$0x1] %vm7283, %v7077
          %7285 = vst.msk [vmem:[%s7282 + $0x20] sm:$0x1] %vm7283, %v7091
          %7286 = vst.msk [vmem:[%s7282 + $0x40] sm:$0x1] %vm7283, %v7099
          %7287 = vst.msk [vmem:[%s7282 + $0x60] sm:$0x1] %vm7283, %v7101
          %7288 = vst.msk [vmem:[%s7282 + $0x80] sm:$0x1] %vm7283, %v7084
          %7289 = vst.msk [vmem:[%s7282 + $0xa0] sm:$0x1] %vm7283, %v7098
          %7290 = vst.msk [vmem:[%s7282 + $0xc0] sm:$0x1] %vm7283, %v7100
          %7291 = vst.msk [vmem:[%s7282 + $0xe0] sm:$0x1] %vm7283, %v7102
          %7292 = vst.msk [vmem:[%s7282 + $0x100] sm:$0x1] %vm7283, %v7126
          %7293 = vst.msk [vmem:[%s7282 + $0x120] sm:$0x1] %vm7283, %v7140
          %7294 = vst.msk [vmem:[%s7282 + $0x140] sm:$0x1] %vm7283, %v7148
          %7295 = vst.msk [vmem:[%s7282 + $0x160] sm:$0x1] %vm7283, %v7150
          %7296 = vst.msk [vmem:[%s7282 + $0x180] sm:$0x1] %vm7283, %v7133
          %7297 = vst.msk [vmem:[%s7282 + $0x1a0] sm:$0x1] %vm7283, %v7147
          %7298 = vst.msk [vmem:[%s7282 + $0x1c0] sm:$0x1] %vm7283, %v7149
          %7299 = vst.msk [vmem:[%s7282 + $0x1e0] sm:$0x1] %vm7283, %v7151
          %7300 = vst.msk [vmem:[%s7282 + $0x200] sm:$0x1] %vm7283, %v7175
          %7301 = vst.msk [vmem:[%s7282 + $0x220] sm:$0x1] %vm7283, %v7189
          %7302 = vst.msk [vmem:[%s7282 + $0x240] sm:$0x1] %vm7283, %v7197
          %7303 = vst.msk [vmem:[%s7282 + $0x260] sm:$0x1] %vm7283, %v7199
          %7304 = vst.msk [vmem:[%s7282 + $0x280] sm:$0x1] %vm7283, %v7182
          %7305 = vst.msk [vmem:[%s7282 + $0x2a0] sm:$0x1] %vm7283, %v7196
          %7306 = vst.msk [vmem:[%s7282 + $0x2c0] sm:$0x1] %vm7283, %v7198
          %7307 = vst.msk [vmem:[%s7282 + $0x2e0] sm:$0x1] %vm7283, %v7200
          %7308 = vst.msk [vmem:[%s7282 + $0x300] sm:$0x1] %vm7283, %v7224
          %7309 = vst.msk [vmem:[%s7282 + $0x320] sm:$0x1] %vm7283, %v7238
          %7310 = vst.msk [vmem:[%s7282 + $0x340] sm:$0x1] %vm7283, %v7246
          %7311 = vst.msk [vmem:[%s7282 + $0x360] sm:$0x1] %vm7283, %v7248
          %7312 = vst.msk [vmem:[%s7282 + $0x380] sm:$0x1] %vm7283, %v7231
          %7313 = vst.msk [vmem:[%s7282 + $0x3a0] sm:$0x1] %vm7283, %v7245
          %7314 = vst.msk [vmem:[%s7282 + $0x3c0] sm:$0x1] %vm7283, %v7247
          %7315 = vst.msk [vmem:[%s7282 + $0x3e0] sm:$0x1] %vm7283, %v7249
        $region68: #{upsample_block.1} parent=47 // loop_footer
          %s7017 = sadd.s32 1, %s7013
        $region69: #{upsample_block.1} parent=47 // loop_footer_branch
          %7012 = sbr.rel target = $region65
        $region70: #{upsample_block.1} parent=47 // loop_exit
          _
        %s7316 = sand.u32 %s183, 1
        %s7317 = scalar_lea.sflag [#allocation5], %s7316
        %s7318 = sand.u32 %s183, 1
        %s7319 = smul.addr %s7318, 1024
        %s7320 = scalar_lea.vmem [#allocation9], %s7319
        // Predicated region
        $region71: #{upsample_block.1} parent=47 // pred_check
          %p7321 = pneg %p193
        $region72: #{upsample_block.1} parent=47 // pred_check_branch
          %7323 = sbr.rel (%p7321) target = $region74
        $region73: #{upsample_block.1} parent=47 // pred_region
          %s7325 = ssub.s32 16384, 16384
          %7326 = vsyncadd %s7317, %s7325
          %s7327 = smul.addr %s23, 128
          %s7328 = smul.addr %s7327, 128
          %s7329 = scalar_lea.hbm %s7, %s7328
          %s7330 = sshll.u32 %s7320, 4
          %s7331 = int_to_ptr.vmem [resolvable:$true] %s7330
          %7336 = dma.vmem_to_hbm [thread:$0]  %s7331, 16384, %s7329, %s7317, 128, 128, 8
        $region74: #{upsample_block.1} parent=47 // pred_fallthru
          _
      $region48: #{upsample_block.1} parent=5 // pred_fallthru
        _
      %p7337 = scmp.le.s32.totalorder 2, %s18
      // Predicated region
      $region75: #{upsample_block.1} parent=5 // pred_check
        %p7338 = pneg %p7337
      $region76: #{upsample_block.1} parent=5 // pred_check_branch
        %7340 = sbr.rel (%p7338) target = $region78
      $region77: #{upsample_block.1} parent=5 // pred_region
        %s7341 = ssub.s32 %s18, 2
        // Predicated region
        $region79: #{upsample_block.1} parent=77 // pred_check
          %p7342 = pneg %p199
        $region80: #{upsample_block.1} parent=77 // pred_check_branch
          %7344 = sbr.rel (%p7342) target = $region82
        $region81: #{upsample_block.1} parent=77 // pred_region
          %s7345 = sand.u32 %s184, 1
          %s7346 = scalar_lea.sflag [#allocation5], %s7345
          %s7347 = sand.u32 %s184, 1
          %s7348 = smul.addr %s7347, 1024
          %s7349 = scalar_lea.vmem [#allocation9], %s7348
          %7350 = dma.done %s7346, 16384
        $region82: #{upsample_block.1} parent=77 // pred_fallthru
          _
      $region78: #{upsample_block.1} parent=5 // pred_fallthru
        _
    $region6: #{upsample_block.1} parent=1 // loop_footer
      %s22 = sadd.s32 1, %s18
    $region7: #{upsample_block.1} parent=1 // loop_footer_branch
      %17 = sbr.rel target = $region3
    $region8: #{upsample_block.1} parent=1 // loop_exit
      _
    %7351 = vsyncpa [#allocation5], 1
    %s7352 = scalar_lea.sflag [#allocation5], 1
    %7353 = vsyncpa %s7352, 1
    %7354 = vsyncpa [#allocation6], 1
    %s7355 = scalar_lea.sflag [#allocation6], 1
    %7356 = vsyncpa %s7355, 1
    %7357 = vsyncpa [#allocation8], 1

</llo_original>
